<compile_context>
chip_gen: v5e
topology: v5e:2x2
jax: 0.10.0
libtpu: 0.0.40
codegen_flags: <defaults>
</compile_context>

<pallas_src>
import math
from functools import partial

import jax
import jax.numpy as jnp
from jax.experimental import pallas as pl
from jax.experimental.pallas import tpu as pltpu


# ----------------------------- in-kernel math helpers -----------------------------

def _silu(x):
    # x * sigmoid(x); reciprocal goes to the (otherwise idle) EUP slot.
    return x * pl.reciprocal(1.0 + jnp.exp(-x), approx=True)


def _softplus(x):
    # numerically stable fused form: max(x,0) + log1p(exp(-|x|))
    return jnp.maximum(x, 0.0) + jnp.log1p(jnp.exp(-jnp.abs(x)))


# ----------------------------- fused (fwd+bwd) Mamba pair kernel -----------------------------

def mamba2d_pair_kernel(x_ref,          # (L, NB, C)   time-major input (rows = t*NB + n)
                        w_in_x_ref,     # (C, 2di)     in_proj, conv/SSM half   [fwd | bwd]
                        w_in_z_ref,     # (C, 2di)     in_proj, gate half       [fwd | bwd]
                        taps_ref,       # (2K-1, 2di)  fused fwd/bwd conv taps
                        b_conv_ref,     # (1, 2di)
                        w_dt_ref,       # (2di, 2di)   x_proj->dt_proj folded, block-diag
                        b_dt_ref,       # (1, 2di)
                        a_flat_ref,     # (1, 2di*ds)  flattened A (negative)
                        w_b_ref,        # (2di, 2ds)   small B projection (block-diag)
                        w_c_ref,        # (2di, 2ds)   small C projection (block-diag)
                        d_ref,          # (1, 2di)
                        w_out_ref,      # (2di, C)     out_proj merged with fc chunk
                        b_fc_ref,       # (1, C)       fc bias (only on orientation 0)
                        s_tile_ref,     # (2di, 2di*ds)   0/1 lane-replicator  (bf16, shared)
                        e_exp_ref,      # (2ds, 2di*ds)   0/1 lane-expander    (bf16, shared)
                        r_half_ref,     # (di*ds, di)     0/1 state-sum reducer(bf16, shared)
                        o_ref,          # (L, NB, C)
                        xpad_s,         # (M + 2P, 2di)   zero-padded conv input
                        xc_s,           # (M, 2di)        conv+SiLU output
                        da_s,           # (M, 2di*ds)     exp(dt*A)
                        dbx_s,          # (M, 2di*ds)     dt*x*B
                        cx_s,           # (M, 2di*ds)     C (lane-expanded)
                        yf_s,           # (M, di)         forward scan output
                        yb_s):          # (M, di)         backward scan output (orig time)
    L, NB, C = x_ref.shape
    di2 = w_in_x_ref.shape[1]
    d_inner = di2 // 2
    DS2 = a_flat_ref.shape[1]
    half = DS2 // 2
    M = L * NB
    K2 = taps_ref.shape[0]             # 2K-1
    khalf = (K2 - 1) // 2              # K-1
    P = khalf * NB                     # pad rows on each side of the conv scratch

    x2 = x_ref[...].reshape(M, C)

    # ---- in_proj (conv/SSM half) ----
    xh = jnp.dot(x2, w_in_x_ref[...], preferred_element_type=jnp.float32)   # (M, 2di)

    # ---- fused fwd(causal)/bwd(anti-causal) depthwise conv1d + SiLU ----
    # A time shift of s is a row shift of s*NB; read static, sublane-aligned
    # windows of a zero-padded VMEM scratch (no shifted concat temporaries).
    if P > 0:
        xpad_s[pl.ds(0, P), :] = jnp.zeros((P, di2), jnp.float32)
        xpad_s[pl.ds(P + M, P), :] = jnp.zeros((P, di2), jnp.float32)
    xpad_s[pl.ds(P, M), :] = xh
    taps = taps_ref[...]
    acc = jnp.broadcast_to(b_conv_ref[...], (M, di2))
    for j in range(K2):
        r = (j - khalf) * NB
        acc = acc + xpad_s[pl.ds(P + r, M), :] * taps[j:j + 1, :]
    xc = _silu(acc)                                                         # (M, 2di)
    xc_s[...] = xc

    # ---- dt = softplus(xc @ (x_proj_dt @ dt_proj) + dt_bias) (folded) ----
    dt = _softplus(jnp.dot(xc, w_dt_ref[...], preferred_element_type=jnp.float32)
                   + b_dt_ref[...])                                         # (M, 2di)

    # ---- flattened-state scan inputs, hoisted over all rows, staged to VMEM ----
    # State is flattened channel-major onto lanes: lane (dir*di + c)*ds + j.
    S = s_tile_ref[...].astype(jnp.float32)                                 # (2di, DS2)
    da_s[...] = jnp.exp(jnp.dot(dt, S, preferred_element_type=jnp.float32)
                        * a_flat_ref[...])                                  # exp(dt*A)
    E = e_exp_ref[...].astype(jnp.float32)                                  # (2ds, DS2)
    bsm = jnp.dot(xc, w_b_ref[...], preferred_element_type=jnp.float32)     # (M, 2ds)
    dbx_s[...] = (jnp.dot(dt * xc, S, preferred_element_type=jnp.float32)
                  * jnp.dot(bsm, E, preferred_element_type=jnp.float32))    # dt*x*B
    csm = jnp.dot(xc, w_c_ref[...], preferred_element_type=jnp.float32)     # (M, 2ds)
    cx_s[...] = jnp.dot(csm, E, preferred_element_type=jnp.float32)

    # ---- selective scan, both directions, unrolled over static L ----
    # Forward reads time block t; backward reads block L-1-t and writes its y
    # rows back at L-1-t, so everything is already in original time order.
    R = r_half_ref[...].astype(jnp.float32)                                 # (di*ds, di)
    h_f = jnp.zeros((NB, half), jnp.float32)
    h_b = jnp.zeros((NB, half), jnp.float32)
    for t in range(L):
        lo = t * NB
        lob = (L - 1 - t) * NB
        h_f = (da_s[pl.ds(lo, NB), pl.ds(0, half)] * h_f
               + dbx_s[pl.ds(lo, NB), pl.ds(0, half)])
        h_b = (da_s[pl.ds(lob, NB), pl.ds(half, half)] * h_b
               + dbx_s[pl.ds(lob, NB), pl.ds(half, half)])
        yf_s[pl.ds(lo, NB), :] = jnp.dot(
            h_f * cx_s[pl.ds(lo, NB), pl.ds(0, half)], R,
            preferred_element_type=jnp.float32)
        yb_s[pl.ds(lob, NB), :] = jnp.dot(
            h_b * cx_s[pl.ds(lob, NB), pl.ds(half, half)], R,
            preferred_element_type=jnp.float32)

    # ---- D skip, SiLU(z) gate, merged out_proj(+fc chunk), fc bias ----
    xc = xc_s[...]
    z = jnp.dot(x_ref[...].reshape(M, C), w_in_z_ref[...],
                preferred_element_type=jnp.float32)
    g = _silu(z)
    xcD = xc * d_ref[...]
    w_out = w_out_ref[...]
    out = (jnp.dot((yf_s[...] + xcD[:, :d_inner]) * g[:, :d_inner],
                   w_out[:d_inner, :], preferred_element_type=jnp.float32)
           + jnp.dot((yb_s[...] + xcD[:, d_inner:]) * g[:, d_inner:],
                     w_out[d_inner:, :], preferred_element_type=jnp.float32)
           + b_fc_ref[...])                                                 # (M, C)
    o_ref[...] = out.reshape(L, NB, C)


_PER_OR_KEYS = ("W_in_x", "W_in_z", "w_taps", "b_conv", "W_dt", "b_dt",
                "A_flat", "W_B", "W_C", "D", "W_out", "b_fc")
_SHARED_KEYS = ("S_tile", "E_exp", "R_half")


def run_mamba2d_pairs(xs, packed, orientation=None):
    """xs: (n_or, L, N, C) time-major stacks; one grid step per orientation."""
    n_or, L, N, C = xs.shape
    di2 = packed["W_in_x"].shape[2]
    d_inner = di2 // 2
    DS2 = packed["A_flat"].shape[2]
    K2 = packed["w_taps"].shape[1]
    M = L * N
    P = ((K2 - 1) // 2) * N

    per_or = [packed[k] for k in _PER_OR_KEYS]
    shared = [packed[k] for k in _SHARED_KEYS]

    if orientation is None:            # fused: grid step == orientation
        or_idx = lambda i: i
        x_idx = lambda i: i
        grid = (n_or,)
    else:                              # single-orientation call (H != W fallback)
        or_idx = lambda i, o=orientation: o
        x_idx = lambda i: 0
        grid = (1,)

    in_specs = [pl.BlockSpec((None, L, N, C), lambda i: (x_idx(i), 0, 0, 0))]
    in_specs += [pl.BlockSpec((None,) + w.shape[1:], lambda i: (or_idx(i), 0, 0))
                 for w in per_or]
    in_specs += [pl.BlockSpec(w.shape, lambda i: (0, 0)) for w in shared]

    grid_spec = pltpu.PrefetchScalarGridSpec(
        num_scalar_prefetch=0,
        grid=grid,
        in_specs=in_specs,
        out_specs=pl.BlockSpec((None, L, N, C), lambda i: (x_idx(i), 0, 0, 0)),
        scratch_shapes=[
            pltpu.VMEM((M + 2 * P, di2), jnp.float32),   # zero-padded conv input
            pltpu.VMEM((M, di2), jnp.float32),           # xc
            pltpu.VMEM((M, DS2), jnp.float32),           # dA
            pltpu.VMEM((M, DS2), jnp.float32),           # dB*x
            pltpu.VMEM((M, DS2), jnp.float32),           # C (lane-expanded)
            pltpu.VMEM((M, d_inner), jnp.float32),       # y forward
            pltpu.VMEM((M, d_inner), jnp.float32),       # y backward
        ],
    )
    return pl.pallas_call(
        mamba2d_pair_kernel,
        out_shape=jax.ShapeDtypeStruct((n_or, L, N, C), jnp.float32),
        grid_spec=grid_spec,
        compiler_params=pltpu.CompilerParams(
            dimension_semantics=("parallel",)),   # orientations independent -> 2 TCs on v7x
    )(xs, *per_or, *shared)


# ----------------------------- parameter initialization (per-branch, PyTorch layout) -----------------------------

def init_mamba_params(key, d_model, d_state, d_conv, expand):
    d_inner = expand * d_model
    dt_rank = math.ceil(d_model / 16)
    ks = jax.random.split(key, 7)

    def u(k, shape, scale):
        return jax.random.uniform(k, shape, jnp.float32, -scale, scale)

    w_in = u(ks[0], (2 * d_inner, d_model), 1.0 / math.sqrt(d_model))
    w_conv = u(ks[1], (d_inner, d_conv), 1.0 / math.sqrt(d_conv))
    b_conv = u(ks[2], (d_inner,), 1.0 / math.sqrt(d_conv))
    w_xproj = u(ks[3], (dt_rank + 2 * d_state, d_inner), 1.0 / math.sqrt(d_inner))
    w_dt = u(ks[4], (d_inner, dt_rank), dt_rank ** -0.5)
    dt = jnp.exp(jax.random.uniform(ks[5], (d_inner,), jnp.float32)
                 * (math.log(0.1) - math.log(1e-3)) + math.log(1e-3))
    b_dt = dt + jnp.log(-jnp.expm1(-dt))                     # inverse softplus init
    A = -jnp.exp(jnp.log(jnp.tile(
        jnp.arange(1, d_state + 1, dtype=jnp.float32)[None, :], (d_inner, 1))))
    D = jnp.ones((d_inner,), jnp.float32)
    w_out = u(ks[6], (d_model, d_inner), 1.0 / math.sqrt(d_inner))
    return dict(w_in=w_in, w_conv=w_conv, b_conv=b_conv, w_xproj=w_xproj,
                w_dt=w_dt, b_dt=b_dt, A=A, D=D, w_out=w_out)


def init_mamba2d_params(key, input_size, state_expansion, block_expansion, conv_dim):
    k0, k1, k2, k3, k4, k5 = jax.random.split(key, 6)
    C = input_size
    fc_in = 4 * C                                            # bidirectional + union='cat'
    bound = 1.0 / math.sqrt(fc_in)
    fc_w = jax.random.uniform(k4, (C, fc_in), jnp.float32, -bound, bound)
    fc_b = jax.random.uniform(k5, (C,), jnp.float32, -bound, bound)
    branches = {
        "vf": init_mamba_params(k0, C, state_expansion, block_expansion, conv_dim),
        "vb": init_mamba_params(k1, C, state_expansion, block_expansion, conv_dim),
        "hf": init_mamba_params(k2, C, state_expansion, block_expansion, conv_dim),
        "hb": init_mamba_params(k3, C, state_expansion, block_expansion, conv_dim),
    }
    return dict(branches=branches, fc_w=fc_w, fc_b=fc_b)


# ----------------------------- weight packing for the fused kernel -----------------------------

def _pack_pair(pf, pb, fc_chunk_f, fc_chunk_b, fc_bias):
    """Pack one (forward, backward) Mamba pair + its fc column chunks."""
    d_inner, K = pf["w_conv"].shape
    d_state = pf["A"].shape[1]
    dt_rank = pf["w_dt"].shape[1]
    di2 = 2 * d_inner
    DS2 = di2 * d_state

    # in_proj split into conv/SSM half and gate half, [fwd | bwd] along features
    W_in_x = jnp.concatenate([pf["w_in"][:d_inner].T, pb["w_in"][:d_inner].T], axis=1)
    W_in_z = jnp.concatenate([pf["w_in"][d_inner:].T, pb["w_in"][d_inner:].T], axis=1)

    # fused conv taps over shifts s = -(K-1)..(K-1):
    #   forward (causal):  w_f[:, K-1+s] for s <= 0
    #   backward (flip-conv-flip): w_b[:, K-1-s] for s >= 0
    rows = []
    for s in range(-(K - 1), K):
        f = pf["w_conv"][:, K - 1 + s] if s <= 0 else jnp.zeros((d_inner,), jnp.float32)
        b = pb["w_conv"][:, K - 1 - s] if s >= 0 else jnp.zeros((d_inner,), jnp.float32)
        rows.append(jnp.concatenate([f, b]))
    w_taps = jnp.stack(rows, axis=0)                                  # (2K-1, di2)
    b_conv = jnp.concatenate([pf["b_conv"], pb["b_conv"]]).reshape(1, di2)

    # dt_proj folded into x_proj, block-diagonal over the two directions
    Wdt_f = pf["w_xproj"][:dt_rank].T @ pf["w_dt"].T
    Wdt_b = pb["w_xproj"][:dt_rank].T @ pb["w_dt"].T
    z_ii = jnp.zeros((d_inner, d_inner), jnp.float32)
    W_dt = jnp.block([[Wdt_f, z_ii], [z_ii, Wdt_b]])                  # (di2, di2)
    b_dt = jnp.concatenate([pf["b_dt"], pb["b_dt"]]).reshape(1, di2)

    # small B / C projections (block-diag over directions); expansion happens in-kernel
    Bf = pf["w_xproj"][dt_rank:dt_rank + d_state].T                   # (di, ds)
    Bb = pb["w_xproj"][dt_rank:dt_rank + d_state].T
    Cf = pf["w_xproj"][dt_rank + d_state:].T
    Cb = pb["w_xproj"][dt_rank + d_state:].T
    z_is = jnp.zeros((d_inner, d_state), jnp.float32)
    W_B = jnp.block([[Bf, z_is], [z_is, Bb]])                         # (di2, 2ds)
    W_C = jnp.block([[Cf, z_is], [z_is, Cb]])

    A_flat = jnp.concatenate([pf["A"], pb["A"]], axis=0).reshape(1, DS2)
    D = jnp.concatenate([pf["D"], pb["D"]]).reshape(1, di2)

    # out_proj merged with the matching fc column block: (fc_chunk @ w_out).T
    W_out = jnp.concatenate([(fc_chunk_f @ pf["w_out"]).T,
                             (fc_chunk_b @ pb["w_out"]).T], axis=0)   # (di2, C)

    return dict(W_in_x=W_in_x, W_in_z=W_in_z, w_taps=w_taps, b_conv=b_conv,
                W_dt=W_dt, b_dt=b_dt, A_flat=A_flat, W_B=W_B, W_C=W_C,
                D=D, W_out=W_out, b_fc=fc_bias)


def pack_mamba2d_params(raw):
    C = raw["fc_b"].shape[0]
    fw = raw["fc_w"]
    # reference concat order for union='cat': [v_fwd, v_bwd, h_fwd, h_bwd]
    chunks = [fw[:, i * C:(i + 1) * C] for i in range(4)]
    br = raw["branches"]
    # orientation 0 = horizontal (carries the fc bias), orientation 1 = vertical
    pair_h = _pack_pair(br["hf"], br["hb"], chunks[2], chunks[3],
                        raw["fc_b"].reshape(1, C))
    pair_v = _pack_pair(br["vf"], br["vb"], chunks[0], chunks[1],
                        jnp.zeros((1, C), jnp.float32))
    packed = {k: jnp.stack([pair_h[k], pair_v[k]], axis=0) for k in _PER_OR_KEYS}

    d_inner = br["hf"]["D"].shape[0]
    d_state = br["hf"]["A"].shape[1]
    di2 = 2 * d_inner
    # shared 0/1 expansion / reduction matrices (exact in bf16 -> half the DMA bytes)
    packed["S_tile"] = jnp.repeat(jnp.eye(di2, dtype=jnp.float32),
                                  d_state, axis=1).astype(jnp.bfloat16)        # (di2, DS2)
    e_half = jnp.tile(jnp.eye(d_state, dtype=jnp.float32), (1, d_inner))       # (ds, di*ds)
    z_e = jnp.zeros_like(e_half)
    packed["E_exp"] = jnp.block([[e_half, z_e],
                                 [z_e, e_half]]).astype(jnp.bfloat16)          # (2ds, DS2)
    packed["R_half"] = jnp.repeat(jnp.eye(d_inner, dtype=jnp.float32),
                                  d_state, axis=0).astype(jnp.bfloat16)        # (di*ds, di)
    return packed


# ----------------------------- MAMBA2D forward (wrapper glue) -----------------------------

@jax.jit
def mamba2d_forward(x, packed):
    """x: (B, H, W, C).  bidirectional=True, union='cat', with_fc=True, num_layers=1."""
    B, H, W, C = x.shape
    x_h = jnp.transpose(x, (2, 0, 1, 3)).reshape(W, B * H, C)   # horizontal: seq along W
    x_v = jnp.transpose(x, (1, 0, 2, 3)).reshape(H, B * W, C)   # vertical:   seq along H
    if H == W:
        # one fused pallas_call, grid=(2,) over orientations
        out = run_mamba2d_pairs(jnp.stack([x_h, x_v], axis=0), packed, orientation=None)
        h_c, v_c = out[0], out[1]
    else:
        # TODO(synk): H != W cannot share one stacked input; fall back to two calls.
        h_c = run_mamba2d_pairs(x_h[None], packed, orientation=0)[0]
        v_c = run_mamba2d_pairs(x_v[None], packed, orientation=1)[0]
    h_c = h_c.transpose(1, 0, 2).reshape(B, H, W, C)
    v_c = v_c.reshape(H, B, W, C).transpose(1, 0, 2, 3)
    # fc weight is folded into the branch out-projections; fc bias added in-kernel.
    return h_c + v_c


# ----------------------------- main -----------------------------

if __name__ == "__main__":
    # MAMBA2D(input_size=16, state_expansion=8, block_expansion=2, conv_dim=4,
    #         num_layers=1, bidirectional=True, union='cat', with_fc=True)
    input_size = 16        # C (d_model)
    state_expansion = 8    # d_state
    block_expansion = 2    # expand -> d_inner = 32
    conv_dim = 4           # d_conv

    B, H, W = 2, 8, 8

    key = jax.random.PRNGKey(0)
    kx, kp = jax.random.split(key)
    x = jax.random.normal(kx, (B, H, W, input_size), dtype=jnp.float32)
    raw = init_mamba2d_params(kp, input_size, state_expansion,
                              block_expansion, conv_dim)
    packed = pack_mamba2d_params(raw)

    out = mamba2d_forward(x, packed)
    out = jax.block_until_ready(out)

    assert out.shape == (B, H, W, input_size)
    assert bool(jnp.all(jnp.isfinite(out)))
    print("KERNEL_OK")
</pallas_src>

<mosaic_0001>
module attributes {stable_mosaic.version = 11 : i64} {
  func.func @mamba2d_pair_kernel(%arg0: i32, %arg1: memref<1x8x16x16xf32, #tpu.memory_space<vmem>>, %arg2: memref<1x16x128xf32, #tpu.memory_space<vmem>>, %arg3: memref<1x16x128xf32, #tpu.memory_space<vmem>>, %arg4: memref<1x3x128xf32, #tpu.memory_space<vmem>>, %arg5: memref<1x1x128xf32, #tpu.memory_space<vmem>>, %arg6: memref<1x128x128xf32, #tpu.memory_space<vmem>>, %arg7: memref<1x1x128xf32, #tpu.memory_space<vmem>>, %arg8: memref<1x1x1024xf32, #tpu.memory_space<vmem>>, %arg9: memref<1x128x16xf32, #tpu.memory_space<vmem>>, %arg10: memref<1x128x16xf32, #tpu.memory_space<vmem>>, %arg11: memref<1x1x128xf32, #tpu.memory_space<vmem>>, %arg12: memref<1x128x16xf32, #tpu.memory_space<vmem>>, %arg13: memref<1x1x16xf32, #tpu.memory_space<vmem>>, %arg14: memref<128x1024xbf16, #tpu.memory_space<vmem>>, %arg15: memref<16x1024xbf16, #tpu.memory_space<vmem>>, %arg16: memref<512x64xbf16, #tpu.memory_space<vmem>>, %arg17: memref<1x8x16x16xf32, #tpu.memory_space<vmem>>, %arg18: memref<160x128xf32, #tpu.memory_space<vmem>>, %arg19: memref<128x128xf32, #tpu.memory_space<vmem>>, %arg20: memref<128x1024xf32, #tpu.memory_space<vmem>>, %arg21: memref<128x1024xf32, #tpu.memory_space<vmem>>, %arg22: memref<128x1024xf32, #tpu.memory_space<vmem>>, %arg23: memref<128x64xf32, #tpu.memory_space<vmem>>, %arg24: memref<128x64xf32, #tpu.memory_space<vmem>>) attributes {dimension_semantics = [#tpu.dimension_semantics<parallel>], iteration_bounds = array<i64: 2>, scalar_prefetch = 0 : i64, scratch_operands = 7 : i64, tpu.core_type = #tpu.core_type<tc>, window_params = [{transform_indices = @transform_0, window_bounds = array<i64: 1, 8, 16, 16>}, {transform_indices = @transform_1, window_bounds = array<i64: 1, 16, 128>}, {transform_indices = @transform_2, window_bounds = array<i64: 1, 16, 128>}, {transform_indices = @transform_3, window_bounds = array<i64: 1, 3, 128>}, {transform_indices = @transform_4, window_bounds = array<i64: 1, 1, 128>}, {transform_indices = @transform_5, window_bounds = array<i64: 1, 128, 128>}, {transform_indices = @transform_6, window_bounds = array<i64: 1, 1, 128>}, {transform_indices = @transform_7, window_bounds = array<i64: 1, 1, 1024>}, {transform_indices = @transform_8, window_bounds = array<i64: 1, 128, 16>}, {transform_indices = @transform_9, window_bounds = array<i64: 1, 128, 16>}, {transform_indices = @transform_10, window_bounds = array<i64: 1, 1, 128>}, {transform_indices = @transform_11, window_bounds = array<i64: 1, 128, 16>}, {transform_indices = @transform_12, window_bounds = array<i64: 1, 1, 16>}, {pipeline_mode = #tpu.pipeline_mode<synchronous>, transform_indices = @transform_13, window_bounds = array<i64: 128, 1024>}, {pipeline_mode = #tpu.pipeline_mode<synchronous>, transform_indices = @transform_14, window_bounds = array<i64: 16, 1024>}, {pipeline_mode = #tpu.pipeline_mode<synchronous>, transform_indices = @transform_15, window_bounds = array<i64: 512, 64>}, {transform_indices = @transform_16, window_bounds = array<i64: 1, 8, 16, 16>}]} {
    %c0 = arith.constant 0 : index
    %c0_0 = arith.constant 0 : index
    %c0_1 = arith.constant 0 : index
    %c0_2 = arith.constant 0 : index
    %0 = vector.load %arg1[%c0, %c0_0, %c0_1, %c0_2] : memref<1x8x16x16xf32, #tpu.memory_space<vmem>>, vector<1x8x16x16xf32>
    %1 = vector.shape_cast %0 : vector<1x8x16x16xf32> to vector<8x16x16xf32>
    %2 = vector.shape_cast %1 : vector<8x16x16xf32> to vector<128x16xf32>
    %c0_3 = arith.constant 0 : index
    %c0_4 = arith.constant 0 : index
    %c0_5 = arith.constant 0 : index
    %3 = vector.load %arg2[%c0_3, %c0_4, %c0_5] : memref<1x16x128xf32, #tpu.memory_space<vmem>>, vector<1x16x128xf32>
    %4 = vector.shape_cast %3 : vector<1x16x128xf32> to vector<16x128xf32>
    %cst = arith.constant dense<0.000000e+00> : vector<128x128xf32>
    %5 = tpu.matmul %2, %4, %cst {dimension_numbers = #tpu.dot_dimension_numbers<[1], [0], [0], [1], [0, 0, 1, 1], [], []>} : vector<128x16xf32>, vector<16x128xf32>, vector<128x128xf32> -> vector<128x128xf32>
    %cst_6 = arith.constant 0.000000e+00 : f32
    %6 = vector.broadcast %cst_6 : f32 to vector<16x128xf32>
    %c0_7 = arith.constant 0 : index
    %c0_8 = arith.constant 0 : index
    %7 = vector.load %arg18[%c0_7, %c0_8] : memref<160x128xf32, #tpu.memory_space<vmem>>, vector<16x128xf32>
    tpu.vector_store %arg18[%c0_7, %c0_8], %6 {strides = array<i32>} : memref<160x128xf32, #tpu.memory_space<vmem>>, vector<16x128xf32>,
    %cst_9 = arith.constant 0.000000e+00 : f32
    %8 = vector.broadcast %cst_9 : f32 to vector<16x128xf32>
    %c144 = arith.constant 144 : index
    %c0_10 = arith.constant 0 : index
    %9 = vector.load %arg18[%c144, %c0_10] : memref<160x128xf32, #tpu.memory_space<vmem>>, vector<16x128xf32>
    tpu.vector_store %arg18[%c144, %c0_10], %8 {strides = array<i32>} : memref<160x128xf32, #tpu.memory_space<vmem>>, vector<16x128xf32>,
    %c16 = arith.constant 16 : index
    %c0_11 = arith.constant 0 : index
    %10 = vector.load %arg18[%c16, %c0_11] : memref<160x128xf32, #tpu.memory_space<vmem>>, vector<128x128xf32>
    tpu.vector_store %arg18[%c16, %c0_11], %5 {strides = array<i32>} : memref<160x128xf32, #tpu.memory_space<vmem>>, vector<128x128xf32>,
    %c0_12 = arith.constant 0 : index
    %c0_13 = arith.constant 0 : index
    %c0_14 = arith.constant 0 : index
    %11 = vector.load %arg4[%c0_12, %c0_13, %c0_14] : memref<1x3x128xf32, #tpu.memory_space<vmem>>, vector<1x3x128xf32>
    %12 = vector.shape_cast %11 : vector<1x3x128xf32> to vector<3x128xf32>
    %c0_15 = arith.constant 0 : index
    %c0_16 = arith.constant 0 : index
    %c0_17 = arith.constant 0 : index
    %13 = vector.load %arg5[%c0_15, %c0_16, %c0_17] : memref<1x1x128xf32, #tpu.memory_space<vmem>>, vector<1x1x128xf32>
    %14 = vector.shape_cast %13 : vector<1x1x128xf32> to vector<1x128xf32>
    %15 = vector.shape_cast %14 : vector<1x128xf32> to vector<1x128xf32>
    %16 = vector.broadcast %15 : vector<1x128xf32> to vector<128x128xf32>
    %c0_18 = arith.constant 0 : index
    %c0_19 = arith.constant 0 : index
    %17 = vector.load %arg18[%c0_18, %c0_19] : memref<160x128xf32, #tpu.memory_space<vmem>>, vector<128x128xf32>
    %18 = vector.extract_strided_slice %12 {offsets = [0, 0], sizes = [1, 128], strides = [1, 1]} : vector<3x128xf32> to vector<1x128xf32>
    %19 = vector.broadcast %18 : vector<1x128xf32> to vector<128x128xf32>
    %20 = arith.mulf %17, %19 : vector<128x128xf32>
    %21 = arith.addf %16, %20 : vector<128x128xf32>
    %c16_20 = arith.constant 16 : index
    %c0_21 = arith.constant 0 : index
    %22 = vector.load %arg18[%c16_20, %c0_21] : memref<160x128xf32, #tpu.memory_space<vmem>>, vector<128x128xf32>
    %23 = vector.extract_strided_slice %12 {offsets = [1, 0], sizes = [1, 128], strides = [1, 1]} : vector<3x128xf32> to vector<1x128xf32>
    %24 = vector.broadcast %23 : vector<1x128xf32> to vector<128x128xf32>
    %25 = arith.mulf %22, %24 : vector<128x128xf32>
    %26 = arith.addf %21, %25 : vector<128x128xf32>
    %c32 = arith.constant 32 : index
    %c0_22 = arith.constant 0 : index
    %27 = vector.load %arg18[%c32, %c0_22] : memref<160x128xf32, #tpu.memory_space<vmem>>, vector<128x128xf32>
    %28 = vector.extract_strided_slice %12 {offsets = [2, 0], sizes = [1, 128], strides = [1, 1]} : vector<3x128xf32> to vector<1x128xf32>
    %29 = vector.broadcast %28 : vector<1x128xf32> to vector<128x128xf32>
    %30 = arith.mulf %27, %29 : vector<128x128xf32>
    %31 = arith.addf %26, %30 : vector<128x128xf32>
    %cst_23 = arith.constant 0.000000e+00 : f32
    %32 = vector.broadcast %cst_23 : f32 to vector<128x128xf32>
    %33 = arith.subf %32, %31 : vector<128x128xf32>
    %34 = math.exp %33 : vector<128x128xf32>
    %cst_24 = arith.constant 1.000000e+00 : f32
    %35 = vector.broadcast %cst_24 : f32 to vector<128x128xf32>
    %36 = arith.addf %35, %34 : vector<128x128xf32>
    %37 = tpu.reciprocal %36 {approx = true} : vector<128x128xf32> -> vector<128x128xf32>
    %38 = arith.mulf %31, %37 : vector<128x128xf32>
    %c0_25 = arith.constant 0 : index
    %c0_26 = arith.constant 0 : index
    %39 = vector.load %arg19[%c0_25, %c0_26] : memref<128x128xf32, #tpu.memory_space<vmem>>, vector<128x128xf32>
    tpu.vector_store %arg19[%c0_25, %c0_26], %38 {strides = array<i32>} : memref<128x128xf32, #tpu.memory_space<vmem>>, vector<128x128xf32>,
    %c0_27 = arith.constant 0 : index
    %c0_28 = arith.constant 0 : index
    %c0_29 = arith.constant 0 : index
    %40 = vector.load %arg6[%c0_27, %c0_28, %c0_29] : memref<1x128x128xf32, #tpu.memory_space<vmem>>, vector<1x128x128xf32>
    %41 = vector.shape_cast %40 : vector<1x128x128xf32> to vector<128x128xf32>
    %cst_30 = arith.constant dense<0.000000e+00> : vector<128x128xf32>
    %42 = tpu.matmul %38, %41, %cst_30 {dimension_numbers = #tpu.dot_dimension_numbers<[1], [0], [0], [1], [0, 0, 1, 1], [], []>} : vector<128x128xf32>, vector<128x128xf32>, vector<128x128xf32> -> vector<128x128xf32>
    %c0_31 = arith.constant 0 : index
    %c0_32 = arith.constant 0 : index
    %c0_33 = arith.constant 0 : index
    %43 = vector.load %arg7[%c0_31, %c0_32, %c0_33] : memref<1x1x128xf32, #tpu.memory_space<vmem>>, vector<1x1x128xf32>
    %44 = vector.shape_cast %43 : vector<1x1x128xf32> to vector<1x128xf32>
    %45 = vector.broadcast %44 : vector<1x128xf32> to vector<128x128xf32>
    %46 = arith.addf %42, %45 : vector<128x128xf32>
    %cst_34 = arith.constant 0.000000e+00 : f32
    %47 = vector.broadcast %cst_34 : f32 to vector<128x128xf32>
    %48 = arith.maximumf %46, %47 : vector<128x128xf32>
    %49 = math.absf %46 : vector<128x128xf32>
    %cst_35 = arith.constant 0.000000e+00 : f32
    %50 = vector.broadcast %cst_35 : f32 to vector<128x128xf32>
    %51 = arith.subf %50, %49 : vector<128x128xf32>
    %52 = math.exp %51 : vector<128x128xf32>
    %53 = math.log1p %52 : vector<128x128xf32>
    %54 = arith.addf %48, %53 : vector<128x128xf32>
    %c0_36 = arith.constant 0 : index
    %c0_37 = arith.constant 0 : index
    %55 = vector.load %arg14[%c0_36, %c0_37] : memref<128x1024xbf16, #tpu.memory_space<vmem>>, vector<128x1024xbf16>
    %56 = arith.extf %55 : vector<128x1024xbf16> to vector<128x1024xf32>
    %cst_38 = arith.constant dense<0.000000e+00> : vector<128x1024xf32>
    %57 = tpu.matmul %54, %56, %cst_38 {dimension_numbers = #tpu.dot_dimension_numbers<[1], [0], [0], [1], [0, 0, 1, 1], [], []>} : vector<128x128xf32>, vector<128x1024xf32>, vector<128x1024xf32> -> vector<128x1024xf32>
    %c0_39 = arith.constant 0 : index
    %c0_40 = arith.constant 0 : index
    %c0_41 = arith.constant 0 : index
    %58 = vector.load %arg8[%c0_39, %c0_40, %c0_41] : memref<1x1x1024xf32, #tpu.memory_space<vmem>>, vector<1x1x1024xf32>
    %59 = vector.shape_cast %58 : vector<1x1x1024xf32> to vector<1x1024xf32>
    %60 = vector.broadcast %59 : vector<1x1024xf32> to vector<128x1024xf32>
    %61 = arith.mulf %57, %60 : vector<128x1024xf32>
    %62 = math.exp %61 : vector<128x1024xf32>
    %c0_42 = arith.constant 0 : index
    %c0_43 = arith.constant 0 : index
    %63 = vector.load %arg20[%c0_42, %c0_43] : memref<128x1024xf32, #tpu.memory_space<vmem>>, vector<128x1024xf32>
    tpu.vector_store %arg20[%c0_42, %c0_43], %62 {strides = array<i32>} : memref<128x1024xf32, #tpu.memory_space<vmem>>, vector<128x1024xf32>,
    %c0_44 = arith.constant 0 : index
    %c0_45 = arith.constant 0 : index
    %64 = vector.load %arg15[%c0_44, %c0_45] : memref<16x1024xbf16, #tpu.memory_space<vmem>>, vector<16x1024xbf16>
    %65 = arith.extf %64 : vector<16x1024xbf16> to vector<16x1024xf32>
    %c0_46 = arith.constant 0 : index
    %c0_47 = arith.constant 0 : index
    %c0_48 = arith.constant 0 : index
    %66 = vector.load %arg9[%c0_46, %c0_47, %c0_48] : memref<1x128x16xf32, #tpu.memory_space<vmem>>, vector<1x128x16xf32>
    %67 = vector.shape_cast %66 : vector<1x128x16xf32> to vector<128x16xf32>
    %cst_49 = arith.constant dense<0.000000e+00> : vector<128x16xf32>
    %68 = tpu.matmul %38, %67, %cst_49 {dimension_numbers = #tpu.dot_dimension_numbers<[1], [0], [0], [1], [0, 0, 1, 1], [], []>} : vector<128x128xf32>, vector<128x16xf32>, vector<128x16xf32> -> vector<128x16xf32>
    %69 = arith.mulf %54, %38 : vector<128x128xf32>
    %cst_50 = arith.constant dense<0.000000e+00> : vector<128x1024xf32>
    %70 = tpu.matmul %69, %56, %cst_50 {dimension_numbers = #tpu.dot_dimension_numbers<[1], [0], [0], [1], [0, 0, 1, 1], [], []>} : vector<128x128xf32>, vector<128x1024xf32>, vector<128x1024xf32> -> vector<128x1024xf32>
    %cst_51 = arith.constant dense<0.000000e+00> : vector<128x1024xf32>
    %71 = tpu.matmul %68, %65, %cst_51 {dimension_numbers = #tpu.dot_dimension_numbers<[1], [0], [0], [1], [0, 0, 1, 1], [], []>} : vector<128x16xf32>, vector<16x1024xf32>, vector<128x1024xf32> -> vector<128x1024xf32>
    %72 = arith.mulf %70, %71 : vector<128x1024xf32>
    %c0_52 = arith.constant 0 : index
    %c0_53 = arith.constant 0 : index
    %73 = vector.load %arg21[%c0_52, %c0_53] : memref<128x1024xf32, #tpu.memory_space<vmem>>, vector<128x1024xf32>
    tpu.vector_store %arg21[%c0_52, %c0_53], %72 {strides = array<i32>} : memref<128x1024xf32, #tpu.memory_space<vmem>>, vector<128x1024xf32>,
    %c0_54 = arith.constant 0 : index
    %c0_55 = arith.constant 0 : index
    %c0_56 = arith.constant 0 : index
    %74 = vector.load %arg10[%c0_54, %c0_55, %c0_56] : memref<1x128x16xf32, #tpu.memory_space<vmem>>, vector<1x128x16xf32>
    %75 = vector.shape_cast %74 : vector<1x128x16xf32> to vector<128x16xf32>
    %cst_57 = arith.constant dense<0.000000e+00> : vector<128x16xf32>
    %76 = tpu.matmul %38, %75, %cst_57 {dimension_numbers = #tpu.dot_dimension_numbers<[1], [0], [0], [1], [0, 0, 1, 1], [], []>} : vector<128x128xf32>, vector<128x16xf32>, vector<128x16xf32> -> vector<128x16xf32>
    %cst_58 = arith.constant dense<0.000000e+00> : vector<128x1024xf32>
    %77 = tpu.matmul %76, %65, %cst_58 {dimension_numbers = #tpu.dot_dimension_numbers<[1], [0], [0], [1], [0, 0, 1, 1], [], []>} : vector<128x16xf32>, vector<16x1024xf32>, vector<128x1024xf32> -> vector<128x1024xf32>
    %c0_59 = arith.constant 0 : index
    %c0_60 = arith.constant 0 : index
    %78 = vector.load %arg22[%c0_59, %c0_60] : memref<128x1024xf32, #tpu.memory_space<vmem>>, vector<128x1024xf32>
    tpu.vector_store %arg22[%c0_59, %c0_60], %77 {strides = array<i32>} : memref<128x1024xf32, #tpu.memory_space<vmem>>, vector<128x1024xf32>,
    %c0_61 = arith.constant 0 : index
    %c0_62 = arith.constant 0 : index
    %79 = vector.load %arg16[%c0_61, %c0_62] : memref<512x64xbf16, #tpu.memory_space<vmem>>, vector<512x64xbf16>
    %80 = arith.extf %79 : vector<512x64xbf16> to vector<512x64xf32>
    %cst_63 = arith.constant 0.000000e+00 : f32
    %81 = vector.broadcast %cst_63 : f32 to vector<16x512xf32>
    %cst_64 = arith.constant 0.000000e+00 : f32
    %82 = vector.broadcast %cst_64 : f32 to vector<16x512xf32>
    %c0_65 = arith.constant 0 : index
    %c0_66 = arith.constant 0 : index
    %83 = vector.load %arg20[%c0_65, %c0_66] : memref<128x1024xf32, #tpu.memory_space<vmem>>, vector<16x512xf32>
    %84 = arith.mulf %83, %81 : vector<16x512xf32>
    %c0_67 = arith.constant 0 : index
    %c0_68 = arith.constant 0 : index
    %85 = vector.load %arg21[%c0_67, %c0_68] : memref<128x1024xf32, #tpu.memory_space<vmem>>, vector<16x512xf32>
    %86 = arith.addf %84, %85 : vector<16x512xf32>
    %c112 = arith.constant 112 : index
    %c512 = arith.constant 512 : index
    %87 = vector.load %arg20[%c112, %c512] : memref<128x1024xf32, #tpu.memory_space<vmem>>, vector<16x512xf32>
    %88 = arith.mulf %87, %82 : vector<16x512xf32>
    %c112_69 = arith.constant 112 : index
    %c512_70 = arith.constant 512 : index
    %89 = vector.load %arg21[%c112_69, %c512_70] : memref<128x1024xf32, #tpu.memory_space<vmem>>, vector<16x512xf32>
    %90 = arith.addf %88, %89 : vector<16x512xf32>
    %c0_71 = arith.constant 0 : index
    %c0_72 = arith.constant 0 : index
    %91 = vector.load %arg22[%c0_71, %c0_72] : memref<128x1024xf32, #tpu.memory_space<vmem>>, vector<16x512xf32>
    %92 = arith.mulf %86, %91 : vector<16x512xf32>
    %cst_73 = arith.constant dense<0.000000e+00> : vector<16x64xf32>
    %93 = tpu.matmul %92, %80, %cst_73 {dimension_numbers = #tpu.dot_dimension_numbers<[1], [0], [0], [1], [0, 0, 1, 1], [], []>} : vector<16x512xf32>, vector<512x64xf32>, vector<16x64xf32> -> vector<16x64xf32>
    %c0_74 = arith.constant 0 : index
    %c0_75 = arith.constant 0 : index
    %94 = vector.load %arg23[%c0_74, %c0_75] : memref<128x64xf32, #tpu.memory_space<vmem>>, vector<16x64xf32>
    tpu.vector_store %arg23[%c0_74, %c0_75], %93 {strides = array<i32>} : memref<128x64xf32, #tpu.memory_space<vmem>>, vector<16x64xf32>,
    %c112_76 = arith.constant 112 : index
    %c512_77 = arith.constant 512 : index
    %95 = vector.load %arg22[%c112_76, %c512_77] : memref<128x1024xf32, #tpu.memory_space<vmem>>, vector<16x512xf32>
    %96 = arith.mulf %90, %95 : vector<16x512xf32>
    %cst_78 = arith.constant dense<0.000000e+00> : vector<16x64xf32>
    %97 = tpu.matmul %96, %80, %cst_78 {dimension_numbers = #tpu.dot_dimension_numbers<[1], [0], [0], [1], [0, 0, 1, 1], [], []>} : vector<16x512xf32>, vector<512x64xf32>, vector<16x64xf32> -> vector<16x64xf32>
    %c112_79 = arith.constant 112 : index
    %c0_80 = arith.constant 0 : index
    %98 = vector.load %arg24[%c112_79, %c0_80] : memref<128x64xf32, #tpu.memory_space<vmem>>, vector<16x64xf32>
    tpu.vector_store %arg24[%c112_79, %c0_80], %97 {strides = array<i32>} : memref<128x64xf32, #tpu.memory_space<vmem>>, vector<16x64xf32>,
    %c16_81 = arith.constant 16 : index
    %c0_82 = arith.constant 0 : index
    %99 = vector.load %arg20[%c16_81, %c0_82] : memref<128x1024xf32, #tpu.memory_space<vmem>>, vector<16x512xf32>
    %100 = arith.mulf %99, %86 : vector<16x512xf32>
    %c16_83 = arith.constant 16 : index
    %c0_84 = arith.constant 0 : index
    %101 = vector.load %arg21[%c16_83, %c0_84] : memref<128x1024xf32, #tpu.memory_space<vmem>>, vector<16x512xf32>
    %102 = arith.addf %100, %101 : vector<16x512xf32>
    %c96 = arith.constant 96 : index
    %c512_85 = arith.constant 512 : index
    %103 = vector.load %arg20[%c96, %c512_85] : memref<128x1024xf32, #tpu.memory_space<vmem>>, vector<16x512xf32>
    %104 = arith.mulf %103, %90 : vector<16x512xf32>
    %c96_86 = arith.constant 96 : index
    %c512_87 = arith.constant 512 : index
    %105 = vector.load %arg21[%c96_86, %c512_87] : memref<128x1024xf32, #tpu.memory_space<vmem>>, vector<16x512xf32>
    %106 = arith.addf %104, %105 : vector<16x512xf32>
    %c16_88 = arith.constant 16 : index
    %c0_89 = arith.constant 0 : index
    %107 = vector.load %arg22[%c16_88, %c0_89] : memref<128x1024xf32, #tpu.memory_space<vmem>>, vector<16x512xf32>
    %108 = arith.mulf %102, %107 : vector<16x512xf32>
    %cst_90 = arith.constant dense<0.000000e+00> : vector<16x64xf32>
    %109 = tpu.matmul %108, %80, %cst_90 {dimension_numbers = #tpu.dot_dimension_numbers<[1], [0], [0], [1], [0, 0, 1, 1], [], []>} : vector<16x512xf32>, vector<512x64xf32>, vector<16x64xf32> -> vector<16x64xf32>
    %c16_91 = arith.constant 16 : index
    %c0_92 = arith.constant 0 : index
    %110 = vector.load %arg23[%c16_91, %c0_92] : memref<128x64xf32, #tpu.memory_space<vmem>>, vector<16x64xf32>
    tpu.vector_store %arg23[%c16_91, %c0_92], %109 {strides = array<i32>} : memref<128x64xf32, #tpu.memory_space<vmem>>, vector<16x64xf32>,
    %c96_93 = arith.constant 96 : index
    %c512_94 = arith.constant 512 : index
    %111 = vector.load %arg22[%c96_93, %c512_94] : memref<128x1024xf32, #tpu.memory_space<vmem>>, vector<16x512xf32>
    %112 = arith.mulf %106, %111 : vector<16x512xf32>
    %cst_95 = arith.constant dense<0.000000e+00> : vector<16x64xf32>
    %113 = tpu.matmul %112, %80, %cst_95 {dimension_numbers = #tpu.dot_dimension_numbers<[1], [0], [0], [1], [0, 0, 1, 1], [], []>} : vector<16x512xf32>, vector<512x64xf32>, vector<16x64xf32> -> vector<16x64xf32>
    %c96_96 = arith.constant 96 : index
    %c0_97 = arith.constant 0 : index
    %114 = vector.load %arg24[%c96_96, %c0_97] : memref<128x64xf32, #tpu.memory_space<vmem>>, vector<16x64xf32>
    tpu.vector_store %arg24[%c96_96, %c0_97], %113 {strides = array<i32>} : memref<128x64xf32, #tpu.memory_space<vmem>>, vector<16x64xf32>,
    %c32_98 = arith.constant 32 : index
    %c0_99 = arith.constant 0 : index
    %115 = vector.load %arg20[%c32_98, %c0_99] : memref<128x1024xf32, #tpu.memory_space<vmem>>, vector<16x512xf32>
    %116 = arith.mulf %115, %102 : vector<16x512xf32>
    %c32_100 = arith.constant 32 : index
    %c0_101 = arith.constant 0 : index
    %117 = vector.load %arg21[%c32_100, %c0_101] : memref<128x1024xf32, #tpu.memory_space<vmem>>, vector<16x512xf32>
    %118 = arith.addf %116, %117 : vector<16x512xf32>
    %c80 = arith.constant 80 : index
    %c512_102 = arith.constant 512 : index
    %119 = vector.load %arg20[%c80, %c512_102] : memref<128x1024xf32, #tpu.memory_space<vmem>>, vector<16x512xf32>
    %120 = arith.mulf %119, %106 : vector<16x512xf32>
    %c80_103 = arith.constant 80 : index
    %c512_104 = arith.constant 512 : index
    %121 = vector.load %arg21[%c80_103, %c512_104] : memref<128x1024xf32, #tpu.memory_space<vmem>>, vector<16x512xf32>
    %122 = arith.addf %120, %121 : vector<16x512xf32>
    %c32_105 = arith.constant 32 : index
    %c0_106 = arith.constant 0 : index
    %123 = vector.load %arg22[%c32_105, %c0_106] : memref<128x1024xf32, #tpu.memory_space<vmem>>, vector<16x512xf32>
    %124 = arith.mulf %118, %123 : vector<16x512xf32>
    %cst_107 = arith.constant dense<0.000000e+00> : vector<16x64xf32>
    %125 = tpu.matmul %124, %80, %cst_107 {dimension_numbers = #tpu.dot_dimension_numbers<[1], [0], [0], [1], [0, 0, 1, 1], [], []>} : vector<16x512xf32>, vector<512x64xf32>, vector<16x64xf32> -> vector<16x64xf32>
    %c32_108 = arith.constant 32 : index
    %c0_109 = arith.constant 0 : index
    %126 = vector.load %arg23[%c32_108, %c0_109] : memref<128x64xf32, #tpu.memory_space<vmem>>, vector<16x64xf32>
    tpu.vector_store %arg23[%c32_108, %c0_109], %125 {strides = array<i32>} : memref<128x64xf32, #tpu.memory_space<vmem>>, vector<16x64xf32>,
    %c80_110 = arith.constant 80 : index
    %c512_111 = arith.constant 512 : index
    %127 = vector.load %arg22[%c80_110, %c512_111] : memref<128x1024xf32, #tpu.memory_space<vmem>>, vector<16x512xf32>
    %128 = arith.mulf %122, %127 : vector<16x512xf32>
    %cst_112 = arith.constant dense<0.000000e+00> : vector<16x64xf32>
    %129 = tpu.matmul %128, %80, %cst_112 {dimension_numbers = #tpu.dot_dimension_numbers<[1], [0], [0], [1], [0, 0, 1, 1], [], []>} : vector<16x512xf32>, vector<512x64xf32>, vector<16x64xf32> -> vector<16x64xf32>
    %c80_113 = arith.constant 80 : index
    %c0_114 = arith.constant 0 : index
    %130 = vector.load %arg24[%c80_113, %c0_114] : memref<128x64xf32, #tpu.memory_space<vmem>>, vector<16x64xf32>
    tpu.vector_store %arg24[%c80_113, %c0_114], %129 {strides = array<i32>} : memref<128x64xf32, #tpu.memory_space<vmem>>, vector<16x64xf32>,
    %c48 = arith.constant 48 : index
    %c0_115 = arith.constant 0 : index
    %131 = vector.load %arg20[%c48, %c0_115] : memref<128x1024xf32, #tpu.memory_space<vmem>>, vector<16x512xf32>
    %132 = arith.mulf %131, %118 : vector<16x512xf32>
    %c48_116 = arith.constant 48 : index
    %c0_117 = arith.constant 0 : index
    %133 = vector.load %arg21[%c48_116, %c0_117] : memref<128x1024xf32, #tpu.memory_space<vmem>>, vector<16x512xf32>
    %134 = arith.addf %132, %133 : vector<16x512xf32>
    %c64 = arith.constant 64 : index
    %c512_118 = arith.constant 512 : index
    %135 = vector.load %arg20[%c64, %c512_118] : memref<128x1024xf32, #tpu.memory_space<vmem>>, vector<16x512xf32>
    %136 = arith.mulf %135, %122 : vector<16x512xf32>
    %c64_119 = arith.constant 64 : index
    %c512_120 = arith.constant 512 : index
    %137 = vector.load %arg21[%c64_119, %c512_120] : memref<128x1024xf32, #tpu.memory_space<vmem>>, vector<16x512xf32>
    %138 = arith.addf %136, %137 : vector<16x512xf32>
    %c48_121 = arith.constant 48 : index
    %c0_122 = arith.constant 0 : index
    %139 = vector.load %arg22[%c48_121, %c0_122] : memref<128x1024xf32, #tpu.memory_space<vmem>>, vector<16x512xf32>
    %140 = arith.mulf %134, %139 : vector<16x512xf32>
    %cst_123 = arith.constant dense<0.000000e+00> : vector<16x64xf32>
    %141 = tpu.matmul %140, %80, %cst_123 {dimension_numbers = #tpu.dot_dimension_numbers<[1], [0], [0], [1], [0, 0, 1, 1], [], []>} : vector<16x512xf32>, vector<512x64xf32>, vector<16x64xf32> -> vector<16x64xf32>
    %c48_124 = arith.constant 48 : index
    %c0_125 = arith.constant 0 : index
    %142 = vector.load %arg23[%c48_124, %c0_125] : memref<128x64xf32, #tpu.memory_space<vmem>>, vector<16x64xf32>
    tpu.vector_store %arg23[%c48_124, %c0_125], %141 {strides = array<i32>} : memref<128x64xf32, #tpu.memory_space<vmem>>, vector<16x64xf32>,
    %c64_126 = arith.constant 64 : index
    %c512_127 = arith.constant 512 : index
    %143 = vector.load %arg22[%c64_126, %c512_127] : memref<128x1024xf32, #tpu.memory_space<vmem>>, vector<16x512xf32>
    %144 = arith.mulf %138, %143 : vector<16x512xf32>
    %cst_128 = arith.constant dense<0.000000e+00> : vector<16x64xf32>
    %145 = tpu.matmul %144, %80, %cst_128 {dimension_numbers = #tpu.dot_dimension_numbers<[1], [0], [0], [1], [0, 0, 1, 1], [], []>} : vector<16x512xf32>, vector<512x64xf32>, vector<16x64xf32> -> vector<16x64xf32>
    %c64_129 = arith.constant 64 : index
    %c0_130 = arith.constant 0 : index
    %146 = vector.load %arg24[%c64_129, %c0_130] : memref<128x64xf32, #tpu.memory_space<vmem>>, vector<16x64xf32>
    tpu.vector_store %arg24[%c64_129, %c0_130], %145 {strides = array<i32>} : memref<128x64xf32, #tpu.memory_space<vmem>>, vector<16x64xf32>,
    %c64_131 = arith.constant 64 : index
    %c0_132 = arith.constant 0 : index
    %147 = vector.load %arg20[%c64_131, %c0_132] : memref<128x1024xf32, #tpu.memory_space<vmem>>, vector<16x512xf32>
    %148 = arith.mulf %147, %134 : vector<16x512xf32>
    %c64_133 = arith.constant 64 : index
    %c0_134 = arith.constant 0 : index
    %149 = vector.load %arg21[%c64_133, %c0_134] : memref<128x1024xf32, #tpu.memory_space<vmem>>, vector<16x512xf32>
    %150 = arith.addf %148, %149 : vector<16x512xf32>
    %c48_135 = arith.constant 48 : index
    %c512_136 = arith.constant 512 : index
    %151 = vector.load %arg20[%c48_135, %c512_136] : memref<128x1024xf32, #tpu.memory_space<vmem>>, vector<16x512xf32>
    %152 = arith.mulf %151, %138 : vector<16x512xf32>
    %c48_137 = arith.constant 48 : index
    %c512_138 = arith.constant 512 : index
    %153 = vector.load %arg21[%c48_137, %c512_138] : memref<128x1024xf32, #tpu.memory_space<vmem>>, vector<16x512xf32>
    %154 = arith.addf %152, %153 : vector<16x512xf32>
    %c64_139 = arith.constant 64 : index
    %c0_140 = arith.constant 0 : index
    %155 = vector.load %arg22[%c64_139, %c0_140] : memref<128x1024xf32, #tpu.memory_space<vmem>>, vector<16x512xf32>
    %156 = arith.mulf %150, %155 : vector<16x512xf32>
    %cst_141 = arith.constant dense<0.000000e+00> : vector<16x64xf32>
    %157 = tpu.matmul %156, %80, %cst_141 {dimension_numbers = #tpu.dot_dimension_numbers<[1], [0], [0], [1], [0, 0, 1, 1], [], []>} : vector<16x512xf32>, vector<512x64xf32>, vector<16x64xf32> -> vector<16x64xf32>
    %c64_142 = arith.constant 64 : index
    %c0_143 = arith.constant 0 : index
    %158 = vector.load %arg23[%c64_142, %c0_143] : memref<128x64xf32, #tpu.memory_space<vmem>>, vector<16x64xf32>
    tpu.vector_store %arg23[%c64_142, %c0_143], %157 {strides = array<i32>} : memref<128x64xf32, #tpu.memory_space<vmem>>, vector<16x64xf32>,
    %c48_144 = arith.constant 48 : index
    %c512_145 = arith.constant 512 : index
    %159 = vector.load %arg22[%c48_144, %c512_145] : memref<128x1024xf32, #tpu.memory_space<vmem>>, vector<16x512xf32>
    %160 = arith.mulf %154, %159 : vector<16x512xf32>
    %cst_146 = arith.constant dense<0.000000e+00> : vector<16x64xf32>
    %161 = tpu.matmul %160, %80, %cst_146 {dimension_numbers = #tpu.dot_dimension_numbers<[1], [0], [0], [1], [0, 0, 1, 1], [], []>} : vector<16x512xf32>, vector<512x64xf32>, vector<16x64xf32> -> vector<16x64xf32>
    %c48_147 = arith.constant 48 : index
    %c0_148 = arith.constant 0 : index
    %162 = vector.load %arg24[%c48_147, %c0_148] : memref<128x64xf32, #tpu.memory_space<vmem>>, vector<16x64xf32>
    tpu.vector_store %arg24[%c48_147, %c0_148], %161 {strides = array<i32>} : memref<128x64xf32, #tpu.memory_space<vmem>>, vector<16x64xf32>,
    %c80_149 = arith.constant 80 : index
    %c0_150 = arith.constant 0 : index
    %163 = vector.load %arg20[%c80_149, %c0_150] : memref<128x1024xf32, #tpu.memory_space<vmem>>, vector<16x512xf32>
    %164 = arith.mulf %163, %150 : vector<16x512xf32>
    %c80_151 = arith.constant 80 : index
    %c0_152 = arith.constant 0 : index
    %165 = vector.load %arg21[%c80_151, %c0_152] : memref<128x1024xf32, #tpu.memory_space<vmem>>, vector<16x512xf32>
    %166 = arith.addf %164, %165 : vector<16x512xf32>
    %c32_153 = arith.constant 32 : index
    %c512_154 = arith.constant 512 : index
    %167 = vector.load %arg20[%c32_153, %c512_154] : memref<128x1024xf32, #tpu.memory_space<vmem>>, vector<16x512xf32>
    %168 = arith.mulf %167, %154 : vector<16x512xf32>
    %c32_155 = arith.constant 32 : index
    %c512_156 = arith.constant 512 : index
    %169 = vector.load %arg21[%c32_155, %c512_156] : memref<128x1024xf32, #tpu.memory_space<vmem>>, vector<16x512xf32>
    %170 = arith.addf %168, %169 : vector<16x512xf32>
    %c80_157 = arith.constant 80 : index
    %c0_158 = arith.constant 0 : index
    %171 = vector.load %arg22[%c80_157, %c0_158] : memref<128x1024xf32, #tpu.memory_space<vmem>>, vector<16x512xf32>
    %172 = arith.mulf %166, %171 : vector<16x512xf32>
    %cst_159 = arith.constant dense<0.000000e+00> : vector<16x64xf32>
    %173 = tpu.matmul %172, %80, %cst_159 {dimension_numbers = #tpu.dot_dimension_numbers<[1], [0], [0], [1], [0, 0, 1, 1], [], []>} : vector<16x512xf32>, vector<512x64xf32>, vector<16x64xf32> -> vector<16x64xf32>
    %c80_160 = arith.constant 80 : index
    %c0_161 = arith.constant 0 : index
    %174 = vector.load %arg23[%c80_160, %c0_161] : memref<128x64xf32, #tpu.memory_space<vmem>>, vector<16x64xf32>
    tpu.vector_store %arg23[%c80_160, %c0_161], %173 {strides = array<i32>} : memref<128x64xf32, #tpu.memory_space<vmem>>, vector<16x64xf32>,
    %c32_162 = arith.constant 32 : index
    %c512_163 = arith.constant 512 : index
    %175 = vector.load %arg22[%c32_162, %c512_163] : memref<128x1024xf32, #tpu.memory_space<vmem>>, vector<16x512xf32>
    %176 = arith.mulf %170, %175 : vector<16x512xf32>
    %cst_164 = arith.constant dense<0.000000e+00> : vector<16x64xf32>
    %177 = tpu.matmul %176, %80, %cst_164 {dimension_numbers = #tpu.dot_dimension_numbers<[1], [0], [0], [1], [0, 0, 1, 1], [], []>} : vector<16x512xf32>, vector<512x64xf32>, vector<16x64xf32> -> vector<16x64xf32>
    %c32_165 = arith.constant 32 : index
    %c0_166 = arith.constant 0 : index
    %178 = vector.load %arg24[%c32_165, %c0_166] : memref<128x64xf32, #tpu.memory_space<vmem>>, vector<16x64xf32>
    tpu.vector_store %arg24[%c32_165, %c0_166], %177 {strides = array<i32>} : memref<128x64xf32, #tpu.memory_space<vmem>>, vector<16x64xf32>,
    %c96_167 = arith.constant 96 : index
    %c0_168 = arith.constant 0 : index
    %179 = vector.load %arg20[%c96_167, %c0_168] : memref<128x1024xf32, #tpu.memory_space<vmem>>, vector<16x512xf32>
    %180 = arith.mulf %179, %166 : vector<16x512xf32>
    %c96_169 = arith.constant 96 : index
    %c0_170 = arith.constant 0 : index
    %181 = vector.load %arg21[%c96_169, %c0_170] : memref<128x1024xf32, #tpu.memory_space<vmem>>, vector<16x512xf32>
    %182 = arith.addf %180, %181 : vector<16x512xf32>
    %c16_171 = arith.constant 16 : index
    %c512_172 = arith.constant 512 : index
    %183 = vector.load %arg20[%c16_171, %c512_172] : memref<128x1024xf32, #tpu.memory_space<vmem>>, vector<16x512xf32>
    %184 = arith.mulf %183, %170 : vector<16x512xf32>
    %c16_173 = arith.constant 16 : index
    %c512_174 = arith.constant 512 : index
    %185 = vector.load %arg21[%c16_173, %c512_174] : memref<128x1024xf32, #tpu.memory_space<vmem>>, vector<16x512xf32>
    %186 = arith.addf %184, %185 : vector<16x512xf32>
    %c96_175 = arith.constant 96 : index
    %c0_176 = arith.constant 0 : index
    %187 = vector.load %arg22[%c96_175, %c0_176] : memref<128x1024xf32, #tpu.memory_space<vmem>>, vector<16x512xf32>
    %188 = arith.mulf %182, %187 : vector<16x512xf32>
    %cst_177 = arith.constant dense<0.000000e+00> : vector<16x64xf32>
    %189 = tpu.matmul %188, %80, %cst_177 {dimension_numbers = #tpu.dot_dimension_numbers<[1], [0], [0], [1], [0, 0, 1, 1], [], []>} : vector<16x512xf32>, vector<512x64xf32>, vector<16x64xf32> -> vector<16x64xf32>
    %c96_178 = arith.constant 96 : index
    %c0_179 = arith.constant 0 : index
    %190 = vector.load %arg23[%c96_178, %c0_179] : memref<128x64xf32, #tpu.memory_space<vmem>>, vector<16x64xf32>
    tpu.vector_store %arg23[%c96_178, %c0_179], %189 {strides = array<i32>} : memref<128x64xf32, #tpu.memory_space<vmem>>, vector<16x64xf32>,
    %c16_180 = arith.constant 16 : index
    %c512_181 = arith.constant 512 : index
    %191 = vector.load %arg22[%c16_180, %c512_181] : memref<128x1024xf32, #tpu.memory_space<vmem>>, vector<16x512xf32>
    %192 = arith.mulf %186, %191 : vector<16x512xf32>
    %cst_182 = arith.constant dense<0.000000e+00> : vector<16x64xf32>
    %193 = tpu.matmul %192, %80, %cst_182 {dimension_numbers = #tpu.dot_dimension_numbers<[1], [0], [0], [1], [0, 0, 1, 1], [], []>} : vector<16x512xf32>, vector<512x64xf32>, vector<16x64xf32> -> vector<16x64xf32>
    %c16_183 = arith.constant 16 : index
    %c0_184 = arith.constant 0 : index
    %194 = vector.load %arg24[%c16_183, %c0_184] : memref<128x64xf32, #tpu.memory_space<vmem>>, vector<16x64xf32>
    tpu.vector_store %arg24[%c16_183, %c0_184], %193 {strides = array<i32>} : memref<128x64xf32, #tpu.memory_space<vmem>>, vector<16x64xf32>,
    %c112_185 = arith.constant 112 : index
    %c0_186 = arith.constant 0 : index
    %195 = vector.load %arg20[%c112_185, %c0_186] : memref<128x1024xf32, #tpu.memory_space<vmem>>, vector<16x512xf32>
    %196 = arith.mulf %195, %182 : vector<16x512xf32>
    %c112_187 = arith.constant 112 : index
    %c0_188 = arith.constant 0 : index
    %197 = vector.load %arg21[%c112_187, %c0_188] : memref<128x1024xf32, #tpu.memory_space<vmem>>, vector<16x512xf32>
    %198 = arith.addf %196, %197 : vector<16x512xf32>
    %c0_189 = arith.constant 0 : index
    %c512_190 = arith.constant 512 : index
    %199 = vector.load %arg20[%c0_189, %c512_190] : memref<128x1024xf32, #tpu.memory_space<vmem>>, vector<16x512xf32>
    %200 = arith.mulf %199, %186 : vector<16x512xf32>
    %c0_191 = arith.constant 0 : index
    %c512_192 = arith.constant 512 : index
    %201 = vector.load %arg21[%c0_191, %c512_192] : memref<128x1024xf32, #tpu.memory_space<vmem>>, vector<16x512xf32>
    %202 = arith.addf %200, %201 : vector<16x512xf32>
    %c112_193 = arith.constant 112 : index
    %c0_194 = arith.constant 0 : index
    %203 = vector.load %arg22[%c112_193, %c0_194] : memref<128x1024xf32, #tpu.memory_space<vmem>>, vector<16x512xf32>
    %204 = arith.mulf %198, %203 : vector<16x512xf32>
    %cst_195 = arith.constant dense<0.000000e+00> : vector<16x64xf32>
    %205 = tpu.matmul %204, %80, %cst_195 {dimension_numbers = #tpu.dot_dimension_numbers<[1], [0], [0], [1], [0, 0, 1, 1], [], []>} : vector<16x512xf32>, vector<512x64xf32>, vector<16x64xf32> -> vector<16x64xf32>
    %c112_196 = arith.constant 112 : index
    %c0_197 = arith.constant 0 : index
    %206 = vector.load %arg23[%c112_196, %c0_197] : memref<128x64xf32, #tpu.memory_space<vmem>>, vector<16x64xf32>
    tpu.vector_store %arg23[%c112_196, %c0_197], %205 {strides = array<i32>} : memref<128x64xf32, #tpu.memory_space<vmem>>, vector<16x64xf32>,
    %c0_198 = arith.constant 0 : index
    %c512_199 = arith.constant 512 : index
    %207 = vector.load %arg22[%c0_198, %c512_199] : memref<128x1024xf32, #tpu.memory_space<vmem>>, vector<16x512xf32>
    %208 = arith.mulf %202, %207 : vector<16x512xf32>
    %cst_200 = arith.constant dense<0.000000e+00> : vector<16x64xf32>
    %209 = tpu.matmul %208, %80, %cst_200 {dimension_numbers = #tpu.dot_dimension_numbers<[1], [0], [0], [1], [0, 0, 1, 1], [], []>} : vector<16x512xf32>, vector<512x64xf32>, vector<16x64xf32> -> vector<16x64xf32>
    %c0_201 = arith.constant 0 : index
    %c0_202 = arith.constant 0 : index
    %210 = vector.load %arg24[%c0_201, %c0_202] : memref<128x64xf32, #tpu.memory_space<vmem>>, vector<16x64xf32>
    tpu.vector_store %arg24[%c0_201, %c0_202], %209 {strides = array<i32>} : memref<128x64xf32, #tpu.memory_space<vmem>>, vector<16x64xf32>,
    %c0_203 = arith.constant 0 : index
    %c0_204 = arith.constant 0 : index
    %211 = vector.load %arg19[%c0_203, %c0_204] : memref<128x128xf32, #tpu.memory_space<vmem>>, vector<128x128xf32>
    %c0_205 = arith.constant 0 : index
    %c0_206 = arith.constant 0 : index
    %c0_207 = arith.constant 0 : index
    %c0_208 = arith.constant 0 : index
    %212 = vector.load %arg1[%c0_205, %c0_206, %c0_207, %c0_208] : memref<1x8x16x16xf32, #tpu.memory_space<vmem>>, vector<1x8x16x16xf32>
    %213 = vector.shape_cast %212 : vector<1x8x16x16xf32> to vector<8x16x16xf32>
    %214 = vector.shape_cast %213 : vector<8x16x16xf32> to vector<128x16xf32>
    %c0_209 = arith.constant 0 : index
    %c0_210 = arith.constant 0 : index
    %c0_211 = arith.constant 0 : index
    %215 = vector.load %arg3[%c0_209, %c0_210, %c0_211] : memref<1x16x128xf32, #tpu.memory_space<vmem>>, vector<1x16x128xf32>
    %216 = vector.shape_cast %215 : vector<1x16x128xf32> to vector<16x128xf32>
    %cst_212 = arith.constant dense<0.000000e+00> : vector<128x128xf32>
    %217 = tpu.matmul %214, %216, %cst_212 {dimension_numbers = #tpu.dot_dimension_numbers<[1], [0], [0], [1], [0, 0, 1, 1], [], []>} : vector<128x16xf32>, vector<16x128xf32>, vector<128x128xf32> -> vector<128x128xf32>
    %cst_213 = arith.constant 0.000000e+00 : f32
    %218 = vector.broadcast %cst_213 : f32 to vector<128x128xf32>
    %219 = arith.subf %218, %217 : vector<128x128xf32>
    %220 = math.exp %219 : vector<128x128xf32>
    %cst_214 = arith.constant 1.000000e+00 : f32
    %221 = vector.broadcast %cst_214 : f32 to vector<128x128xf32>
    %222 = arith.addf %221, %220 : vector<128x128xf32>
    %223 = tpu.reciprocal %222 {approx = true} : vector<128x128xf32> -> vector<128x128xf32>
    %224 = arith.mulf %217, %223 : vector<128x128xf32>
    %c0_215 = arith.constant 0 : index
    %c0_216 = arith.constant 0 : index
    %c0_217 = arith.constant 0 : index
    %225 = vector.load %arg11[%c0_215, %c0_216, %c0_217] : memref<1x1x128xf32, #tpu.memory_space<vmem>>, vector<1x1x128xf32>
    %226 = vector.shape_cast %225 : vector<1x1x128xf32> to vector<1x128xf32>
    %227 = vector.broadcast %226 : vector<1x128xf32> to vector<128x128xf32>
    %228 = arith.mulf %211, %227 : vector<128x128xf32>
    %c0_218 = arith.constant 0 : index
    %c0_219 = arith.constant 0 : index
    %c0_220 = arith.constant 0 : index
    %229 = vector.load %arg12[%c0_218, %c0_219, %c0_220] : memref<1x128x16xf32, #tpu.memory_space<vmem>>, vector<1x128x16xf32>
    %230 = vector.shape_cast %229 : vector<1x128x16xf32> to vector<128x16xf32>
    %c0_221 = arith.constant 0 : index
    %c0_222 = arith.constant 0 : index
    %231 = vector.load %arg23[%c0_221, %c0_222] : memref<128x64xf32, #tpu.memory_space<vmem>>, vector<128x64xf32>
    %232 = vector.extract_strided_slice %228 {offsets = [0, 0], sizes = [128, 64], strides = [1, 1]} : vector<128x128xf32> to vector<128x64xf32>
    %233 = arith.addf %231, %232 : vector<128x64xf32>
    %234 = vector.extract_strided_slice %224 {offsets = [0, 0], sizes = [128, 64], strides = [1, 1]} : vector<128x128xf32> to vector<128x64xf32>
    %235 = arith.mulf %233, %234 : vector<128x64xf32>
    %236 = vector.extract_strided_slice %230 {offsets = [0, 0], sizes = [64, 16], strides = [1, 1]} : vector<128x16xf32> to vector<64x16xf32>
    %cst_223 = arith.constant dense<0.000000e+00> : vector<128x16xf32>
    %237 = tpu.matmul %235, %236, %cst_223 {dimension_numbers = #tpu.dot_dimension_numbers<[1], [0], [0], [1], [0, 0, 1, 1], [], []>} : vector<128x64xf32>, vector<64x16xf32>, vector<128x16xf32> -> vector<128x16xf32>
    %c0_224 = arith.constant 0 : index
    %c0_225 = arith.constant 0 : index
    %238 = vector.load %arg24[%c0_224, %c0_225] : memref<128x64xf32, #tpu.memory_space<vmem>>, vector<128x64xf32>
    %239 = vector.extract_strided_slice %228 {offsets = [0, 64], sizes = [128, 64], strides = [1, 1]} : vector<128x128xf32> to vector<128x64xf32>
    %240 = arith.addf %238, %239 : vector<128x64xf32>
    %241 = vector.extract_strided_slice %224 {offsets = [0, 64], sizes = [128, 64], strides = [1, 1]} : vector<128x128xf32> to vector<128x64xf32>
    %242 = arith.mulf %240, %241 : vector<128x64xf32>
    %243 = vector.extract_strided_slice %230 {offsets = [64, 0], sizes = [64, 16], strides = [1, 1]} : vector<128x16xf32> to vector<64x16xf32>
    %cst_226 = arith.constant dense<0.000000e+00> : vector<128x16xf32>
    %244 = tpu.matmul %242, %243, %cst_226 {dimension_numbers = #tpu.dot_dimension_numbers<[1], [0], [0], [1], [0, 0, 1, 1], [], []>} : vector<128x64xf32>, vector<64x16xf32>, vector<128x16xf32> -> vector<128x16xf32>
    %245 = arith.addf %237, %244 : vector<128x16xf32>
    %c0_227 = arith.constant 0 : index
    %c0_228 = arith.constant 0 : index
    %c0_229 = arith.constant 0 : index
    %246 = vector.load %arg13[%c0_227, %c0_228, %c0_229] : memref<1x1x16xf32, #tpu.memory_space<vmem>>, vector<1x1x16xf32>
    %247 = vector.shape_cast %246 : vector<1x1x16xf32> to vector<1x16xf32>
    %248 = vector.broadcast %247 : vector<1x16xf32> to vector<128x16xf32>
    %249 = arith.addf %245, %248 : vector<128x16xf32>
    %250 = vector.shape_cast %249 : vector<128x16xf32> to vector<8x16x16xf32>
    %c0_230 = arith.constant 0 : index
    %c0_231 = arith.constant 0 : index
    %c0_232 = arith.constant 0 : index
    %c0_233 = arith.constant 0 : index
    %251 = vector.load %arg17[%c0_230, %c0_231, %c0_232, %c0_233] : memref<1x8x16x16xf32, #tpu.memory_space<vmem>>, vector<1x8x16x16xf32>
    %252 = vector.shape_cast %251 : vector<1x8x16x16xf32> to vector<8x16x16xf32>
    %253 = vector.shape_cast %250 : vector<8x16x16xf32> to vector<1x8x16x16xf32>
    tpu.vector_store %arg17[%c0_230, %c0_231, %c0_232, %c0_233], %253 {strides = array<i32>} : memref<1x8x16x16xf32, #tpu.memory_space<vmem>>, vector<1x8x16x16xf32>,
    return
  }
  func.func @transform_0(%arg0: i32) -> (i32, i32, i32, i32) {
    %c0_i32 = arith.constant 0 : i32
    %c0_i32_0 = arith.constant 0 : i32
    %c0_i32_1 = arith.constant 0 : i32
    %c0_i32_2 = arith.constant 0 : i32
    return %arg0, %c0_i32, %c0_i32_0, %c0_i32_1 : i32, i32, i32, i32
  }
  func.func @transform_1(%arg0: i32) -> (i32, i32, i32) {
    %c0_i32 = arith.constant 0 : i32
    %c0_i32_0 = arith.constant 0 : i32
    %c0_i32_1 = arith.constant 0 : i32
    return %arg0, %c0_i32, %c0_i32_0 : i32, i32, i32
  }
  func.func @transform_2(%arg0: i32) -> (i32, i32, i32) {
    %c0_i32 = arith.constant 0 : i32
    %c0_i32_0 = arith.constant 0 : i32
    %c0_i32_1 = arith.constant 0 : i32
    return %arg0, %c0_i32, %c0_i32_0 : i32, i32, i32
  }
  func.func @transform_3(%arg0: i32) -> (i32, i32, i32) {
    %c0_i32 = arith.constant 0 : i32
    %c0_i32_0 = arith.constant 0 : i32
    %c0_i32_1 = arith.constant 0 : i32
    return %arg0, %c0_i32, %c0_i32_0 : i32, i32, i32
  }
  func.func @transform_4(%arg0: i32) -> (i32, i32, i32) {
    %c0_i32 = arith.constant 0 : i32
    %c0_i32_0 = arith.constant 0 : i32
    %c0_i32_1 = arith.constant 0 : i32
    return %arg0, %c0_i32, %c0_i32_0 : i32, i32, i32
  }
  func.func @transform_5(%arg0: i32) -> (i32, i32, i32) {
    %c0_i32 = arith.constant 0 : i32
    %c0_i32_0 = arith.constant 0 : i32
    %c0_i32_1 = arith.constant 0 : i32
    return %arg0, %c0_i32, %c0_i32_0 : i32, i32, i32
  }
  func.func @transform_6(%arg0: i32) -> (i32, i32, i32) {
    %c0_i32 = arith.constant 0 : i32
    %c0_i32_0 = arith.constant 0 : i32
    %c0_i32_1 = arith.constant 0 : i32
    return %arg0, %c0_i32, %c0_i32_0 : i32, i32, i32
  }
  func.func @transform_7(%arg0: i32) -> (i32, i32, i32) {
    %c0_i32 = arith.constant 0 : i32
    %c0_i32_0 = arith.constant 0 : i32
    %c0_i32_1 = arith.constant 0 : i32
    return %arg0, %c0_i32, %c0_i32_0 : i32, i32, i32
  }
  func.func @transform_8(%arg0: i32) -> (i32, i32, i32) {
    %c0_i32 = arith.constant 0 : i32
    %c0_i32_0 = arith.constant 0 : i32
    %c0_i32_1 = arith.constant 0 : i32
    return %arg0, %c0_i32, %c0_i32_0 : i32, i32, i32
  }
  func.func @transform_9(%arg0: i32) -> (i32, i32, i32) {
    %c0_i32 = arith.constant 0 : i32
    %c0_i32_0 = arith.constant 0 : i32
    %c0_i32_1 = arith.constant 0 : i32
    return %arg0, %c0_i32, %c0_i32_0 : i32, i32, i32
  }
  func.func @transform_10(%arg0: i32) -> (i32, i32, i32) {
    %c0_i32 = arith.constant 0 : i32
    %c0_i32_0 = arith.constant 0 : i32
    %c0_i32_1 = arith.constant 0 : i32
    return %arg0, %c0_i32, %c0_i32_0 : i32, i32, i32
  }
  func.func @transform_11(%arg0: i32) -> (i32, i32, i32) {
    %c0_i32 = arith.constant 0 : i32
    %c0_i32_0 = arith.constant 0 : i32
    %c0_i32_1 = arith.constant 0 : i32
    return %arg0, %c0_i32, %c0_i32_0 : i32, i32, i32
  }
  func.func @transform_12(%arg0: i32) -> (i32, i32, i32) {
    %c0_i32 = arith.constant 0 : i32
    %c0_i32_0 = arith.constant 0 : i32
    %c0_i32_1 = arith.constant 0 : i32
    return %arg0, %c0_i32, %c0_i32_0 : i32, i32, i32
  }
  func.func @transform_13(%arg0: i32) -> (i32, i32) {
    %c0_i32 = arith.constant 0 : i32
    %c0_i32_0 = arith.constant 0 : i32
    %c0_i32_1 = arith.constant 0 : i32
    return %c0_i32, %c0_i32_0 : i32, i32
  }
  func.func @transform_14(%arg0: i32) -> (i32, i32) {
    %c0_i32 = arith.constant 0 : i32
    %c0_i32_0 = arith.constant 0 : i32
    %c0_i32_1 = arith.constant 0 : i32
    return %c0_i32, %c0_i32_0 : i32, i32
  }
  func.func @transform_15(%arg0: i32) -> (i32, i32) {
    %c0_i32 = arith.constant 0 : i32
    %c0_i32_0 = arith.constant 0 : i32
    %c0_i32_1 = arith.constant 0 : i32
    return %c0_i32, %c0_i32_0 : i32, i32
  }
  func.func @transform_16(%arg0: i32) -> (i32, i32, i32, i32) {
    %c0_i32 = arith.constant 0 : i32
    %c0_i32_0 = arith.constant 0 : i32
    %c0_i32_1 = arith.constant 0 : i32
    %c0_i32_2 = arith.constant 0 : i32
    return %arg0, %c0_i32, %c0_i32_0, %c0_i32_1 : i32, i32, i32, i32
  }
}

</mosaic_0001>

<llo_original>
// kernel: mamba2d_forward.1
$region0: #{mamba2d_forward.1}
  #allocation0 [shape = 'u32[]', space=smem, size = 0x4, offset = 0x4, fixed_abs, tag = 'smem constant byte address 0x4 - core index']
  #allocation1 [shape = 'u32[72,128]{1,0:T(1,128)}', space=vmem, size = 0x9000, scoped, tag = 'internal scratch']
  #allocation2 [shape = 'f32[160,128]{1,0:T(8,128)}', space=vmem, size = 0x14000, scoped, tag = 'scratch operand']
  #allocation3 [shape = 'f32[128,128]{1,0:T(8,128)}', space=vmem, size = 0x10000, scoped, tag = 'scratch operand']
  #allocation4 [shape = 'f32[128,1024]{1,0:T(8,128)}', space=vmem, size = 0x80000, scoped, tag = 'scratch operand']
  #allocation5 [shape = 'f32[128,1024]{1,0:T(8,128)}', space=vmem, size = 0x80000, scoped, tag = 'scratch operand']
  #allocation6 [shape = 'f32[128,1024]{1,0:T(8,128)}', space=vmem, size = 0x80000, scoped, tag = 'scratch operand']
  #allocation7 [shape = 'f32[128,64]{1,0:T(8,128)}', space=vmem, size = 0x10000, scoped, tag = 'scratch operand']
  #allocation8 [shape = 'f32[128,64]{1,0:T(8,128)}', space=vmem, size = 0x10000, scoped, tag = 'scratch operand']
  %s0 = inlined_call_operand.vmem [shape: f32[2,8,16,16], index: 0, kind: input, shape index: {}]
  %s1 = inlined_call_operand.vmem [shape: f32[2,16,128], index: 1, kind: input, shape index: {}]
  %s2 = inlined_call_operand.vmem [shape: f32[2,16,128], index: 2, kind: input, shape index: {}]
  %s3 = inlined_call_operand.vmem [shape: f32[2,3,128], index: 3, kind: input, shape index: {}]
  %s4 = inlined_call_operand.vmem [shape: f32[2,1,128], index: 4, kind: input, shape index: {}]
  %s5 = inlined_call_operand.vmem [shape: f32[2,128,128], index: 5, kind: input, shape index: {}]
  %s6 = inlined_call_operand.vmem [shape: f32[2,1,128], index: 6, kind: input, shape index: {}]
  %s7 = inlined_call_operand.vmem [shape: f32[2,1,1024], index: 7, kind: input, shape index: {}]
  %s8 = inlined_call_operand.vmem [shape: f32[2,128,16], index: 8, kind: input, shape index: {}]
  %s9 = inlined_call_operand.vmem [shape: f32[2,128,16], index: 9, kind: input, shape index: {}]
  %s10 = inlined_call_operand.vmem [shape: f32[2,1,128], index: 10, kind: input, shape index: {}]
  %s11 = inlined_call_operand.vmem [shape: f32[2,128,16], index: 11, kind: input, shape index: {}]
  %s12 = inlined_call_operand.vmem [shape: f32[2,1,16], index: 12, kind: input, shape index: {}]
  %s13 = inlined_call_operand.vmem [shape: bf16[128,1024], index: 13, kind: input, shape index: {}]
  %s14 = inlined_call_operand.vmem [shape: bf16[16,1024], index: 14, kind: input, shape index: {}]
  %s15 = inlined_call_operand.vmem [shape: bf16[512,64], index: 15, kind: input, shape index: {}]
  %s16 = inlined_call_operand.vmem [shape: f32[2,8,16,16], index: 16, kind: output, shape index: {}]
  %s17 = sld [smem:[#allocation0]]
  $region97: #{mamba2d_forward.1} parent=0
    _
  %s19 = ssub.s32 1, %s17
  %s20 = scalar_select 0, %s19, %s17
  loop: start=0, step=1, limit=4
  $region2: #{mamba2d_forward.1} parent=0 // loop_pre_header
    _
  $region3: #{mamba2d_forward.1} parent=0 // loop_header
    %s22 = sphi 0, %s26
    %p23 = scmp.ge.s32.totalorder %s22, 4
    %s32 = sphi 0, %s34
    %s35 = sphi 0, %s32
    %s36 = sphi 0, %s35
    %s52 = sphi 0, %s36
    %s58 = sphi 0, %s60
    %s61 = sphi 0, %s58
    %s62 = sphi 0, %s61
    %s78 = sphi 0, %s62
    %s84 = sphi 0, %s86
    %s87 = sphi 0, %s84
    %s88 = sphi 0, %s87
    %s104 = sphi 0, %s88
    %s110 = sphi 0, %s112
    %s113 = sphi 0, %s110
    %s114 = sphi 0, %s113
    %s130 = sphi 0, %s114
    %s136 = sphi 0, %s138
    %s139 = sphi 0, %s136
    %s140 = sphi 0, %s139
    %s156 = sphi 0, %s140
    %s162 = sphi 0, %s164
    %s165 = sphi 0, %s162
    %s166 = sphi 0, %s165
    %s182 = sphi 0, %s166
    %s188 = sphi 0, %s190
    %s191 = sphi 0, %s188
    %s192 = sphi 0, %s191
    %s208 = sphi 0, %s192
    %s214 = sphi 0, %s216
    %s217 = sphi 0, %s214
    %s218 = sphi 0, %s217
    %s234 = sphi 0, %s218
    %s240 = sphi 0, %s242
    %s243 = sphi 0, %s240
    %s244 = sphi 0, %s243
    %s260 = sphi 0, %s244
    %s266 = sphi 0, %s268
    %s269 = sphi 0, %s266
    %s270 = sphi 0, %s269
    %s286 = sphi 0, %s270
    %s292 = sphi 0, %s294
    %s295 = sphi 0, %s292
    %s296 = sphi 0, %s295
    %s312 = sphi 0, %s296
    %s318 = sphi 0, %s320
    %s321 = sphi 0, %s318
    %s322 = sphi 0, %s321
    %s338 = sphi 0, %s322
    %s344 = sphi 0, %s346
    %s347 = sphi 0, %s344
    %s348 = sphi 0, %s347
    %s364 = sphi 0, %s348
    %s368 = sphi 0, %s368
    %s370 = sphi 0, %s368
    %s371 = sphi 0, %s370
    %s385 = sphi 0, %s371
    %s389 = sphi 0, %s389
    %s391 = sphi 0, %s389
    %s392 = sphi 0, %s391
    %s406 = sphi 0, %s392
    %s410 = sphi 0, %s410
    %s412 = sphi 0, %s410
    %s413 = sphi 0, %s412
    %s427 = sphi 0, %s413
    %s433 = sphi 0, %s435
    %s436 = sphi 0, %s433
    %s437 = sphi 0, %s436
    %s453 = sphi 0, %s437
  $region4: #{mamba2d_forward.1} parent=0 // loop_header_branch
    %25 = sbr.rel (%p23) target = $region8
  $region5: #{mamba2d_forward.1} parent=0 // loop_body
    %s27 = ssub.s32 %s22, 1
    %s28 = ssub.s32 %s22, 2
    %s29 = sadd.s32 %s22, 1
    %s30 = ssub.s32 %s22, %s29
    %p31 = scmp.eq.s32.totalorder %s30, 0
    %s33 = sadd.s32 %s32, 1
    %s34 = scalar_select %p31, %s32, %s33
    %p37 = pneg %p31
    %p38 = scmp.eq.s32.totalorder %s22, 1
    %p39 = por %p37, %p38
    %p40 = scmp.ne.s32.totalorder %s32, %s35
    %p41 = scmp.eq.s32.totalorder %s22, 0
    %p42 = por %p40, %p41
    %p43 = scmp.ne.s32.totalorder %s32, %s35
    %p44 = scmp.eq.s32.totalorder %s27, 1
    %p45 = por %p43, %p44
    %p46 = scmp.ne.s32.totalorder %s35, %s36
    %p47 = scmp.eq.s32.totalorder %s27, 0
    %p48 = por %p46, %p47
    %p49 = scmp.ne.s32.totalorder %s35, %s36
    %p50 = scmp.eq.s32.totalorder %s28, 1
    %p51 = por %p49, %p50
    %p53 = scmp.ne.s32.totalorder %s36, %s52
    %p54 = scmp.eq.s32.totalorder %s28, 0
    %p55 = por %p53, %p54
    %s56 = ssub.s32 %s22, %s29
    %p57 = scmp.eq.s32.totalorder %s56, 0
    %s59 = sadd.s32 %s58, 1
    %s60 = scalar_select %p57, %s58, %s59
    %p63 = pneg %p57
    %p64 = scmp.eq.s32.totalorder %s22, 1
    %p65 = por %p63, %p64
    %p66 = scmp.ne.s32.totalorder %s58, %s61
    %p67 = scmp.eq.s32.totalorder %s22, 0
    %p68 = por %p66, %p67
    %p69 = scmp.ne.s32.totalorder %s58, %s61
    %p70 = scmp.eq.s32.totalorder %s27, 1
    %p71 = por %p69, %p70
    %p72 = scmp.ne.s32.totalorder %s61, %s62
    %p73 = scmp.eq.s32.totalorder %s27, 0
    %p74 = por %p72, %p73
    %p75 = scmp.ne.s32.totalorder %s61, %s62
    %p76 = scmp.eq.s32.totalorder %s28, 1
    %p77 = por %p75, %p76
    %p79 = scmp.ne.s32.totalorder %s62, %s78
    %p80 = scmp.eq.s32.totalorder %s28, 0
    %p81 = por %p79, %p80
    %s82 = ssub.s32 %s22, %s29
    %p83 = scmp.eq.s32.totalorder %s82, 0
    %s85 = sadd.s32 %s84, 1
    %s86 = scalar_select %p83, %s84, %s85
    %p89 = pneg %p83
    %p90 = scmp.eq.s32.totalorder %s22, 1
    %p91 = por %p89, %p90
    %p92 = scmp.ne.s32.totalorder %s84, %s87
    %p93 = scmp.eq.s32.totalorder %s22, 0
    %p94 = por %p92, %p93
    %p95 = scmp.ne.s32.totalorder %s84, %s87
    %p96 = scmp.eq.s32.totalorder %s27, 1
    %p97 = por %p95, %p96
    %p98 = scmp.ne.s32.totalorder %s87, %s88
    %p99 = scmp.eq.s32.totalorder %s27, 0
    %p100 = por %p98, %p99
    %p101 = scmp.ne.s32.totalorder %s87, %s88
    %p102 = scmp.eq.s32.totalorder %s28, 1
    %p103 = por %p101, %p102
    %p105 = scmp.ne.s32.totalorder %s88, %s104
    %p106 = scmp.eq.s32.totalorder %s28, 0
    %p107 = por %p105, %p106
    %s108 = ssub.s32 %s22, %s29
    %p109 = scmp.eq.s32.totalorder %s108, 0
    %s111 = sadd.s32 %s110, 1
    %s112 = scalar_select %p109, %s110, %s111
    %p115 = pneg %p109
    %p116 = scmp.eq.s32.totalorder %s22, 1
    %p117 = por %p115, %p116
    %p118 = scmp.ne.s32.totalorder %s110, %s113
    %p119 = scmp.eq.s32.totalorder %s22, 0
    %p120 = por %p118, %p119
    %p121 = scmp.ne.s32.totalorder %s110, %s113
    %p122 = scmp.eq.s32.totalorder %s27, 1
    %p123 = por %p121, %p122
    %p124 = scmp.ne.s32.totalorder %s113, %s114
    %p125 = scmp.eq.s32.totalorder %s27, 0
    %p126 = por %p124, %p125
    %p127 = scmp.ne.s32.totalorder %s113, %s114
    %p128 = scmp.eq.s32.totalorder %s28, 1
    %p129 = por %p127, %p128
    %p131 = scmp.ne.s32.totalorder %s114, %s130
    %p132 = scmp.eq.s32.totalorder %s28, 0
    %p133 = por %p131, %p132
    %s134 = ssub.s32 %s22, %s29
    %p135 = scmp.eq.s32.totalorder %s134, 0
    %s137 = sadd.s32 %s136, 1
    %s138 = scalar_select %p135, %s136, %s137
    %p141 = pneg %p135
    %p142 = scmp.eq.s32.totalorder %s22, 1
    %p143 = por %p141, %p142
    %p144 = scmp.ne.s32.totalorder %s136, %s139
    %p145 = scmp.eq.s32.totalorder %s22, 0
    %p146 = por %p144, %p145
    %p147 = scmp.ne.s32.totalorder %s136, %s139
    %p148 = scmp.eq.s32.totalorder %s27, 1
    %p149 = por %p147, %p148
    %p150 = scmp.ne.s32.totalorder %s139, %s140
    %p151 = scmp.eq.s32.totalorder %s27, 0
    %p152 = por %p150, %p151
    %p153 = scmp.ne.s32.totalorder %s139, %s140
    %p154 = scmp.eq.s32.totalorder %s28, 1
    %p155 = por %p153, %p154
    %p157 = scmp.ne.s32.totalorder %s140, %s156
    %p158 = scmp.eq.s32.totalorder %s28, 0
    %p159 = por %p157, %p158
    %s160 = ssub.s32 %s22, %s29
    %p161 = scmp.eq.s32.totalorder %s160, 0
    %s163 = sadd.s32 %s162, 1
    %s164 = scalar_select %p161, %s162, %s163
    %p167 = pneg %p161
    %p168 = scmp.eq.s32.totalorder %s22, 1
    %p169 = por %p167, %p168
    %p170 = scmp.ne.s32.totalorder %s162, %s165
    %p171 = scmp.eq.s32.totalorder %s22, 0
    %p172 = por %p170, %p171
    %p173 = scmp.ne.s32.totalorder %s162, %s165
    %p174 = scmp.eq.s32.totalorder %s27, 1
    %p175 = por %p173, %p174
    %p176 = scmp.ne.s32.totalorder %s165, %s166
    %p177 = scmp.eq.s32.totalorder %s27, 0
    %p178 = por %p176, %p177
    %p179 = scmp.ne.s32.totalorder %s165, %s166
    %p180 = scmp.eq.s32.totalorder %s28, 1
    %p181 = por %p179, %p180
    %p183 = scmp.ne.s32.totalorder %s166, %s182
    %p184 = scmp.eq.s32.totalorder %s28, 0
    %p185 = por %p183, %p184
    %s186 = ssub.s32 %s22, %s29
    %p187 = scmp.eq.s32.totalorder %s186, 0
    %s189 = sadd.s32 %s188, 1
    %s190 = scalar_select %p187, %s188, %s189
    %p193 = pneg %p187
    %p194 = scmp.eq.s32.totalorder %s22, 1
    %p195 = por %p193, %p194
    %p196 = scmp.ne.s32.totalorder %s188, %s191
    %p197 = scmp.eq.s32.totalorder %s22, 0
    %p198 = por %p196, %p197
    %p199 = scmp.ne.s32.totalorder %s188, %s191
    %p200 = scmp.eq.s32.totalorder %s27, 1
    %p201 = por %p199, %p200
    %p202 = scmp.ne.s32.totalorder %s191, %s192
    %p203 = scmp.eq.s32.totalorder %s27, 0
    %p204 = por %p202, %p203
    %p205 = scmp.ne.s32.totalorder %s191, %s192
    %p206 = scmp.eq.s32.totalorder %s28, 1
    %p207 = por %p205, %p206
    %p209 = scmp.ne.s32.totalorder %s192, %s208
    %p210 = scmp.eq.s32.totalorder %s28, 0
    %p211 = por %p209, %p210
    %s212 = ssub.s32 %s22, %s29
    %p213 = scmp.eq.s32.totalorder %s212, 0
    %s215 = sadd.s32 %s214, 1
    %s216 = scalar_select %p213, %s214, %s215
    %p219 = pneg %p213
    %p220 = scmp.eq.s32.totalorder %s22, 1
    %p221 = por %p219, %p220
    %p222 = scmp.ne.s32.totalorder %s214, %s217
    %p223 = scmp.eq.s32.totalorder %s22, 0
    %p224 = por %p222, %p223
    %p225 = scmp.ne.s32.totalorder %s214, %s217
    %p226 = scmp.eq.s32.totalorder %s27, 1
    %p227 = por %p225, %p226
    %p228 = scmp.ne.s32.totalorder %s217, %s218
    %p229 = scmp.eq.s32.totalorder %s27, 0
    %p230 = por %p228, %p229
    %p231 = scmp.ne.s32.totalorder %s217, %s218
    %p232 = scmp.eq.s32.totalorder %s28, 1
    %p233 = por %p231, %p232
    %p235 = scmp.ne.s32.totalorder %s218, %s234
    %p236 = scmp.eq.s32.totalorder %s28, 0
    %p237 = por %p235, %p236
    %s238 = ssub.s32 %s22, %s29
    %p239 = scmp.eq.s32.totalorder %s238, 0
    %s241 = sadd.s32 %s240, 1
    %s242 = scalar_select %p239, %s240, %s241
    %p245 = pneg %p239
    %p246 = scmp.eq.s32.totalorder %s22, 1
    %p247 = por %p245, %p246
    %p248 = scmp.ne.s32.totalorder %s240, %s243
    %p249 = scmp.eq.s32.totalorder %s22, 0
    %p250 = por %p248, %p249
    %p251 = scmp.ne.s32.totalorder %s240, %s243
    %p252 = scmp.eq.s32.totalorder %s27, 1
    %p253 = por %p251, %p252
    %p254 = scmp.ne.s32.totalorder %s243, %s244
    %p255 = scmp.eq.s32.totalorder %s27, 0
    %p256 = por %p254, %p255
    %p257 = scmp.ne.s32.totalorder %s243, %s244
    %p258 = scmp.eq.s32.totalorder %s28, 1
    %p259 = por %p257, %p258
    %p261 = scmp.ne.s32.totalorder %s244, %s260
    %p262 = scmp.eq.s32.totalorder %s28, 0
    %p263 = por %p261, %p262
    %s264 = ssub.s32 %s22, %s29
    %p265 = scmp.eq.s32.totalorder %s264, 0
    %s267 = sadd.s32 %s266, 1
    %s268 = scalar_select %p265, %s266, %s267
    %p271 = pneg %p265
    %p272 = scmp.eq.s32.totalorder %s22, 1
    %p273 = por %p271, %p272
    %p274 = scmp.ne.s32.totalorder %s266, %s269
    %p275 = scmp.eq.s32.totalorder %s22, 0
    %p276 = por %p274, %p275
    %p277 = scmp.ne.s32.totalorder %s266, %s269
    %p278 = scmp.eq.s32.totalorder %s27, 1
    %p279 = por %p277, %p278
    %p280 = scmp.ne.s32.totalorder %s269, %s270
    %p281 = scmp.eq.s32.totalorder %s27, 0
    %p282 = por %p280, %p281
    %p283 = scmp.ne.s32.totalorder %s269, %s270
    %p284 = scmp.eq.s32.totalorder %s28, 1
    %p285 = por %p283, %p284
    %p287 = scmp.ne.s32.totalorder %s270, %s286
    %p288 = scmp.eq.s32.totalorder %s28, 0
    %p289 = por %p287, %p288
    %s290 = ssub.s32 %s22, %s29
    %p291 = scmp.eq.s32.totalorder %s290, 0
    %s293 = sadd.s32 %s292, 1
    %s294 = scalar_select %p291, %s292, %s293
    %p297 = pneg %p291
    %p298 = scmp.eq.s32.totalorder %s22, 1
    %p299 = por %p297, %p298
    %p300 = scmp.ne.s32.totalorder %s292, %s295
    %p301 = scmp.eq.s32.totalorder %s22, 0
    %p302 = por %p300, %p301
    %p303 = scmp.ne.s32.totalorder %s292, %s295
    %p304 = scmp.eq.s32.totalorder %s27, 1
    %p305 = por %p303, %p304
    %p306 = scmp.ne.s32.totalorder %s295, %s296
    %p307 = scmp.eq.s32.totalorder %s27, 0
    %p308 = por %p306, %p307
    %p309 = scmp.ne.s32.totalorder %s295, %s296
    %p310 = scmp.eq.s32.totalorder %s28, 1
    %p311 = por %p309, %p310
    %p313 = scmp.ne.s32.totalorder %s296, %s312
    %p314 = scmp.eq.s32.totalorder %s28, 0
    %p315 = por %p313, %p314
    %s316 = ssub.s32 %s22, %s29
    %p317 = scmp.eq.s32.totalorder %s316, 0
    %s319 = sadd.s32 %s318, 1
    %s320 = scalar_select %p317, %s318, %s319
    %p323 = pneg %p317
    %p324 = scmp.eq.s32.totalorder %s22, 1
    %p325 = por %p323, %p324
    %p326 = scmp.ne.s32.totalorder %s318, %s321
    %p327 = scmp.eq.s32.totalorder %s22, 0
    %p328 = por %p326, %p327
    %p329 = scmp.ne.s32.totalorder %s318, %s321
    %p330 = scmp.eq.s32.totalorder %s27, 1
    %p331 = por %p329, %p330
    %p332 = scmp.ne.s32.totalorder %s321, %s322
    %p333 = scmp.eq.s32.totalorder %s27, 0
    %p334 = por %p332, %p333
    %p335 = scmp.ne.s32.totalorder %s321, %s322
    %p336 = scmp.eq.s32.totalorder %s28, 1
    %p337 = por %p335, %p336
    %p339 = scmp.ne.s32.totalorder %s322, %s338
    %p340 = scmp.eq.s32.totalorder %s28, 0
    %p341 = por %p339, %p340
    %s342 = ssub.s32 %s22, %s29
    %p343 = scmp.eq.s32.totalorder %s342, 0
    %s345 = sadd.s32 %s344, 1
    %s346 = scalar_select %p343, %s344, %s345
    %p349 = pneg %p343
    %p350 = scmp.eq.s32.totalorder %s22, 1
    %p351 = por %p349, %p350
    %p352 = scmp.ne.s32.totalorder %s344, %s347
    %p353 = scmp.eq.s32.totalorder %s22, 0
    %p354 = por %p352, %p353
    %p355 = scmp.ne.s32.totalorder %s344, %s347
    %p356 = scmp.eq.s32.totalorder %s27, 1
    %p357 = por %p355, %p356
    %p358 = scmp.ne.s32.totalorder %s347, %s348
    %p359 = scmp.eq.s32.totalorder %s27, 0
    %p360 = por %p358, %p359
    %p361 = scmp.ne.s32.totalorder %s347, %s348
    %p362 = scmp.eq.s32.totalorder %s28, 1
    %p363 = por %p361, %p362
    %p365 = scmp.ne.s32.totalorder %s348, %s364
    %p366 = scmp.eq.s32.totalorder %s28, 0
    %p367 = por %p365, %p366
    %s369 = sadd.s32 %s368, 1
    %p372 = scmp.eq.s32.totalorder %s22, 1
    %p373 = scmp.ne.s32.totalorder %s368, %s370
    %p374 = scmp.eq.s32.totalorder %s22, 0
    %p375 = por %p373, %p374
    %p376 = scmp.ne.s32.totalorder %s368, %s370
    %p377 = scmp.eq.s32.totalorder %s27, 1
    %p378 = por %p376, %p377
    %p379 = scmp.ne.s32.totalorder %s370, %s371
    %p380 = scmp.eq.s32.totalorder %s27, 0
    %p381 = por %p379, %p380
    %p382 = scmp.ne.s32.totalorder %s370, %s371
    %p383 = scmp.eq.s32.totalorder %s28, 1
    %p384 = por %p382, %p383
    %p386 = scmp.ne.s32.totalorder %s371, %s385
    %p387 = scmp.eq.s32.totalorder %s28, 0
    %p388 = por %p386, %p387
    %s390 = sadd.s32 %s389, 1
    %p393 = scmp.eq.s32.totalorder %s22, 1
    %p394 = scmp.ne.s32.totalorder %s389, %s391
    %p395 = scmp.eq.s32.totalorder %s22, 0
    %p396 = por %p394, %p395
    %p397 = scmp.ne.s32.totalorder %s389, %s391
    %p398 = scmp.eq.s32.totalorder %s27, 1
    %p399 = por %p397, %p398
    %p400 = scmp.ne.s32.totalorder %s391, %s392
    %p401 = scmp.eq.s32.totalorder %s27, 0
    %p402 = por %p400, %p401
    %p403 = scmp.ne.s32.totalorder %s391, %s392
    %p404 = scmp.eq.s32.totalorder %s28, 1
    %p405 = por %p403, %p404
    %p407 = scmp.ne.s32.totalorder %s392, %s406
    %p408 = scmp.eq.s32.totalorder %s28, 0
    %p409 = por %p407, %p408
    %s411 = sadd.s32 %s410, 1
    %p414 = scmp.eq.s32.totalorder %s22, 1
    %p415 = scmp.ne.s32.totalorder %s410, %s412
    %p416 = scmp.eq.s32.totalorder %s22, 0
    %p417 = por %p415, %p416
    %p418 = scmp.ne.s32.totalorder %s410, %s412
    %p419 = scmp.eq.s32.totalorder %s27, 1
    %p420 = por %p418, %p419
    %p421 = scmp.ne.s32.totalorder %s412, %s413
    %p422 = scmp.eq.s32.totalorder %s27, 0
    %p423 = por %p421, %p422
    %p424 = scmp.ne.s32.totalorder %s412, %s413
    %p425 = scmp.eq.s32.totalorder %s28, 1
    %p426 = por %p424, %p425
    %p428 = scmp.ne.s32.totalorder %s413, %s427
    %p429 = scmp.eq.s32.totalorder %s28, 0
    %p430 = por %p428, %p429
    %s431 = ssub.s32 %s22, %s29
    %p432 = scmp.eq.s32.totalorder %s431, 0
    %s434 = sadd.s32 %s433, 1
    %s435 = scalar_select %p432, %s433, %s434
    %p438 = pneg %p432
    %p439 = scmp.eq.s32.totalorder %s22, 1
    %p440 = por %p438, %p439
    %p441 = scmp.ne.s32.totalorder %s433, %s436
    %p442 = scmp.eq.s32.totalorder %s22, 0
    %p443 = por %p441, %p442
    %p444 = scmp.ne.s32.totalorder %s433, %s436
    %p445 = scmp.eq.s32.totalorder %s27, 1
    %p446 = por %p444, %p445
    %p447 = scmp.ne.s32.totalorder %s436, %s437
    %p448 = scmp.eq.s32.totalorder %s27, 0
    %p449 = por %p447, %p448
    %p450 = scmp.ne.s32.totalorder %s436, %s437
    %p451 = scmp.eq.s32.totalorder %s28, 1
    %p452 = por %p450, %p451
    %p454 = scmp.ne.s32.totalorder %s437, %s453
    %p455 = scmp.eq.s32.totalorder %s28, 0
    %p456 = por %p454, %p455
    %p457 = scmp.le.s32.totalorder 1, %s22
    %p458 = scmp.lt.s32.totalorder %s22, 3
    %p459 = pnand %p457, %p458
    %p460 = pneg %p459
    // Predicated region
    $region9: #{mamba2d_forward.1} parent=5 // pred_check
      _
    $region10: #{mamba2d_forward.1} parent=5 // pred_check_branch
      %462 = sbr.rel (%p459) target = $region12
    $region11: #{mamba2d_forward.1} parent=5 // pred_region
      %s463 = ssub.s32 %s22, 1
      // Predicated region
      $region13: #{mamba2d_forward.1} parent=11 // pred_check
        %p464 = pneg %p381
      $region14: #{mamba2d_forward.1} parent=11 // pred_check_branch
        %466 = sbr.rel (%p464) target = $region16
      $region15: #{mamba2d_forward.1} parent=11 // pred_region
        _
      $region16: #{mamba2d_forward.1} parent=11 // pred_fallthru
        _
      // Predicated region
      $region17: #{mamba2d_forward.1} parent=11 // pred_check
        %p467 = pneg %p402
      $region18: #{mamba2d_forward.1} parent=11 // pred_check_branch
        %469 = sbr.rel (%p467) target = $region20
      $region19: #{mamba2d_forward.1} parent=11 // pred_region
        _
      $region20: #{mamba2d_forward.1} parent=11 // pred_fallthru
        _
      // Predicated region
      $region21: #{mamba2d_forward.1} parent=11 // pred_check
        %p470 = pneg %p423
      $region22: #{mamba2d_forward.1} parent=11 // pred_check_branch
        %472 = sbr.rel (%p470) target = $region24
      $region23: #{mamba2d_forward.1} parent=11 // pred_region
        _
      $region24: #{mamba2d_forward.1} parent=11 // pred_fallthru
        _
    $region12: #{mamba2d_forward.1} parent=5 // pred_fallthru
      _
    %p473 = scmp.lt.s32.totalorder %s22, 2
    // Predicated region
    $region25: #{mamba2d_forward.1} parent=5 // pred_check
      %p474 = pneg %p473
    $region26: #{mamba2d_forward.1} parent=5 // pred_check_branch
      %476 = sbr.rel (%p474) target = $region28
    $region27: #{mamba2d_forward.1} parent=5 // pred_region
      // Predicated region
      $region29: #{mamba2d_forward.1} parent=27 // pred_check
        %p477 = pneg %p42
      $region30: #{mamba2d_forward.1} parent=27 // pred_check_branch
        %479 = sbr.rel (%p477) target = $region32
      $region31: #{mamba2d_forward.1} parent=27 // pred_region
        %p480 = scmp.lt.s32.totalorder %s22, 1
        %s481 = scalar_select %p480, %s22, 1
        %s482 = smul.addr %s481, 16
        %s483 = smul.addr %s482, 8
        %s484 = scalar_lea.vmem %s0, %s483
      $region32: #{mamba2d_forward.1} parent=27 // pred_fallthru
        _
      // Predicated region
      $region33: #{mamba2d_forward.1} parent=27 // pred_check
        %p485 = pneg %p68
      $region34: #{mamba2d_forward.1} parent=27 // pred_check_branch
        %487 = sbr.rel (%p485) target = $region36
      $region35: #{mamba2d_forward.1} parent=27 // pred_region
        %p488 = scmp.lt.s32.totalorder %s22, 1
        %s489 = scalar_select %p488, %s22, 1
        %s490 = smul.addr %s489, 2
        %s491 = smul.addr %s490, 8
        %s492 = scalar_lea.vmem %s1, %s491
      $region36: #{mamba2d_forward.1} parent=27 // pred_fallthru
        _
      // Predicated region
      $region37: #{mamba2d_forward.1} parent=27 // pred_check
        %p493 = pneg %p94
      $region38: #{mamba2d_forward.1} parent=27 // pred_check_branch
        %495 = sbr.rel (%p493) target = $region40
      $region39: #{mamba2d_forward.1} parent=27 // pred_region
        %p496 = scmp.lt.s32.totalorder %s22, 1
        %s497 = scalar_select %p496, %s22, 1
        %s498 = smul.addr %s497, 2
        %s499 = smul.addr %s498, 8
        %s500 = scalar_lea.vmem %s2, %s499
      $region40: #{mamba2d_forward.1} parent=27 // pred_fallthru
        _
      // Predicated region
      $region41: #{mamba2d_forward.1} parent=27 // pred_check
        %p501 = pneg %p120
      $region42: #{mamba2d_forward.1} parent=27 // pred_check_branch
        %503 = sbr.rel (%p501) target = $region44
      $region43: #{mamba2d_forward.1} parent=27 // pred_region
        %p504 = scmp.lt.s32.totalorder %s22, 1
        %s505 = scalar_select %p504, %s22, 1
        %s506 = smul.addr %s505, 4
        %s507 = scalar_lea.vmem %s3, %s506
      $region44: #{mamba2d_forward.1} parent=27 // pred_fallthru
        _
      // Predicated region
      $region45: #{mamba2d_forward.1} parent=27 // pred_check
        %p508 = pneg %p146
      $region46: #{mamba2d_forward.1} parent=27 // pred_check_branch
        %510 = sbr.rel (%p508) target = $region48
      $region47: #{mamba2d_forward.1} parent=27 // pred_region
        %p511 = scmp.lt.s32.totalorder %s22, 1
        %s512 = scalar_select %p511, %s22, 1
        %s513 = scalar_lea.vmem %s4, %s512
      $region48: #{mamba2d_forward.1} parent=27 // pred_fallthru
        _
      // Predicated region
      $region49: #{mamba2d_forward.1} parent=27 // pred_check
        %p514 = pneg %p172
      $region50: #{mamba2d_forward.1} parent=27 // pred_check_branch
        %516 = sbr.rel (%p514) target = $region52
      $region51: #{mamba2d_forward.1} parent=27 // pred_region
        %p517 = scmp.lt.s32.totalorder %s22, 1
        %s518 = scalar_select %p517, %s22, 1
        %s519 = smul.addr %s518, 16
        %s520 = smul.addr %s519, 8
        %s521 = scalar_lea.vmem %s5, %s520
      $region52: #{mamba2d_forward.1} parent=27 // pred_fallthru
        _
      // Predicated region
      $region53: #{mamba2d_forward.1} parent=27 // pred_check
        %p522 = pneg %p198
      $region54: #{mamba2d_forward.1} parent=27 // pred_check_branch
        %524 = sbr.rel (%p522) target = $region56
      $region55: #{mamba2d_forward.1} parent=27 // pred_region
        %p525 = scmp.lt.s32.totalorder %s22, 1
        %s526 = scalar_select %p525, %s22, 1
        %s527 = scalar_lea.vmem %s6, %s526
      $region56: #{mamba2d_forward.1} parent=27 // pred_fallthru
        _
      // Predicated region
      $region57: #{mamba2d_forward.1} parent=27 // pred_check
        %p528 = pneg %p224
      $region58: #{mamba2d_forward.1} parent=27 // pred_check_branch
        %530 = sbr.rel (%p528) target = $region60
      $region59: #{mamba2d_forward.1} parent=27 // pred_region
        %p531 = scmp.lt.s32.totalorder %s22, 1
        %s532 = scalar_select %p531, %s22, 1
        %s533 = smul.addr %s532, 8
        %s534 = scalar_lea.vmem %s7, %s533
      $region60: #{mamba2d_forward.1} parent=27 // pred_fallthru
        _
      // Predicated region
      $region61: #{mamba2d_forward.1} parent=27 // pred_check
        %p535 = pneg %p250
      $region62: #{mamba2d_forward.1} parent=27 // pred_check_branch
        %537 = sbr.rel (%p535) target = $region64
      $region63: #{mamba2d_forward.1} parent=27 // pred_region
        %p538 = scmp.lt.s32.totalorder %s22, 1
        %s539 = scalar_select %p538, %s22, 1
        %s540 = smul.addr %s539, 16
        %s541 = smul.addr %s540, 8
        %s542 = scalar_lea.vmem %s8, %s541
      $region64: #{mamba2d_forward.1} parent=27 // pred_fallthru
        _
      // Predicated region
      $region65: #{mamba2d_forward.1} parent=27 // pred_check
        %p543 = pneg %p276
      $region66: #{mamba2d_forward.1} parent=27 // pred_check_branch
        %545 = sbr.rel (%p543) target = $region68
      $region67: #{mamba2d_forward.1} parent=27 // pred_region
        %p546 = scmp.lt.s32.totalorder %s22, 1
        %s547 = scalar_select %p546, %s22, 1
        %s548 = smul.addr %s547, 16
        %s549 = smul.addr %s548, 8
        %s550 = scalar_lea.vmem %s9, %s549
      $region68: #{mamba2d_forward.1} parent=27 // pred_fallthru
        _
      // Predicated region
      $region69: #{mamba2d_forward.1} parent=27 // pred_check
        %p551 = pneg %p302
      $region70: #{mamba2d_forward.1} parent=27 // pred_check_branch
        %553 = sbr.rel (%p551) target = $region72
      $region71: #{mamba2d_forward.1} parent=27 // pred_region
        %p554 = scmp.lt.s32.totalorder %s22, 1
        %s555 = scalar_select %p554, %s22, 1
        %s556 = scalar_lea.vmem %s10, %s555
      $region72: #{mamba2d_forward.1} parent=27 // pred_fallthru
        _
      // Predicated region
      $region73: #{mamba2d_forward.1} parent=27 // pred_check
        %p557 = pneg %p328
      $region74: #{mamba2d_forward.1} parent=27 // pred_check_branch
        %559 = sbr.rel (%p557) target = $region76
      $region75: #{mamba2d_forward.1} parent=27 // pred_region
        %p560 = scmp.lt.s32.totalorder %s22, 1
        %s561 = scalar_select %p560, %s22, 1
        %s562 = smul.addr %s561, 16
        %s563 = smul.addr %s562, 8
        %s564 = scalar_lea.vmem %s11, %s563
      $region76: #{mamba2d_forward.1} parent=27 // pred_fallthru
        _
      // Predicated region
      $region77: #{mamba2d_forward.1} parent=27 // pred_check
        %p565 = pneg %p354
      $region78: #{mamba2d_forward.1} parent=27 // pred_check_branch
        %567 = sbr.rel (%p565) target = $region80
      $region79: #{mamba2d_forward.1} parent=27 // pred_region
        %p568 = scmp.lt.s32.totalorder %s22, 1
        %s569 = scalar_select %p568, %s22, 1
        %s570 = scalar_lea.vmem %s12, %s569
      $region80: #{mamba2d_forward.1} parent=27 // pred_fallthru
        _
    $region28: #{mamba2d_forward.1} parent=5 // pred_fallthru
      _
    %p571 = scmp.le.s32.totalorder 1, %s22
    %p572 = scmp.lt.s32.totalorder %s22, 3
    %p573 = pnand %p571, %p572
    %p574 = pneg %p573
    // Predicated region
    $region81: #{mamba2d_forward.1} parent=5 // pred_check
      _
    $region82: #{mamba2d_forward.1} parent=5 // pred_check_branch
      %576 = sbr.rel (%p573) target = $region84
    $region83: #{mamba2d_forward.1} parent=5 // pred_region
      %s577 = ssub.s32 %s22, 1
      %p578 = scmp.lt.s32.totalorder %s27, 1
      %s579 = scalar_select %p578, %s27, 1
      %s580 = smul.addr %s579, 16
      %s581 = smul.addr %s580, 8
      %s582 = scalar_lea.vmem %s0, %s581
      %p583 = pneg %p48
      %p584 = pneg %p45
      %p585 = scmp.lt.s32.totalorder %s27, 1
      %s586 = scalar_select %p585, %s27, 1
      %s587 = smul.addr %s586, 2
      %s588 = smul.addr %s587, 8
      %s589 = scalar_lea.vmem %s1, %s588
      %p590 = pneg %p74
      %p591 = pneg %p71
      %p592 = scmp.lt.s32.totalorder %s27, 1
      %s593 = scalar_select %p592, %s27, 1
      %s594 = smul.addr %s593, 2
      %s595 = smul.addr %s594, 8
      %s596 = scalar_lea.vmem %s2, %s595
      %p597 = pneg %p100
      %p598 = pneg %p97
      %p599 = scmp.lt.s32.totalorder %s27, 1
      %s600 = scalar_select %p599, %s27, 1
      %s601 = smul.addr %s600, 4
      %s602 = scalar_lea.vmem %s3, %s601
      %p603 = pneg %p126
      %p604 = pneg %p123
      %p605 = scmp.lt.s32.totalorder %s27, 1
      %s606 = scalar_select %p605, %s27, 1
      %s607 = scalar_lea.vmem %s4, %s606
      %p608 = pneg %p152
      %p609 = pneg %p149
      %p610 = scmp.lt.s32.totalorder %s27, 1
      %s611 = scalar_select %p610, %s27, 1
      %s612 = smul.addr %s611, 16
      %s613 = smul.addr %s612, 8
      %s614 = scalar_lea.vmem %s5, %s613
      %p615 = pneg %p178
      %p616 = pneg %p175
      %p617 = scmp.lt.s32.totalorder %s27, 1
      %s618 = scalar_select %p617, %s27, 1
      %s619 = scalar_lea.vmem %s6, %s618
      %p620 = pneg %p204
      %p621 = pneg %p201
      %p622 = scmp.lt.s32.totalorder %s27, 1
      %s623 = scalar_select %p622, %s27, 1
      %s624 = smul.addr %s623, 8
      %s625 = scalar_lea.vmem %s7, %s624
      %p626 = pneg %p230
      %p627 = pneg %p227
      %p628 = scmp.lt.s32.totalorder %s27, 1
      %s629 = scalar_select %p628, %s27, 1
      %s630 = smul.addr %s629, 16
      %s631 = smul.addr %s630, 8
      %s632 = scalar_lea.vmem %s8, %s631
      %p633 = pneg %p256
      %p634 = pneg %p253
      %p635 = scmp.lt.s32.totalorder %s27, 1
      %s636 = scalar_select %p635, %s27, 1
      %s637 = smul.addr %s636, 16
      %s638 = smul.addr %s637, 8
      %s639 = scalar_lea.vmem %s9, %s638
      %p640 = pneg %p282
      %p641 = pneg %p279
      %p642 = scmp.lt.s32.totalorder %s27, 1
      %s643 = scalar_select %p642, %s27, 1
      %s644 = scalar_lea.vmem %s10, %s643
      %p645 = pneg %p308
      %p646 = pneg %p305
      %p647 = scmp.lt.s32.totalorder %s27, 1
      %s648 = scalar_select %p647, %s27, 1
      %s649 = smul.addr %s648, 16
      %s650 = smul.addr %s649, 8
      %s651 = scalar_lea.vmem %s11, %s650
      %p652 = pneg %p334
      %p653 = pneg %p331
      %p654 = scmp.lt.s32.totalorder %s27, 1
      %s655 = scalar_select %p654, %s27, 1
      %s656 = scalar_lea.vmem %s12, %s655
      %p657 = pneg %p360
      %p658 = pneg %p357
      %p659 = pneg %p381
      %p660 = pneg %p378
      %p661 = pneg %p402
      %p662 = pneg %p399
      %p663 = pneg %p423
      %p664 = pneg %p420
      %p665 = pneg %p449
      %p666 = pneg %p446
      %p667 = scmp.lt.s32.totalorder %s27, 1
      %s668 = scalar_select %p667, %s27, 1
      %s669 = smul.addr %s668, 16
      %s670 = smul.addr %s669, 8
      %s671 = scalar_lea.vmem %s16, %s670
      %p672 = scmp.lt.s32.totalorder %s27, 1
      %s673 = scalar_select %p672, %s27, 1
      %s674 = smul.addr %s673, 16
      %s675 = smul.addr %s674, 8
      %s676 = scalar_lea.vmem %s0, %s675
      %p677 = scmp.lt.s32.totalorder %s27, 1
      %s678 = scalar_select %p677, %s27, 1
      %s679 = smul.addr %s678, 2
      %s680 = smul.addr %s679, 8
      %s681 = scalar_lea.vmem %s1, %s680
      %p682 = scmp.lt.s32.totalorder %s27, 1
      %s683 = scalar_select %p682, %s27, 1
      %s684 = smul.addr %s683, 2
      %s685 = smul.addr %s684, 8
      %s686 = scalar_lea.vmem %s2, %s685
      %p687 = scmp.lt.s32.totalorder %s27, 1
      %s688 = scalar_select %p687, %s27, 1
      %s689 = smul.addr %s688, 4
      %s690 = scalar_lea.vmem %s3, %s689
      %p691 = scmp.lt.s32.totalorder %s27, 1
      %s692 = scalar_select %p691, %s27, 1
      %s693 = scalar_lea.vmem %s4, %s692
      %p694 = scmp.lt.s32.totalorder %s27, 1
      %s695 = scalar_select %p694, %s27, 1
      %s696 = smul.addr %s695, 16
      %s697 = smul.addr %s696, 8
      %s698 = scalar_lea.vmem %s5, %s697
      %p699 = scmp.lt.s32.totalorder %s27, 1
      %s700 = scalar_select %p699, %s27, 1
      %s701 = scalar_lea.vmem %s6, %s700
      %p702 = scmp.lt.s32.totalorder %s27, 1
      %s703 = scalar_select %p702, %s27, 1
      %s704 = smul.addr %s703, 8
      %s705 = scalar_lea.vmem %s7, %s704
      %p706 = scmp.lt.s32.totalorder %s27, 1
      %s707 = scalar_select %p706, %s27, 1
      %s708 = smul.addr %s707, 16
      %s709 = smul.addr %s708, 8
      %s710 = scalar_lea.vmem %s8, %s709
      %p711 = scmp.lt.s32.totalorder %s27, 1
      %s712 = scalar_select %p711, %s27, 1
      %s713 = smul.addr %s712, 16
      %s714 = smul.addr %s713, 8
      %s715 = scalar_lea.vmem %s9, %s714
      %p716 = scmp.lt.s32.totalorder %s27, 1
      %s717 = scalar_select %p716, %s27, 1
      %s718 = scalar_lea.vmem %s10, %s717
      %p719 = scmp.lt.s32.totalorder %s27, 1
      %s720 = scalar_select %p719, %s27, 1
      %s721 = smul.addr %s720, 16
      %s722 = smul.addr %s721, 8
      %s723 = scalar_lea.vmem %s11, %s722
      %p724 = scmp.lt.s32.totalorder %s27, 1
      %s725 = scalar_select %p724, %s27, 1
      %s726 = scalar_lea.vmem %s12, %s725
      %p727 = scmp.lt.s32.totalorder %s27, 1
      %s728 = scalar_select %p727, %s27, 1
      %s729 = smul.addr %s728, 16
      %s730 = smul.addr %s729, 8
      %s731 = scalar_lea.vmem %s16, %s730
      %v732 = vld [vmem:[%s676] sm:$0xff]
      %v733 = vld [vmem:[%s676 + $0x8] sm:$0xff]
      %v734 = vld [vmem:[%s676 + $0x10] sm:$0xff]
      %v735 = vld [vmem:[%s676 + $0x18] sm:$0xff]
      %v736 = vld [vmem:[%s676 + $0x20] sm:$0xff]
      %v737 = vld [vmem:[%s676 + $0x28] sm:$0xff]
      %v738 = vld [vmem:[%s676 + $0x30] sm:$0xff]
      %v739 = vld [vmem:[%s676 + $0x38] sm:$0xff]
      %v740 = vld [vmem:[%s676 + $0x40] sm:$0xff]
      %v741 = vld [vmem:[%s676 + $0x48] sm:$0xff]
      %v742 = vld [vmem:[%s676 + $0x50] sm:$0xff]
      %v743 = vld [vmem:[%s676 + $0x58] sm:$0xff]
      %v744 = vld [vmem:[%s676 + $0x60] sm:$0xff]
      %v745 = vld [vmem:[%s676 + $0x68] sm:$0xff]
      %v746 = vld [vmem:[%s676 + $0x70] sm:$0xff]
      %v747 = vld [vmem:[%s676 + $0x78] sm:$0xff]
      %v748 = vld [vmem:[%s681] sm:$0xff]
      %v749 = vld [vmem:[%s681 + $0x8] sm:$0xff]
      %vm750 = vcmask 130048
      %v752 = vsel %vm750, %v732, 0
      %v755 = vsel %vm750, %v733, 0
      %v758 = vsel %vm750, %v734, 0
      %v761 = vsel %vm750, %v735, 0
      %v764 = vsel %vm750, %v736, 0
      %v767 = vsel %vm750, %v737, 0
      %v770 = vsel %vm750, %v738, 0
      %v773 = vsel %vm750, %v739, 0
      %v776 = vsel %vm750, %v740, 0
      %v779 = vsel %vm750, %v741, 0
      %v782 = vsel %vm750, %v742, 0
      %v785 = vsel %vm750, %v743, 0
      %v788 = vsel %vm750, %v744, 0
      %v791 = vsel %vm750, %v745, 0
      %v794 = vsel %vm750, %v746, 0
      %v797 = vsel %vm750, %v747, 0
      %799 = vmatpush.msra.mxu0 0.0
      %800 = vmatpush.msra.mxu0 0.0
      %801 = vmatpush.msra.mxu0 0.0
      %802 = vmatpush.msra.mxu0 0.0
      %803 = vmatpush.msra.mxu0 0.0
      %804 = vmatpush.msra.mxu0 0.0
      %805 = vmatpush.msra.mxu0 0.0
      %806 = vmatpush.msra.mxu0 0.0
      %807 = vmatpush.msra.mxu0 0.0
      %808 = vmatpush.msra.mxu0 0.0
      %809 = vmatpush.msra.mxu0 0.0
      %810 = vmatpush.msra.mxu0 0.0
      %811 = vmatpush.msra.mxu0 0.0
      %812 = vmatpush.msra.mxu0 0.0
      %813 = vmatpush.msra.mxu0 %v749
      %814 = vmatpush.msra.mxu0 %v748
      %815 = vmatmul.f32.gmra.mxu0 %v752
      %v816 = vpop.f32.mrf.mxu0
      %v817 = vadd.f32 0.0, %v816
      %818 = vmatmul.f32.gmra.mxu0 %v755
      %v819 = vpop.f32.mrf.mxu0
      %v820 = vadd.f32 0.0, %v819
      %821 = vmatmul.f32.gmra.mxu0 %v758
      %v822 = vpop.f32.mrf.mxu0
      %v823 = vadd.f32 0.0, %v822
      %824 = vmatmul.f32.gmra.mxu0 %v761
      %v825 = vpop.f32.mrf.mxu0
      %v826 = vadd.f32 0.0, %v825
      %827 = vmatmul.f32.gmra.mxu0 %v764
      %v828 = vpop.f32.mrf.mxu0
      %v829 = vadd.f32 0.0, %v828
      %830 = vmatmul.f32.gmra.mxu0 %v767
      %v831 = vpop.f32.mrf.mxu0
      %v832 = vadd.f32 0.0, %v831
      %833 = vmatmul.f32.gmra.mxu0 %v770
      %v834 = vpop.f32.mrf.mxu0
      %v835 = vadd.f32 0.0, %v834
      %836 = vmatmul.f32.gmra.mxu0 %v773
      %v837 = vpop.f32.mrf.mxu0
      %v838 = vadd.f32 0.0, %v837
      %839 = vmatmul.f32.gmra.mxu0 %v776
      %v840 = vpop.f32.mrf.mxu0
      %v841 = vadd.f32 0.0, %v840
      %842 = vmatmul.f32.gmra.mxu0 %v779
      %v843 = vpop.f32.mrf.mxu0
      %v844 = vadd.f32 0.0, %v843
      %845 = vmatmul.f32.gmra.mxu0 %v782
      %v846 = vpop.f32.mrf.mxu0
      %v847 = vadd.f32 0.0, %v846
      %848 = vmatmul.f32.gmra.mxu0 %v785
      %v849 = vpop.f32.mrf.mxu0
      %v850 = vadd.f32 0.0, %v849
      %851 = vmatmul.f32.gmra.mxu0 %v788
      %v852 = vpop.f32.mrf.mxu0
      %v853 = vadd.f32 0.0, %v852
      %854 = vmatmul.f32.gmra.mxu0 %v791
      %v855 = vpop.f32.mrf.mxu0
      %v856 = vadd.f32 0.0, %v855
      %857 = vmatmul.f32.gmra.mxu0 %v794
      %v858 = vpop.f32.mrf.mxu0
      %v859 = vadd.f32 0.0, %v858
      %860 = vmatmul.f32.gmra.mxu0 %v797
      %v861 = vpop.f32.mrf.mxu0
      %v862 = vadd.f32 0.0, %v861
      %863 = vdwg.mxu0
      %864 = vst [vmem:[#allocation2] sm:$0xff] 0.0
      %865 = vst [vmem:[#allocation2 + $0x8] sm:$0xff] 0.0
      %866 = vst [vmem:[#allocation2 + $0x90] sm:$0xff] 0.0
      %867 = vst [vmem:[#allocation2 + $0x98] sm:$0xff] 0.0
      %868 = vst [vmem:[#allocation2 + $0x10] sm:$0xff] %v817
      %869 = vst [vmem:[#allocation2 + $0x18] sm:$0xff] %v820
      %870 = vst [vmem:[#allocation2 + $0x20] sm:$0xff] %v823
      %871 = vst [vmem:[#allocation2 + $0x28] sm:$0xff] %v826
      %872 = vst [vmem:[#allocation2 + $0x30] sm:$0xff] %v829
      %873 = vst [vmem:[#allocation2 + $0x38] sm:$0xff] %v832
      %874 = vst [vmem:[#allocation2 + $0x40] sm:$0xff] %v835
      %875 = vst [vmem:[#allocation2 + $0x48] sm:$0xff] %v838
      %876 = vst [vmem:[#allocation2 + $0x50] sm:$0xff] %v841
      %877 = vst [vmem:[#allocation2 + $0x58] sm:$0xff] %v844
      %878 = vst [vmem:[#allocation2 + $0x60] sm:$0xff] %v847
      %879 = vst [vmem:[#allocation2 + $0x68] sm:$0xff] %v850
      %880 = vst [vmem:[#allocation2 + $0x70] sm:$0xff] %v853
      %881 = vst [vmem:[#allocation2 + $0x78] sm:$0xff] %v856
      %882 = vst [vmem:[#allocation2 + $0x80] sm:$0xff] %v859
      %883 = vst [vmem:[#allocation2 + $0x88] sm:$0xff] %v862
      %v884 = vld [vmem:[%s690] sm:$0x7]
      %v885 = vld [vmem:[%s693] sm:$0x1]
      %v887 = vperm.slane %v885, 0
      %v889 = vld [vmem:[#allocation2] sm:$0xff]
      %v890 = vld [vmem:[#allocation2 + $0x8] sm:$0xff]
      %v891 = vld [vmem:[#allocation2 + $0x10] sm:$0xff]
      %v892 = vld [vmem:[#allocation2 + $0x18] sm:$0xff]
      %v893 = vld [vmem:[#allocation2 + $0x20] sm:$0xff]
      %v894 = vld [vmem:[#allocation2 + $0x28] sm:$0xff]
      %v895 = vld [vmem:[#allocation2 + $0x30] sm:$0xff]
      %v896 = vld [vmem:[#allocation2 + $0x38] sm:$0xff]
      %v897 = vld [vmem:[#allocation2 + $0x40] sm:$0xff]
      %v898 = vld [vmem:[#allocation2 + $0x48] sm:$0xff]
      %v899 = vld [vmem:[#allocation2 + $0x50] sm:$0xff]
      %v900 = vld [vmem:[#allocation2 + $0x58] sm:$0xff]
      %v901 = vld [vmem:[#allocation2 + $0x60] sm:$0xff]
      %v902 = vld [vmem:[#allocation2 + $0x68] sm:$0xff]
      %v903 = vld [vmem:[#allocation2 + $0x70] sm:$0xff]
      %v904 = vld [vmem:[#allocation2 + $0x78] sm:$0xff]
      %v905 = vperm.slane %v884, 0
      %v906 = vmul.f32 %v889, %v905
      %v907 = vmul.f32 %v890, %v905
      %v908 = vmul.f32 %v891, %v905
      %v909 = vmul.f32 %v892, %v905
      %v910 = vmul.f32 %v893, %v905
      %v911 = vmul.f32 %v894, %v905
      %v912 = vmul.f32 %v895, %v905
      %v913 = vmul.f32 %v896, %v905
      %v914 = vmul.f32 %v897, %v905
      %v915 = vmul.f32 %v898, %v905
      %v916 = vmul.f32 %v899, %v905
      %v917 = vmul.f32 %v900, %v905
      %v918 = vmul.f32 %v901, %v905
      %v919 = vmul.f32 %v902, %v905
      %v920 = vmul.f32 %v903, %v905
      %v921 = vmul.f32 %v904, %v905
      %v922 = vadd.f32 %v887, %v906
      %v923 = vadd.f32 %v887, %v907
      %v924 = vadd.f32 %v887, %v908
      %v925 = vadd.f32 %v887, %v909
      %v926 = vadd.f32 %v887, %v910
      %v927 = vadd.f32 %v887, %v911
      %v928 = vadd.f32 %v887, %v912
      %v929 = vadd.f32 %v887, %v913
      %v930 = vadd.f32 %v887, %v914
      %v931 = vadd.f32 %v887, %v915
      %v932 = vadd.f32 %v887, %v916
      %v933 = vadd.f32 %v887, %v917
      %v934 = vadd.f32 %v887, %v918
      %v935 = vadd.f32 %v887, %v919
      %v936 = vadd.f32 %v887, %v920
      %v937 = vadd.f32 %v887, %v921
      %v938 = vld [vmem:[#allocation2 + $0x80] sm:$0xff]
      %v939 = vld [vmem:[#allocation2 + $0x88] sm:$0xff]
      %v940 = vperm.slane %v884, 1
      %v941 = vmul.f32 %v891, %v940
      %v942 = vmul.f32 %v892, %v940
      %v943 = vmul.f32 %v893, %v940
      %v944 = vmul.f32 %v894, %v940
      %v945 = vmul.f32 %v895, %v940
      %v946 = vmul.f32 %v896, %v940
      %v947 = vmul.f32 %v897, %v940
      %v948 = vmul.f32 %v898, %v940
      %v949 = vmul.f32 %v899, %v940
      %v950 = vmul.f32 %v900, %v940
      %v951 = vmul.f32 %v901, %v940
      %v952 = vmul.f32 %v902, %v940
      %v953 = vmul.f32 %v903, %v940
      %v954 = vmul.f32 %v904, %v940
      %v955 = vmul.f32 %v938, %v940
      %v956 = vmul.f32 %v939, %v940
      %v957 = vadd.f32 %v922, %v941
      %v958 = vadd.f32 %v923, %v942
      %v959 = vadd.f32 %v924, %v943
      %v960 = vadd.f32 %v925, %v944
      %v961 = vadd.f32 %v926, %v945
      %v962 = vadd.f32 %v927, %v946
      %v963 = vadd.f32 %v928, %v947
      %v964 = vadd.f32 %v929, %v948
      %v965 = vadd.f32 %v930, %v949
      %v966 = vadd.f32 %v931, %v950
      %v967 = vadd.f32 %v932, %v951
      %v968 = vadd.f32 %v933, %v952
      %v969 = vadd.f32 %v934, %v953
      %v970 = vadd.f32 %v935, %v954
      %v971 = vadd.f32 %v936, %v955
      %v972 = vadd.f32 %v937, %v956
      %v973 = vld [vmem:[#allocation2 + $0x20] sm:$0xff]
      %v974 = vld [vmem:[#allocation2 + $0x28] sm:$0xff]
      %v975 = vld [vmem:[#allocation2 + $0x30] sm:$0xff]
      %v976 = vld [vmem:[#allocation2 + $0x38] sm:$0xff]
      %v977 = vld [vmem:[#allocation2 + $0x40] sm:$0xff]
      %v978 = vld [vmem:[#allocation2 + $0x48] sm:$0xff]
      %v979 = vld [vmem:[#allocation2 + $0x50] sm:$0xff]
      %v980 = vld [vmem:[#allocation2 + $0x58] sm:$0xff]
      %v981 = vld [vmem:[#allocation2 + $0x60] sm:$0xff]
      %v982 = vld [vmem:[#allocation2 + $0x68] sm:$0xff]
      %v983 = vld [vmem:[#allocation2 + $0x70] sm:$0xff]
      %v984 = vld [vmem:[#allocation2 + $0x78] sm:$0xff]
      %v985 = vld [vmem:[#allocation2 + $0x80] sm:$0xff]
      %v986 = vld [vmem:[#allocation2 + $0x88] sm:$0xff]
      %v987 = vld [vmem:[#allocation2 + $0x90] sm:$0xff]
      %v988 = vld [vmem:[#allocation2 + $0x98] sm:$0xff]
      %v989 = vperm.slane %v884, 2
      %v990 = vmul.f32 %v973, %v989
      %v991 = vmul.f32 %v974, %v989
      %v992 = vmul.f32 %v975, %v989
      %v993 = vmul.f32 %v976, %v989
      %v994 = vmul.f32 %v977, %v989
      %v995 = vmul.f32 %v978, %v989
      %v996 = vmul.f32 %v979, %v989
      %v997 = vmul.f32 %v980, %v989
      %v998 = vmul.f32 %v981, %v989
      %v999 = vmul.f32 %v982, %v989
      %v1000 = vmul.f32 %v983, %v989
      %v1001 = vmul.f32 %v984, %v989
      %v1002 = vmul.f32 %v985, %v989
      %v1003 = vmul.f32 %v986, %v989
      %v1004 = vmul.f32 %v987, %v989
      %v1005 = vmul.f32 %v988, %v989
      %v1006 = vadd.f32 %v957, %v990
      %v1007 = vadd.f32 %v958, %v991
      %v1008 = vadd.f32 %v959, %v992
      %v1009 = vadd.f32 %v960, %v993
      %v1010 = vadd.f32 %v961, %v994
      %v1011 = vadd.f32 %v962, %v995
      %v1012 = vadd.f32 %v963, %v996
      %v1013 = vadd.f32 %v964, %v997
      %v1014 = vadd.f32 %v965, %v998
      %v1015 = vadd.f32 %v966, %v999
      %v1016 = vadd.f32 %v967, %v1000
      %v1017 = vadd.f32 %v968, %v1001
      %v1018 = vadd.f32 %v969, %v1002
      %v1019 = vadd.f32 %v970, %v1003
      %v1020 = vadd.f32 %v971, %v1004
      %v1021 = vadd.f32 %v972, %v1005
      %v1022 = vsub.f32 0.0, %v1006
      %v1023 = vsub.f32 0.0, %v1007
      %v1024 = vsub.f32 0.0, %v1008
      %v1025 = vsub.f32 0.0, %v1009
      %v1026 = vsub.f32 0.0, %v1010
      %v1027 = vsub.f32 0.0, %v1011
      %v1028 = vsub.f32 0.0, %v1012
      %v1029 = vsub.f32 0.0, %v1013
      %v1030 = vsub.f32 0.0, %v1014
      %v1031 = vsub.f32 0.0, %v1015
      %v1032 = vsub.f32 0.0, %v1016
      %v1033 = vsub.f32 0.0, %v1017
      %v1034 = vsub.f32 0.0, %v1018
      %v1035 = vsub.f32 0.0, %v1019
      %v1036 = vsub.f32 0.0, %v1020
      %v1037 = vsub.f32 0.0, %v1021
      %v1038 = vmul.f32 %v1022, 1.442695
      %v1039 = vpow.pop %v1038
      %v1040 = vmul.f32 %v1023, 1.442695
      %v1041 = vpow.pop %v1040
      %v1042 = vmul.f32 %v1024, 1.442695
      %v1043 = vpow.pop %v1042
      %v1044 = vmul.f32 %v1025, 1.442695
      %v1045 = vpow.pop %v1044
      %v1046 = vmul.f32 %v1026, 1.442695
      %v1047 = vpow.pop %v1046
      %v1048 = vmul.f32 %v1027, 1.442695
      %v1049 = vpow.pop %v1048
      %v1050 = vmul.f32 %v1028, 1.442695
      %v1051 = vpow.pop %v1050
      %v1052 = vmul.f32 %v1029, 1.442695
      %v1053 = vpow.pop %v1052
      %v1054 = vmul.f32 %v1030, 1.442695
      %v1055 = vpow.pop %v1054
      %v1056 = vmul.f32 %v1031, 1.442695
      %v1057 = vpow.pop %v1056
      %v1058 = vmul.f32 %v1032, 1.442695
      %v1059 = vpow.pop %v1058
      %v1060 = vmul.f32 %v1033, 1.442695
      %v1061 = vpow.pop %v1060
      %v1062 = vmul.f32 %v1034, 1.442695
      %v1063 = vpow.pop %v1062
      %v1064 = vmul.f32 %v1035, 1.442695
      %v1065 = vpow.pop %v1064
      %v1066 = vmul.f32 %v1036, 1.442695
      %v1067 = vpow.pop %v1066
      %v1068 = vmul.f32 %v1037, 1.442695
      %v1069 = vpow.pop %v1068
      %v1070 = vadd.f32 %v1039, 1.0
      %v1071 = vadd.f32 %v1041, 1.0
      %v1072 = vadd.f32 %v1043, 1.0
      %v1073 = vadd.f32 %v1045, 1.0
      %v1074 = vadd.f32 %v1047, 1.0
      %v1075 = vadd.f32 %v1049, 1.0
      %v1076 = vadd.f32 %v1051, 1.0
      %v1077 = vadd.f32 %v1053, 1.0
      %v1078 = vadd.f32 %v1055, 1.0
      %v1079 = vadd.f32 %v1057, 1.0
      %v1080 = vadd.f32 %v1059, 1.0
      %v1081 = vadd.f32 %v1061, 1.0
      %v1082 = vadd.f32 %v1063, 1.0
      %v1083 = vadd.f32 %v1065, 1.0
      %v1084 = vadd.f32 %v1067, 1.0
      %v1085 = vadd.f32 %v1069, 1.0
      %v1086 = vrcp.pop %v1070
      %v1087 = vrcp.pop %v1071
      %v1088 = vrcp.pop %v1072
      %v1089 = vrcp.pop %v1073
      %v1090 = vrcp.pop %v1074
      %v1091 = vrcp.pop %v1075
      %v1092 = vrcp.pop %v1076
      %v1093 = vrcp.pop %v1077
      %v1094 = vrcp.pop %v1078
      %v1095 = vrcp.pop %v1079
      %v1096 = vrcp.pop %v1080
      %v1097 = vrcp.pop %v1081
      %v1098 = vrcp.pop %v1082
      %v1099 = vrcp.pop %v1083
      %v1100 = vrcp.pop %v1084
      %v1101 = vrcp.pop %v1085
      %v1102 = vmul.f32 %v1006, %v1086
      %v1103 = vmul.f32 %v1007, %v1087
      %v1104 = vmul.f32 %v1008, %v1088
      %v1105 = vmul.f32 %v1009, %v1089
      %v1106 = vmul.f32 %v1010, %v1090
      %v1107 = vmul.f32 %v1011, %v1091
      %v1108 = vmul.f32 %v1012, %v1092
      %v1109 = vmul.f32 %v1013, %v1093
      %v1110 = vmul.f32 %v1014, %v1094
      %v1111 = vmul.f32 %v1015, %v1095
      %v1112 = vmul.f32 %v1016, %v1096
      %v1113 = vmul.f32 %v1017, %v1097
      %v1114 = vmul.f32 %v1018, %v1098
      %v1115 = vmul.f32 %v1019, %v1099
      %v1116 = vmul.f32 %v1020, %v1100
      %v1117 = vmul.f32 %v1021, %v1101
      %1118 = vst [vmem:[#allocation3] sm:$0xff] %v1102
      %1119 = vst [vmem:[#allocation3 + $0x8] sm:$0xff] %v1103
      %1120 = vst [vmem:[#allocation3 + $0x10] sm:$0xff] %v1104
      %1121 = vst [vmem:[#allocation3 + $0x18] sm:$0xff] %v1105
      %1122 = vst [vmem:[#allocation3 + $0x20] sm:$0xff] %v1106
      %1123 = vst [vmem:[#allocation3 + $0x28] sm:$0xff] %v1107
      %1124 = vst [vmem:[#allocation3 + $0x30] sm:$0xff] %v1108
      %1125 = vst [vmem:[#allocation3 + $0x38] sm:$0xff] %v1109
      %1126 = vst [vmem:[#allocation3 + $0x40] sm:$0xff] %v1110
      %1127 = vst [vmem:[#allocation3 + $0x48] sm:$0xff] %v1111
      %1128 = vst [vmem:[#allocation3 + $0x50] sm:$0xff] %v1112
      %1129 = vst [vmem:[#allocation3 + $0x58] sm:$0xff] %v1113
      %1130 = vst [vmem:[#allocation3 + $0x60] sm:$0xff] %v1114
      %1131 = vst [vmem:[#allocation3 + $0x68] sm:$0xff] %v1115
      %1132 = vst [vmem:[#allocation3 + $0x70] sm:$0xff] %v1116
      %1133 = vst [vmem:[#allocation3 + $0x78] sm:$0xff] %v1117
      %v1134 = vld [vmem:[%s698] sm:$0xff]
      %v1135 = vld [vmem:[%s698 + $0x8] sm:$0xff]
      %v1136 = vld [vmem:[%s698 + $0x10] sm:$0xff]
      %v1137 = vld [vmem:[%s698 + $0x18] sm:$0xff]
      %v1138 = vld [vmem:[%s698 + $0x20] sm:$0xff]
      %v1139 = vld [vmem:[%s698 + $0x28] sm:$0xff]
      %v1140 = vld [vmem:[%s698 + $0x30] sm:$0xff]
      %v1141 = vld [vmem:[%s698 + $0x38] sm:$0xff]
      %v1142 = vld [vmem:[%s698 + $0x40] sm:$0xff]
      %v1143 = vld [vmem:[%s698 + $0x48] sm:$0xff]
      %v1144 = vld [vmem:[%s698 + $0x50] sm:$0xff]
      %v1145 = vld [vmem:[%s698 + $0x58] sm:$0xff]
      %v1146 = vld [vmem:[%s698 + $0x60] sm:$0xff]
      %v1147 = vld [vmem:[%s698 + $0x68] sm:$0xff]
      %v1148 = vld [vmem:[%s698 + $0x70] sm:$0xff]
      %v1149 = vld [vmem:[%s698 + $0x78] sm:$0xff]
      %v1150 = vld [vmem:[%s701] sm:$0x1]
      %v1152 = vperm.slane %v1150, 0
      %1154 = vmatpush.msra.mxu0 %v1149
      %1155 = vmatpush.msra.mxu0 %v1148
      %1156 = vmatpush.msra.mxu0 %v1147
      %1157 = vmatpush.msra.mxu0 %v1146
      %1158 = vmatpush.msra.mxu0 %v1145
      %1159 = vmatpush.msra.mxu0 %v1144
      %1160 = vmatpush.msra.mxu0 %v1143
      %1161 = vmatpush.msra.mxu0 %v1142
      %1162 = vmatpush.msra.mxu0 %v1141
      %1163 = vmatpush.msra.mxu0 %v1140
      %1164 = vmatpush.msra.mxu0 %v1139
      %1165 = vmatpush.msra.mxu0 %v1138
      %1166 = vmatpush.msra.mxu0 %v1137
      %1167 = vmatpush.msra.mxu0 %v1136
      %1168 = vmatpush.msra.mxu0 %v1135
      %1169 = vmatpush.msra.mxu0 %v1134
      %1170 = vmatmul.f32.gmra.mxu0 %v1102
      %v1171 = vpop.f32.mrf.mxu0
      %v1172 = vadd.f32 %v1152, %v1171
      %1173 = vmatmul.f32.gmra.mxu0 %v1103
      %v1174 = vpop.f32.mrf.mxu0
      %v1175 = vadd.f32 %v1152, %v1174
      %1176 = vmatmul.f32.gmra.mxu0 %v1104
      %v1177 = vpop.f32.mrf.mxu0
      %v1178 = vadd.f32 %v1152, %v1177
      %1179 = vmatmul.f32.gmra.mxu0 %v1105
      %v1180 = vpop.f32.mrf.mxu0
      %v1181 = vadd.f32 %v1152, %v1180
      %1182 = vmatmul.f32.gmra.mxu0 %v1106
      %v1183 = vpop.f32.mrf.mxu0
      %v1184 = vadd.f32 %v1152, %v1183
      %1185 = vmatmul.f32.gmra.mxu0 %v1107
      %v1186 = vpop.f32.mrf.mxu0
      %v1187 = vadd.f32 %v1152, %v1186
      %1188 = vmatmul.f32.gmra.mxu0 %v1108
      %v1189 = vpop.f32.mrf.mxu0
      %v1190 = vadd.f32 %v1152, %v1189
      %1191 = vmatmul.f32.gmra.mxu0 %v1109
      %v1192 = vpop.f32.mrf.mxu0
      %v1193 = vadd.f32 %v1152, %v1192
      %1194 = vmatmul.f32.gmra.mxu0 %v1110
      %v1195 = vpop.f32.mrf.mxu0
      %v1196 = vadd.f32 %v1152, %v1195
      %1197 = vmatmul.f32.gmra.mxu0 %v1111
      %v1198 = vpop.f32.mrf.mxu0
      %v1199 = vadd.f32 %v1152, %v1198
      %1200 = vmatmul.f32.gmra.mxu0 %v1112
      %v1201 = vpop.f32.mrf.mxu0
      %v1202 = vadd.f32 %v1152, %v1201
      %1203 = vmatmul.f32.gmra.mxu0 %v1113
      %v1204 = vpop.f32.mrf.mxu0
      %v1205 = vadd.f32 %v1152, %v1204
      %1206 = vmatmul.f32.gmra.mxu0 %v1114
      %v1207 = vpop.f32.mrf.mxu0
      %v1208 = vadd.f32 %v1152, %v1207
      %1209 = vmatmul.f32.gmra.mxu0 %v1115
      %v1210 = vpop.f32.mrf.mxu0
      %v1211 = vadd.f32 %v1152, %v1210
      %1212 = vmatmul.f32.gmra.mxu0 %v1116
      %v1213 = vpop.f32.mrf.mxu0
      %v1214 = vadd.f32 %v1152, %v1213
      %1215 = vmatmul.f32.gmra.mxu0 %v1117
      %v1216 = vpop.f32.mrf.mxu0
      %v1217 = vadd.f32 %v1152, %v1216
      %1218 = vdwg.mxu0
      %v1219 = vmax.f32 %v1172, 0.0
      %v1220 = vmax.f32 %v1175, 0.0
      %v1221 = vmax.f32 %v1178, 0.0
      %v1222 = vmax.f32 %v1181, 0.0
      %v1223 = vmax.f32 %v1184, 0.0
      %v1224 = vmax.f32 %v1187, 0.0
      %v1225 = vmax.f32 %v1190, 0.0
      %v1226 = vmax.f32 %v1193, 0.0
      %v1227 = vmax.f32 %v1196, 0.0
      %v1228 = vmax.f32 %v1199, 0.0
      %v1229 = vmax.f32 %v1202, 0.0
      %v1230 = vmax.f32 %v1205, 0.0
      %v1231 = vmax.f32 %v1208, 0.0
      %v1232 = vmax.f32 %v1211, 0.0
      %v1233 = vmax.f32 %v1214, 0.0
      %v1234 = vmax.f32 %v1217, 0.0
      %v1235 = vand.u32 2147483647, %v1172
      %v1236 = vand.u32 2147483647, %v1175
      %v1237 = vand.u32 2147483647, %v1178
      %v1238 = vand.u32 2147483647, %v1181
      %v1239 = vand.u32 2147483647, %v1184
      %v1240 = vand.u32 2147483647, %v1187
      %v1241 = vand.u32 2147483647, %v1190
      %v1242 = vand.u32 2147483647, %v1193
      %v1243 = vand.u32 2147483647, %v1196
      %v1244 = vand.u32 2147483647, %v1199
      %v1245 = vand.u32 2147483647, %v1202
      %v1246 = vand.u32 2147483647, %v1205
      %v1247 = vand.u32 2147483647, %v1208
      %v1248 = vand.u32 2147483647, %v1211
      %v1249 = vand.u32 2147483647, %v1214
      %v1250 = vand.u32 2147483647, %v1217
      %v1251 = vsub.f32 0.0, %v1235
      %v1252 = vsub.f32 0.0, %v1236
      %v1253 = vsub.f32 0.0, %v1237
      %v1254 = vsub.f32 0.0, %v1238
      %v1255 = vsub.f32 0.0, %v1239
      %v1256 = vsub.f32 0.0, %v1240
      %v1257 = vsub.f32 0.0, %v1241
      %v1258 = vsub.f32 0.0, %v1242
      %v1259 = vsub.f32 0.0, %v1243
      %v1260 = vsub.f32 0.0, %v1244
      %v1261 = vsub.f32 0.0, %v1245
      %v1262 = vsub.f32 0.0, %v1246
      %v1263 = vsub.f32 0.0, %v1247
      %v1264 = vsub.f32 0.0, %v1248
      %v1265 = vsub.f32 0.0, %v1249
      %v1266 = vsub.f32 0.0, %v1250
      %v1267 = vmul.f32 %v1251, 1.442695
      %v1268 = vpow.pop %v1267
      %v1269 = vmul.f32 %v1252, 1.442695
      %v1270 = vpow.pop %v1269
      %v1271 = vmul.f32 %v1253, 1.442695
      %v1272 = vpow.pop %v1271
      %v1273 = vmul.f32 %v1254, 1.442695
      %v1274 = vpow.pop %v1273
      %v1275 = vmul.f32 %v1255, 1.442695
      %v1276 = vpow.pop %v1275
      %v1277 = vmul.f32 %v1256, 1.442695
      %v1278 = vpow.pop %v1277
      %v1279 = vmul.f32 %v1257, 1.442695
      %v1280 = vpow.pop %v1279
      %v1281 = vmul.f32 %v1258, 1.442695
      %v1282 = vpow.pop %v1281
      %v1283 = vmul.f32 %v1259, 1.442695
      %v1284 = vpow.pop %v1283
      %v1285 = vmul.f32 %v1260, 1.442695
      %v1286 = vpow.pop %v1285
      %v1287 = vmul.f32 %v1261, 1.442695
      %v1288 = vpow.pop %v1287
      %v1289 = vmul.f32 %v1262, 1.442695
      %v1290 = vpow.pop %v1289
      %v1291 = vmul.f32 %v1263, 1.442695
      %v1292 = vpow.pop %v1291
      %v1293 = vmul.f32 %v1264, 1.442695
      %v1294 = vpow.pop %v1293
      %v1295 = vmul.f32 %v1265, 1.442695
      %v1296 = vpow.pop %v1295
      %v1297 = vmul.f32 %v1266, 1.442695
      %v1298 = vpow.pop %v1297
      %v1299 = vadd.f32 %v1268, 1.0
      %v1300 = vlog2.pop %v1299
      %v1301 = vmul.f32 %v1300, 0.6931472
      %v1302 = vmul.f32 -0.5, %v1268
      %v1303 = vadd.f32 %v1302, 1.0
      %v1304 = vmul.f32 %v1303, %v1268
      %v1305 = vand.u32 2147483647, %v1268
      %vm1306 = vcmp.lt.f32.partialorder %v1305, 0.0004427343
      %v1307 = vsel %vm1306, %v1304, %v1301
      %v1308 = vadd.f32 %v1270, 1.0
      %v1309 = vlog2.pop %v1308
      %v1310 = vmul.f32 %v1309, 0.6931472
      %v1311 = vmul.f32 -0.5, %v1270
      %v1312 = vadd.f32 %v1311, 1.0
      %v1313 = vmul.f32 %v1312, %v1270
      %v1314 = vand.u32 2147483647, %v1270
      %vm1315 = vcmp.lt.f32.partialorder %v1314, 0.0004427343
      %v1316 = vsel %vm1315, %v1313, %v1310
      %v1317 = vadd.f32 %v1272, 1.0
      %v1318 = vlog2.pop %v1317
      %v1319 = vmul.f32 %v1318, 0.6931472
      %v1320 = vmul.f32 -0.5, %v1272
      %v1321 = vadd.f32 %v1320, 1.0
      %v1322 = vmul.f32 %v1321, %v1272
      %v1323 = vand.u32 2147483647, %v1272
      %vm1324 = vcmp.lt.f32.partialorder %v1323, 0.0004427343
      %v1325 = vsel %vm1324, %v1322, %v1319
      %v1326 = vadd.f32 %v1274, 1.0
      %v1327 = vlog2.pop %v1326
      %v1328 = vmul.f32 %v1327, 0.6931472
      %v1329 = vmul.f32 -0.5, %v1274
      %v1330 = vadd.f32 %v1329, 1.0
      %v1331 = vmul.f32 %v1330, %v1274
      %v1332 = vand.u32 2147483647, %v1274
      %vm1333 = vcmp.lt.f32.partialorder %v1332, 0.0004427343
      %v1334 = vsel %vm1333, %v1331, %v1328
      %v1335 = vadd.f32 %v1276, 1.0
      %v1336 = vlog2.pop %v1335
      %v1337 = vmul.f32 %v1336, 0.6931472
      %v1338 = vmul.f32 -0.5, %v1276
      %v1339 = vadd.f32 %v1338, 1.0
      %v1340 = vmul.f32 %v1339, %v1276
      %v1341 = vand.u32 2147483647, %v1276
      %vm1342 = vcmp.lt.f32.partialorder %v1341, 0.0004427343
      %v1343 = vsel %vm1342, %v1340, %v1337
      %v1344 = vadd.f32 %v1278, 1.0
      %v1345 = vlog2.pop %v1344
      %v1346 = vmul.f32 %v1345, 0.6931472
      %v1347 = vmul.f32 -0.5, %v1278
      %v1348 = vadd.f32 %v1347, 1.0
      %v1349 = vmul.f32 %v1348, %v1278
      %v1350 = vand.u32 2147483647, %v1278
      %vm1351 = vcmp.lt.f32.partialorder %v1350, 0.0004427343
      %v1352 = vsel %vm1351, %v1349, %v1346
      %v1353 = vadd.f32 %v1280, 1.0
      %v1354 = vlog2.pop %v1353
      %v1355 = vmul.f32 %v1354, 0.6931472
      %v1356 = vmul.f32 -0.5, %v1280
      %v1357 = vadd.f32 %v1356, 1.0
      %v1358 = vmul.f32 %v1357, %v1280
      %v1359 = vand.u32 2147483647, %v1280
      %vm1360 = vcmp.lt.f32.partialorder %v1359, 0.0004427343
      %v1361 = vsel %vm1360, %v1358, %v1355
      %v1362 = vadd.f32 %v1282, 1.0
      %v1363 = vlog2.pop %v1362
      %v1364 = vmul.f32 %v1363, 0.6931472
      %v1365 = vmul.f32 -0.5, %v1282
      %v1366 = vadd.f32 %v1365, 1.0
      %v1367 = vmul.f32 %v1366, %v1282
      %v1368 = vand.u32 2147483647, %v1282
      %vm1369 = vcmp.lt.f32.partialorder %v1368, 0.0004427343
      %v1370 = vsel %vm1369, %v1367, %v1364
      %v1371 = vadd.f32 %v1284, 1.0
      %v1372 = vlog2.pop %v1371
      %v1373 = vmul.f32 %v1372, 0.6931472
      %v1374 = vmul.f32 -0.5, %v1284
      %v1375 = vadd.f32 %v1374, 1.0
      %v1376 = vmul.f32 %v1375, %v1284
      %v1377 = vand.u32 2147483647, %v1284
      %vm1378 = vcmp.lt.f32.partialorder %v1377, 0.0004427343
      %v1379 = vsel %vm1378, %v1376, %v1373
      %v1380 = vadd.f32 %v1286, 1.0
      %v1381 = vlog2.pop %v1380
      %v1382 = vmul.f32 %v1381, 0.6931472
      %v1383 = vmul.f32 -0.5, %v1286
      %v1384 = vadd.f32 %v1383, 1.0
      %v1385 = vmul.f32 %v1384, %v1286
      %v1386 = vand.u32 2147483647, %v1286
      %vm1387 = vcmp.lt.f32.partialorder %v1386, 0.0004427343
      %v1388 = vsel %vm1387, %v1385, %v1382
      %v1389 = vadd.f32 %v1288, 1.0
      %v1390 = vlog2.pop %v1389
      %v1391 = vmul.f32 %v1390, 0.6931472
      %v1392 = vmul.f32 -0.5, %v1288
      %v1393 = vadd.f32 %v1392, 1.0
      %v1394 = vmul.f32 %v1393, %v1288
      %v1395 = vand.u32 2147483647, %v1288
      %vm1396 = vcmp.lt.f32.partialorder %v1395, 0.0004427343
      %v1397 = vsel %vm1396, %v1394, %v1391
      %v1398 = vadd.f32 %v1290, 1.0
      %v1399 = vlog2.pop %v1398
      %v1400 = vmul.f32 %v1399, 0.6931472
      %v1401 = vmul.f32 -0.5, %v1290
      %v1402 = vadd.f32 %v1401, 1.0
      %v1403 = vmul.f32 %v1402, %v1290
      %v1404 = vand.u32 2147483647, %v1290
      %vm1405 = vcmp.lt.f32.partialorder %v1404, 0.0004427343
      %v1406 = vsel %vm1405, %v1403, %v1400
      %v1407 = vadd.f32 %v1292, 1.0
      %v1408 = vlog2.pop %v1407
      %v1409 = vmul.f32 %v1408, 0.6931472
      %v1410 = vmul.f32 -0.5, %v1292
      %v1411 = vadd.f32 %v1410, 1.0
      %v1412 = vmul.f32 %v1411, %v1292
      %v1413 = vand.u32 2147483647, %v1292
      %vm1414 = vcmp.lt.f32.partialorder %v1413, 0.0004427343
      %v1415 = vsel %vm1414, %v1412, %v1409
      %v1416 = vadd.f32 %v1294, 1.0
      %v1417 = vlog2.pop %v1416
      %v1418 = vmul.f32 %v1417, 0.6931472
      %v1419 = vmul.f32 -0.5, %v1294
      %v1420 = vadd.f32 %v1419, 1.0
      %v1421 = vmul.f32 %v1420, %v1294
      %v1422 = vand.u32 2147483647, %v1294
      %vm1423 = vcmp.lt.f32.partialorder %v1422, 0.0004427343
      %v1424 = vsel %vm1423, %v1421, %v1418
      %v1425 = vadd.f32 %v1296, 1.0
      %v1426 = vlog2.pop %v1425
      %v1427 = vmul.f32 %v1426, 0.6931472
      %v1428 = vmul.f32 -0.5, %v1296
      %v1429 = vadd.f32 %v1428, 1.0
      %v1430 = vmul.f32 %v1429, %v1296
      %v1431 = vand.u32 2147483647, %v1296
      %vm1432 = vcmp.lt.f32.partialorder %v1431, 0.0004427343
      %v1433 = vsel %vm1432, %v1430, %v1427
      %v1434 = vadd.f32 %v1298, 1.0
      %v1435 = vlog2.pop %v1434
      %v1436 = vmul.f32 %v1435, 0.6931472
      %v1437 = vmul.f32 -0.5, %v1298
      %v1438 = vadd.f32 %v1437, 1.0
      %v1439 = vmul.f32 %v1438, %v1298
      %v1440 = vand.u32 2147483647, %v1298
      %vm1441 = vcmp.lt.f32.partialorder %v1440, 0.0004427343
      %v1442 = vsel %vm1441, %v1439, %v1436
      %v1443 = vadd.f32 %v1219, %v1307
      %v1444 = vadd.f32 %v1220, %v1316
      %v1445 = vadd.f32 %v1221, %v1325
      %v1446 = vadd.f32 %v1222, %v1334
      %v1447 = vadd.f32 %v1223, %v1343
      %v1448 = vadd.f32 %v1224, %v1352
      %v1449 = vadd.f32 %v1225, %v1361
      %v1450 = vadd.f32 %v1226, %v1370
      %v1451 = vadd.f32 %v1227, %v1379
      %v1452 = vadd.f32 %v1228, %v1388
      %v1453 = vadd.f32 %v1229, %v1397
      %v1454 = vadd.f32 %v1230, %v1406
      %v1455 = vadd.f32 %v1231, %v1415
      %v1456 = vadd.f32 %v1232, %v1424
      %v1457 = vadd.f32 %v1233, %v1433
      %v1458 = vadd.f32 %v1234, %v1442
      %v1459 = vld [vmem:[%s13] sm:$0xff]
      %v1460 = vld [vmem:[%s13 + $0x8] sm:$0xff]
      %v1461 = vld [vmem:[%s13 + $0x10] sm:$0xff]
      %v1462 = vld [vmem:[%s13 + $0x18] sm:$0xff]
      %v1463 = vld [vmem:[%s13 + $0x20] sm:$0xff]
      %v1464 = vld [vmem:[%s13 + $0x28] sm:$0xff]
      %v1465 = vld [vmem:[%s13 + $0x30] sm:$0xff]
      %v1466 = vld [vmem:[%s13 + $0x38] sm:$0xff]
      %v1467 = vld [vmem:[%s13 + $0x40] sm:$0xff]
      %v1468 = vld [vmem:[%s13 + $0x48] sm:$0xff]
      %v1469 = vld [vmem:[%s13 + $0x50] sm:$0xff]
      %v1470 = vld [vmem:[%s13 + $0x58] sm:$0xff]
      %v1471 = vld [vmem:[%s13 + $0x60] sm:$0xff]
      %v1472 = vld [vmem:[%s13 + $0x68] sm:$0xff]
      %v1473 = vld [vmem:[%s13 + $0x70] sm:$0xff]
      %v1474 = vld [vmem:[%s13 + $0x78] sm:$0xff]
      %v1475 = vld [vmem:[%s13 + $0x80] sm:$0xff]
      %v1476 = vld [vmem:[%s13 + $0x88] sm:$0xff]
      %v1477 = vld [vmem:[%s13 + $0x90] sm:$0xff]
      %v1478 = vld [vmem:[%s13 + $0x98] sm:$0xff]
      %v1479 = vld [vmem:[%s13 + $0xa0] sm:$0xff]
      %v1480 = vld [vmem:[%s13 + $0xa8] sm:$0xff]
      %v1481 = vld [vmem:[%s13 + $0xb0] sm:$0xff]
      %v1482 = vld [vmem:[%s13 + $0xb8] sm:$0xff]
      %v1483 = vld [vmem:[%s13 + $0xc0] sm:$0xff]
      %v1484 = vld [vmem:[%s13 + $0xc8] sm:$0xff]
      %v1485 = vld [vmem:[%s13 + $0xd0] sm:$0xff]
      %v1486 = vld [vmem:[%s13 + $0xd8] sm:$0xff]
      %v1487 = vld [vmem:[%s13 + $0xe0] sm:$0xff]
      %v1488 = vld [vmem:[%s13 + $0xe8] sm:$0xff]
      %v1489 = vld [vmem:[%s13 + $0xf0] sm:$0xff]
      %v1490 = vld [vmem:[%s13 + $0xf8] sm:$0xff]
      %v1491 = vld [vmem:[%s13 + $0x100] sm:$0xff]
      %v1492 = vld [vmem:[%s13 + $0x108] sm:$0xff]
      %v1493 = vld [vmem:[%s13 + $0x110] sm:$0xff]
      %v1494 = vld [vmem:[%s13 + $0x118] sm:$0xff]
      %v1495 = vld [vmem:[%s13 + $0x120] sm:$0xff]
      %v1496 = vld [vmem:[%s13 + $0x128] sm:$0xff]
      %v1497 = vld [vmem:[%s13 + $0x130] sm:$0xff]
      %v1498 = vld [vmem:[%s13 + $0x138] sm:$0xff]
      %v1499 = vld [vmem:[%s13 + $0x140] sm:$0xff]
      %v1500 = vld [vmem:[%s13 + $0x148] sm:$0xff]
      %v1501 = vld [vmem:[%s13 + $0x150] sm:$0xff]
      %v1502 = vld [vmem:[%s13 + $0x158] sm:$0xff]
      %v1503 = vld [vmem:[%s13 + $0x160] sm:$0xff]
      %v1504 = vld [vmem:[%s13 + $0x168] sm:$0xff]
      %v1505 = vld [vmem:[%s13 + $0x170] sm:$0xff]
      %v1506 = vld [vmem:[%s13 + $0x178] sm:$0xff]
      %v1507 = vld [vmem:[%s13 + $0x180] sm:$0xff]
      %v1508 = vld [vmem:[%s13 + $0x188] sm:$0xff]
      %v1509 = vld [vmem:[%s13 + $0x190] sm:$0xff]
      %v1510 = vld [vmem:[%s13 + $0x198] sm:$0xff]
      %v1511 = vld [vmem:[%s13 + $0x1a0] sm:$0xff]
      %v1512 = vld [vmem:[%s13 + $0x1a8] sm:$0xff]
      %v1513 = vld [vmem:[%s13 + $0x1b0] sm:$0xff]
      %v1514 = vld [vmem:[%s13 + $0x1b8] sm:$0xff]
      %v1515 = vld [vmem:[%s13 + $0x1c0] sm:$0xff]
      %v1516 = vld [vmem:[%s13 + $0x1c8] sm:$0xff]
      %v1517 = vld [vmem:[%s13 + $0x1d0] sm:$0xff]
      %v1518 = vld [vmem:[%s13 + $0x1d8] sm:$0xff]
      %v1519 = vld [vmem:[%s13 + $0x1e0] sm:$0xff]
      %v1520 = vld [vmem:[%s13 + $0x1e8] sm:$0xff]
      %v1521 = vld [vmem:[%s13 + $0x1f0] sm:$0xff]
      %v1522 = vld [vmem:[%s13 + $0x1f8] sm:$0xff]
      %v1523 = vunpack.c.l.bf16 %v1459
      %v1524 = vunpack.c.h.bf16 %v1459
      %v1525 = vunpack.c.l.bf16 %v1460
      %v1526 = vunpack.c.h.bf16 %v1460
      %v1527 = vunpack.c.l.bf16 %v1461
      %v1528 = vunpack.c.h.bf16 %v1461
      %v1529 = vunpack.c.l.bf16 %v1462
      %v1530 = vunpack.c.h.bf16 %v1462
      %v1531 = vunpack.c.l.bf16 %v1463
      %v1532 = vunpack.c.h.bf16 %v1463
      %v1533 = vunpack.c.l.bf16 %v1464
      %v1534 = vunpack.c.h.bf16 %v1464
      %v1535 = vunpack.c.l.bf16 %v1465
      %v1536 = vunpack.c.h.bf16 %v1465
      %v1537 = vunpack.c.l.bf16 %v1466
      %v1538 = vunpack.c.h.bf16 %v1466
      %v1539 = vunpack.c.l.bf16 %v1467
      %v1540 = vunpack.c.h.bf16 %v1467
      %v1541 = vunpack.c.l.bf16 %v1468
      %v1542 = vunpack.c.h.bf16 %v1468
      %v1543 = vunpack.c.l.bf16 %v1469
      %v1544 = vunpack.c.h.bf16 %v1469
      %v1545 = vunpack.c.l.bf16 %v1470
      %v1546 = vunpack.c.h.bf16 %v1470
      %v1547 = vunpack.c.l.bf16 %v1471
      %v1548 = vunpack.c.h.bf16 %v1471
      %v1549 = vunpack.c.l.bf16 %v1472
      %v1550 = vunpack.c.h.bf16 %v1472
      %v1551 = vunpack.c.l.bf16 %v1473
      %v1552 = vunpack.c.h.bf16 %v1473
      %v1553 = vunpack.c.l.bf16 %v1474
      %v1554 = vunpack.c.h.bf16 %v1474
      %v1555 = vunpack.c.l.bf16 %v1475
      %v1556 = vunpack.c.h.bf16 %v1475
      %v1557 = vunpack.c.l.bf16 %v1476
      %v1558 = vunpack.c.h.bf16 %v1476
      %v1559 = vunpack.c.l.bf16 %v1477
      %v1560 = vunpack.c.h.bf16 %v1477
      %v1561 = vunpack.c.l.bf16 %v1478
      %v1562 = vunpack.c.h.bf16 %v1478
      %v1563 = vunpack.c.l.bf16 %v1479
      %v1564 = vunpack.c.h.bf16 %v1479
      %v1565 = vunpack.c.l.bf16 %v1480
      %v1566 = vunpack.c.h.bf16 %v1480
      %v1567 = vunpack.c.l.bf16 %v1481
      %v1568 = vunpack.c.h.bf16 %v1481
      %v1569 = vunpack.c.l.bf16 %v1482
      %v1570 = vunpack.c.h.bf16 %v1482
      %v1571 = vunpack.c.l.bf16 %v1483
      %v1572 = vunpack.c.h.bf16 %v1483
      %v1573 = vunpack.c.l.bf16 %v1484
      %v1574 = vunpack.c.h.bf16 %v1484
      %v1575 = vunpack.c.l.bf16 %v1485
      %v1576 = vunpack.c.h.bf16 %v1485
      %v1577 = vunpack.c.l.bf16 %v1486
      %v1578 = vunpack.c.h.bf16 %v1486
      %v1579 = vunpack.c.l.bf16 %v1487
      %v1580 = vunpack.c.h.bf16 %v1487
      %v1581 = vunpack.c.l.bf16 %v1488
      %v1582 = vunpack.c.h.bf16 %v1488
      %v1583 = vunpack.c.l.bf16 %v1489
      %v1584 = vunpack.c.h.bf16 %v1489
      %v1585 = vunpack.c.l.bf16 %v1490
      %v1586 = vunpack.c.h.bf16 %v1490
      %v1587 = vunpack.c.l.bf16 %v1491
      %v1588 = vunpack.c.h.bf16 %v1491
      %v1589 = vunpack.c.l.bf16 %v1492
      %v1590 = vunpack.c.h.bf16 %v1492
      %v1591 = vunpack.c.l.bf16 %v1493
      %v1592 = vunpack.c.h.bf16 %v1493
      %v1593 = vunpack.c.l.bf16 %v1494
      %v1594 = vunpack.c.h.bf16 %v1494
      %v1595 = vunpack.c.l.bf16 %v1495
      %v1596 = vunpack.c.h.bf16 %v1495
      %v1597 = vunpack.c.l.bf16 %v1496
      %v1598 = vunpack.c.h.bf16 %v1496
      %v1599 = vunpack.c.l.bf16 %v1497
      %v1600 = vunpack.c.h.bf16 %v1497
      %v1601 = vunpack.c.l.bf16 %v1498
      %v1602 = vunpack.c.h.bf16 %v1498
      %v1603 = vunpack.c.l.bf16 %v1499
      %v1604 = vunpack.c.h.bf16 %v1499
      %v1605 = vunpack.c.l.bf16 %v1500
      %v1606 = vunpack.c.h.bf16 %v1500
      %v1607 = vunpack.c.l.bf16 %v1501
      %v1608 = vunpack.c.h.bf16 %v1501
      %v1609 = vunpack.c.l.bf16 %v1502
      %v1610 = vunpack.c.h.bf16 %v1502
      %v1611 = vunpack.c.l.bf16 %v1503
      %v1612 = vunpack.c.h.bf16 %v1503
      %v1613 = vunpack.c.l.bf16 %v1504
      %v1614 = vunpack.c.h.bf16 %v1504
      %v1615 = vunpack.c.l.bf16 %v1505
      %v1616 = vunpack.c.h.bf16 %v1505
      %v1617 = vunpack.c.l.bf16 %v1506
      %v1618 = vunpack.c.h.bf16 %v1506
      %v1619 = vunpack.c.l.bf16 %v1507
      %v1620 = vunpack.c.h.bf16 %v1507
      %v1621 = vunpack.c.l.bf16 %v1508
      %v1622 = vunpack.c.h.bf16 %v1508
      %v1623 = vunpack.c.l.bf16 %v1509
      %v1624 = vunpack.c.h.bf16 %v1509
      %v1625 = vunpack.c.l.bf16 %v1510
      %v1626 = vunpack.c.h.bf16 %v1510
      %v1627 = vunpack.c.l.bf16 %v1511
      %v1628 = vunpack.c.h.bf16 %v1511
      %v1629 = vunpack.c.l.bf16 %v1512
      %v1630 = vunpack.c.h.bf16 %v1512
      %v1631 = vunpack.c.l.bf16 %v1513
      %v1632 = vunpack.c.h.bf16 %v1513
      %v1633 = vunpack.c.l.bf16 %v1514
      %v1634 = vunpack.c.h.bf16 %v1514
      %v1635 = vunpack.c.l.bf16 %v1515
      %v1636 = vunpack.c.h.bf16 %v1515
      %v1637 = vunpack.c.l.bf16 %v1516
      %v1638 = vunpack.c.h.bf16 %v1516
      %v1639 = vunpack.c.l.bf16 %v1517
      %v1640 = vunpack.c.h.bf16 %v1517
      %v1641 = vunpack.c.l.bf16 %v1518
      %v1642 = vunpack.c.h.bf16 %v1518
      %v1643 = vunpack.c.l.bf16 %v1519
      %v1644 = vunpack.c.h.bf16 %v1519
      %v1645 = vunpack.c.l.bf16 %v1520
      %v1646 = vunpack.c.h.bf16 %v1520
      %v1647 = vunpack.c.l.bf16 %v1521
      %v1648 = vunpack.c.h.bf16 %v1521
      %v1649 = vunpack.c.l.bf16 %v1522
      %v1650 = vunpack.c.h.bf16 %v1522
      %1651 = vmatpush.msra.mxu0 %v1643
      %1652 = vmatpush.msra.mxu0 %v1635
      %1653 = vmatpush.msra.mxu0 %v1627
      %1654 = vmatpush.msra.mxu0 %v1619
      %1655 = vmatpush.msra.mxu0 %v1611
      %1656 = vmatpush.msra.mxu0 %v1603
      %1657 = vmatpush.msra.mxu0 %v1595
      %1658 = vmatpush.msra.mxu0 %v1587
      %1659 = vmatpush.msra.mxu0 %v1579
      %1660 = vmatpush.msra.mxu0 %v1571
      %1661 = vmatpush.msra.mxu0 %v1563
      %1662 = vmatpush.msra.mxu0 %v1555
      %1663 = vmatpush.msra.mxu0 %v1547
      %1664 = vmatpush.msra.mxu0 %v1539
      %1665 = vmatpush.msra.mxu0 %v1531
      %1666 = vmatpush.msra.mxu0 %v1523
      %1667 = vmatmul.f32.gmra.mxu0 %v1443
      %v1668 = vpop.f32.mrf.mxu0
      %v1669 = vadd.f32 0.0, %v1668
      %1670 = vmatmul.f32.gmra.mxu0 %v1444
      %v1671 = vpop.f32.mrf.mxu0
      %v1672 = vadd.f32 0.0, %v1671
      %1673 = vmatmul.f32.gmra.mxu0 %v1445
      %v1674 = vpop.f32.mrf.mxu0
      %v1675 = vadd.f32 0.0, %v1674
      %1676 = vmatmul.f32.gmra.mxu0 %v1446
      %v1677 = vpop.f32.mrf.mxu0
      %v1678 = vadd.f32 0.0, %v1677
      %1679 = vmatmul.f32.gmra.mxu0 %v1447
      %v1680 = vpop.f32.mrf.mxu0
      %v1681 = vadd.f32 0.0, %v1680
      %1682 = vmatmul.f32.gmra.mxu0 %v1448
      %v1683 = vpop.f32.mrf.mxu0
      %v1684 = vadd.f32 0.0, %v1683
      %1685 = vmatmul.f32.gmra.mxu0 %v1449
      %v1686 = vpop.f32.mrf.mxu0
      %v1687 = vadd.f32 0.0, %v1686
      %1688 = vmatmul.f32.gmra.mxu0 %v1450
      %v1689 = vpop.f32.mrf.mxu0
      %v1690 = vadd.f32 0.0, %v1689
      %1691 = vmatmul.f32.gmra.mxu0 %v1451
      %v1692 = vpop.f32.mrf.mxu0
      %v1693 = vadd.f32 0.0, %v1692
      %1694 = vmatmul.f32.gmra.mxu0 %v1452
      %v1695 = vpop.f32.mrf.mxu0
      %v1696 = vadd.f32 0.0, %v1695
      %1697 = vmatmul.f32.gmra.mxu0 %v1453
      %v1698 = vpop.f32.mrf.mxu0
      %v1699 = vadd.f32 0.0, %v1698
      %1700 = vmatmul.f32.gmra.mxu0 %v1454
      %v1701 = vpop.f32.mrf.mxu0
      %v1702 = vadd.f32 0.0, %v1701
      %1703 = vmatmul.f32.gmra.mxu0 %v1455
      %v1704 = vpop.f32.mrf.mxu0
      %v1705 = vadd.f32 0.0, %v1704
      %1706 = vmatmul.f32.gmra.mxu0 %v1456
      %v1707 = vpop.f32.mrf.mxu0
      %v1708 = vadd.f32 0.0, %v1707
      %1709 = vmatmul.f32.gmra.mxu0 %v1457
      %v1710 = vpop.f32.mrf.mxu0
      %v1711 = vadd.f32 0.0, %v1710
      %1712 = vmatmul.f32.gmra.mxu0 %v1458
      %v1713 = vpop.f32.mrf.mxu0
      %v1714 = vadd.f32 0.0, %v1713
      %1715 = vdwg.mxu0
      %1716 = vmatpush.msra.mxu0 %v1644
      %1717 = vmatpush.msra.mxu0 %v1636
      %1718 = vmatpush.msra.mxu0 %v1628
      %1719 = vmatpush.msra.mxu0 %v1620
      %1720 = vmatpush.msra.mxu0 %v1612
      %1721 = vmatpush.msra.mxu0 %v1604
      %1722 = vmatpush.msra.mxu0 %v1596
      %1723 = vmatpush.msra.mxu0 %v1588
      %1724 = vmatpush.msra.mxu0 %v1580
      %1725 = vmatpush.msra.mxu0 %v1572
      %1726 = vmatpush.msra.mxu0 %v1564
      %1727 = vmatpush.msra.mxu0 %v1556
      %1728 = vmatpush.msra.mxu0 %v1548
      %1729 = vmatpush.msra.mxu0 %v1540
      %1730 = vmatpush.msra.mxu0 %v1532
      %1731 = vmatpush.msra.mxu0 %v1524
      %1732 = vmatmul.f32.gmra.mxu0 %v1443
      %v1733 = vpop.f32.mrf.mxu0
      %v1734 = vadd.f32 0.0, %v1733
      %1735 = vmatmul.f32.gmra.mxu0 %v1444
      %v1736 = vpop.f32.mrf.mxu0
      %v1737 = vadd.f32 0.0, %v1736
      %1738 = vmatmul.f32.gmra.mxu0 %v1445
      %v1739 = vpop.f32.mrf.mxu0
      %v1740 = vadd.f32 0.0, %v1739
      %1741 = vmatmul.f32.gmra.mxu0 %v1446
      %v1742 = vpop.f32.mrf.mxu0
      %v1743 = vadd.f32 0.0, %v1742
      %1744 = vmatmul.f32.gmra.mxu0 %v1447
      %v1745 = vpop.f32.mrf.mxu0
      %v1746 = vadd.f32 0.0, %v1745
      %1747 = vmatmul.f32.gmra.mxu0 %v1448
      %v1748 = vpop.f32.mrf.mxu0
      %v1749 = vadd.f32 0.0, %v1748
      %1750 = vmatmul.f32.gmra.mxu0 %v1449
      %v1751 = vpop.f32.mrf.mxu0
      %v1752 = vadd.f32 0.0, %v1751
      %1753 = vmatmul.f32.gmra.mxu0 %v1450
      %v1754 = vpop.f32.mrf.mxu0
      %v1755 = vadd.f32 0.0, %v1754
      %1756 = vmatmul.f32.gmra.mxu0 %v1451
      %v1757 = vpop.f32.mrf.mxu0
      %v1758 = vadd.f32 0.0, %v1757
      %1759 = vmatmul.f32.gmra.mxu0 %v1452
      %v1760 = vpop.f32.mrf.mxu0
      %v1761 = vadd.f32 0.0, %v1760
      %1762 = vmatmul.f32.gmra.mxu0 %v1453
      %v1763 = vpop.f32.mrf.mxu0
      %v1764 = vadd.f32 0.0, %v1763
      %1765 = vmatmul.f32.gmra.mxu0 %v1454
      %v1766 = vpop.f32.mrf.mxu0
      %v1767 = vadd.f32 0.0, %v1766
      %1768 = vmatmul.f32.gmra.mxu0 %v1455
      %v1769 = vpop.f32.mrf.mxu0
      %v1770 = vadd.f32 0.0, %v1769
      %1771 = vmatmul.f32.gmra.mxu0 %v1456
      %v1772 = vpop.f32.mrf.mxu0
      %v1773 = vadd.f32 0.0, %v1772
      %1774 = vmatmul.f32.gmra.mxu0 %v1457
      %v1775 = vpop.f32.mrf.mxu0
      %v1776 = vadd.f32 0.0, %v1775
      %1777 = vmatmul.f32.gmra.mxu0 %v1458
      %v1778 = vpop.f32.mrf.mxu0
      %v1779 = vadd.f32 0.0, %v1778
      %1780 = vdwg.mxu0
      %1781 = vmatpush.msra.mxu0 %v1645
      %1782 = vmatpush.msra.mxu0 %v1637
      %1783 = vmatpush.msra.mxu0 %v1629
      %1784 = vmatpush.msra.mxu0 %v1621
      %1785 = vmatpush.msra.mxu0 %v1613
      %1786 = vmatpush.msra.mxu0 %v1605
      %1787 = vmatpush.msra.mxu0 %v1597
      %1788 = vmatpush.msra.mxu0 %v1589
      %1789 = vmatpush.msra.mxu0 %v1581
      %1790 = vmatpush.msra.mxu0 %v1573
      %1791 = vmatpush.msra.mxu0 %v1565
      %1792 = vmatpush.msra.mxu0 %v1557
      %1793 = vmatpush.msra.mxu0 %v1549
      %1794 = vmatpush.msra.mxu0 %v1541
      %1795 = vmatpush.msra.mxu0 %v1533
      %1796 = vmatpush.msra.mxu0 %v1525
      %1797 = vmatmul.f32.gmra.mxu0 %v1443
      %v1798 = vpop.f32.mrf.mxu0
      %v1799 = vadd.f32 0.0, %v1798
      %1800 = vmatmul.f32.gmra.mxu0 %v1444
      %v1801 = vpop.f32.mrf.mxu0
      %v1802 = vadd.f32 0.0, %v1801
      %1803 = vmatmul.f32.gmra.mxu0 %v1445
      %v1804 = vpop.f32.mrf.mxu0
      %v1805 = vadd.f32 0.0, %v1804
      %1806 = vmatmul.f32.gmra.mxu0 %v1446
      %v1807 = vpop.f32.mrf.mxu0
      %v1808 = vadd.f32 0.0, %v1807
      %1809 = vmatmul.f32.gmra.mxu0 %v1447
      %v1810 = vpop.f32.mrf.mxu0
      %v1811 = vadd.f32 0.0, %v1810
      %1812 = vmatmul.f32.gmra.mxu0 %v1448
      %v1813 = vpop.f32.mrf.mxu0
      %v1814 = vadd.f32 0.0, %v1813
      %1815 = vmatmul.f32.gmra.mxu0 %v1449
      %v1816 = vpop.f32.mrf.mxu0
      %v1817 = vadd.f32 0.0, %v1816
      %1818 = vmatmul.f32.gmra.mxu0 %v1450
      %v1819 = vpop.f32.mrf.mxu0
      %v1820 = vadd.f32 0.0, %v1819
      %1821 = vmatmul.f32.gmra.mxu0 %v1451
      %v1822 = vpop.f32.mrf.mxu0
      %v1823 = vadd.f32 0.0, %v1822
      %1824 = vmatmul.f32.gmra.mxu0 %v1452
      %v1825 = vpop.f32.mrf.mxu0
      %v1826 = vadd.f32 0.0, %v1825
      %1827 = vmatmul.f32.gmra.mxu0 %v1453
      %v1828 = vpop.f32.mrf.mxu0
      %v1829 = vadd.f32 0.0, %v1828
      %1830 = vmatmul.f32.gmra.mxu0 %v1454
      %v1831 = vpop.f32.mrf.mxu0
      %v1832 = vadd.f32 0.0, %v1831
      %1833 = vmatmul.f32.gmra.mxu0 %v1455
      %v1834 = vpop.f32.mrf.mxu0
      %v1835 = vadd.f32 0.0, %v1834
      %1836 = vmatmul.f32.gmra.mxu0 %v1456
      %v1837 = vpop.f32.mrf.mxu0
      %v1838 = vadd.f32 0.0, %v1837
      %1839 = vmatmul.f32.gmra.mxu0 %v1457
      %v1840 = vpop.f32.mrf.mxu0
      %v1841 = vadd.f32 0.0, %v1840
      %1842 = vmatmul.f32.gmra.mxu0 %v1458
      %v1843 = vpop.f32.mrf.mxu0
      %v1844 = vadd.f32 0.0, %v1843
      %1845 = vdwg.mxu0
      %1846 = vmatpush.msra.mxu0 %v1646
      %1847 = vmatpush.msra.mxu0 %v1638
      %1848 = vmatpush.msra.mxu0 %v1630
      %1849 = vmatpush.msra.mxu0 %v1622
      %1850 = vmatpush.msra.mxu0 %v1614
      %1851 = vmatpush.msra.mxu0 %v1606
      %1852 = vmatpush.msra.mxu0 %v1598
      %1853 = vmatpush.msra.mxu0 %v1590
      %1854 = vmatpush.msra.mxu0 %v1582
      %1855 = vmatpush.msra.mxu0 %v1574
      %1856 = vmatpush.msra.mxu0 %v1566
      %1857 = vmatpush.msra.mxu0 %v1558
      %1858 = vmatpush.msra.mxu0 %v1550
      %1859 = vmatpush.msra.mxu0 %v1542
      %1860 = vmatpush.msra.mxu0 %v1534
      %1861 = vmatpush.msra.mxu0 %v1526
      %1862 = vmatmul.f32.gmra.mxu0 %v1443
      %v1863 = vpop.f32.mrf.mxu0
      %v1864 = vadd.f32 0.0, %v1863
      %1865 = vmatmul.f32.gmra.mxu0 %v1444
      %v1866 = vpop.f32.mrf.mxu0
      %v1867 = vadd.f32 0.0, %v1866
      %1868 = vmatmul.f32.gmra.mxu0 %v1445
      %v1869 = vpop.f32.mrf.mxu0
      %v1870 = vadd.f32 0.0, %v1869
      %1871 = vmatmul.f32.gmra.mxu0 %v1446
      %v1872 = vpop.f32.mrf.mxu0
      %v1873 = vadd.f32 0.0, %v1872
      %1874 = vmatmul.f32.gmra.mxu0 %v1447
      %v1875 = vpop.f32.mrf.mxu0
      %v1876 = vadd.f32 0.0, %v1875
      %1877 = vmatmul.f32.gmra.mxu0 %v1448
      %v1878 = vpop.f32.mrf.mxu0
      %v1879 = vadd.f32 0.0, %v1878
      %1880 = vmatmul.f32.gmra.mxu0 %v1449
      %v1881 = vpop.f32.mrf.mxu0
      %v1882 = vadd.f32 0.0, %v1881
      %1883 = vmatmul.f32.gmra.mxu0 %v1450
      %v1884 = vpop.f32.mrf.mxu0
      %v1885 = vadd.f32 0.0, %v1884
      %1886 = vmatmul.f32.gmra.mxu0 %v1451
      %v1887 = vpop.f32.mrf.mxu0
      %v1888 = vadd.f32 0.0, %v1887
      %1889 = vmatmul.f32.gmra.mxu0 %v1452
      %v1890 = vpop.f32.mrf.mxu0
      %v1891 = vadd.f32 0.0, %v1890
      %1892 = vmatmul.f32.gmra.mxu0 %v1453
      %v1893 = vpop.f32.mrf.mxu0
      %v1894 = vadd.f32 0.0, %v1893
      %1895 = vmatmul.f32.gmra.mxu0 %v1454
      %v1896 = vpop.f32.mrf.mxu0
      %v1897 = vadd.f32 0.0, %v1896
      %1898 = vmatmul.f32.gmra.mxu0 %v1455
      %v1899 = vpop.f32.mrf.mxu0
      %v1900 = vadd.f32 0.0, %v1899
      %1901 = vmatmul.f32.gmra.mxu0 %v1456
      %v1902 = vpop.f32.mrf.mxu0
      %v1903 = vadd.f32 0.0, %v1902
      %1904 = vmatmul.f32.gmra.mxu0 %v1457
      %v1905 = vpop.f32.mrf.mxu0
      %v1906 = vadd.f32 0.0, %v1905
      %1907 = vmatmul.f32.gmra.mxu0 %v1458
      %v1908 = vpop.f32.mrf.mxu0
      %v1909 = vadd.f32 0.0, %v1908
      %1910 = vdwg.mxu0
      %1911 = vmatpush.msra.mxu0 %v1647
      %1912 = vmatpush.msra.mxu0 %v1639
      %1913 = vmatpush.msra.mxu0 %v1631
      %1914 = vmatpush.msra.mxu0 %v1623
      %1915 = vmatpush.msra.mxu0 %v1615
      %1916 = vmatpush.msra.mxu0 %v1607
      %1917 = vmatpush.msra.mxu0 %v1599
      %1918 = vmatpush.msra.mxu0 %v1591
      %1919 = vmatpush.msra.mxu0 %v1583
      %1920 = vmatpush.msra.mxu0 %v1575
      %1921 = vmatpush.msra.mxu0 %v1567
      %1922 = vmatpush.msra.mxu0 %v1559
      %1923 = vmatpush.msra.mxu0 %v1551
      %1924 = vmatpush.msra.mxu0 %v1543
      %1925 = vmatpush.msra.mxu0 %v1535
      %1926 = vmatpush.msra.mxu0 %v1527
      %1927 = vmatmul.f32.gmra.mxu0 %v1443
      %v1928 = vpop.f32.mrf.mxu0
      %v1929 = vadd.f32 0.0, %v1928
      %1930 = vmatmul.f32.gmra.mxu0 %v1444
      %v1931 = vpop.f32.mrf.mxu0
      %v1932 = vadd.f32 0.0, %v1931
      %1933 = vmatmul.f32.gmra.mxu0 %v1445
      %v1934 = vpop.f32.mrf.mxu0
      %v1935 = vadd.f32 0.0, %v1934
      %1936 = vmatmul.f32.gmra.mxu0 %v1446
      %v1937 = vpop.f32.mrf.mxu0
      %v1938 = vadd.f32 0.0, %v1937
      %1939 = vmatmul.f32.gmra.mxu0 %v1447
      %v1940 = vpop.f32.mrf.mxu0
      %v1941 = vadd.f32 0.0, %v1940
      %1942 = vmatmul.f32.gmra.mxu0 %v1448
      %v1943 = vpop.f32.mrf.mxu0
      %v1944 = vadd.f32 0.0, %v1943
      %1945 = vmatmul.f32.gmra.mxu0 %v1449
      %v1946 = vpop.f32.mrf.mxu0
      %v1947 = vadd.f32 0.0, %v1946
      %1948 = vmatmul.f32.gmra.mxu0 %v1450
      %v1949 = vpop.f32.mrf.mxu0
      %v1950 = vadd.f32 0.0, %v1949
      %1951 = vmatmul.f32.gmra.mxu0 %v1451
      %v1952 = vpop.f32.mrf.mxu0
      %v1953 = vadd.f32 0.0, %v1952
      %1954 = vmatmul.f32.gmra.mxu0 %v1452
      %v1955 = vpop.f32.mrf.mxu0
      %v1956 = vadd.f32 0.0, %v1955
      %1957 = vmatmul.f32.gmra.mxu0 %v1453
      %v1958 = vpop.f32.mrf.mxu0
      %v1959 = vadd.f32 0.0, %v1958
      %1960 = vmatmul.f32.gmra.mxu0 %v1454
      %v1961 = vpop.f32.mrf.mxu0
      %v1962 = vadd.f32 0.0, %v1961
      %1963 = vmatmul.f32.gmra.mxu0 %v1455
      %v1964 = vpop.f32.mrf.mxu0
      %v1965 = vadd.f32 0.0, %v1964
      %1966 = vmatmul.f32.gmra.mxu0 %v1456
      %v1967 = vpop.f32.mrf.mxu0
      %v1968 = vadd.f32 0.0, %v1967
      %1969 = vmatmul.f32.gmra.mxu0 %v1457
      %v1970 = vpop.f32.mrf.mxu0
      %v1971 = vadd.f32 0.0, %v1970
      %1972 = vmatmul.f32.gmra.mxu0 %v1458
      %v1973 = vpop.f32.mrf.mxu0
      %v1974 = vadd.f32 0.0, %v1973
      %1975 = vdwg.mxu0
      %1976 = vmatpush.msra.mxu0 %v1648
      %1977 = vmatpush.msra.mxu0 %v1640
      %1978 = vmatpush.msra.mxu0 %v1632
      %1979 = vmatpush.msra.mxu0 %v1624
      %1980 = vmatpush.msra.mxu0 %v1616
      %1981 = vmatpush.msra.mxu0 %v1608
      %1982 = vmatpush.msra.mxu0 %v1600
      %1983 = vmatpush.msra.mxu0 %v1592
      %1984 = vmatpush.msra.mxu0 %v1584
      %1985 = vmatpush.msra.mxu0 %v1576
      %1986 = vmatpush.msra.mxu0 %v1568
      %1987 = vmatpush.msra.mxu0 %v1560
      %1988 = vmatpush.msra.mxu0 %v1552
      %1989 = vmatpush.msra.mxu0 %v1544
      %1990 = vmatpush.msra.mxu0 %v1536
      %1991 = vmatpush.msra.mxu0 %v1528
      %1992 = vmatmul.f32.gmra.mxu0 %v1443
      %v1993 = vpop.f32.mrf.mxu0
      %v1994 = vadd.f32 0.0, %v1993
      %1995 = vmatmul.f32.gmra.mxu0 %v1444
      %v1996 = vpop.f32.mrf.mxu0
      %v1997 = vadd.f32 0.0, %v1996
      %1998 = vmatmul.f32.gmra.mxu0 %v1445
      %v1999 = vpop.f32.mrf.mxu0
      %v2000 = vadd.f32 0.0, %v1999
      %2001 = vmatmul.f32.gmra.mxu0 %v1446
      %v2002 = vpop.f32.mrf.mxu0
      %v2003 = vadd.f32 0.0, %v2002
      %2004 = vmatmul.f32.gmra.mxu0 %v1447
      %v2005 = vpop.f32.mrf.mxu0
      %v2006 = vadd.f32 0.0, %v2005
      %2007 = vmatmul.f32.gmra.mxu0 %v1448
      %v2008 = vpop.f32.mrf.mxu0
      %v2009 = vadd.f32 0.0, %v2008
      %2010 = vmatmul.f32.gmra.mxu0 %v1449
      %v2011 = vpop.f32.mrf.mxu0
      %v2012 = vadd.f32 0.0, %v2011
      %2013 = vmatmul.f32.gmra.mxu0 %v1450
      %v2014 = vpop.f32.mrf.mxu0
      %v2015 = vadd.f32 0.0, %v2014
      %2016 = vmatmul.f32.gmra.mxu0 %v1451
      %v2017 = vpop.f32.mrf.mxu0
      %v2018 = vadd.f32 0.0, %v2017
      %2019 = vmatmul.f32.gmra.mxu0 %v1452
      %v2020 = vpop.f32.mrf.mxu0
      %v2021 = vadd.f32 0.0, %v2020
      %2022 = vmatmul.f32.gmra.mxu0 %v1453
      %v2023 = vpop.f32.mrf.mxu0
      %v2024 = vadd.f32 0.0, %v2023
      %2025 = vmatmul.f32.gmra.mxu0 %v1454
      %v2026 = vpop.f32.mrf.mxu0
      %v2027 = vadd.f32 0.0, %v2026
      %2028 = vmatmul.f32.gmra.mxu0 %v1455
      %v2029 = vpop.f32.mrf.mxu0
      %v2030 = vadd.f32 0.0, %v2029
      %2031 = vmatmul.f32.gmra.mxu0 %v1456
      %v2032 = vpop.f32.mrf.mxu0
      %v2033 = vadd.f32 0.0, %v2032
      %2034 = vmatmul.f32.gmra.mxu0 %v1457
      %v2035 = vpop.f32.mrf.mxu0
      %v2036 = vadd.f32 0.0, %v2035
      %2037 = vmatmul.f32.gmra.mxu0 %v1458
      %v2038 = vpop.f32.mrf.mxu0
      %v2039 = vadd.f32 0.0, %v2038
      %2040 = vdwg.mxu0
      %2041 = vmatpush.msra.mxu0 %v1649
      %2042 = vmatpush.msra.mxu0 %v1641
      %2043 = vmatpush.msra.mxu0 %v1633
      %2044 = vmatpush.msra.mxu0 %v1625
      %2045 = vmatpush.msra.mxu0 %v1617
      %2046 = vmatpush.msra.mxu0 %v1609
      %2047 = vmatpush.msra.mxu0 %v1601
      %2048 = vmatpush.msra.mxu0 %v1593
      %2049 = vmatpush.msra.mxu0 %v1585
      %2050 = vmatpush.msra.mxu0 %v1577
      %2051 = vmatpush.msra.mxu0 %v1569
      %2052 = vmatpush.msra.mxu0 %v1561
      %2053 = vmatpush.msra.mxu0 %v1553
      %2054 = vmatpush.msra.mxu0 %v1545
      %2055 = vmatpush.msra.mxu0 %v1537
      %2056 = vmatpush.msra.mxu0 %v1529
      %2057 = vmatmul.f32.gmra.mxu0 %v1443
      %v2058 = vpop.f32.mrf.mxu0
      %v2059 = vadd.f32 0.0, %v2058
      %2060 = vmatmul.f32.gmra.mxu0 %v1444
      %v2061 = vpop.f32.mrf.mxu0
      %v2062 = vadd.f32 0.0, %v2061
      %2063 = vmatmul.f32.gmra.mxu0 %v1445
      %v2064 = vpop.f32.mrf.mxu0
      %v2065 = vadd.f32 0.0, %v2064
      %2066 = vmatmul.f32.gmra.mxu0 %v1446
      %v2067 = vpop.f32.mrf.mxu0
      %v2068 = vadd.f32 0.0, %v2067
      %2069 = vmatmul.f32.gmra.mxu0 %v1447
      %v2070 = vpop.f32.mrf.mxu0
      %v2071 = vadd.f32 0.0, %v2070
      %2072 = vmatmul.f32.gmra.mxu0 %v1448
      %v2073 = vpop.f32.mrf.mxu0
      %v2074 = vadd.f32 0.0, %v2073
      %2075 = vmatmul.f32.gmra.mxu0 %v1449
      %v2076 = vpop.f32.mrf.mxu0
      %v2077 = vadd.f32 0.0, %v2076
      %2078 = vmatmul.f32.gmra.mxu0 %v1450
      %v2079 = vpop.f32.mrf.mxu0
      %v2080 = vadd.f32 0.0, %v2079
      %2081 = vmatmul.f32.gmra.mxu0 %v1451
      %v2082 = vpop.f32.mrf.mxu0
      %v2083 = vadd.f32 0.0, %v2082
      %2084 = vmatmul.f32.gmra.mxu0 %v1452
      %v2085 = vpop.f32.mrf.mxu0
      %v2086 = vadd.f32 0.0, %v2085
      %2087 = vmatmul.f32.gmra.mxu0 %v1453
      %v2088 = vpop.f32.mrf.mxu0
      %v2089 = vadd.f32 0.0, %v2088
      %2090 = vmatmul.f32.gmra.mxu0 %v1454
      %v2091 = vpop.f32.mrf.mxu0
      %v2092 = vadd.f32 0.0, %v2091
      %2093 = vmatmul.f32.gmra.mxu0 %v1455
      %v2094 = vpop.f32.mrf.mxu0
      %v2095 = vadd.f32 0.0, %v2094
      %2096 = vmatmul.f32.gmra.mxu0 %v1456
      %v2097 = vpop.f32.mrf.mxu0
      %v2098 = vadd.f32 0.0, %v2097
      %2099 = vmatmul.f32.gmra.mxu0 %v1457
      %v2100 = vpop.f32.mrf.mxu0
      %v2101 = vadd.f32 0.0, %v2100
      %2102 = vmatmul.f32.gmra.mxu0 %v1458
      %v2103 = vpop.f32.mrf.mxu0
      %v2104 = vadd.f32 0.0, %v2103
      %2105 = vdwg.mxu0
      %2106 = vmatpush.msra.mxu0 %v1650
      %2107 = vmatpush.msra.mxu0 %v1642
      %2108 = vmatpush.msra.mxu0 %v1634
      %2109 = vmatpush.msra.mxu0 %v1626
      %2110 = vmatpush.msra.mxu0 %v1618
      %2111 = vmatpush.msra.mxu0 %v1610
      %2112 = vmatpush.msra.mxu0 %v1602
      %2113 = vmatpush.msra.mxu0 %v1594
      %2114 = vmatpush.msra.mxu0 %v1586
      %2115 = vmatpush.msra.mxu0 %v1578
      %2116 = vmatpush.msra.mxu0 %v1570
      %2117 = vmatpush.msra.mxu0 %v1562
      %2118 = vmatpush.msra.mxu0 %v1554
      %2119 = vmatpush.msra.mxu0 %v1546
      %2120 = vmatpush.msra.mxu0 %v1538
      %2121 = vmatpush.msra.mxu0 %v1530
      %2122 = vmatmul.f32.gmra.mxu0 %v1443
      %v2123 = vpop.f32.mrf.mxu0
      %v2124 = vadd.f32 0.0, %v2123
      %2125 = vmatmul.f32.gmra.mxu0 %v1444
      %v2126 = vpop.f32.mrf.mxu0
      %v2127 = vadd.f32 0.0, %v2126
      %2128 = vmatmul.f32.gmra.mxu0 %v1445
      %v2129 = vpop.f32.mrf.mxu0
      %v2130 = vadd.f32 0.0, %v2129
      %2131 = vmatmul.f32.gmra.mxu0 %v1446
      %v2132 = vpop.f32.mrf.mxu0
      %v2133 = vadd.f32 0.0, %v2132
      %2134 = vmatmul.f32.gmra.mxu0 %v1447
      %v2135 = vpop.f32.mrf.mxu0
      %v2136 = vadd.f32 0.0, %v2135
      %2137 = vmatmul.f32.gmra.mxu0 %v1448
      %v2138 = vpop.f32.mrf.mxu0
      %v2139 = vadd.f32 0.0, %v2138
      %2140 = vmatmul.f32.gmra.mxu0 %v1449
      %v2141 = vpop.f32.mrf.mxu0
      %v2142 = vadd.f32 0.0, %v2141
      %2143 = vmatmul.f32.gmra.mxu0 %v1450
      %v2144 = vpop.f32.mrf.mxu0
      %v2145 = vadd.f32 0.0, %v2144
      %2146 = vmatmul.f32.gmra.mxu0 %v1451
      %v2147 = vpop.f32.mrf.mxu0
      %v2148 = vadd.f32 0.0, %v2147
      %2149 = vmatmul.f32.gmra.mxu0 %v1452
      %v2150 = vpop.f32.mrf.mxu0
      %v2151 = vadd.f32 0.0, %v2150
      %2152 = vmatmul.f32.gmra.mxu0 %v1453
      %v2153 = vpop.f32.mrf.mxu0
      %v2154 = vadd.f32 0.0, %v2153
      %2155 = vmatmul.f32.gmra.mxu0 %v1454
      %v2156 = vpop.f32.mrf.mxu0
      %v2157 = vadd.f32 0.0, %v2156
      %2158 = vmatmul.f32.gmra.mxu0 %v1455
      %v2159 = vpop.f32.mrf.mxu0
      %v2160 = vadd.f32 0.0, %v2159
      %2161 = vmatmul.f32.gmra.mxu0 %v1456
      %v2162 = vpop.f32.mrf.mxu0
      %v2163 = vadd.f32 0.0, %v2162
      %2164 = vmatmul.f32.gmra.mxu0 %v1457
      %v2165 = vpop.f32.mrf.mxu0
      %v2166 = vadd.f32 0.0, %v2165
      %2167 = vmatmul.f32.gmra.mxu0 %v1458
      %v2168 = vpop.f32.mrf.mxu0
      %v2169 = vadd.f32 0.0, %v2168
      %2170 = vdwg.mxu0
      %v2171 = vld [vmem:[%s705] sm:$0xff]
      %v2173 = vperm.slane %v2171, 0
      %v2174 = vperm.slane %v2171, 1
      %v2175 = vperm.slane %v2171, 2
      %v2176 = vperm.slane %v2171, 3
      %v2177 = vperm.slane %v2171, 4
      %v2178 = vperm.slane %v2171, 5
      %v2179 = vperm.slane %v2171, 6
      %v2180 = vperm.slane %v2171, 7
      %v2189 = vmul.f32 %v1669, %v2173
      %v2190 = vmul.f32 %v1734, %v2174
      %v2191 = vmul.f32 %v1799, %v2175
      %v2192 = vmul.f32 %v1864, %v2176
      %v2193 = vmul.f32 %v1929, %v2177
      %v2194 = vmul.f32 %v1994, %v2178
      %v2195 = vmul.f32 %v2059, %v2179
      %v2196 = vmul.f32 %v2124, %v2180
      %v2197 = vmul.f32 %v1672, %v2173
      %v2198 = vmul.f32 %v1737, %v2174
      %v2199 = vmul.f32 %v1802, %v2175
      %v2200 = vmul.f32 %v1867, %v2176
      %v2201 = vmul.f32 %v1932, %v2177
      %v2202 = vmul.f32 %v1997, %v2178
      %v2203 = vmul.f32 %v2062, %v2179
      %v2204 = vmul.f32 %v2127, %v2180
      %v2205 = vmul.f32 %v1675, %v2173
      %v2206 = vmul.f32 %v1740, %v2174
      %v2207 = vmul.f32 %v1805, %v2175
      %v2208 = vmul.f32 %v1870, %v2176
      %v2209 = vmul.f32 %v1935, %v2177
      %v2210 = vmul.f32 %v2000, %v2178
      %v2211 = vmul.f32 %v2065, %v2179
      %v2212 = vmul.f32 %v2130, %v2180
      %v2213 = vmul.f32 %v1678, %v2173
      %v2214 = vmul.f32 %v1743, %v2174
      %v2215 = vmul.f32 %v1808, %v2175
      %v2216 = vmul.f32 %v1873, %v2176
      %v2217 = vmul.f32 %v1938, %v2177
      %v2218 = vmul.f32 %v2003, %v2178
      %v2219 = vmul.f32 %v2068, %v2179
      %v2220 = vmul.f32 %v2133, %v2180
      %v2221 = vmul.f32 %v1681, %v2173
      %v2222 = vmul.f32 %v1746, %v2174
      %v2223 = vmul.f32 %v1811, %v2175
      %v2224 = vmul.f32 %v1876, %v2176
      %v2225 = vmul.f32 %v1941, %v2177
      %v2226 = vmul.f32 %v2006, %v2178
      %v2227 = vmul.f32 %v2071, %v2179
      %v2228 = vmul.f32 %v2136, %v2180
      %v2229 = vmul.f32 %v1684, %v2173
      %v2230 = vmul.f32 %v1749, %v2174
      %v2231 = vmul.f32 %v1814, %v2175
      %v2232 = vmul.f32 %v1879, %v2176
      %v2233 = vmul.f32 %v1944, %v2177
      %v2234 = vmul.f32 %v2009, %v2178
      %v2235 = vmul.f32 %v2074, %v2179
      %v2236 = vmul.f32 %v2139, %v2180
      %v2237 = vmul.f32 %v1687, %v2173
      %v2238 = vmul.f32 %v1752, %v2174
      %v2239 = vmul.f32 %v1817, %v2175
      %v2240 = vmul.f32 %v1882, %v2176
      %v2241 = vmul.f32 %v1947, %v2177
      %v2242 = vmul.f32 %v2012, %v2178
      %v2243 = vmul.f32 %v2077, %v2179
      %v2244 = vmul.f32 %v2142, %v2180
      %v2245 = vmul.f32 %v1690, %v2173
      %v2246 = vmul.f32 %v1755, %v2174
      %v2247 = vmul.f32 %v1820, %v2175
      %v2248 = vmul.f32 %v1885, %v2176
      %v2249 = vmul.f32 %v1950, %v2177
      %v2250 = vmul.f32 %v2015, %v2178
      %v2251 = vmul.f32 %v2080, %v2179
      %v2252 = vmul.f32 %v2145, %v2180
      %v2253 = vmul.f32 %v1693, %v2173
      %v2254 = vmul.f32 %v1758, %v2174
      %v2255 = vmul.f32 %v1823, %v2175
      %v2256 = vmul.f32 %v1888, %v2176
      %v2257 = vmul.f32 %v1953, %v2177
      %v2258 = vmul.f32 %v2018, %v2178
      %v2259 = vmul.f32 %v2083, %v2179
      %v2260 = vmul.f32 %v2148, %v2180
      %v2261 = vmul.f32 %v1696, %v2173
      %v2262 = vmul.f32 %v1761, %v2174
      %v2263 = vmul.f32 %v1826, %v2175
      %v2264 = vmul.f32 %v1891, %v2176
      %v2265 = vmul.f32 %v1956, %v2177
      %v2266 = vmul.f32 %v2021, %v2178
      %v2267 = vmul.f32 %v2086, %v2179
      %v2268 = vmul.f32 %v2151, %v2180
      %v2269 = vmul.f32 %v1699, %v2173
      %v2270 = vmul.f32 %v1764, %v2174
      %v2271 = vmul.f32 %v1829, %v2175
      %v2272 = vmul.f32 %v1894, %v2176
      %v2273 = vmul.f32 %v1959, %v2177
      %v2274 = vmul.f32 %v2024, %v2178
      %v2275 = vmul.f32 %v2089, %v2179
      %v2276 = vmul.f32 %v2154, %v2180
      %v2277 = vmul.f32 %v1702, %v2173
      %v2278 = vmul.f32 %v1767, %v2174
      %v2279 = vmul.f32 %v1832, %v2175
      %v2280 = vmul.f32 %v1897, %v2176
      %v2281 = vmul.f32 %v1962, %v2177
      %v2282 = vmul.f32 %v2027, %v2178
      %v2283 = vmul.f32 %v2092, %v2179
      %v2284 = vmul.f32 %v2157, %v2180
      %v2285 = vmul.f32 %v1705, %v2173
      %v2286 = vmul.f32 %v1770, %v2174
      %v2287 = vmul.f32 %v1835, %v2175
      %v2288 = vmul.f32 %v1900, %v2176
      %v2289 = vmul.f32 %v1965, %v2177
      %v2290 = vmul.f32 %v2030, %v2178
      %v2291 = vmul.f32 %v2095, %v2179
      %v2292 = vmul.f32 %v2160, %v2180
      %v2293 = vmul.f32 %v1708, %v2173
      %v2294 = vmul.f32 %v1773, %v2174
      %v2295 = vmul.f32 %v1838, %v2175
      %v2296 = vmul.f32 %v1903, %v2176
      %v2297 = vmul.f32 %v1968, %v2177
      %v2298 = vmul.f32 %v2033, %v2178
      %v2299 = vmul.f32 %v2098, %v2179
      %v2300 = vmul.f32 %v2163, %v2180
      %v2301 = vmul.f32 %v1711, %v2173
      %v2302 = vmul.f32 %v1776, %v2174
      %v2303 = vmul.f32 %v1841, %v2175
      %v2304 = vmul.f32 %v1906, %v2176
      %v2305 = vmul.f32 %v1971, %v2177
      %v2306 = vmul.f32 %v2036, %v2178
      %v2307 = vmul.f32 %v2101, %v2179
      %v2308 = vmul.f32 %v2166, %v2180
      %v2309 = vmul.f32 %v1714, %v2173
      %v2310 = vmul.f32 %v1779, %v2174
      %v2311 = vmul.f32 %v1844, %v2175
      %v2312 = vmul.f32 %v1909, %v2176
      %v2313 = vmul.f32 %v1974, %v2177
      %v2314 = vmul.f32 %v2039, %v2178
      %v2315 = vmul.f32 %v2104, %v2179
      %v2316 = vmul.f32 %v2169, %v2180
      %v2317 = vmul.f32 %v2189, 1.442695
      %v2318 = vpow.pop %v2317
      %v2319 = vmul.f32 %v2190, 1.442695
      %v2320 = vpow.pop %v2319
      %v2321 = vmul.f32 %v2191, 1.442695
      %v2322 = vpow.pop %v2321
      %v2323 = vmul.f32 %v2192, 1.442695
      %v2324 = vpow.pop %v2323
      %v2325 = vmul.f32 %v2193, 1.442695
      %v2326 = vpow.pop %v2325
      %v2327 = vmul.f32 %v2194, 1.442695
      %v2328 = vpow.pop %v2327
      %v2329 = vmul.f32 %v2195, 1.442695
      %v2330 = vpow.pop %v2329
      %v2331 = vmul.f32 %v2196, 1.442695
      %v2332 = vpow.pop %v2331
      %v2333 = vmul.f32 %v2197, 1.442695
      %v2334 = vpow.pop %v2333
      %v2335 = vmul.f32 %v2198, 1.442695
      %v2336 = vpow.pop %v2335
      %v2337 = vmul.f32 %v2199, 1.442695
      %v2338 = vpow.pop %v2337
      %v2339 = vmul.f32 %v2200, 1.442695
      %v2340 = vpow.pop %v2339
      %v2341 = vmul.f32 %v2201, 1.442695
      %v2342 = vpow.pop %v2341
      %v2343 = vmul.f32 %v2202, 1.442695
      %v2344 = vpow.pop %v2343
      %v2345 = vmul.f32 %v2203, 1.442695
      %v2346 = vpow.pop %v2345
      %v2347 = vmul.f32 %v2204, 1.442695
      %v2348 = vpow.pop %v2347
      %v2349 = vmul.f32 %v2205, 1.442695
      %v2350 = vpow.pop %v2349
      %v2351 = vmul.f32 %v2206, 1.442695
      %v2352 = vpow.pop %v2351
      %v2353 = vmul.f32 %v2207, 1.442695
      %v2354 = vpow.pop %v2353
      %v2355 = vmul.f32 %v2208, 1.442695
      %v2356 = vpow.pop %v2355
      %v2357 = vmul.f32 %v2209, 1.442695
      %v2358 = vpow.pop %v2357
      %v2359 = vmul.f32 %v2210, 1.442695
      %v2360 = vpow.pop %v2359
      %v2361 = vmul.f32 %v2211, 1.442695
      %v2362 = vpow.pop %v2361
      %v2363 = vmul.f32 %v2212, 1.442695
      %v2364 = vpow.pop %v2363
      %v2365 = vmul.f32 %v2213, 1.442695
      %v2366 = vpow.pop %v2365
      %v2367 = vmul.f32 %v2214, 1.442695
      %v2368 = vpow.pop %v2367
      %v2369 = vmul.f32 %v2215, 1.442695
      %v2370 = vpow.pop %v2369
      %v2371 = vmul.f32 %v2216, 1.442695
      %v2372 = vpow.pop %v2371
      %v2373 = vmul.f32 %v2217, 1.442695
      %v2374 = vpow.pop %v2373
      %v2375 = vmul.f32 %v2218, 1.442695
      %v2376 = vpow.pop %v2375
      %v2377 = vmul.f32 %v2219, 1.442695
      %v2378 = vpow.pop %v2377
      %v2379 = vmul.f32 %v2220, 1.442695
      %v2380 = vpow.pop %v2379
      %v2381 = vmul.f32 %v2221, 1.442695
      %v2382 = vpow.pop %v2381
      %v2383 = vmul.f32 %v2222, 1.442695
      %v2384 = vpow.pop %v2383
      %v2385 = vmul.f32 %v2223, 1.442695
      %v2386 = vpow.pop %v2385
      %v2387 = vmul.f32 %v2224, 1.442695
      %v2388 = vpow.pop %v2387
      %v2389 = vmul.f32 %v2225, 1.442695
      %v2390 = vpow.pop %v2389
      %v2391 = vmul.f32 %v2226, 1.442695
      %v2392 = vpow.pop %v2391
      %v2393 = vmul.f32 %v2227, 1.442695
      %v2394 = vpow.pop %v2393
      %v2395 = vmul.f32 %v2228, 1.442695
      %v2396 = vpow.pop %v2395
      %v2397 = vmul.f32 %v2229, 1.442695
      %v2398 = vpow.pop %v2397
      %v2399 = vmul.f32 %v2230, 1.442695
      %v2400 = vpow.pop %v2399
      %v2401 = vmul.f32 %v2231, 1.442695
      %v2402 = vpow.pop %v2401
      %v2403 = vmul.f32 %v2232, 1.442695
      %v2404 = vpow.pop %v2403
      %v2405 = vmul.f32 %v2233, 1.442695
      %v2406 = vpow.pop %v2405
      %v2407 = vmul.f32 %v2234, 1.442695
      %v2408 = vpow.pop %v2407
      %v2409 = vmul.f32 %v2235, 1.442695
      %v2410 = vpow.pop %v2409
      %v2411 = vmul.f32 %v2236, 1.442695
      %v2412 = vpow.pop %v2411
      %v2413 = vmul.f32 %v2237, 1.442695
      %v2414 = vpow.pop %v2413
      %v2415 = vmul.f32 %v2238, 1.442695
      %v2416 = vpow.pop %v2415
      %v2417 = vmul.f32 %v2239, 1.442695
      %v2418 = vpow.pop %v2417
      %v2419 = vmul.f32 %v2240, 1.442695
      %v2420 = vpow.pop %v2419
      %v2421 = vmul.f32 %v2241, 1.442695
      %v2422 = vpow.pop %v2421
      %v2423 = vmul.f32 %v2242, 1.442695
      %v2424 = vpow.pop %v2423
      %v2425 = vmul.f32 %v2243, 1.442695
      %v2426 = vpow.pop %v2425
      %v2427 = vmul.f32 %v2244, 1.442695
      %v2428 = vpow.pop %v2427
      %v2429 = vmul.f32 %v2245, 1.442695
      %v2430 = vpow.pop %v2429
      %v2431 = vmul.f32 %v2246, 1.442695
      %v2432 = vpow.pop %v2431
      %v2433 = vmul.f32 %v2247, 1.442695
      %v2434 = vpow.pop %v2433
      %v2435 = vmul.f32 %v2248, 1.442695
      %v2436 = vpow.pop %v2435
      %v2437 = vmul.f32 %v2249, 1.442695
      %v2438 = vpow.pop %v2437
      %v2439 = vmul.f32 %v2250, 1.442695
      %v2440 = vpow.pop %v2439
      %v2441 = vmul.f32 %v2251, 1.442695
      %v2442 = vpow.pop %v2441
      %v2443 = vmul.f32 %v2252, 1.442695
      %v2444 = vpow.pop %v2443
      %v2445 = vmul.f32 %v2253, 1.442695
      %v2446 = vpow.pop %v2445
      %v2447 = vmul.f32 %v2254, 1.442695
      %v2448 = vpow.pop %v2447
      %v2449 = vmul.f32 %v2255, 1.442695
      %v2450 = vpow.pop %v2449
      %v2451 = vmul.f32 %v2256, 1.442695
      %v2452 = vpow.pop %v2451
      %v2453 = vmul.f32 %v2257, 1.442695
      %v2454 = vpow.pop %v2453
      %v2455 = vmul.f32 %v2258, 1.442695
      %v2456 = vpow.pop %v2455
      %v2457 = vmul.f32 %v2259, 1.442695
      %v2458 = vpow.pop %v2457
      %v2459 = vmul.f32 %v2260, 1.442695
      %v2460 = vpow.pop %v2459
      %v2461 = vmul.f32 %v2261, 1.442695
      %v2462 = vpow.pop %v2461
      %v2463 = vmul.f32 %v2262, 1.442695
      %v2464 = vpow.pop %v2463
      %v2465 = vmul.f32 %v2263, 1.442695
      %v2466 = vpow.pop %v2465
      %v2467 = vmul.f32 %v2264, 1.442695
      %v2468 = vpow.pop %v2467
      %v2469 = vmul.f32 %v2265, 1.442695
      %v2470 = vpow.pop %v2469
      %v2471 = vmul.f32 %v2266, 1.442695
      %v2472 = vpow.pop %v2471
      %v2473 = vmul.f32 %v2267, 1.442695
      %v2474 = vpow.pop %v2473
      %v2475 = vmul.f32 %v2268, 1.442695
      %v2476 = vpow.pop %v2475
      %v2477 = vmul.f32 %v2269, 1.442695
      %v2478 = vpow.pop %v2477
      %v2479 = vmul.f32 %v2270, 1.442695
      %v2480 = vpow.pop %v2479
      %v2481 = vmul.f32 %v2271, 1.442695
      %v2482 = vpow.pop %v2481
      %v2483 = vmul.f32 %v2272, 1.442695
      %v2484 = vpow.pop %v2483
      %v2485 = vmul.f32 %v2273, 1.442695
      %v2486 = vpow.pop %v2485
      %v2487 = vmul.f32 %v2274, 1.442695
      %v2488 = vpow.pop %v2487
      %v2489 = vmul.f32 %v2275, 1.442695
      %v2490 = vpow.pop %v2489
      %v2491 = vmul.f32 %v2276, 1.442695
      %v2492 = vpow.pop %v2491
      %v2493 = vmul.f32 %v2277, 1.442695
      %v2494 = vpow.pop %v2493
      %v2495 = vmul.f32 %v2278, 1.442695
      %v2496 = vpow.pop %v2495
      %v2497 = vmul.f32 %v2279, 1.442695
      %v2498 = vpow.pop %v2497
      %v2499 = vmul.f32 %v2280, 1.442695
      %v2500 = vpow.pop %v2499
      %v2501 = vmul.f32 %v2281, 1.442695
      %v2502 = vpow.pop %v2501
      %v2503 = vmul.f32 %v2282, 1.442695
      %v2504 = vpow.pop %v2503
      %v2505 = vmul.f32 %v2283, 1.442695
      %v2506 = vpow.pop %v2505
      %v2507 = vmul.f32 %v2284, 1.442695
      %v2508 = vpow.pop %v2507
      %v2509 = vmul.f32 %v2285, 1.442695
      %v2510 = vpow.pop %v2509
      %v2511 = vmul.f32 %v2286, 1.442695
      %v2512 = vpow.pop %v2511
      %v2513 = vmul.f32 %v2287, 1.442695
      %v2514 = vpow.pop %v2513
      %v2515 = vmul.f32 %v2288, 1.442695
      %v2516 = vpow.pop %v2515
      %v2517 = vmul.f32 %v2289, 1.442695
      %v2518 = vpow.pop %v2517
      %v2519 = vmul.f32 %v2290, 1.442695
      %v2520 = vpow.pop %v2519
      %v2521 = vmul.f32 %v2291, 1.442695
      %v2522 = vpow.pop %v2521
      %v2523 = vmul.f32 %v2292, 1.442695
      %v2524 = vpow.pop %v2523
      %v2525 = vmul.f32 %v2293, 1.442695
      %v2526 = vpow.pop %v2525
      %v2527 = vmul.f32 %v2294, 1.442695
      %v2528 = vpow.pop %v2527
      %v2529 = vmul.f32 %v2295, 1.442695
      %v2530 = vpow.pop %v2529
      %v2531 = vmul.f32 %v2296, 1.442695
      %v2532 = vpow.pop %v2531
      %v2533 = vmul.f32 %v2297, 1.442695
      %v2534 = vpow.pop %v2533
      %v2535 = vmul.f32 %v2298, 1.442695
      %v2536 = vpow.pop %v2535
      %v2537 = vmul.f32 %v2299, 1.442695
      %v2538 = vpow.pop %v2537
      %v2539 = vmul.f32 %v2300, 1.442695
      %v2540 = vpow.pop %v2539
      %v2541 = vmul.f32 %v2301, 1.442695
      %v2542 = vpow.pop %v2541
      %v2543 = vmul.f32 %v2302, 1.442695
      %v2544 = vpow.pop %v2543
      %v2545 = vmul.f32 %v2303, 1.442695
      %v2546 = vpow.pop %v2545
      %v2547 = vmul.f32 %v2304, 1.442695
      %v2548 = vpow.pop %v2547
      %v2549 = vmul.f32 %v2305, 1.442695
      %v2550 = vpow.pop %v2549
      %v2551 = vmul.f32 %v2306, 1.442695
      %v2552 = vpow.pop %v2551
      %v2553 = vmul.f32 %v2307, 1.442695
      %v2554 = vpow.pop %v2553
      %v2555 = vmul.f32 %v2308, 1.442695
      %v2556 = vpow.pop %v2555
      %v2557 = vmul.f32 %v2309, 1.442695
      %v2558 = vpow.pop %v2557
      %v2559 = vmul.f32 %v2310, 1.442695
      %v2560 = vpow.pop %v2559
      %v2561 = vmul.f32 %v2311, 1.442695
      %v2562 = vpow.pop %v2561
      %v2563 = vmul.f32 %v2312, 1.442695
      %v2564 = vpow.pop %v2563
      %v2565 = vmul.f32 %v2313, 1.442695
      %v2566 = vpow.pop %v2565
      %v2567 = vmul.f32 %v2314, 1.442695
      %v2568 = vpow.pop %v2567
      %v2569 = vmul.f32 %v2315, 1.442695
      %v2570 = vpow.pop %v2569
      %v2571 = vmul.f32 %v2316, 1.442695
      %v2572 = vpow.pop %v2571
      %2573 = vst [vmem:[#allocation4] sm:$0xff] %v2318
      %2574 = vst [vmem:[#allocation4 + $0x8] sm:$0xff] %v2320
      %2575 = vst [vmem:[#allocation4 + $0x10] sm:$0xff] %v2322
      %2576 = vst [vmem:[#allocation4 + $0x18] sm:$0xff] %v2324
      %2577 = vst [vmem:[#allocation4 + $0x20] sm:$0xff] %v2326
      %2578 = vst [vmem:[#allocation4 + $0x28] sm:$0xff] %v2328
      %2579 = vst [vmem:[#allocation4 + $0x30] sm:$0xff] %v2330
      %2580 = vst [vmem:[#allocation4 + $0x38] sm:$0xff] %v2332
      %2581 = vst [vmem:[#allocation4 + $0x40] sm:$0xff] %v2334
      %2582 = vst [vmem:[#allocation4 + $0x48] sm:$0xff] %v2336
      %2583 = vst [vmem:[#allocation4 + $0x50] sm:$0xff] %v2338
      %2584 = vst [vmem:[#allocation4 + $0x58] sm:$0xff] %v2340
      %2585 = vst [vmem:[#allocation4 + $0x60] sm:$0xff] %v2342
      %2586 = vst [vmem:[#allocation4 + $0x68] sm:$0xff] %v2344
      %2587 = vst [vmem:[#allocation4 + $0x70] sm:$0xff] %v2346
      %2588 = vst [vmem:[#allocation4 + $0x78] sm:$0xff] %v2348
      %2589 = vst [vmem:[#allocation4 + $0x80] sm:$0xff] %v2350
      %2590 = vst [vmem:[#allocation4 + $0x88] sm:$0xff] %v2352
      %2591 = vst [vmem:[#allocation4 + $0x90] sm:$0xff] %v2354
      %2592 = vst [vmem:[#allocation4 + $0x98] sm:$0xff] %v2356
      %2593 = vst [vmem:[#allocation4 + $0xa0] sm:$0xff] %v2358
      %2594 = vst [vmem:[#allocation4 + $0xa8] sm:$0xff] %v2360
      %2595 = vst [vmem:[#allocation4 + $0xb0] sm:$0xff] %v2362
      %2596 = vst [vmem:[#allocation4 + $0xb8] sm:$0xff] %v2364
      %2597 = vst [vmem:[#allocation4 + $0xc0] sm:$0xff] %v2366
      %2598 = vst [vmem:[#allocation4 + $0xc8] sm:$0xff] %v2368
      %2599 = vst [vmem:[#allocation4 + $0xd0] sm:$0xff] %v2370
      %2600 = vst [vmem:[#allocation4 + $0xd8] sm:$0xff] %v2372
      %2601 = vst [vmem:[#allocation4 + $0xe0] sm:$0xff] %v2374
      %2602 = vst [vmem:[#allocation4 + $0xe8] sm:$0xff] %v2376
      %2603 = vst [vmem:[#allocation4 + $0xf0] sm:$0xff] %v2378
      %2604 = vst [vmem:[#allocation4 + $0xf8] sm:$0xff] %v2380
      %2605 = vst [vmem:[#allocation4 + $0x100] sm:$0xff] %v2382
      %2606 = vst [vmem:[#allocation4 + $0x108] sm:$0xff] %v2384
      %2607 = vst [vmem:[#allocation4 + $0x110] sm:$0xff] %v2386
      %2608 = vst [vmem:[#allocation4 + $0x118] sm:$0xff] %v2388
      %2609 = vst [vmem:[#allocation4 + $0x120] sm:$0xff] %v2390
      %2610 = vst [vmem:[#allocation4 + $0x128] sm:$0xff] %v2392
      %2611 = vst [vmem:[#allocation4 + $0x130] sm:$0xff] %v2394
      %2612 = vst [vmem:[#allocation4 + $0x138] sm:$0xff] %v2396
      %2613 = vst [vmem:[#allocation4 + $0x140] sm:$0xff] %v2398
      %2614 = vst [vmem:[#allocation4 + $0x148] sm:$0xff] %v2400
      %2615 = vst [vmem:[#allocation4 + $0x150] sm:$0xff] %v2402
      %2616 = vst [vmem:[#allocation4 + $0x158] sm:$0xff] %v2404
      %2617 = vst [vmem:[#allocation4 + $0x160] sm:$0xff] %v2406
      %2618 = vst [vmem:[#allocation4 + $0x168] sm:$0xff] %v2408
      %2619 = vst [vmem:[#allocation4 + $0x170] sm:$0xff] %v2410
      %2620 = vst [vmem:[#allocation4 + $0x178] sm:$0xff] %v2412
      %2621 = vst [vmem:[#allocation4 + $0x180] sm:$0xff] %v2414
      %2622 = vst [vmem:[#allocation4 + $0x188] sm:$0xff] %v2416
      %2623 = vst [vmem:[#allocation4 + $0x190] sm:$0xff] %v2418
      %2624 = vst [vmem:[#allocation4 + $0x198] sm:$0xff] %v2420
      %2625 = vst [vmem:[#allocation4 + $0x1a0] sm:$0xff] %v2422
      %2626 = vst [vmem:[#allocation4 + $0x1a8] sm:$0xff] %v2424
      %2627 = vst [vmem:[#allocation4 + $0x1b0] sm:$0xff] %v2426
      %2628 = vst [vmem:[#allocation4 + $0x1b8] sm:$0xff] %v2428
      %2629 = vst [vmem:[#allocation4 + $0x1c0] sm:$0xff] %v2430
      %2630 = vst [vmem:[#allocation4 + $0x1c8] sm:$0xff] %v2432
      %2631 = vst [vmem:[#allocation4 + $0x1d0] sm:$0xff] %v2434
      %2632 = vst [vmem:[#allocation4 + $0x1d8] sm:$0xff] %v2436
      %2633 = vst [vmem:[#allocation4 + $0x1e0] sm:$0xff] %v2438
      %2634 = vst [vmem:[#allocation4 + $0x1e8] sm:$0xff] %v2440
      %2635 = vst [vmem:[#allocation4 + $0x1f0] sm:$0xff] %v2442
      %2636 = vst [vmem:[#allocation4 + $0x1f8] sm:$0xff] %v2444
      %2637 = vst [vmem:[#allocation4 + $0x200] sm:$0xff] %v2446
      %2638 = vst [vmem:[#allocation4 + $0x208] sm:$0xff] %v2448
      %2639 = vst [vmem:[#allocation4 + $0x210] sm:$0xff] %v2450
      %2640 = vst [vmem:[#allocation4 + $0x218] sm:$0xff] %v2452
      %2641 = vst [vmem:[#allocation4 + $0x220] sm:$0xff] %v2454
      %2642 = vst [vmem:[#allocation4 + $0x228] sm:$0xff] %v2456
      %2643 = vst [vmem:[#allocation4 + $0x230] sm:$0xff] %v2458
      %2644 = vst [vmem:[#allocation4 + $0x238] sm:$0xff] %v2460
      %2645 = vst [vmem:[#allocation4 + $0x240] sm:$0xff] %v2462
      %2646 = vst [vmem:[#allocation4 + $0x248] sm:$0xff] %v2464
      %2647 = vst [vmem:[#allocation4 + $0x250] sm:$0xff] %v2466
      %2648 = vst [vmem:[#allocation4 + $0x258] sm:$0xff] %v2468
      %2649 = vst [vmem:[#allocation4 + $0x260] sm:$0xff] %v2470
      %2650 = vst [vmem:[#allocation4 + $0x268] sm:$0xff] %v2472
      %2651 = vst [vmem:[#allocation4 + $0x270] sm:$0xff] %v2474
      %2652 = vst [vmem:[#allocation4 + $0x278] sm:$0xff] %v2476
      %2653 = vst [vmem:[#allocation4 + $0x280] sm:$0xff] %v2478
      %2654 = vst [vmem:[#allocation4 + $0x288] sm:$0xff] %v2480
      %2655 = vst [vmem:[#allocation4 + $0x290] sm:$0xff] %v2482
      %2656 = vst [vmem:[#allocation4 + $0x298] sm:$0xff] %v2484
      %2657 = vst [vmem:[#allocation4 + $0x2a0] sm:$0xff] %v2486
      %2658 = vst [vmem:[#allocation4 + $0x2a8] sm:$0xff] %v2488
      %2659 = vst [vmem:[#allocation4 + $0x2b0] sm:$0xff] %v2490
      %2660 = vst [vmem:[#allocation4 + $0x2b8] sm:$0xff] %v2492
      %2661 = vst [vmem:[#allocation4 + $0x2c0] sm:$0xff] %v2494
      %2662 = vst [vmem:[#allocation4 + $0x2c8] sm:$0xff] %v2496
      %2663 = vst [vmem:[#allocation4 + $0x2d0] sm:$0xff] %v2498
      %2664 = vst [vmem:[#allocation4 + $0x2d8] sm:$0xff] %v2500
      %2665 = vst [vmem:[#allocation4 + $0x2e0] sm:$0xff] %v2502
      %2666 = vst [vmem:[#allocation4 + $0x2e8] sm:$0xff] %v2504
      %2667 = vst [vmem:[#allocation4 + $0x2f0] sm:$0xff] %v2506
      %2668 = vst [vmem:[#allocation4 + $0x2f8] sm:$0xff] %v2508
      %2669 = vst [vmem:[#allocation4 + $0x300] sm:$0xff] %v2510
      %2670 = vst [vmem:[#allocation4 + $0x308] sm:$0xff] %v2512
      %2671 = vst [vmem:[#allocation4 + $0x310] sm:$0xff] %v2514
      %2672 = vst [vmem:[#allocation4 + $0x318] sm:$0xff] %v2516
      %2673 = vst [vmem:[#allocation4 + $0x320] sm:$0xff] %v2518
      %2674 = vst [vmem:[#allocation4 + $0x328] sm:$0xff] %v2520
      %2675 = vst [vmem:[#allocation4 + $0x330] sm:$0xff] %v2522
      %2676 = vst [vmem:[#allocation4 + $0x338] sm:$0xff] %v2524
      %2677 = vst [vmem:[#allocation4 + $0x340] sm:$0xff] %v2526
      %2678 = vst [vmem:[#allocation4 + $0x348] sm:$0xff] %v2528
      %2679 = vst [vmem:[#allocation4 + $0x350] sm:$0xff] %v2530
      %2680 = vst [vmem:[#allocation4 + $0x358] sm:$0xff] %v2532
      %2681 = vst [vmem:[#allocation4 + $0x360] sm:$0xff] %v2534
      %2682 = vst [vmem:[#allocation4 + $0x368] sm:$0xff] %v2536
      %2683 = vst [vmem:[#allocation4 + $0x370] sm:$0xff] %v2538
      %2684 = vst [vmem:[#allocation4 + $0x378] sm:$0xff] %v2540
      %2685 = vst [vmem:[#allocation4 + $0x380] sm:$0xff] %v2542
      %2686 = vst [vmem:[#allocation4 + $0x388] sm:$0xff] %v2544
      %2687 = vst [vmem:[#allocation4 + $0x390] sm:$0xff] %v2546
      %2688 = vst [vmem:[#allocation4 + $0x398] sm:$0xff] %v2548
      %2689 = vst [vmem:[#allocation4 + $0x3a0] sm:$0xff] %v2550
      %2690 = vst [vmem:[#allocation4 + $0x3a8] sm:$0xff] %v2552
      %2691 = vst [vmem:[#allocation4 + $0x3b0] sm:$0xff] %v2554
      %2692 = vst [vmem:[#allocation4 + $0x3b8] sm:$0xff] %v2556
      %2693 = vst [vmem:[#allocation4 + $0x3c0] sm:$0xff] %v2558
      %2694 = vst [vmem:[#allocation4 + $0x3c8] sm:$0xff] %v2560
      %2695 = vst [vmem:[#allocation4 + $0x3d0] sm:$0xff] %v2562
      %2696 = vst [vmem:[#allocation4 + $0x3d8] sm:$0xff] %v2564
      %2697 = vst [vmem:[#allocation4 + $0x3e0] sm:$0xff] %v2566
      %2698 = vst [vmem:[#allocation4 + $0x3e8] sm:$0xff] %v2568
      %2699 = vst [vmem:[#allocation4 + $0x3f0] sm:$0xff] %v2570
      %2700 = vst [vmem:[#allocation4 + $0x3f8] sm:$0xff] %v2572
      %v2701 = vld [vmem:[%s14] sm:$0xff]
      %v2702 = vld [vmem:[%s14 + $0x8] sm:$0xff]
      %v2703 = vld [vmem:[%s14 + $0x10] sm:$0xff]
      %v2704 = vld [vmem:[%s14 + $0x18] sm:$0xff]
      %v2705 = vld [vmem:[%s14 + $0x20] sm:$0xff]
      %v2706 = vld [vmem:[%s14 + $0x28] sm:$0xff]
      %v2707 = vld [vmem:[%s14 + $0x30] sm:$0xff]
      %v2708 = vld [vmem:[%s14 + $0x38] sm:$0xff]
      %v2709 = vunpack.c.l.bf16 %v2701
      %v2710 = vunpack.c.h.bf16 %v2701
      %v2711 = vunpack.c.l.bf16 %v2702
      %v2712 = vunpack.c.h.bf16 %v2702
      %v2713 = vunpack.c.l.bf16 %v2703
      %v2714 = vunpack.c.h.bf16 %v2703
      %v2715 = vunpack.c.l.bf16 %v2704
      %v2716 = vunpack.c.h.bf16 %v2704
      %v2717 = vunpack.c.l.bf16 %v2705
      %v2718 = vunpack.c.h.bf16 %v2705
      %v2719 = vunpack.c.l.bf16 %v2706
      %v2720 = vunpack.c.h.bf16 %v2706
      %v2721 = vunpack.c.l.bf16 %v2707
      %v2722 = vunpack.c.h.bf16 %v2707
      %v2723 = vunpack.c.l.bf16 %v2708
      %v2724 = vunpack.c.h.bf16 %v2708
      %v2725 = vld [vmem:[%s710] sm:$0xff]
      %v2726 = vld [vmem:[%s710 + $0x8] sm:$0xff]
      %v2727 = vld [vmem:[%s710 + $0x10] sm:$0xff]
      %v2728 = vld [vmem:[%s710 + $0x18] sm:$0xff]
      %v2729 = vld [vmem:[%s710 + $0x20] sm:$0xff]
      %v2730 = vld [vmem:[%s710 + $0x28] sm:$0xff]
      %v2731 = vld [vmem:[%s710 + $0x30] sm:$0xff]
      %v2732 = vld [vmem:[%s710 + $0x38] sm:$0xff]
      %v2733 = vld [vmem:[%s710 + $0x40] sm:$0xff]
      %v2734 = vld [vmem:[%s710 + $0x48] sm:$0xff]
      %v2735 = vld [vmem:[%s710 + $0x50] sm:$0xff]
      %v2736 = vld [vmem:[%s710 + $0x58] sm:$0xff]
      %v2737 = vld [vmem:[%s710 + $0x60] sm:$0xff]
      %v2738 = vld [vmem:[%s710 + $0x68] sm:$0xff]
      %v2739 = vld [vmem:[%s710 + $0x70] sm:$0xff]
      %v2740 = vld [vmem:[%s710 + $0x78] sm:$0xff]
      %2741 = vmatpush.msra.mxu0 %v2740
      %2742 = vmatpush.msra.mxu0 %v2739
      %2743 = vmatpush.msra.mxu0 %v2738
      %2744 = vmatpush.msra.mxu0 %v2737
      %2745 = vmatpush.msra.mxu0 %v2736
      %2746 = vmatpush.msra.mxu0 %v2735
      %2747 = vmatpush.msra.mxu0 %v2734
      %2748 = vmatpush.msra.mxu0 %v2733
      %2749 = vmatpush.msra.mxu0 %v2732
      %2750 = vmatpush.msra.mxu0 %v2731
      %2751 = vmatpush.msra.mxu0 %v2730
      %2752 = vmatpush.msra.mxu0 %v2729
      %2753 = vmatpush.msra.mxu0 %v2728
      %2754 = vmatpush.msra.mxu0 %v2727
      %2755 = vmatpush.msra.mxu0 %v2726
      %2756 = vmatpush.msra.mxu0 %v2725
      %2757 = vmatmul.f32.gmra.mxu0 %v1102
      %v2758 = vpop.f32.mrf.mxu0
      %v2759 = vadd.f32 0.0, %v2758
      %2760 = vmatmul.f32.gmra.mxu0 %v1103
      %v2761 = vpop.f32.mrf.mxu0
      %v2762 = vadd.f32 0.0, %v2761
      %2763 = vmatmul.f32.gmra.mxu0 %v1104
      %v2764 = vpop.f32.mrf.mxu0
      %v2765 = vadd.f32 0.0, %v2764
      %2766 = vmatmul.f32.gmra.mxu0 %v1105
      %v2767 = vpop.f32.mrf.mxu0
      %v2768 = vadd.f32 0.0, %v2767
      %2769 = vmatmul.f32.gmra.mxu0 %v1106
      %v2770 = vpop.f32.mrf.mxu0
      %v2771 = vadd.f32 0.0, %v2770
      %2772 = vmatmul.f32.gmra.mxu0 %v1107
      %v2773 = vpop.f32.mrf.mxu0
      %v2774 = vadd.f32 0.0, %v2773
      %2775 = vmatmul.f32.gmra.mxu0 %v1108
      %v2776 = vpop.f32.mrf.mxu0
      %v2777 = vadd.f32 0.0, %v2776
      %2778 = vmatmul.f32.gmra.mxu0 %v1109
      %v2779 = vpop.f32.mrf.mxu0
      %v2780 = vadd.f32 0.0, %v2779
      %2781 = vmatmul.f32.gmra.mxu0 %v1110
      %v2782 = vpop.f32.mrf.mxu0
      %v2783 = vadd.f32 0.0, %v2782
      %2784 = vmatmul.f32.gmra.mxu0 %v1111
      %v2785 = vpop.f32.mrf.mxu0
      %v2786 = vadd.f32 0.0, %v2785
      %2787 = vmatmul.f32.gmra.mxu0 %v1112
      %v2788 = vpop.f32.mrf.mxu0
      %v2789 = vadd.f32 0.0, %v2788
      %2790 = vmatmul.f32.gmra.mxu0 %v1113
      %v2791 = vpop.f32.mrf.mxu0
      %v2792 = vadd.f32 0.0, %v2791
      %2793 = vmatmul.f32.gmra.mxu0 %v1114
      %v2794 = vpop.f32.mrf.mxu0
      %v2795 = vadd.f32 0.0, %v2794
      %2796 = vmatmul.f32.gmra.mxu0 %v1115
      %v2797 = vpop.f32.mrf.mxu0
      %v2798 = vadd.f32 0.0, %v2797
      %2799 = vmatmul.f32.gmra.mxu0 %v1116
      %v2800 = vpop.f32.mrf.mxu0
      %v2801 = vadd.f32 0.0, %v2800
      %2802 = vmatmul.f32.gmra.mxu0 %v1117
      %v2803 = vpop.f32.mrf.mxu0
      %v2804 = vadd.f32 0.0, %v2803
      %2805 = vdwg.mxu0
      %v2806 = vmul.f32 %v1443, %v1102
      %v2807 = vmul.f32 %v1444, %v1103
      %v2808 = vmul.f32 %v1445, %v1104
      %v2809 = vmul.f32 %v1446, %v1105
      %v2810 = vmul.f32 %v1447, %v1106
      %v2811 = vmul.f32 %v1448, %v1107
      %v2812 = vmul.f32 %v1449, %v1108
      %v2813 = vmul.f32 %v1450, %v1109
      %v2814 = vmul.f32 %v1451, %v1110
      %v2815 = vmul.f32 %v1452, %v1111
      %v2816 = vmul.f32 %v1453, %v1112
      %v2817 = vmul.f32 %v1454, %v1113
      %v2818 = vmul.f32 %v1455, %v1114
      %v2819 = vmul.f32 %v1456, %v1115
      %v2820 = vmul.f32 %v1457, %v1116
      %v2821 = vmul.f32 %v1458, %v1117
      %2822 = vmatpush.msra.mxu0 %v1643
      %2823 = vmatpush.msra.mxu0 %v1635
      %2824 = vmatpush.msra.mxu0 %v1627
      %2825 = vmatpush.msra.mxu0 %v1619
      %2826 = vmatpush.msra.mxu0 %v1611
      %2827 = vmatpush.msra.mxu0 %v1603
      %2828 = vmatpush.msra.mxu0 %v1595
      %2829 = vmatpush.msra.mxu0 %v1587
      %2830 = vmatpush.msra.mxu0 %v1579
      %2831 = vmatpush.msra.mxu0 %v1571
      %2832 = vmatpush.msra.mxu0 %v1563
      %2833 = vmatpush.msra.mxu0 %v1555
      %2834 = vmatpush.msra.mxu0 %v1547
      %2835 = vmatpush.msra.mxu0 %v1539
      %2836 = vmatpush.msra.mxu0 %v1531
      %2837 = vmatpush.msra.mxu0 %v1523
      %2838 = vmatmul.f32.gmra.mxu0 %v2806
      %v2839 = vpop.f32.mrf.mxu0
      %v2840 = vadd.f32 0.0, %v2839
      %2841 = vmatmul.f32.gmra.mxu0 %v2807
      %v2842 = vpop.f32.mrf.mxu0
      %v2843 = vadd.f32 0.0, %v2842
      %2844 = vmatmul.f32.gmra.mxu0 %v2808
      %v2845 = vpop.f32.mrf.mxu0
      %v2846 = vadd.f32 0.0, %v2845
      %2847 = vmatmul.f32.gmra.mxu0 %v2809
      %v2848 = vpop.f32.mrf.mxu0
      %v2849 = vadd.f32 0.0, %v2848
      %2850 = vmatmul.f32.gmra.mxu0 %v2810
      %v2851 = vpop.f32.mrf.mxu0
      %v2852 = vadd.f32 0.0, %v2851
      %2853 = vmatmul.f32.gmra.mxu0 %v2811
      %v2854 = vpop.f32.mrf.mxu0
      %v2855 = vadd.f32 0.0, %v2854
      %2856 = vmatmul.f32.gmra.mxu0 %v2812
      %v2857 = vpop.f32.mrf.mxu0
      %v2858 = vadd.f32 0.0, %v2857
      %2859 = vmatmul.f32.gmra.mxu0 %v2813
      %v2860 = vpop.f32.mrf.mxu0
      %v2861 = vadd.f32 0.0, %v2860
      %2862 = vmatmul.f32.gmra.mxu0 %v2814
      %v2863 = vpop.f32.mrf.mxu0
      %v2864 = vadd.f32 0.0, %v2863
      %2865 = vmatmul.f32.gmra.mxu0 %v2815
      %v2866 = vpop.f32.mrf.mxu0
      %v2867 = vadd.f32 0.0, %v2866
      %2868 = vmatmul.f32.gmra.mxu0 %v2816
      %v2869 = vpop.f32.mrf.mxu0
      %v2870 = vadd.f32 0.0, %v2869
      %2871 = vmatmul.f32.gmra.mxu0 %v2817
      %v2872 = vpop.f32.mrf.mxu0
      %v2873 = vadd.f32 0.0, %v2872
      %2874 = vmatmul.f32.gmra.mxu0 %v2818
      %v2875 = vpop.f32.mrf.mxu0
      %v2876 = vadd.f32 0.0, %v2875
      %2877 = vmatmul.f32.gmra.mxu0 %v2819
      %v2878 = vpop.f32.mrf.mxu0
      %v2879 = vadd.f32 0.0, %v2878
      %2880 = vmatmul.f32.gmra.mxu0 %v2820
      %v2881 = vpop.f32.mrf.mxu0
      %v2882 = vadd.f32 0.0, %v2881
      %2883 = vmatmul.f32.gmra.mxu0 %v2821
      %v2884 = vpop.f32.mrf.mxu0
      %v2885 = vadd.f32 0.0, %v2884
      %2886 = vdwg.mxu0
      %2887 = vmatpush.msra.mxu0 %v1644
      %2888 = vmatpush.msra.mxu0 %v1636
      %2889 = vmatpush.msra.mxu0 %v1628
      %2890 = vmatpush.msra.mxu0 %v1620
      %2891 = vmatpush.msra.mxu0 %v1612
      %2892 = vmatpush.msra.mxu0 %v1604
      %2893 = vmatpush.msra.mxu0 %v1596
      %2894 = vmatpush.msra.mxu0 %v1588
      %2895 = vmatpush.msra.mxu0 %v1580
      %2896 = vmatpush.msra.mxu0 %v1572
      %2897 = vmatpush.msra.mxu0 %v1564
      %2898 = vmatpush.msra.mxu0 %v1556
      %2899 = vmatpush.msra.mxu0 %v1548
      %2900 = vmatpush.msra.mxu0 %v1540
      %2901 = vmatpush.msra.mxu0 %v1532
      %2902 = vmatpush.msra.mxu0 %v1524
      %2903 = vmatmul.f32.gmra.mxu0 %v2806
      %v2904 = vpop.f32.mrf.mxu0
      %v2905 = vadd.f32 0.0, %v2904
      %2906 = vmatmul.f32.gmra.mxu0 %v2807
      %v2907 = vpop.f32.mrf.mxu0
      %v2908 = vadd.f32 0.0, %v2907
      %2909 = vmatmul.f32.gmra.mxu0 %v2808
      %v2910 = vpop.f32.mrf.mxu0
      %v2911 = vadd.f32 0.0, %v2910
      %2912 = vmatmul.f32.gmra.mxu0 %v2809
      %v2913 = vpop.f32.mrf.mxu0
      %v2914 = vadd.f32 0.0, %v2913
      %2915 = vmatmul.f32.gmra.mxu0 %v2810
      %v2916 = vpop.f32.mrf.mxu0
      %v2917 = vadd.f32 0.0, %v2916
      %2918 = vmatmul.f32.gmra.mxu0 %v2811
      %v2919 = vpop.f32.mrf.mxu0
      %v2920 = vadd.f32 0.0, %v2919
      %2921 = vmatmul.f32.gmra.mxu0 %v2812
      %v2922 = vpop.f32.mrf.mxu0
      %v2923 = vadd.f32 0.0, %v2922
      %2924 = vmatmul.f32.gmra.mxu0 %v2813
      %v2925 = vpop.f32.mrf.mxu0
      %v2926 = vadd.f32 0.0, %v2925
      %2927 = vmatmul.f32.gmra.mxu0 %v2814
      %v2928 = vpop.f32.mrf.mxu0
      %v2929 = vadd.f32 0.0, %v2928
      %2930 = vmatmul.f32.gmra.mxu0 %v2815
      %v2931 = vpop.f32.mrf.mxu0
      %v2932 = vadd.f32 0.0, %v2931
      %2933 = vmatmul.f32.gmra.mxu0 %v2816
      %v2934 = vpop.f32.mrf.mxu0
      %v2935 = vadd.f32 0.0, %v2934
      %2936 = vmatmul.f32.gmra.mxu0 %v2817
      %v2937 = vpop.f32.mrf.mxu0
      %v2938 = vadd.f32 0.0, %v2937
      %2939 = vmatmul.f32.gmra.mxu0 %v2818
      %v2940 = vpop.f32.mrf.mxu0
      %v2941 = vadd.f32 0.0, %v2940
      %2942 = vmatmul.f32.gmra.mxu0 %v2819
      %v2943 = vpop.f32.mrf.mxu0
      %v2944 = vadd.f32 0.0, %v2943
      %2945 = vmatmul.f32.gmra.mxu0 %v2820
      %v2946 = vpop.f32.mrf.mxu0
      %v2947 = vadd.f32 0.0, %v2946
      %2948 = vmatmul.f32.gmra.mxu0 %v2821
      %v2949 = vpop.f32.mrf.mxu0
      %v2950 = vadd.f32 0.0, %v2949
      %2951 = vdwg.mxu0
      %2952 = vmatpush.msra.mxu0 %v1645
      %2953 = vmatpush.msra.mxu0 %v1637
      %2954 = vmatpush.msra.mxu0 %v1629
      %2955 = vmatpush.msra.mxu0 %v1621
      %2956 = vmatpush.msra.mxu0 %v1613
      %2957 = vmatpush.msra.mxu0 %v1605
      %2958 = vmatpush.msra.mxu0 %v1597
      %2959 = vmatpush.msra.mxu0 %v1589
      %2960 = vmatpush.msra.mxu0 %v1581
      %2961 = vmatpush.msra.mxu0 %v1573
      %2962 = vmatpush.msra.mxu0 %v1565
      %2963 = vmatpush.msra.mxu0 %v1557
      %2964 = vmatpush.msra.mxu0 %v1549
      %2965 = vmatpush.msra.mxu0 %v1541
      %2966 = vmatpush.msra.mxu0 %v1533
      %2967 = vmatpush.msra.mxu0 %v1525
      %2968 = vmatmul.f32.gmra.mxu0 %v2806
      %v2969 = vpop.f32.mrf.mxu0
      %v2970 = vadd.f32 0.0, %v2969
      %2971 = vmatmul.f32.gmra.mxu0 %v2807
      %v2972 = vpop.f32.mrf.mxu0
      %v2973 = vadd.f32 0.0, %v2972
      %2974 = vmatmul.f32.gmra.mxu0 %v2808
      %v2975 = vpop.f32.mrf.mxu0
      %v2976 = vadd.f32 0.0, %v2975
      %2977 = vmatmul.f32.gmra.mxu0 %v2809
      %v2978 = vpop.f32.mrf.mxu0
      %v2979 = vadd.f32 0.0, %v2978
      %2980 = vmatmul.f32.gmra.mxu0 %v2810
      %v2981 = vpop.f32.mrf.mxu0
      %v2982 = vadd.f32 0.0, %v2981
      %2983 = vmatmul.f32.gmra.mxu0 %v2811
      %v2984 = vpop.f32.mrf.mxu0
      %v2985 = vadd.f32 0.0, %v2984
      %2986 = vmatmul.f32.gmra.mxu0 %v2812
      %v2987 = vpop.f32.mrf.mxu0
      %v2988 = vadd.f32 0.0, %v2987
      %2989 = vmatmul.f32.gmra.mxu0 %v2813
      %v2990 = vpop.f32.mrf.mxu0
      %v2991 = vadd.f32 0.0, %v2990
      %2992 = vmatmul.f32.gmra.mxu0 %v2814
      %v2993 = vpop.f32.mrf.mxu0
      %v2994 = vadd.f32 0.0, %v2993
      %2995 = vmatmul.f32.gmra.mxu0 %v2815
      %v2996 = vpop.f32.mrf.mxu0
      %v2997 = vadd.f32 0.0, %v2996
      %2998 = vmatmul.f32.gmra.mxu0 %v2816
      %v2999 = vpop.f32.mrf.mxu0
      %v3000 = vadd.f32 0.0, %v2999
      %3001 = vmatmul.f32.gmra.mxu0 %v2817
      %v3002 = vpop.f32.mrf.mxu0
      %v3003 = vadd.f32 0.0, %v3002
      %3004 = vmatmul.f32.gmra.mxu0 %v2818
      %v3005 = vpop.f32.mrf.mxu0
      %v3006 = vadd.f32 0.0, %v3005
      %3007 = vmatmul.f32.gmra.mxu0 %v2819
      %v3008 = vpop.f32.mrf.mxu0
      %v3009 = vadd.f32 0.0, %v3008
      %3010 = vmatmul.f32.gmra.mxu0 %v2820
      %v3011 = vpop.f32.mrf.mxu0
      %v3012 = vadd.f32 0.0, %v3011
      %3013 = vmatmul.f32.gmra.mxu0 %v2821
      %v3014 = vpop.f32.mrf.mxu0
      %v3015 = vadd.f32 0.0, %v3014
      %3016 = vdwg.mxu0
      %3017 = vmatpush.msra.mxu0 %v1646
      %3018 = vmatpush.msra.mxu0 %v1638
      %3019 = vmatpush.msra.mxu0 %v1630
      %3020 = vmatpush.msra.mxu0 %v1622
      %3021 = vmatpush.msra.mxu0 %v1614
      %3022 = vmatpush.msra.mxu0 %v1606
      %3023 = vmatpush.msra.mxu0 %v1598
      %3024 = vmatpush.msra.mxu0 %v1590
      %3025 = vmatpush.msra.mxu0 %v1582
      %3026 = vmatpush.msra.mxu0 %v1574
      %3027 = vmatpush.msra.mxu0 %v1566
      %3028 = vmatpush.msra.mxu0 %v1558
      %3029 = vmatpush.msra.mxu0 %v1550
      %3030 = vmatpush.msra.mxu0 %v1542
      %3031 = vmatpush.msra.mxu0 %v1534
      %3032 = vmatpush.msra.mxu0 %v1526
      %3033 = vmatmul.f32.gmra.mxu0 %v2806
      %v3034 = vpop.f32.mrf.mxu0
      %v3035 = vadd.f32 0.0, %v3034
      %3036 = vmatmul.f32.gmra.mxu0 %v2807
      %v3037 = vpop.f32.mrf.mxu0
      %v3038 = vadd.f32 0.0, %v3037
      %3039 = vmatmul.f32.gmra.mxu0 %v2808
      %v3040 = vpop.f32.mrf.mxu0
      %v3041 = vadd.f32 0.0, %v3040
      %3042 = vmatmul.f32.gmra.mxu0 %v2809
      %v3043 = vpop.f32.mrf.mxu0
      %v3044 = vadd.f32 0.0, %v3043
      %3045 = vmatmul.f32.gmra.mxu0 %v2810
      %v3046 = vpop.f32.mrf.mxu0
      %v3047 = vadd.f32 0.0, %v3046
      %3048 = vmatmul.f32.gmra.mxu0 %v2811
      %v3049 = vpop.f32.mrf.mxu0
      %v3050 = vadd.f32 0.0, %v3049
      %3051 = vmatmul.f32.gmra.mxu0 %v2812
      %v3052 = vpop.f32.mrf.mxu0
      %v3053 = vadd.f32 0.0, %v3052
      %3054 = vmatmul.f32.gmra.mxu0 %v2813
      %v3055 = vpop.f32.mrf.mxu0
      %v3056 = vadd.f32 0.0, %v3055
      %3057 = vmatmul.f32.gmra.mxu0 %v2814
      %v3058 = vpop.f32.mrf.mxu0
      %v3059 = vadd.f32 0.0, %v3058
      %3060 = vmatmul.f32.gmra.mxu0 %v2815
      %v3061 = vpop.f32.mrf.mxu0
      %v3062 = vadd.f32 0.0, %v3061
      %3063 = vmatmul.f32.gmra.mxu0 %v2816
      %v3064 = vpop.f32.mrf.mxu0
      %v3065 = vadd.f32 0.0, %v3064
      %3066 = vmatmul.f32.gmra.mxu0 %v2817
      %v3067 = vpop.f32.mrf.mxu0
      %v3068 = vadd.f32 0.0, %v3067
      %3069 = vmatmul.f32.gmra.mxu0 %v2818
      %v3070 = vpop.f32.mrf.mxu0
      %v3071 = vadd.f32 0.0, %v3070
      %3072 = vmatmul.f32.gmra.mxu0 %v2819
      %v3073 = vpop.f32.mrf.mxu0
      %v3074 = vadd.f32 0.0, %v3073
      %3075 = vmatmul.f32.gmra.mxu0 %v2820
      %v3076 = vpop.f32.mrf.mxu0
      %v3077 = vadd.f32 0.0, %v3076
      %3078 = vmatmul.f32.gmra.mxu0 %v2821
      %v3079 = vpop.f32.mrf.mxu0
      %v3080 = vadd.f32 0.0, %v3079
      %3081 = vdwg.mxu0
      %3082 = vmatpush.msra.mxu0 %v1647
      %3083 = vmatpush.msra.mxu0 %v1639
      %3084 = vmatpush.msra.mxu0 %v1631
      %3085 = vmatpush.msra.mxu0 %v1623
      %3086 = vmatpush.msra.mxu0 %v1615
      %3087 = vmatpush.msra.mxu0 %v1607
      %3088 = vmatpush.msra.mxu0 %v1599
      %3089 = vmatpush.msra.mxu0 %v1591
      %3090 = vmatpush.msra.mxu0 %v1583
      %3091 = vmatpush.msra.mxu0 %v1575
      %3092 = vmatpush.msra.mxu0 %v1567
      %3093 = vmatpush.msra.mxu0 %v1559
      %3094 = vmatpush.msra.mxu0 %v1551
      %3095 = vmatpush.msra.mxu0 %v1543
      %3096 = vmatpush.msra.mxu0 %v1535
      %3097 = vmatpush.msra.mxu0 %v1527
      %3098 = vmatmul.f32.gmra.mxu0 %v2806
      %v3099 = vpop.f32.mrf.mxu0
      %v3100 = vadd.f32 0.0, %v3099
      %3101 = vmatmul.f32.gmra.mxu0 %v2807
      %v3102 = vpop.f32.mrf.mxu0
      %v3103 = vadd.f32 0.0, %v3102
      %3104 = vmatmul.f32.gmra.mxu0 %v2808
      %v3105 = vpop.f32.mrf.mxu0
      %v3106 = vadd.f32 0.0, %v3105
      %3107 = vmatmul.f32.gmra.mxu0 %v2809
      %v3108 = vpop.f32.mrf.mxu0
      %v3109 = vadd.f32 0.0, %v3108
      %3110 = vmatmul.f32.gmra.mxu0 %v2810
      %v3111 = vpop.f32.mrf.mxu0
      %v3112 = vadd.f32 0.0, %v3111
      %3113 = vmatmul.f32.gmra.mxu0 %v2811
      %v3114 = vpop.f32.mrf.mxu0
      %v3115 = vadd.f32 0.0, %v3114
      %3116 = vmatmul.f32.gmra.mxu0 %v2812
      %v3117 = vpop.f32.mrf.mxu0
      %v3118 = vadd.f32 0.0, %v3117
      %3119 = vmatmul.f32.gmra.mxu0 %v2813
      %v3120 = vpop.f32.mrf.mxu0
      %v3121 = vadd.f32 0.0, %v3120
      %3122 = vmatmul.f32.gmra.mxu0 %v2814
      %v3123 = vpop.f32.mrf.mxu0
      %v3124 = vadd.f32 0.0, %v3123
      %3125 = vmatmul.f32.gmra.mxu0 %v2815
      %v3126 = vpop.f32.mrf.mxu0
      %v3127 = vadd.f32 0.0, %v3126
      %3128 = vmatmul.f32.gmra.mxu0 %v2816
      %v3129 = vpop.f32.mrf.mxu0
      %v3130 = vadd.f32 0.0, %v3129
      %3131 = vmatmul.f32.gmra.mxu0 %v2817
      %v3132 = vpop.f32.mrf.mxu0
      %v3133 = vadd.f32 0.0, %v3132
      %3134 = vmatmul.f32.gmra.mxu0 %v2818
      %v3135 = vpop.f32.mrf.mxu0
      %v3136 = vadd.f32 0.0, %v3135
      %3137 = vmatmul.f32.gmra.mxu0 %v2819
      %v3138 = vpop.f32.mrf.mxu0
      %v3139 = vadd.f32 0.0, %v3138
      %3140 = vmatmul.f32.gmra.mxu0 %v2820
      %v3141 = vpop.f32.mrf.mxu0
      %v3142 = vadd.f32 0.0, %v3141
      %3143 = vmatmul.f32.gmra.mxu0 %v2821
      %v3144 = vpop.f32.mrf.mxu0
      %v3145 = vadd.f32 0.0, %v3144
      %3146 = vdwg.mxu0
      %3147 = vmatpush.msra.mxu0 %v1648
      %3148 = vmatpush.msra.mxu0 %v1640
      %3149 = vmatpush.msra.mxu0 %v1632
      %3150 = vmatpush.msra.mxu0 %v1624
      %3151 = vmatpush.msra.mxu0 %v1616
      %3152 = vmatpush.msra.mxu0 %v1608
      %3153 = vmatpush.msra.mxu0 %v1600
      %3154 = vmatpush.msra.mxu0 %v1592
      %3155 = vmatpush.msra.mxu0 %v1584
      %3156 = vmatpush.msra.mxu0 %v1576
      %3157 = vmatpush.msra.mxu0 %v1568
      %3158 = vmatpush.msra.mxu0 %v1560
      %3159 = vmatpush.msra.mxu0 %v1552
      %3160 = vmatpush.msra.mxu0 %v1544
      %3161 = vmatpush.msra.mxu0 %v1536
      %3162 = vmatpush.msra.mxu0 %v1528
      %3163 = vmatmul.f32.gmra.mxu0 %v2806
      %v3164 = vpop.f32.mrf.mxu0
      %v3165 = vadd.f32 0.0, %v3164
      %3166 = vmatmul.f32.gmra.mxu0 %v2807
      %v3167 = vpop.f32.mrf.mxu0
      %v3168 = vadd.f32 0.0, %v3167
      %3169 = vmatmul.f32.gmra.mxu0 %v2808
      %v3170 = vpop.f32.mrf.mxu0
      %v3171 = vadd.f32 0.0, %v3170
      %3172 = vmatmul.f32.gmra.mxu0 %v2809
      %v3173 = vpop.f32.mrf.mxu0
      %v3174 = vadd.f32 0.0, %v3173
      %3175 = vmatmul.f32.gmra.mxu0 %v2810
      %v3176 = vpop.f32.mrf.mxu0
      %v3177 = vadd.f32 0.0, %v3176
      %3178 = vmatmul.f32.gmra.mxu0 %v2811
      %v3179 = vpop.f32.mrf.mxu0
      %v3180 = vadd.f32 0.0, %v3179
      %3181 = vmatmul.f32.gmra.mxu0 %v2812
      %v3182 = vpop.f32.mrf.mxu0
      %v3183 = vadd.f32 0.0, %v3182
      %3184 = vmatmul.f32.gmra.mxu0 %v2813
      %v3185 = vpop.f32.mrf.mxu0
      %v3186 = vadd.f32 0.0, %v3185
      %3187 = vmatmul.f32.gmra.mxu0 %v2814
      %v3188 = vpop.f32.mrf.mxu0
      %v3189 = vadd.f32 0.0, %v3188
      %3190 = vmatmul.f32.gmra.mxu0 %v2815
      %v3191 = vpop.f32.mrf.mxu0
      %v3192 = vadd.f32 0.0, %v3191
      %3193 = vmatmul.f32.gmra.mxu0 %v2816
      %v3194 = vpop.f32.mrf.mxu0
      %v3195 = vadd.f32 0.0, %v3194
      %3196 = vmatmul.f32.gmra.mxu0 %v2817
      %v3197 = vpop.f32.mrf.mxu0
      %v3198 = vadd.f32 0.0, %v3197
      %3199 = vmatmul.f32.gmra.mxu0 %v2818
      %v3200 = vpop.f32.mrf.mxu0
      %v3201 = vadd.f32 0.0, %v3200
      %3202 = vmatmul.f32.gmra.mxu0 %v2819
      %v3203 = vpop.f32.mrf.mxu0
      %v3204 = vadd.f32 0.0, %v3203
      %3205 = vmatmul.f32.gmra.mxu0 %v2820
      %v3206 = vpop.f32.mrf.mxu0
      %v3207 = vadd.f32 0.0, %v3206
      %3208 = vmatmul.f32.gmra.mxu0 %v2821
      %v3209 = vpop.f32.mrf.mxu0
      %v3210 = vadd.f32 0.0, %v3209
      %3211 = vdwg.mxu0
      %3212 = vmatpush.msra.mxu0 %v1649
      %3213 = vmatpush.msra.mxu0 %v1641
      %3214 = vmatpush.msra.mxu0 %v1633
      %3215 = vmatpush.msra.mxu0 %v1625
      %3216 = vmatpush.msra.mxu0 %v1617
      %3217 = vmatpush.msra.mxu0 %v1609
      %3218 = vmatpush.msra.mxu0 %v1601
      %3219 = vmatpush.msra.mxu0 %v1593
      %3220 = vmatpush.msra.mxu0 %v1585
      %3221 = vmatpush.msra.mxu0 %v1577
      %3222 = vmatpush.msra.mxu0 %v1569
      %3223 = vmatpush.msra.mxu0 %v1561
      %3224 = vmatpush.msra.mxu0 %v1553
      %3225 = vmatpush.msra.mxu0 %v1545
      %3226 = vmatpush.msra.mxu0 %v1537
      %3227 = vmatpush.msra.mxu0 %v1529
      %3228 = vmatmul.f32.gmra.mxu0 %v2806
      %v3229 = vpop.f32.mrf.mxu0
      %v3230 = vadd.f32 0.0, %v3229
      %3231 = vmatmul.f32.gmra.mxu0 %v2807
      %v3232 = vpop.f32.mrf.mxu0
      %v3233 = vadd.f32 0.0, %v3232
      %3234 = vmatmul.f32.gmra.mxu0 %v2808
      %v3235 = vpop.f32.mrf.mxu0
      %v3236 = vadd.f32 0.0, %v3235
      %3237 = vmatmul.f32.gmra.mxu0 %v2809
      %v3238 = vpop.f32.mrf.mxu0
      %v3239 = vadd.f32 0.0, %v3238
      %3240 = vmatmul.f32.gmra.mxu0 %v2810
      %v3241 = vpop.f32.mrf.mxu0
      %v3242 = vadd.f32 0.0, %v3241
      %3243 = vmatmul.f32.gmra.mxu0 %v2811
      %v3244 = vpop.f32.mrf.mxu0
      %v3245 = vadd.f32 0.0, %v3244
      %3246 = vmatmul.f32.gmra.mxu0 %v2812
      %v3247 = vpop.f32.mrf.mxu0
      %v3248 = vadd.f32 0.0, %v3247
      %3249 = vmatmul.f32.gmra.mxu0 %v2813
      %v3250 = vpop.f32.mrf.mxu0
      %v3251 = vadd.f32 0.0, %v3250
      %3252 = vmatmul.f32.gmra.mxu0 %v2814
      %v3253 = vpop.f32.mrf.mxu0
      %v3254 = vadd.f32 0.0, %v3253
      %3255 = vmatmul.f32.gmra.mxu0 %v2815
      %v3256 = vpop.f32.mrf.mxu0
      %v3257 = vadd.f32 0.0, %v3256
      %3258 = vmatmul.f32.gmra.mxu0 %v2816
      %v3259 = vpop.f32.mrf.mxu0
      %v3260 = vadd.f32 0.0, %v3259
      %3261 = vmatmul.f32.gmra.mxu0 %v2817
      %v3262 = vpop.f32.mrf.mxu0
      %v3263 = vadd.f32 0.0, %v3262
      %3264 = vmatmul.f32.gmra.mxu0 %v2818
      %v3265 = vpop.f32.mrf.mxu0
      %v3266 = vadd.f32 0.0, %v3265
      %3267 = vmatmul.f32.gmra.mxu0 %v2819
      %v3268 = vpop.f32.mrf.mxu0
      %v3269 = vadd.f32 0.0, %v3268
      %3270 = vmatmul.f32.gmra.mxu0 %v2820
      %v3271 = vpop.f32.mrf.mxu0
      %v3272 = vadd.f32 0.0, %v3271
      %3273 = vmatmul.f32.gmra.mxu0 %v2821
      %v3274 = vpop.f32.mrf.mxu0
      %v3275 = vadd.f32 0.0, %v3274
      %3276 = vdwg.mxu0
      %3277 = vmatpush.msra.mxu0 %v1650
      %3278 = vmatpush.msra.mxu0 %v1642
      %3279 = vmatpush.msra.mxu0 %v1634
      %3280 = vmatpush.msra.mxu0 %v1626
      %3281 = vmatpush.msra.mxu0 %v1618
      %3282 = vmatpush.msra.mxu0 %v1610
      %3283 = vmatpush.msra.mxu0 %v1602
      %3284 = vmatpush.msra.mxu0 %v1594
      %3285 = vmatpush.msra.mxu0 %v1586
      %3286 = vmatpush.msra.mxu0 %v1578
      %3287 = vmatpush.msra.mxu0 %v1570
      %3288 = vmatpush.msra.mxu0 %v1562
      %3289 = vmatpush.msra.mxu0 %v1554
      %3290 = vmatpush.msra.mxu0 %v1546
      %3291 = vmatpush.msra.mxu0 %v1538
      %3292 = vmatpush.msra.mxu0 %v1530
      %3293 = vmatmul.f32.gmra.mxu0 %v2806
      %v3294 = vpop.f32.mrf.mxu0
      %v3295 = vadd.f32 0.0, %v3294
      %3296 = vmatmul.f32.gmra.mxu0 %v2807
      %v3297 = vpop.f32.mrf.mxu0
      %v3298 = vadd.f32 0.0, %v3297
      %3299 = vmatmul.f32.gmra.mxu0 %v2808
      %v3300 = vpop.f32.mrf.mxu0
      %v3301 = vadd.f32 0.0, %v3300
      %3302 = vmatmul.f32.gmra.mxu0 %v2809
      %v3303 = vpop.f32.mrf.mxu0
      %v3304 = vadd.f32 0.0, %v3303
      %3305 = vmatmul.f32.gmra.mxu0 %v2810
      %v3306 = vpop.f32.mrf.mxu0
      %v3307 = vadd.f32 0.0, %v3306
      %3308 = vmatmul.f32.gmra.mxu0 %v2811
      %v3309 = vpop.f32.mrf.mxu0
      %v3310 = vadd.f32 0.0, %v3309
      %3311 = vmatmul.f32.gmra.mxu0 %v2812
      %v3312 = vpop.f32.mrf.mxu0
      %v3313 = vadd.f32 0.0, %v3312
      %3314 = vmatmul.f32.gmra.mxu0 %v2813
      %v3315 = vpop.f32.mrf.mxu0
      %v3316 = vadd.f32 0.0, %v3315
      %3317 = vmatmul.f32.gmra.mxu0 %v2814
      %v3318 = vpop.f32.mrf.mxu0
      %v3319 = vadd.f32 0.0, %v3318
      %3320 = vmatmul.f32.gmra.mxu0 %v2815
      %v3321 = vpop.f32.mrf.mxu0
      %v3322 = vadd.f32 0.0, %v3321
      %3323 = vmatmul.f32.gmra.mxu0 %v2816
      %v3324 = vpop.f32.mrf.mxu0
      %v3325 = vadd.f32 0.0, %v3324
      %3326 = vmatmul.f32.gmra.mxu0 %v2817
      %v3327 = vpop.f32.mrf.mxu0
      %v3328 = vadd.f32 0.0, %v3327
      %3329 = vmatmul.f32.gmra.mxu0 %v2818
      %v3330 = vpop.f32.mrf.mxu0
      %v3331 = vadd.f32 0.0, %v3330
      %3332 = vmatmul.f32.gmra.mxu0 %v2819
      %v3333 = vpop.f32.mrf.mxu0
      %v3334 = vadd.f32 0.0, %v3333
      %3335 = vmatmul.f32.gmra.mxu0 %v2820
      %v3336 = vpop.f32.mrf.mxu0
      %v3337 = vadd.f32 0.0, %v3336
      %3338 = vmatmul.f32.gmra.mxu0 %v2821
      %v3339 = vpop.f32.mrf.mxu0
      %v3340 = vadd.f32 0.0, %v3339
      %3341 = vdwg.mxu0
      %v3343 = vsel %vm750, %v2759, 0
      %v3346 = vsel %vm750, %v2762, 0
      %v3349 = vsel %vm750, %v2765, 0
      %v3352 = vsel %vm750, %v2768, 0
      %v3355 = vsel %vm750, %v2771, 0
      %v3358 = vsel %vm750, %v2774, 0
      %v3361 = vsel %vm750, %v2777, 0
      %v3364 = vsel %vm750, %v2780, 0
      %v3367 = vsel %vm750, %v2783, 0
      %v3370 = vsel %vm750, %v2786, 0
      %v3373 = vsel %vm750, %v2789, 0
      %v3376 = vsel %vm750, %v2792, 0
      %v3379 = vsel %vm750, %v2795, 0
      %v3382 = vsel %vm750, %v2798, 0
      %v3385 = vsel %vm750, %v2801, 0
      %v3388 = vsel %vm750, %v2804, 0
      %3390 = vmatpush.msra.mxu0 0.0
      %3391 = vmatpush.msra.mxu0 0.0
      %3392 = vmatpush.msra.mxu0 0.0
      %3393 = vmatpush.msra.mxu0 0.0
      %3394 = vmatpush.msra.mxu0 0.0
      %3395 = vmatpush.msra.mxu0 0.0
      %3396 = vmatpush.msra.mxu0 0.0
      %3397 = vmatpush.msra.mxu0 0.0
      %3398 = vmatpush.msra.mxu0 0.0
      %3399 = vmatpush.msra.mxu0 0.0
      %3400 = vmatpush.msra.mxu0 0.0
      %3401 = vmatpush.msra.mxu0 0.0
      %3402 = vmatpush.msra.mxu0 0.0
      %3403 = vmatpush.msra.mxu0 0.0
      %3404 = vmatpush.msra.mxu0 %v2717
      %3405 = vmatpush.msra.mxu0 %v2709
      %3406 = vmatmul.f32.gmra.mxu0 %v3343
      %v3407 = vpop.f32.mrf.mxu0
      %v3408 = vadd.f32 0.0, %v3407
      %3409 = vmatmul.f32.gmra.mxu0 %v3346
      %v3410 = vpop.f32.mrf.mxu0
      %v3411 = vadd.f32 0.0, %v3410
      %3412 = vmatmul.f32.gmra.mxu0 %v3349
      %v3413 = vpop.f32.mrf.mxu0
      %v3414 = vadd.f32 0.0, %v3413
      %3415 = vmatmul.f32.gmra.mxu0 %v3352
      %v3416 = vpop.f32.mrf.mxu0
      %v3417 = vadd.f32 0.0, %v3416
      %3418 = vmatmul.f32.gmra.mxu0 %v3355
      %v3419 = vpop.f32.mrf.mxu0
      %v3420 = vadd.f32 0.0, %v3419
      %3421 = vmatmul.f32.gmra.mxu0 %v3358
      %v3422 = vpop.f32.mrf.mxu0
      %v3423 = vadd.f32 0.0, %v3422
      %3424 = vmatmul.f32.gmra.mxu0 %v3361
      %v3425 = vpop.f32.mrf.mxu0
      %v3426 = vadd.f32 0.0, %v3425
      %3427 = vmatmul.f32.gmra.mxu0 %v3364
      %v3428 = vpop.f32.mrf.mxu0
      %v3429 = vadd.f32 0.0, %v3428
      %3430 = vmatmul.f32.gmra.mxu0 %v3367
      %v3431 = vpop.f32.mrf.mxu0
      %v3432 = vadd.f32 0.0, %v3431
      %3433 = vmatmul.f32.gmra.mxu0 %v3370
      %v3434 = vpop.f32.mrf.mxu0
      %v3435 = vadd.f32 0.0, %v3434
      %3436 = vmatmul.f32.gmra.mxu0 %v3373
      %v3437 = vpop.f32.mrf.mxu0
      %v3438 = vadd.f32 0.0, %v3437
      %3439 = vmatmul.f32.gmra.mxu0 %v3376
      %v3440 = vpop.f32.mrf.mxu0
      %v3441 = vadd.f32 0.0, %v3440
      %3442 = vmatmul.f32.gmra.mxu0 %v3379
      %v3443 = vpop.f32.mrf.mxu0
      %v3444 = vadd.f32 0.0, %v3443
      %3445 = vmatmul.f32.gmra.mxu0 %v3382
      %v3446 = vpop.f32.mrf.mxu0
      %v3447 = vadd.f32 0.0, %v3446
      %3448 = vmatmul.f32.gmra.mxu0 %v3385
      %v3449 = vpop.f32.mrf.mxu0
      %v3450 = vadd.f32 0.0, %v3449
      %3451 = vmatmul.f32.gmra.mxu0 %v3388
      %v3452 = vpop.f32.mrf.mxu0
      %v3453 = vadd.f32 0.0, %v3452
      %3454 = vdwg.mxu0
      %3455 = vmatpush.msra.mxu0 0.0
      %3456 = vmatpush.msra.mxu0 0.0
      %3457 = vmatpush.msra.mxu0 0.0
      %3458 = vmatpush.msra.mxu0 0.0
      %3459 = vmatpush.msra.mxu0 0.0
      %3460 = vmatpush.msra.mxu0 0.0
      %3461 = vmatpush.msra.mxu0 0.0
      %3462 = vmatpush.msra.mxu0 0.0
      %3463 = vmatpush.msra.mxu0 0.0
      %3464 = vmatpush.msra.mxu0 0.0
      %3465 = vmatpush.msra.mxu0 0.0
      %3466 = vmatpush.msra.mxu0 0.0
      %3467 = vmatpush.msra.mxu0 0.0
      %3468 = vmatpush.msra.mxu0 0.0
      %3469 = vmatpush.msra.mxu0 %v2718
      %3470 = vmatpush.msra.mxu0 %v2710
      %3471 = vmatmul.f32.gmra.mxu0 %v3343
      %v3472 = vpop.f32.mrf.mxu0
      %v3473 = vadd.f32 0.0, %v3472
      %3474 = vmatmul.f32.gmra.mxu0 %v3346
      %v3475 = vpop.f32.mrf.mxu0
      %v3476 = vadd.f32 0.0, %v3475
      %3477 = vmatmul.f32.gmra.mxu0 %v3349
      %v3478 = vpop.f32.mrf.mxu0
      %v3479 = vadd.f32 0.0, %v3478
      %3480 = vmatmul.f32.gmra.mxu0 %v3352
      %v3481 = vpop.f32.mrf.mxu0
      %v3482 = vadd.f32 0.0, %v3481
      %3483 = vmatmul.f32.gmra.mxu0 %v3355
      %v3484 = vpop.f32.mrf.mxu0
      %v3485 = vadd.f32 0.0, %v3484
      %3486 = vmatmul.f32.gmra.mxu0 %v3358
      %v3487 = vpop.f32.mrf.mxu0
      %v3488 = vadd.f32 0.0, %v3487
      %3489 = vmatmul.f32.gmra.mxu0 %v3361
      %v3490 = vpop.f32.mrf.mxu0
      %v3491 = vadd.f32 0.0, %v3490
      %3492 = vmatmul.f32.gmra.mxu0 %v3364
      %v3493 = vpop.f32.mrf.mxu0
      %v3494 = vadd.f32 0.0, %v3493
      %3495 = vmatmul.f32.gmra.mxu0 %v3367
      %v3496 = vpop.f32.mrf.mxu0
      %v3497 = vadd.f32 0.0, %v3496
      %3498 = vmatmul.f32.gmra.mxu0 %v3370
      %v3499 = vpop.f32.mrf.mxu0
      %v3500 = vadd.f32 0.0, %v3499
      %3501 = vmatmul.f32.gmra.mxu0 %v3373
      %v3502 = vpop.f32.mrf.mxu0
      %v3503 = vadd.f32 0.0, %v3502
      %3504 = vmatmul.f32.gmra.mxu0 %v3376
      %v3505 = vpop.f32.mrf.mxu0
      %v3506 = vadd.f32 0.0, %v3505
      %3507 = vmatmul.f32.gmra.mxu0 %v3379
      %v3508 = vpop.f32.mrf.mxu0
      %v3509 = vadd.f32 0.0, %v3508
      %3510 = vmatmul.f32.gmra.mxu0 %v3382
      %v3511 = vpop.f32.mrf.mxu0
      %v3512 = vadd.f32 0.0, %v3511
      %3513 = vmatmul.f32.gmra.mxu0 %v3385
      %v3514 = vpop.f32.mrf.mxu0
      %v3515 = vadd.f32 0.0, %v3514
      %3516 = vmatmul.f32.gmra.mxu0 %v3388
      %v3517 = vpop.f32.mrf.mxu0
      %v3518 = vadd.f32 0.0, %v3517
      %3519 = vdwg.mxu0
      %3520 = vmatpush.msra.mxu0 0.0
      %3521 = vmatpush.msra.mxu0 0.0
      %3522 = vmatpush.msra.mxu0 0.0
      %3523 = vmatpush.msra.mxu0 0.0
      %3524 = vmatpush.msra.mxu0 0.0
      %3525 = vmatpush.msra.mxu0 0.0
      %3526 = vmatpush.msra.mxu0 0.0
      %3527 = vmatpush.msra.mxu0 0.0
      %3528 = vmatpush.msra.mxu0 0.0
      %3529 = vmatpush.msra.mxu0 0.0
      %3530 = vmatpush.msra.mxu0 0.0
      %3531 = vmatpush.msra.mxu0 0.0
      %3532 = vmatpush.msra.mxu0 0.0
      %3533 = vmatpush.msra.mxu0 0.0
      %3534 = vmatpush.msra.mxu0 %v2719
      %3535 = vmatpush.msra.mxu0 %v2711
      %3536 = vmatmul.f32.gmra.mxu0 %v3343
      %v3537 = vpop.f32.mrf.mxu0
      %v3538 = vadd.f32 0.0, %v3537
      %3539 = vmatmul.f32.gmra.mxu0 %v3346
      %v3540 = vpop.f32.mrf.mxu0
      %v3541 = vadd.f32 0.0, %v3540
      %3542 = vmatmul.f32.gmra.mxu0 %v3349
      %v3543 = vpop.f32.mrf.mxu0
      %v3544 = vadd.f32 0.0, %v3543
      %3545 = vmatmul.f32.gmra.mxu0 %v3352
      %v3546 = vpop.f32.mrf.mxu0
      %v3547 = vadd.f32 0.0, %v3546
      %3548 = vmatmul.f32.gmra.mxu0 %v3355
      %v3549 = vpop.f32.mrf.mxu0
      %v3550 = vadd.f32 0.0, %v3549
      %3551 = vmatmul.f32.gmra.mxu0 %v3358
      %v3552 = vpop.f32.mrf.mxu0
      %v3553 = vadd.f32 0.0, %v3552
      %3554 = vmatmul.f32.gmra.mxu0 %v3361
      %v3555 = vpop.f32.mrf.mxu0
      %v3556 = vadd.f32 0.0, %v3555
      %3557 = vmatmul.f32.gmra.mxu0 %v3364
      %v3558 = vpop.f32.mrf.mxu0
      %v3559 = vadd.f32 0.0, %v3558
      %3560 = vmatmul.f32.gmra.mxu0 %v3367
      %v3561 = vpop.f32.mrf.mxu0
      %v3562 = vadd.f32 0.0, %v3561
      %3563 = vmatmul.f32.gmra.mxu0 %v3370
      %v3564 = vpop.f32.mrf.mxu0
      %v3565 = vadd.f32 0.0, %v3564
      %3566 = vmatmul.f32.gmra.mxu0 %v3373
      %v3567 = vpop.f32.mrf.mxu0
      %v3568 = vadd.f32 0.0, %v3567
      %3569 = vmatmul.f32.gmra.mxu0 %v3376
      %v3570 = vpop.f32.mrf.mxu0
      %v3571 = vadd.f32 0.0, %v3570
      %3572 = vmatmul.f32.gmra.mxu0 %v3379
      %v3573 = vpop.f32.mrf.mxu0
      %v3574 = vadd.f32 0.0, %v3573
      %3575 = vmatmul.f32.gmra.mxu0 %v3382
      %v3576 = vpop.f32.mrf.mxu0
      %v3577 = vadd.f32 0.0, %v3576
      %3578 = vmatmul.f32.gmra.mxu0 %v3385
      %v3579 = vpop.f32.mrf.mxu0
      %v3580 = vadd.f32 0.0, %v3579
      %3581 = vmatmul.f32.gmra.mxu0 %v3388
      %v3582 = vpop.f32.mrf.mxu0
      %v3583 = vadd.f32 0.0, %v3582
      %3584 = vdwg.mxu0
      %3585 = vmatpush.msra.mxu0 0.0
      %3586 = vmatpush.msra.mxu0 0.0
      %3587 = vmatpush.msra.mxu0 0.0
      %3588 = vmatpush.msra.mxu0 0.0
      %3589 = vmatpush.msra.mxu0 0.0
      %3590 = vmatpush.msra.mxu0 0.0
      %3591 = vmatpush.msra.mxu0 0.0
      %3592 = vmatpush.msra.mxu0 0.0
      %3593 = vmatpush.msra.mxu0 0.0
      %3594 = vmatpush.msra.mxu0 0.0
      %3595 = vmatpush.msra.mxu0 0.0
      %3596 = vmatpush.msra.mxu0 0.0
      %3597 = vmatpush.msra.mxu0 0.0
      %3598 = vmatpush.msra.mxu0 0.0
      %3599 = vmatpush.msra.mxu0 %v2720
      %3600 = vmatpush.msra.mxu0 %v2712
      %3601 = vmatmul.f32.gmra.mxu0 %v3343
      %v3602 = vpop.f32.mrf.mxu0
      %v3603 = vadd.f32 0.0, %v3602
      %3604 = vmatmul.f32.gmra.mxu0 %v3346
      %v3605 = vpop.f32.mrf.mxu0
      %v3606 = vadd.f32 0.0, %v3605
      %3607 = vmatmul.f32.gmra.mxu0 %v3349
      %v3608 = vpop.f32.mrf.mxu0
      %v3609 = vadd.f32 0.0, %v3608
      %3610 = vmatmul.f32.gmra.mxu0 %v3352
      %v3611 = vpop.f32.mrf.mxu0
      %v3612 = vadd.f32 0.0, %v3611
      %3613 = vmatmul.f32.gmra.mxu0 %v3355
      %v3614 = vpop.f32.mrf.mxu0
      %v3615 = vadd.f32 0.0, %v3614
      %3616 = vmatmul.f32.gmra.mxu0 %v3358
      %v3617 = vpop.f32.mrf.mxu0
      %v3618 = vadd.f32 0.0, %v3617
      %3619 = vmatmul.f32.gmra.mxu0 %v3361
      %v3620 = vpop.f32.mrf.mxu0
      %v3621 = vadd.f32 0.0, %v3620
      %3622 = vmatmul.f32.gmra.mxu0 %v3364
      %v3623 = vpop.f32.mrf.mxu0
      %v3624 = vadd.f32 0.0, %v3623
      %3625 = vmatmul.f32.gmra.mxu0 %v3367
      %v3626 = vpop.f32.mrf.mxu0
      %v3627 = vadd.f32 0.0, %v3626
      %3628 = vmatmul.f32.gmra.mxu0 %v3370
      %v3629 = vpop.f32.mrf.mxu0
      %v3630 = vadd.f32 0.0, %v3629
      %3631 = vmatmul.f32.gmra.mxu0 %v3373
      %v3632 = vpop.f32.mrf.mxu0
      %v3633 = vadd.f32 0.0, %v3632
      %3634 = vmatmul.f32.gmra.mxu0 %v3376
      %v3635 = vpop.f32.mrf.mxu0
      %v3636 = vadd.f32 0.0, %v3635
      %3637 = vmatmul.f32.gmra.mxu0 %v3379
      %v3638 = vpop.f32.mrf.mxu0
      %v3639 = vadd.f32 0.0, %v3638
      %3640 = vmatmul.f32.gmra.mxu0 %v3382
      %v3641 = vpop.f32.mrf.mxu0
      %v3642 = vadd.f32 0.0, %v3641
      %3643 = vmatmul.f32.gmra.mxu0 %v3385
      %v3644 = vpop.f32.mrf.mxu0
      %v3645 = vadd.f32 0.0, %v3644
      %3646 = vmatmul.f32.gmra.mxu0 %v3388
      %v3647 = vpop.f32.mrf.mxu0
      %v3648 = vadd.f32 0.0, %v3647
      %3649 = vdwg.mxu0
      %3650 = vmatpush.msra.mxu0 0.0
      %3651 = vmatpush.msra.mxu0 0.0
      %3652 = vmatpush.msra.mxu0 0.0
      %3653 = vmatpush.msra.mxu0 0.0
      %3654 = vmatpush.msra.mxu0 0.0
      %3655 = vmatpush.msra.mxu0 0.0
      %3656 = vmatpush.msra.mxu0 0.0
      %3657 = vmatpush.msra.mxu0 0.0
      %3658 = vmatpush.msra.mxu0 0.0
      %3659 = vmatpush.msra.mxu0 0.0
      %3660 = vmatpush.msra.mxu0 0.0
      %3661 = vmatpush.msra.mxu0 0.0
      %3662 = vmatpush.msra.mxu0 0.0
      %3663 = vmatpush.msra.mxu0 0.0
      %3664 = vmatpush.msra.mxu0 %v2721
      %3665 = vmatpush.msra.mxu0 %v2713
      %3666 = vmatmul.f32.gmra.mxu0 %v3343
      %v3667 = vpop.f32.mrf.mxu0
      %v3668 = vadd.f32 0.0, %v3667
      %3669 = vmatmul.f32.gmra.mxu0 %v3346
      %v3670 = vpop.f32.mrf.mxu0
      %v3671 = vadd.f32 0.0, %v3670
      %3672 = vmatmul.f32.gmra.mxu0 %v3349
      %v3673 = vpop.f32.mrf.mxu0
      %v3674 = vadd.f32 0.0, %v3673
      %3675 = vmatmul.f32.gmra.mxu0 %v3352
      %v3676 = vpop.f32.mrf.mxu0
      %v3677 = vadd.f32 0.0, %v3676
      %3678 = vmatmul.f32.gmra.mxu0 %v3355
      %v3679 = vpop.f32.mrf.mxu0
      %v3680 = vadd.f32 0.0, %v3679
      %3681 = vmatmul.f32.gmra.mxu0 %v3358
      %v3682 = vpop.f32.mrf.mxu0
      %v3683 = vadd.f32 0.0, %v3682
      %3684 = vmatmul.f32.gmra.mxu0 %v3361
      %v3685 = vpop.f32.mrf.mxu0
      %v3686 = vadd.f32 0.0, %v3685
      %3687 = vmatmul.f32.gmra.mxu0 %v3364
      %v3688 = vpop.f32.mrf.mxu0
      %v3689 = vadd.f32 0.0, %v3688
      %3690 = vmatmul.f32.gmra.mxu0 %v3367
      %v3691 = vpop.f32.mrf.mxu0
      %v3692 = vadd.f32 0.0, %v3691
      %3693 = vmatmul.f32.gmra.mxu0 %v3370
      %v3694 = vpop.f32.mrf.mxu0
      %v3695 = vadd.f32 0.0, %v3694
      %3696 = vmatmul.f32.gmra.mxu0 %v3373
      %v3697 = vpop.f32.mrf.mxu0
      %v3698 = vadd.f32 0.0, %v3697
      %3699 = vmatmul.f32.gmra.mxu0 %v3376
      %v3700 = vpop.f32.mrf.mxu0
      %v3701 = vadd.f32 0.0, %v3700
      %3702 = vmatmul.f32.gmra.mxu0 %v3379
      %v3703 = vpop.f32.mrf.mxu0
      %v3704 = vadd.f32 0.0, %v3703
      %3705 = vmatmul.f32.gmra.mxu0 %v3382
      %v3706 = vpop.f32.mrf.mxu0
      %v3707 = vadd.f32 0.0, %v3706
      %3708 = vmatmul.f32.gmra.mxu0 %v3385
      %v3709 = vpop.f32.mrf.mxu0
      %v3710 = vadd.f32 0.0, %v3709
      %3711 = vmatmul.f32.gmra.mxu0 %v3388
      %v3712 = vpop.f32.mrf.mxu0
      %v3713 = vadd.f32 0.0, %v3712
      %3714 = vdwg.mxu0
      %3715 = vmatpush.msra.mxu0 0.0
      %3716 = vmatpush.msra.mxu0 0.0
      %3717 = vmatpush.msra.mxu0 0.0
      %3718 = vmatpush.msra.mxu0 0.0
      %3719 = vmatpush.msra.mxu0 0.0
      %3720 = vmatpush.msra.mxu0 0.0
      %3721 = vmatpush.msra.mxu0 0.0
      %3722 = vmatpush.msra.mxu0 0.0
      %3723 = vmatpush.msra.mxu0 0.0
      %3724 = vmatpush.msra.mxu0 0.0
      %3725 = vmatpush.msra.mxu0 0.0
      %3726 = vmatpush.msra.mxu0 0.0
      %3727 = vmatpush.msra.mxu0 0.0
      %3728 = vmatpush.msra.mxu0 0.0
      %3729 = vmatpush.msra.mxu0 %v2722
      %3730 = vmatpush.msra.mxu0 %v2714
      %3731 = vmatmul.f32.gmra.mxu0 %v3343
      %v3732 = vpop.f32.mrf.mxu0
      %v3733 = vadd.f32 0.0, %v3732
      %3734 = vmatmul.f32.gmra.mxu0 %v3346
      %v3735 = vpop.f32.mrf.mxu0
      %v3736 = vadd.f32 0.0, %v3735
      %3737 = vmatmul.f32.gmra.mxu0 %v3349
      %v3738 = vpop.f32.mrf.mxu0
      %v3739 = vadd.f32 0.0, %v3738
      %3740 = vmatmul.f32.gmra.mxu0 %v3352
      %v3741 = vpop.f32.mrf.mxu0
      %v3742 = vadd.f32 0.0, %v3741
      %3743 = vmatmul.f32.gmra.mxu0 %v3355
      %v3744 = vpop.f32.mrf.mxu0
      %v3745 = vadd.f32 0.0, %v3744
      %3746 = vmatmul.f32.gmra.mxu0 %v3358
      %v3747 = vpop.f32.mrf.mxu0
      %v3748 = vadd.f32 0.0, %v3747
      %3749 = vmatmul.f32.gmra.mxu0 %v3361
      %v3750 = vpop.f32.mrf.mxu0
      %v3751 = vadd.f32 0.0, %v3750
      %3752 = vmatmul.f32.gmra.mxu0 %v3364
      %v3753 = vpop.f32.mrf.mxu0
      %v3754 = vadd.f32 0.0, %v3753
      %3755 = vmatmul.f32.gmra.mxu0 %v3367
      %v3756 = vpop.f32.mrf.mxu0
      %v3757 = vadd.f32 0.0, %v3756
      %3758 = vmatmul.f32.gmra.mxu0 %v3370
      %v3759 = vpop.f32.mrf.mxu0
      %v3760 = vadd.f32 0.0, %v3759
      %3761 = vmatmul.f32.gmra.mxu0 %v3373
      %v3762 = vpop.f32.mrf.mxu0
      %v3763 = vadd.f32 0.0, %v3762
      %3764 = vmatmul.f32.gmra.mxu0 %v3376
      %v3765 = vpop.f32.mrf.mxu0
      %v3766 = vadd.f32 0.0, %v3765
      %3767 = vmatmul.f32.gmra.mxu0 %v3379
      %v3768 = vpop.f32.mrf.mxu0
      %v3769 = vadd.f32 0.0, %v3768
      %3770 = vmatmul.f32.gmra.mxu0 %v3382
      %v3771 = vpop.f32.mrf.mxu0
      %v3772 = vadd.f32 0.0, %v3771
      %3773 = vmatmul.f32.gmra.mxu0 %v3385
      %v3774 = vpop.f32.mrf.mxu0
      %v3775 = vadd.f32 0.0, %v3774
      %3776 = vmatmul.f32.gmra.mxu0 %v3388
      %v3777 = vpop.f32.mrf.mxu0
      %v3778 = vadd.f32 0.0, %v3777
      %3779 = vdwg.mxu0
      %3780 = vmatpush.msra.mxu0 0.0
      %3781 = vmatpush.msra.mxu0 0.0
      %3782 = vmatpush.msra.mxu0 0.0
      %3783 = vmatpush.msra.mxu0 0.0
      %3784 = vmatpush.msra.mxu0 0.0
      %3785 = vmatpush.msra.mxu0 0.0
      %3786 = vmatpush.msra.mxu0 0.0
      %3787 = vmatpush.msra.mxu0 0.0
      %3788 = vmatpush.msra.mxu0 0.0
      %3789 = vmatpush.msra.mxu0 0.0
      %3790 = vmatpush.msra.mxu0 0.0
      %3791 = vmatpush.msra.mxu0 0.0
      %3792 = vmatpush.msra.mxu0 0.0
      %3793 = vmatpush.msra.mxu0 0.0
      %3794 = vmatpush.msra.mxu0 %v2723
      %3795 = vmatpush.msra.mxu0 %v2715
      %3796 = vmatmul.f32.gmra.mxu0 %v3343
      %v3797 = vpop.f32.mrf.mxu0
      %v3798 = vadd.f32 0.0, %v3797
      %3799 = vmatmul.f32.gmra.mxu0 %v3346
      %v3800 = vpop.f32.mrf.mxu0
      %v3801 = vadd.f32 0.0, %v3800
      %3802 = vmatmul.f32.gmra.mxu0 %v3349
      %v3803 = vpop.f32.mrf.mxu0
      %v3804 = vadd.f32 0.0, %v3803
      %3805 = vmatmul.f32.gmra.mxu0 %v3352
      %v3806 = vpop.f32.mrf.mxu0
      %v3807 = vadd.f32 0.0, %v3806
      %3808 = vmatmul.f32.gmra.mxu0 %v3355
      %v3809 = vpop.f32.mrf.mxu0
      %v3810 = vadd.f32 0.0, %v3809
      %3811 = vmatmul.f32.gmra.mxu0 %v3358
      %v3812 = vpop.f32.mrf.mxu0
      %v3813 = vadd.f32 0.0, %v3812
      %3814 = vmatmul.f32.gmra.mxu0 %v3361
      %v3815 = vpop.f32.mrf.mxu0
      %v3816 = vadd.f32 0.0, %v3815
      %3817 = vmatmul.f32.gmra.mxu0 %v3364
      %v3818 = vpop.f32.mrf.mxu0
      %v3819 = vadd.f32 0.0, %v3818
      %3820 = vmatmul.f32.gmra.mxu0 %v3367
      %v3821 = vpop.f32.mrf.mxu0
      %v3822 = vadd.f32 0.0, %v3821
      %3823 = vmatmul.f32.gmra.mxu0 %v3370
      %v3824 = vpop.f32.mrf.mxu0
      %v3825 = vadd.f32 0.0, %v3824
      %3826 = vmatmul.f32.gmra.mxu0 %v3373
      %v3827 = vpop.f32.mrf.mxu0
      %v3828 = vadd.f32 0.0, %v3827
      %3829 = vmatmul.f32.gmra.mxu0 %v3376
      %v3830 = vpop.f32.mrf.mxu0
      %v3831 = vadd.f32 0.0, %v3830
      %3832 = vmatmul.f32.gmra.mxu0 %v3379
      %v3833 = vpop.f32.mrf.mxu0
      %v3834 = vadd.f32 0.0, %v3833
      %3835 = vmatmul.f32.gmra.mxu0 %v3382
      %v3836 = vpop.f32.mrf.mxu0
      %v3837 = vadd.f32 0.0, %v3836
      %3838 = vmatmul.f32.gmra.mxu0 %v3385
      %v3839 = vpop.f32.mrf.mxu0
      %v3840 = vadd.f32 0.0, %v3839
      %3841 = vmatmul.f32.gmra.mxu0 %v3388
      %v3842 = vpop.f32.mrf.mxu0
      %v3843 = vadd.f32 0.0, %v3842
      %3844 = vdwg.mxu0
      %3845 = vmatpush.msra.mxu0 0.0
      %3846 = vmatpush.msra.mxu0 0.0
      %3847 = vmatpush.msra.mxu0 0.0
      %3848 = vmatpush.msra.mxu0 0.0
      %3849 = vmatpush.msra.mxu0 0.0
      %3850 = vmatpush.msra.mxu0 0.0
      %3851 = vmatpush.msra.mxu0 0.0
      %3852 = vmatpush.msra.mxu0 0.0
      %3853 = vmatpush.msra.mxu0 0.0
      %3854 = vmatpush.msra.mxu0 0.0
      %3855 = vmatpush.msra.mxu0 0.0
      %3856 = vmatpush.msra.mxu0 0.0
      %3857 = vmatpush.msra.mxu0 0.0
      %3858 = vmatpush.msra.mxu0 0.0
      %3859 = vmatpush.msra.mxu0 %v2724
      %3860 = vmatpush.msra.mxu0 %v2716
      %3861 = vmatmul.f32.gmra.mxu0 %v3343
      %v3862 = vpop.f32.mrf.mxu0
      %v3863 = vadd.f32 0.0, %v3862
      %3864 = vmatmul.f32.gmra.mxu0 %v3346
      %v3865 = vpop.f32.mrf.mxu0
      %v3866 = vadd.f32 0.0, %v3865
      %3867 = vmatmul.f32.gmra.mxu0 %v3349
      %v3868 = vpop.f32.mrf.mxu0
      %v3869 = vadd.f32 0.0, %v3868
      %3870 = vmatmul.f32.gmra.mxu0 %v3352
      %v3871 = vpop.f32.mrf.mxu0
      %v3872 = vadd.f32 0.0, %v3871
      %3873 = vmatmul.f32.gmra.mxu0 %v3355
      %v3874 = vpop.f32.mrf.mxu0
      %v3875 = vadd.f32 0.0, %v3874
      %3876 = vmatmul.f32.gmra.mxu0 %v3358
      %v3877 = vpop.f32.mrf.mxu0
      %v3878 = vadd.f32 0.0, %v3877
      %3879 = vmatmul.f32.gmra.mxu0 %v3361
      %v3880 = vpop.f32.mrf.mxu0
      %v3881 = vadd.f32 0.0, %v3880
      %3882 = vmatmul.f32.gmra.mxu0 %v3364
      %v3883 = vpop.f32.mrf.mxu0
      %v3884 = vadd.f32 0.0, %v3883
      %3885 = vmatmul.f32.gmra.mxu0 %v3367
      %v3886 = vpop.f32.mrf.mxu0
      %v3887 = vadd.f32 0.0, %v3886
      %3888 = vmatmul.f32.gmra.mxu0 %v3370
      %v3889 = vpop.f32.mrf.mxu0
      %v3890 = vadd.f32 0.0, %v3889
      %3891 = vmatmul.f32.gmra.mxu0 %v3373
      %v3892 = vpop.f32.mrf.mxu0
      %v3893 = vadd.f32 0.0, %v3892
      %3894 = vmatmul.f32.gmra.mxu0 %v3376
      %v3895 = vpop.f32.mrf.mxu0
      %v3896 = vadd.f32 0.0, %v3895
      %3897 = vmatmul.f32.gmra.mxu0 %v3379
      %v3898 = vpop.f32.mrf.mxu0
      %v3899 = vadd.f32 0.0, %v3898
      %3900 = vmatmul.f32.gmra.mxu0 %v3382
      %v3901 = vpop.f32.mrf.mxu0
      %v3902 = vadd.f32 0.0, %v3901
      %3903 = vmatmul.f32.gmra.mxu0 %v3385
      %v3904 = vpop.f32.mrf.mxu0
      %v3905 = vadd.f32 0.0, %v3904
      %3906 = vmatmul.f32.gmra.mxu0 %v3388
      %v3907 = vpop.f32.mrf.mxu0
      %v3908 = vadd.f32 0.0, %v3907
      %3909 = vdwg.mxu0
      %v3910 = vmul.f32 %v2840, %v3408
      %v3911 = vmul.f32 %v2905, %v3473
      %v3912 = vmul.f32 %v2970, %v3538
      %v3913 = vmul.f32 %v3035, %v3603
      %v3914 = vmul.f32 %v3100, %v3668
      %v3915 = vmul.f32 %v3165, %v3733
      %v3916 = vmul.f32 %v3230, %v3798
      %v3917 = vmul.f32 %v3295, %v3863
      %v3918 = vmul.f32 %v2843, %v3411
      %v3919 = vmul.f32 %v2908, %v3476
      %v3920 = vmul.f32 %v2973, %v3541
      %v3921 = vmul.f32 %v3038, %v3606
      %v3922 = vmul.f32 %v3103, %v3671
      %v3923 = vmul.f32 %v3168, %v3736
      %v3924 = vmul.f32 %v3233, %v3801
      %v3925 = vmul.f32 %v3298, %v3866
      %v3926 = vmul.f32 %v2846, %v3414
      %v3927 = vmul.f32 %v2911, %v3479
      %v3928 = vmul.f32 %v2976, %v3544
      %v3929 = vmul.f32 %v3041, %v3609
      %v3930 = vmul.f32 %v3106, %v3674
      %v3931 = vmul.f32 %v3171, %v3739
      %v3932 = vmul.f32 %v3236, %v3804
      %v3933 = vmul.f32 %v3301, %v3869
      %v3934 = vmul.f32 %v2849, %v3417
      %v3935 = vmul.f32 %v2914, %v3482
      %v3936 = vmul.f32 %v2979, %v3547
      %v3937 = vmul.f32 %v3044, %v3612
      %v3938 = vmul.f32 %v3109, %v3677
      %v3939 = vmul.f32 %v3174, %v3742
      %v3940 = vmul.f32 %v3239, %v3807
      %v3941 = vmul.f32 %v3304, %v3872
      %v3942 = vmul.f32 %v2852, %v3420
      %v3943 = vmul.f32 %v2917, %v3485
      %v3944 = vmul.f32 %v2982, %v3550
      %v3945 = vmul.f32 %v3047, %v3615
      %v3946 = vmul.f32 %v3112, %v3680
      %v3947 = vmul.f32 %v3177, %v3745
      %v3948 = vmul.f32 %v3242, %v3810
      %v3949 = vmul.f32 %v3307, %v3875
      %v3950 = vmul.f32 %v2855, %v3423
      %v3951 = vmul.f32 %v2920, %v3488
      %v3952 = vmul.f32 %v2985, %v3553
      %v3953 = vmul.f32 %v3050, %v3618
      %v3954 = vmul.f32 %v3115, %v3683
      %v3955 = vmul.f32 %v3180, %v3748
      %v3956 = vmul.f32 %v3245, %v3813
      %v3957 = vmul.f32 %v3310, %v3878
      %v3958 = vmul.f32 %v2858, %v3426
      %v3959 = vmul.f32 %v2923, %v3491
      %v3960 = vmul.f32 %v2988, %v3556
      %v3961 = vmul.f32 %v3053, %v3621
      %v3962 = vmul.f32 %v3118, %v3686
      %v3963 = vmul.f32 %v3183, %v3751
      %v3964 = vmul.f32 %v3248, %v3816
      %v3965 = vmul.f32 %v3313, %v3881
      %v3966 = vmul.f32 %v2861, %v3429
      %v3967 = vmul.f32 %v2926, %v3494
      %v3968 = vmul.f32 %v2991, %v3559
      %v3969 = vmul.f32 %v3056, %v3624
      %v3970 = vmul.f32 %v3121, %v3689
      %v3971 = vmul.f32 %v3186, %v3754
      %v3972 = vmul.f32 %v3251, %v3819
      %v3973 = vmul.f32 %v3316, %v3884
      %v3974 = vmul.f32 %v2864, %v3432
      %v3975 = vmul.f32 %v2929, %v3497
      %v3976 = vmul.f32 %v2994, %v3562
      %v3977 = vmul.f32 %v3059, %v3627
      %v3978 = vmul.f32 %v3124, %v3692
      %v3979 = vmul.f32 %v3189, %v3757
      %v3980 = vmul.f32 %v3254, %v3822
      %v3981 = vmul.f32 %v3319, %v3887
      %v3982 = vmul.f32 %v2867, %v3435
      %v3983 = vmul.f32 %v2932, %v3500
      %v3984 = vmul.f32 %v2997, %v3565
      %v3985 = vmul.f32 %v3062, %v3630
      %v3986 = vmul.f32 %v3127, %v3695
      %v3987 = vmul.f32 %v3192, %v3760
      %v3988 = vmul.f32 %v3257, %v3825
      %v3989 = vmul.f32 %v3322, %v3890
      %v3990 = vmul.f32 %v2870, %v3438
      %v3991 = vmul.f32 %v2935, %v3503
      %v3992 = vmul.f32 %v3000, %v3568
      %v3993 = vmul.f32 %v3065, %v3633
      %v3994 = vmul.f32 %v3130, %v3698
      %v3995 = vmul.f32 %v3195, %v3763
      %v3996 = vmul.f32 %v3260, %v3828
      %v3997 = vmul.f32 %v3325, %v3893
      %v3998 = vmul.f32 %v2873, %v3441
      %v3999 = vmul.f32 %v2938, %v3506
      %v4000 = vmul.f32 %v3003, %v3571
      %v4001 = vmul.f32 %v3068, %v3636
      %v4002 = vmul.f32 %v3133, %v3701
      %v4003 = vmul.f32 %v3198, %v3766
      %v4004 = vmul.f32 %v3263, %v3831
      %v4005 = vmul.f32 %v3328, %v3896
      %v4006 = vmul.f32 %v2876, %v3444
      %v4007 = vmul.f32 %v2941, %v3509
      %v4008 = vmul.f32 %v3006, %v3574
      %v4009 = vmul.f32 %v3071, %v3639
      %v4010 = vmul.f32 %v3136, %v3704
      %v4011 = vmul.f32 %v3201, %v3769
      %v4012 = vmul.f32 %v3266, %v3834
      %v4013 = vmul.f32 %v3331, %v3899
      %v4014 = vmul.f32 %v2879, %v3447
      %v4015 = vmul.f32 %v2944, %v3512
      %v4016 = vmul.f32 %v3009, %v3577
      %v4017 = vmul.f32 %v3074, %v3642
      %v4018 = vmul.f32 %v3139, %v3707
      %v4019 = vmul.f32 %v3204, %v3772
      %v4020 = vmul.f32 %v3269, %v3837
      %v4021 = vmul.f32 %v3334, %v3902
      %v4022 = vmul.f32 %v2882, %v3450
      %v4023 = vmul.f32 %v2947, %v3515
      %v4024 = vmul.f32 %v3012, %v3580
      %v4025 = vmul.f32 %v3077, %v3645
      %v4026 = vmul.f32 %v3142, %v3710
      %v4027 = vmul.f32 %v3207, %v3775
      %v4028 = vmul.f32 %v3272, %v3840
      %v4029 = vmul.f32 %v3337, %v3905
      %v4030 = vmul.f32 %v2885, %v3453
      %v4031 = vmul.f32 %v2950, %v3518
      %v4032 = vmul.f32 %v3015, %v3583
      %v4033 = vmul.f32 %v3080, %v3648
      %v4034 = vmul.f32 %v3145, %v3713
      %v4035 = vmul.f32 %v3210, %v3778
      %v4036 = vmul.f32 %v3275, %v3843
      %v4037 = vmul.f32 %v3340, %v3908
      %4038 = vst [vmem:[#allocation5] sm:$0xff] %v3910
      %4039 = vst [vmem:[#allocation5 + $0x8] sm:$0xff] %v3911
      %4040 = vst [vmem:[#allocation5 + $0x10] sm:$0xff] %v3912
      %4041 = vst [vmem:[#allocation5 + $0x18] sm:$0xff] %v3913
      %4042 = vst [vmem:[#allocation5 + $0x20] sm:$0xff] %v3914
      %4043 = vst [vmem:[#allocation5 + $0x28] sm:$0xff] %v3915
      %4044 = vst [vmem:[#allocation5 + $0x30] sm:$0xff] %v3916
      %4045 = vst [vmem:[#allocation5 + $0x38] sm:$0xff] %v3917
      %4046 = vst [vmem:[#allocation5 + $0x40] sm:$0xff] %v3918
      %4047 = vst [vmem:[#allocation5 + $0x48] sm:$0xff] %v3919
      %4048 = vst [vmem:[#allocation5 + $0x50] sm:$0xff] %v3920
      %4049 = vst [vmem:[#allocation5 + $0x58] sm:$0xff] %v3921
      %4050 = vst [vmem:[#allocation5 + $0x60] sm:$0xff] %v3922
      %4051 = vst [vmem:[#allocation5 + $0x68] sm:$0xff] %v3923
      %4052 = vst [vmem:[#allocation5 + $0x70] sm:$0xff] %v3924
      %4053 = vst [vmem:[#allocation5 + $0x78] sm:$0xff] %v3925
      %4054 = vst [vmem:[#allocation5 + $0x80] sm:$0xff] %v3926
      %4055 = vst [vmem:[#allocation5 + $0x88] sm:$0xff] %v3927
      %4056 = vst [vmem:[#allocation5 + $0x90] sm:$0xff] %v3928
      %4057 = vst [vmem:[#allocation5 + $0x98] sm:$0xff] %v3929
      %4058 = vst [vmem:[#allocation5 + $0xa0] sm:$0xff] %v3930
      %4059 = vst [vmem:[#allocation5 + $0xa8] sm:$0xff] %v3931
      %4060 = vst [vmem:[#allocation5 + $0xb0] sm:$0xff] %v3932
      %4061 = vst [vmem:[#allocation5 + $0xb8] sm:$0xff] %v3933
      %4062 = vst [vmem:[#allocation5 + $0xc0] sm:$0xff] %v3934
      %4063 = vst [vmem:[#allocation5 + $0xc8] sm:$0xff] %v3935
      %4064 = vst [vmem:[#allocation5 + $0xd0] sm:$0xff] %v3936
      %4065 = vst [vmem:[#allocation5 + $0xd8] sm:$0xff] %v3937
      %4066 = vst [vmem:[#allocation5 + $0xe0] sm:$0xff] %v3938
      %4067 = vst [vmem:[#allocation5 + $0xe8] sm:$0xff] %v3939
      %4068 = vst [vmem:[#allocation5 + $0xf0] sm:$0xff] %v3940
      %4069 = vst [vmem:[#allocation5 + $0xf8] sm:$0xff] %v3941
      %4070 = vst [vmem:[#allocation5 + $0x100] sm:$0xff] %v3942
      %4071 = vst [vmem:[#allocation5 + $0x108] sm:$0xff] %v3943
      %4072 = vst [vmem:[#allocation5 + $0x110] sm:$0xff] %v3944
      %4073 = vst [vmem:[#allocation5 + $0x118] sm:$0xff] %v3945
      %4074 = vst [vmem:[#allocation5 + $0x120] sm:$0xff] %v3946
      %4075 = vst [vmem:[#allocation5 + $0x128] sm:$0xff] %v3947
      %4076 = vst [vmem:[#allocation5 + $0x130] sm:$0xff] %v3948
      %4077 = vst [vmem:[#allocation5 + $0x138] sm:$0xff] %v3949
      %4078 = vst [vmem:[#allocation5 + $0x140] sm:$0xff] %v3950
      %4079 = vst [vmem:[#allocation5 + $0x148] sm:$0xff] %v3951
      %4080 = vst [vmem:[#allocation5 + $0x150] sm:$0xff] %v3952
      %4081 = vst [vmem:[#allocation5 + $0x158] sm:$0xff] %v3953
      %4082 = vst [vmem:[#allocation5 + $0x160] sm:$0xff] %v3954
      %4083 = vst [vmem:[#allocation5 + $0x168] sm:$0xff] %v3955
      %4084 = vst [vmem:[#allocation5 + $0x170] sm:$0xff] %v3956
      %4085 = vst [vmem:[#allocation5 + $0x178] sm:$0xff] %v3957
      %4086 = vst [vmem:[#allocation5 + $0x180] sm:$0xff] %v3958
      %4087 = vst [vmem:[#allocation5 + $0x188] sm:$0xff] %v3959
      %4088 = vst [vmem:[#allocation5 + $0x190] sm:$0xff] %v3960
      %4089 = vst [vmem:[#allocation5 + $0x198] sm:$0xff] %v3961
      %4090 = vst [vmem:[#allocation5 + $0x1a0] sm:$0xff] %v3962
      %4091 = vst [vmem:[#allocation5 + $0x1a8] sm:$0xff] %v3963
      %4092 = vst [vmem:[#allocation5 + $0x1b0] sm:$0xff] %v3964
      %4093 = vst [vmem:[#allocation5 + $0x1b8] sm:$0xff] %v3965
      %4094 = vst [vmem:[#allocation5 + $0x1c0] sm:$0xff] %v3966
      %4095 = vst [vmem:[#allocation5 + $0x1c8] sm:$0xff] %v3967
      %4096 = vst [vmem:[#allocation5 + $0x1d0] sm:$0xff] %v3968
      %4097 = vst [vmem:[#allocation5 + $0x1d8] sm:$0xff] %v3969
      %4098 = vst [vmem:[#allocation5 + $0x1e0] sm:$0xff] %v3970
      %4099 = vst [vmem:[#allocation5 + $0x1e8] sm:$0xff] %v3971
      %4100 = vst [vmem:[#allocation5 + $0x1f0] sm:$0xff] %v3972
      %4101 = vst [vmem:[#allocation5 + $0x1f8] sm:$0xff] %v3973
      %4102 = vst [vmem:[#allocation5 + $0x200] sm:$0xff] %v3974
      %4103 = vst [vmem:[#allocation5 + $0x208] sm:$0xff] %v3975
      %4104 = vst [vmem:[#allocation5 + $0x210] sm:$0xff] %v3976
      %4105 = vst [vmem:[#allocation5 + $0x218] sm:$0xff] %v3977
      %4106 = vst [vmem:[#allocation5 + $0x220] sm:$0xff] %v3978
      %4107 = vst [vmem:[#allocation5 + $0x228] sm:$0xff] %v3979
      %4108 = vst [vmem:[#allocation5 + $0x230] sm:$0xff] %v3980
      %4109 = vst [vmem:[#allocation5 + $0x238] sm:$0xff] %v3981
      %4110 = vst [vmem:[#allocation5 + $0x240] sm:$0xff] %v3982
      %4111 = vst [vmem:[#allocation5 + $0x248] sm:$0xff] %v3983
      %4112 = vst [vmem:[#allocation5 + $0x250] sm:$0xff] %v3984
      %4113 = vst [vmem:[#allocation5 + $0x258] sm:$0xff] %v3985
      %4114 = vst [vmem:[#allocation5 + $0x260] sm:$0xff] %v3986
      %4115 = vst [vmem:[#allocation5 + $0x268] sm:$0xff] %v3987
      %4116 = vst [vmem:[#allocation5 + $0x270] sm:$0xff] %v3988
      %4117 = vst [vmem:[#allocation5 + $0x278] sm:$0xff] %v3989
      %4118 = vst [vmem:[#allocation5 + $0x280] sm:$0xff] %v3990
      %4119 = vst [vmem:[#allocation5 + $0x288] sm:$0xff] %v3991
      %4120 = vst [vmem:[#allocation5 + $0x290] sm:$0xff] %v3992
      %4121 = vst [vmem:[#allocation5 + $0x298] sm:$0xff] %v3993
      %4122 = vst [vmem:[#allocation5 + $0x2a0] sm:$0xff] %v3994
      %4123 = vst [vmem:[#allocation5 + $0x2a8] sm:$0xff] %v3995
      %4124 = vst [vmem:[#allocation5 + $0x2b0] sm:$0xff] %v3996
      %4125 = vst [vmem:[#allocation5 + $0x2b8] sm:$0xff] %v3997
      %4126 = vst [vmem:[#allocation5 + $0x2c0] sm:$0xff] %v3998
      %4127 = vst [vmem:[#allocation5 + $0x2c8] sm:$0xff] %v3999
      %4128 = vst [vmem:[#allocation5 + $0x2d0] sm:$0xff] %v4000
      %4129 = vst [vmem:[#allocation5 + $0x2d8] sm:$0xff] %v4001
      %4130 = vst [vmem:[#allocation5 + $0x2e0] sm:$0xff] %v4002
      %4131 = vst [vmem:[#allocation5 + $0x2e8] sm:$0xff] %v4003
      %4132 = vst [vmem:[#allocation5 + $0x2f0] sm:$0xff] %v4004
      %4133 = vst [vmem:[#allocation5 + $0x2f8] sm:$0xff] %v4005
      %4134 = vst [vmem:[#allocation5 + $0x300] sm:$0xff] %v4006
      %4135 = vst [vmem:[#allocation5 + $0x308] sm:$0xff] %v4007
      %4136 = vst [vmem:[#allocation5 + $0x310] sm:$0xff] %v4008
      %4137 = vst [vmem:[#allocation5 + $0x318] sm:$0xff] %v4009
      %4138 = vst [vmem:[#allocation5 + $0x320] sm:$0xff] %v4010
      %4139 = vst [vmem:[#allocation5 + $0x328] sm:$0xff] %v4011
      %4140 = vst [vmem:[#allocation5 + $0x330] sm:$0xff] %v4012
      %4141 = vst [vmem:[#allocation5 + $0x338] sm:$0xff] %v4013
      %4142 = vst [vmem:[#allocation5 + $0x340] sm:$0xff] %v4014
      %4143 = vst [vmem:[#allocation5 + $0x348] sm:$0xff] %v4015
      %4144 = vst [vmem:[#allocation5 + $0x350] sm:$0xff] %v4016
      %4145 = vst [vmem:[#allocation5 + $0x358] sm:$0xff] %v4017
      %4146 = vst [vmem:[#allocation5 + $0x360] sm:$0xff] %v4018
      %4147 = vst [vmem:[#allocation5 + $0x368] sm:$0xff] %v4019
      %4148 = vst [vmem:[#allocation5 + $0x370] sm:$0xff] %v4020
      %4149 = vst [vmem:[#allocation5 + $0x378] sm:$0xff] %v4021
      %4150 = vst [vmem:[#allocation5 + $0x380] sm:$0xff] %v4022
      %4151 = vst [vmem:[#allocation5 + $0x388] sm:$0xff] %v4023
      %4152 = vst [vmem:[#allocation5 + $0x390] sm:$0xff] %v4024
      %4153 = vst [vmem:[#allocation5 + $0x398] sm:$0xff] %v4025
      %4154 = vst [vmem:[#allocation5 + $0x3a0] sm:$0xff] %v4026
      %4155 = vst [vmem:[#allocation5 + $0x3a8] sm:$0xff] %v4027
      %4156 = vst [vmem:[#allocation5 + $0x3b0] sm:$0xff] %v4028
      %4157 = vst [vmem:[#allocation5 + $0x3b8] sm:$0xff] %v4029
      %4158 = vst [vmem:[#allocation5 + $0x3c0] sm:$0xff] %v4030
      %4159 = vst [vmem:[#allocation5 + $0x3c8] sm:$0xff] %v4031
      %4160 = vst [vmem:[#allocation5 + $0x3d0] sm:$0xff] %v4032
      %4161 = vst [vmem:[#allocation5 + $0x3d8] sm:$0xff] %v4033
      %4162 = vst [vmem:[#allocation5 + $0x3e0] sm:$0xff] %v4034
      %4163 = vst [vmem:[#allocation5 + $0x3e8] sm:$0xff] %v4035
      %4164 = vst [vmem:[#allocation5 + $0x3f0] sm:$0xff] %v4036
      %4165 = vst [vmem:[#allocation5 + $0x3f8] sm:$0xff] %v4037
      %v4166 = vld [vmem:[%s715] sm:$0xff]
      %v4167 = vld [vmem:[%s715 + $0x8] sm:$0xff]
      %v4168 = vld [vmem:[%s715 + $0x10] sm:$0xff]
      %v4169 = vld [vmem:[%s715 + $0x18] sm:$0xff]
      %v4170 = vld [vmem:[%s715 + $0x20] sm:$0xff]
      %v4171 = vld [vmem:[%s715 + $0x28] sm:$0xff]
      %v4172 = vld [vmem:[%s715 + $0x30] sm:$0xff]
      %v4173 = vld [vmem:[%s715 + $0x38] sm:$0xff]
      %v4174 = vld [vmem:[%s715 + $0x40] sm:$0xff]
      %v4175 = vld [vmem:[%s715 + $0x48] sm:$0xff]
      %v4176 = vld [vmem:[%s715 + $0x50] sm:$0xff]
      %v4177 = vld [vmem:[%s715 + $0x58] sm:$0xff]
      %v4178 = vld [vmem:[%s715 + $0x60] sm:$0xff]
      %v4179 = vld [vmem:[%s715 + $0x68] sm:$0xff]
      %v4180 = vld [vmem:[%s715 + $0x70] sm:$0xff]
      %v4181 = vld [vmem:[%s715 + $0x78] sm:$0xff]
      %4182 = vmatpush.msra.mxu0 %v4181
      %4183 = vmatpush.msra.mxu0 %v4180
      %4184 = vmatpush.msra.mxu0 %v4179
      %4185 = vmatpush.msra.mxu0 %v4178
      %4186 = vmatpush.msra.mxu0 %v4177
      %4187 = vmatpush.msra.mxu0 %v4176
      %4188 = vmatpush.msra.mxu0 %v4175
      %4189 = vmatpush.msra.mxu0 %v4174
      %4190 = vmatpush.msra.mxu0 %v4173
      %4191 = vmatpush.msra.mxu0 %v4172
      %4192 = vmatpush.msra.mxu0 %v4171
      %4193 = vmatpush.msra.mxu0 %v4170
      %4194 = vmatpush.msra.mxu0 %v4169
      %4195 = vmatpush.msra.mxu0 %v4168
      %4196 = vmatpush.msra.mxu0 %v4167
      %4197 = vmatpush.msra.mxu0 %v4166
      %4198 = vmatmul.f32.gmra.mxu0 %v1102
      %v4199 = vpop.f32.mrf.mxu0
      %v4200 = vadd.f32 0.0, %v4199
      %4201 = vmatmul.f32.gmra.mxu0 %v1103
      %v4202 = vpop.f32.mrf.mxu0
      %v4203 = vadd.f32 0.0, %v4202
      %4204 = vmatmul.f32.gmra.mxu0 %v1104
      %v4205 = vpop.f32.mrf.mxu0
      %v4206 = vadd.f32 0.0, %v4205
      %4207 = vmatmul.f32.gmra.mxu0 %v1105
      %v4208 = vpop.f32.mrf.mxu0
      %v4209 = vadd.f32 0.0, %v4208
      %4210 = vmatmul.f32.gmra.mxu0 %v1106
      %v4211 = vpop.f32.mrf.mxu0
      %v4212 = vadd.f32 0.0, %v4211
      %4213 = vmatmul.f32.gmra.mxu0 %v1107
      %v4214 = vpop.f32.mrf.mxu0
      %v4215 = vadd.f32 0.0, %v4214
      %4216 = vmatmul.f32.gmra.mxu0 %v1108
      %v4217 = vpop.f32.mrf.mxu0
      %v4218 = vadd.f32 0.0, %v4217
      %4219 = vmatmul.f32.gmra.mxu0 %v1109
      %v4220 = vpop.f32.mrf.mxu0
      %v4221 = vadd.f32 0.0, %v4220
      %4222 = vmatmul.f32.gmra.mxu0 %v1110
      %v4223 = vpop.f32.mrf.mxu0
      %v4224 = vadd.f32 0.0, %v4223
      %4225 = vmatmul.f32.gmra.mxu0 %v1111
      %v4226 = vpop.f32.mrf.mxu0
      %v4227 = vadd.f32 0.0, %v4226
      %4228 = vmatmul.f32.gmra.mxu0 %v1112
      %v4229 = vpop.f32.mrf.mxu0
      %v4230 = vadd.f32 0.0, %v4229
      %4231 = vmatmul.f32.gmra.mxu0 %v1113
      %v4232 = vpop.f32.mrf.mxu0
      %v4233 = vadd.f32 0.0, %v4232
      %4234 = vmatmul.f32.gmra.mxu0 %v1114
      %v4235 = vpop.f32.mrf.mxu0
      %v4236 = vadd.f32 0.0, %v4235
      %4237 = vmatmul.f32.gmra.mxu0 %v1115
      %v4238 = vpop.f32.mrf.mxu0
      %v4239 = vadd.f32 0.0, %v4238
      %4240 = vmatmul.f32.gmra.mxu0 %v1116
      %v4241 = vpop.f32.mrf.mxu0
      %v4242 = vadd.f32 0.0, %v4241
      %4243 = vmatmul.f32.gmra.mxu0 %v1117
      %v4244 = vpop.f32.mrf.mxu0
      %v4245 = vadd.f32 0.0, %v4244
      %4246 = vdwg.mxu0
      %v4248 = vsel %vm750, %v4200, 0
      %v4251 = vsel %vm750, %v4203, 0
      %v4254 = vsel %vm750, %v4206, 0
      %v4257 = vsel %vm750, %v4209, 0
      %v4260 = vsel %vm750, %v4212, 0
      %v4263 = vsel %vm750, %v4215, 0
      %v4266 = vsel %vm750, %v4218, 0
      %v4269 = vsel %vm750, %v4221, 0
      %v4272 = vsel %vm750, %v4224, 0
      %v4275 = vsel %vm750, %v4227, 0
      %v4278 = vsel %vm750, %v4230, 0
      %v4281 = vsel %vm750, %v4233, 0
      %v4284 = vsel %vm750, %v4236, 0
      %v4287 = vsel %vm750, %v4239, 0
      %v4290 = vsel %vm750, %v4242, 0
      %v4293 = vsel %vm750, %v4245, 0
      %4295 = vmatpush.msra.mxu0 0.0
      %4296 = vmatpush.msra.mxu0 0.0
      %4297 = vmatpush.msra.mxu0 0.0
      %4298 = vmatpush.msra.mxu0 0.0
      %4299 = vmatpush.msra.mxu0 0.0
      %4300 = vmatpush.msra.mxu0 0.0
      %4301 = vmatpush.msra.mxu0 0.0
      %4302 = vmatpush.msra.mxu0 0.0
      %4303 = vmatpush.msra.mxu0 0.0
      %4304 = vmatpush.msra.mxu0 0.0
      %4305 = vmatpush.msra.mxu0 0.0
      %4306 = vmatpush.msra.mxu0 0.0
      %4307 = vmatpush.msra.mxu0 0.0
      %4308 = vmatpush.msra.mxu0 0.0
      %4309 = vmatpush.msra.mxu0 %v2717
      %4310 = vmatpush.msra.mxu0 %v2709
      %4311 = vmatmul.f32.gmra.mxu0 %v4248
      %v4312 = vpop.f32.mrf.mxu0
      %v4313 = vadd.f32 0.0, %v4312
      %4314 = vmatmul.f32.gmra.mxu0 %v4251
      %v4315 = vpop.f32.mrf.mxu0
      %v4316 = vadd.f32 0.0, %v4315
      %4317 = vmatmul.f32.gmra.mxu0 %v4254
      %v4318 = vpop.f32.mrf.mxu0
      %v4319 = vadd.f32 0.0, %v4318
      %4320 = vmatmul.f32.gmra.mxu0 %v4257
      %v4321 = vpop.f32.mrf.mxu0
      %v4322 = vadd.f32 0.0, %v4321
      %4323 = vmatmul.f32.gmra.mxu0 %v4260
      %v4324 = vpop.f32.mrf.mxu0
      %v4325 = vadd.f32 0.0, %v4324
      %4326 = vmatmul.f32.gmra.mxu0 %v4263
      %v4327 = vpop.f32.mrf.mxu0
      %v4328 = vadd.f32 0.0, %v4327
      %4329 = vmatmul.f32.gmra.mxu0 %v4266
      %v4330 = vpop.f32.mrf.mxu0
      %v4331 = vadd.f32 0.0, %v4330
      %4332 = vmatmul.f32.gmra.mxu0 %v4269
      %v4333 = vpop.f32.mrf.mxu0
      %v4334 = vadd.f32 0.0, %v4333
      %4335 = vmatmul.f32.gmra.mxu0 %v4272
      %v4336 = vpop.f32.mrf.mxu0
      %v4337 = vadd.f32 0.0, %v4336
      %4338 = vmatmul.f32.gmra.mxu0 %v4275
      %v4339 = vpop.f32.mrf.mxu0
      %v4340 = vadd.f32 0.0, %v4339
      %4341 = vmatmul.f32.gmra.mxu0 %v4278
      %v4342 = vpop.f32.mrf.mxu0
      %v4343 = vadd.f32 0.0, %v4342
      %4344 = vmatmul.f32.gmra.mxu0 %v4281
      %v4345 = vpop.f32.mrf.mxu0
      %v4346 = vadd.f32 0.0, %v4345
      %4347 = vmatmul.f32.gmra.mxu0 %v4284
      %v4348 = vpop.f32.mrf.mxu0
      %v4349 = vadd.f32 0.0, %v4348
      %4350 = vmatmul.f32.gmra.mxu0 %v4287
      %v4351 = vpop.f32.mrf.mxu0
      %v4352 = vadd.f32 0.0, %v4351
      %4353 = vmatmul.f32.gmra.mxu0 %v4290
      %v4354 = vpop.f32.mrf.mxu0
      %v4355 = vadd.f32 0.0, %v4354
      %4356 = vmatmul.f32.gmra.mxu0 %v4293
      %v4357 = vpop.f32.mrf.mxu0
      %v4358 = vadd.f32 0.0, %v4357
      %4359 = vdwg.mxu0
      %4360 = vmatpush.msra.mxu0 0.0
      %4361 = vmatpush.msra.mxu0 0.0
      %4362 = vmatpush.msra.mxu0 0.0
      %4363 = vmatpush.msra.mxu0 0.0
      %4364 = vmatpush.msra.mxu0 0.0
      %4365 = vmatpush.msra.mxu0 0.0
      %4366 = vmatpush.msra.mxu0 0.0
      %4367 = vmatpush.msra.mxu0 0.0
      %4368 = vmatpush.msra.mxu0 0.0
      %4369 = vmatpush.msra.mxu0 0.0
      %4370 = vmatpush.msra.mxu0 0.0
      %4371 = vmatpush.msra.mxu0 0.0
      %4372 = vmatpush.msra.mxu0 0.0
      %4373 = vmatpush.msra.mxu0 0.0
      %4374 = vmatpush.msra.mxu0 %v2718
      %4375 = vmatpush.msra.mxu0 %v2710
      %4376 = vmatmul.f32.gmra.mxu0 %v4248
      %v4377 = vpop.f32.mrf.mxu0
      %v4378 = vadd.f32 0.0, %v4377
      %4379 = vmatmul.f32.gmra.mxu0 %v4251
      %v4380 = vpop.f32.mrf.mxu0
      %v4381 = vadd.f32 0.0, %v4380
      %4382 = vmatmul.f32.gmra.mxu0 %v4254
      %v4383 = vpop.f32.mrf.mxu0
      %v4384 = vadd.f32 0.0, %v4383
      %4385 = vmatmul.f32.gmra.mxu0 %v4257
      %v4386 = vpop.f32.mrf.mxu0
      %v4387 = vadd.f32 0.0, %v4386
      %4388 = vmatmul.f32.gmra.mxu0 %v4260
      %v4389 = vpop.f32.mrf.mxu0
      %v4390 = vadd.f32 0.0, %v4389
      %4391 = vmatmul.f32.gmra.mxu0 %v4263
      %v4392 = vpop.f32.mrf.mxu0
      %v4393 = vadd.f32 0.0, %v4392
      %4394 = vmatmul.f32.gmra.mxu0 %v4266
      %v4395 = vpop.f32.mrf.mxu0
      %v4396 = vadd.f32 0.0, %v4395
      %4397 = vmatmul.f32.gmra.mxu0 %v4269
      %v4398 = vpop.f32.mrf.mxu0
      %v4399 = vadd.f32 0.0, %v4398
      %4400 = vmatmul.f32.gmra.mxu0 %v4272
      %v4401 = vpop.f32.mrf.mxu0
      %v4402 = vadd.f32 0.0, %v4401
      %4403 = vmatmul.f32.gmra.mxu0 %v4275
      %v4404 = vpop.f32.mrf.mxu0
      %v4405 = vadd.f32 0.0, %v4404
      %4406 = vmatmul.f32.gmra.mxu0 %v4278
      %v4407 = vpop.f32.mrf.mxu0
      %v4408 = vadd.f32 0.0, %v4407
      %4409 = vmatmul.f32.gmra.mxu0 %v4281
      %v4410 = vpop.f32.mrf.mxu0
      %v4411 = vadd.f32 0.0, %v4410
      %4412 = vmatmul.f32.gmra.mxu0 %v4284
      %v4413 = vpop.f32.mrf.mxu0
      %v4414 = vadd.f32 0.0, %v4413
      %4415 = vmatmul.f32.gmra.mxu0 %v4287
      %v4416 = vpop.f32.mrf.mxu0
      %v4417 = vadd.f32 0.0, %v4416
      %4418 = vmatmul.f32.gmra.mxu0 %v4290
      %v4419 = vpop.f32.mrf.mxu0
      %v4420 = vadd.f32 0.0, %v4419
      %4421 = vmatmul.f32.gmra.mxu0 %v4293
      %v4422 = vpop.f32.mrf.mxu0
      %v4423 = vadd.f32 0.0, %v4422
      %4424 = vdwg.mxu0
      %4425 = vmatpush.msra.mxu0 0.0
      %4426 = vmatpush.msra.mxu0 0.0
      %4427 = vmatpush.msra.mxu0 0.0
      %4428 = vmatpush.msra.mxu0 0.0
      %4429 = vmatpush.msra.mxu0 0.0
      %4430 = vmatpush.msra.mxu0 0.0
      %4431 = vmatpush.msra.mxu0 0.0
      %4432 = vmatpush.msra.mxu0 0.0
      %4433 = vmatpush.msra.mxu0 0.0
      %4434 = vmatpush.msra.mxu0 0.0
      %4435 = vmatpush.msra.mxu0 0.0
      %4436 = vmatpush.msra.mxu0 0.0
      %4437 = vmatpush.msra.mxu0 0.0
      %4438 = vmatpush.msra.mxu0 0.0
      %4439 = vmatpush.msra.mxu0 %v2719
      %4440 = vmatpush.msra.mxu0 %v2711
      %4441 = vmatmul.f32.gmra.mxu0 %v4248
      %v4442 = vpop.f32.mrf.mxu0
      %v4443 = vadd.f32 0.0, %v4442
      %4444 = vmatmul.f32.gmra.mxu0 %v4251
      %v4445 = vpop.f32.mrf.mxu0
      %v4446 = vadd.f32 0.0, %v4445
      %4447 = vmatmul.f32.gmra.mxu0 %v4254
      %v4448 = vpop.f32.mrf.mxu0
      %v4449 = vadd.f32 0.0, %v4448
      %4450 = vmatmul.f32.gmra.mxu0 %v4257
      %v4451 = vpop.f32.mrf.mxu0
      %v4452 = vadd.f32 0.0, %v4451
      %4453 = vmatmul.f32.gmra.mxu0 %v4260
      %v4454 = vpop.f32.mrf.mxu0
      %v4455 = vadd.f32 0.0, %v4454
      %4456 = vmatmul.f32.gmra.mxu0 %v4263
      %v4457 = vpop.f32.mrf.mxu0
      %v4458 = vadd.f32 0.0, %v4457
      %4459 = vmatmul.f32.gmra.mxu0 %v4266
      %v4460 = vpop.f32.mrf.mxu0
      %v4461 = vadd.f32 0.0, %v4460
      %4462 = vmatmul.f32.gmra.mxu0 %v4269
      %v4463 = vpop.f32.mrf.mxu0
      %v4464 = vadd.f32 0.0, %v4463
      %4465 = vmatmul.f32.gmra.mxu0 %v4272
      %v4466 = vpop.f32.mrf.mxu0
      %v4467 = vadd.f32 0.0, %v4466
      %4468 = vmatmul.f32.gmra.mxu0 %v4275
      %v4469 = vpop.f32.mrf.mxu0
      %v4470 = vadd.f32 0.0, %v4469
      %4471 = vmatmul.f32.gmra.mxu0 %v4278
      %v4472 = vpop.f32.mrf.mxu0
      %v4473 = vadd.f32 0.0, %v4472
      %4474 = vmatmul.f32.gmra.mxu0 %v4281
      %v4475 = vpop.f32.mrf.mxu0
      %v4476 = vadd.f32 0.0, %v4475
      %4477 = vmatmul.f32.gmra.mxu0 %v4284
      %v4478 = vpop.f32.mrf.mxu0
      %v4479 = vadd.f32 0.0, %v4478
      %4480 = vmatmul.f32.gmra.mxu0 %v4287
      %v4481 = vpop.f32.mrf.mxu0
      %v4482 = vadd.f32 0.0, %v4481
      %4483 = vmatmul.f32.gmra.mxu0 %v4290
      %v4484 = vpop.f32.mrf.mxu0
      %v4485 = vadd.f32 0.0, %v4484
      %4486 = vmatmul.f32.gmra.mxu0 %v4293
      %v4487 = vpop.f32.mrf.mxu0
      %v4488 = vadd.f32 0.0, %v4487
      %4489 = vdwg.mxu0
      %4490 = vmatpush.msra.mxu0 0.0
      %4491 = vmatpush.msra.mxu0 0.0
      %4492 = vmatpush.msra.mxu0 0.0
      %4493 = vmatpush.msra.mxu0 0.0
      %4494 = vmatpush.msra.mxu0 0.0
      %4495 = vmatpush.msra.mxu0 0.0
      %4496 = vmatpush.msra.mxu0 0.0
      %4497 = vmatpush.msra.mxu0 0.0
      %4498 = vmatpush.msra.mxu0 0.0
      %4499 = vmatpush.msra.mxu0 0.0
      %4500 = vmatpush.msra.mxu0 0.0
      %4501 = vmatpush.msra.mxu0 0.0
      %4502 = vmatpush.msra.mxu0 0.0
      %4503 = vmatpush.msra.mxu0 0.0
      %4504 = vmatpush.msra.mxu0 %v2720
      %4505 = vmatpush.msra.mxu0 %v2712
      %4506 = vmatmul.f32.gmra.mxu0 %v4248
      %v4507 = vpop.f32.mrf.mxu0
      %v4508 = vadd.f32 0.0, %v4507
      %4509 = vmatmul.f32.gmra.mxu0 %v4251
      %v4510 = vpop.f32.mrf.mxu0
      %v4511 = vadd.f32 0.0, %v4510
      %4512 = vmatmul.f32.gmra.mxu0 %v4254
      %v4513 = vpop.f32.mrf.mxu0
      %v4514 = vadd.f32 0.0, %v4513
      %4515 = vmatmul.f32.gmra.mxu0 %v4257
      %v4516 = vpop.f32.mrf.mxu0
      %v4517 = vadd.f32 0.0, %v4516
      %4518 = vmatmul.f32.gmra.mxu0 %v4260
      %v4519 = vpop.f32.mrf.mxu0
      %v4520 = vadd.f32 0.0, %v4519
      %4521 = vmatmul.f32.gmra.mxu0 %v4263
      %v4522 = vpop.f32.mrf.mxu0
      %v4523 = vadd.f32 0.0, %v4522
      %4524 = vmatmul.f32.gmra.mxu0 %v4266
      %v4525 = vpop.f32.mrf.mxu0
      %v4526 = vadd.f32 0.0, %v4525
      %4527 = vmatmul.f32.gmra.mxu0 %v4269
      %v4528 = vpop.f32.mrf.mxu0
      %v4529 = vadd.f32 0.0, %v4528
      %4530 = vmatmul.f32.gmra.mxu0 %v4272
      %v4531 = vpop.f32.mrf.mxu0
      %v4532 = vadd.f32 0.0, %v4531
      %4533 = vmatmul.f32.gmra.mxu0 %v4275
      %v4534 = vpop.f32.mrf.mxu0
      %v4535 = vadd.f32 0.0, %v4534
      %4536 = vmatmul.f32.gmra.mxu0 %v4278
      %v4537 = vpop.f32.mrf.mxu0
      %v4538 = vadd.f32 0.0, %v4537
      %4539 = vmatmul.f32.gmra.mxu0 %v4281
      %v4540 = vpop.f32.mrf.mxu0
      %v4541 = vadd.f32 0.0, %v4540
      %4542 = vmatmul.f32.gmra.mxu0 %v4284
      %v4543 = vpop.f32.mrf.mxu0
      %v4544 = vadd.f32 0.0, %v4543
      %4545 = vmatmul.f32.gmra.mxu0 %v4287
      %v4546 = vpop.f32.mrf.mxu0
      %v4547 = vadd.f32 0.0, %v4546
      %4548 = vmatmul.f32.gmra.mxu0 %v4290
      %v4549 = vpop.f32.mrf.mxu0
      %v4550 = vadd.f32 0.0, %v4549
      %4551 = vmatmul.f32.gmra.mxu0 %v4293
      %v4552 = vpop.f32.mrf.mxu0
      %v4553 = vadd.f32 0.0, %v4552
      %4554 = vdwg.mxu0
      %4555 = vmatpush.msra.mxu0 0.0
      %4556 = vmatpush.msra.mxu0 0.0
      %4557 = vmatpush.msra.mxu0 0.0
      %4558 = vmatpush.msra.mxu0 0.0
      %4559 = vmatpush.msra.mxu0 0.0
      %4560 = vmatpush.msra.mxu0 0.0
      %4561 = vmatpush.msra.mxu0 0.0
      %4562 = vmatpush.msra.mxu0 0.0
      %4563 = vmatpush.msra.mxu0 0.0
      %4564 = vmatpush.msra.mxu0 0.0
      %4565 = vmatpush.msra.mxu0 0.0
      %4566 = vmatpush.msra.mxu0 0.0
      %4567 = vmatpush.msra.mxu0 0.0
      %4568 = vmatpush.msra.mxu0 0.0
      %4569 = vmatpush.msra.mxu0 %v2721
      %4570 = vmatpush.msra.mxu0 %v2713
      %4571 = vmatmul.f32.gmra.mxu0 %v4248
      %v4572 = vpop.f32.mrf.mxu0
      %v4573 = vadd.f32 0.0, %v4572
      %4574 = vmatmul.f32.gmra.mxu0 %v4251
      %v4575 = vpop.f32.mrf.mxu0
      %v4576 = vadd.f32 0.0, %v4575
      %4577 = vmatmul.f32.gmra.mxu0 %v4254
      %v4578 = vpop.f32.mrf.mxu0
      %v4579 = vadd.f32 0.0, %v4578
      %4580 = vmatmul.f32.gmra.mxu0 %v4257
      %v4581 = vpop.f32.mrf.mxu0
      %v4582 = vadd.f32 0.0, %v4581
      %4583 = vmatmul.f32.gmra.mxu0 %v4260
      %v4584 = vpop.f32.mrf.mxu0
      %v4585 = vadd.f32 0.0, %v4584
      %4586 = vmatmul.f32.gmra.mxu0 %v4263
      %v4587 = vpop.f32.mrf.mxu0
      %v4588 = vadd.f32 0.0, %v4587
      %4589 = vmatmul.f32.gmra.mxu0 %v4266
      %v4590 = vpop.f32.mrf.mxu0
      %v4591 = vadd.f32 0.0, %v4590
      %4592 = vmatmul.f32.gmra.mxu0 %v4269
      %v4593 = vpop.f32.mrf.mxu0
      %v4594 = vadd.f32 0.0, %v4593
      %4595 = vmatmul.f32.gmra.mxu0 %v4272
      %v4596 = vpop.f32.mrf.mxu0
      %v4597 = vadd.f32 0.0, %v4596
      %4598 = vmatmul.f32.gmra.mxu0 %v4275
      %v4599 = vpop.f32.mrf.mxu0
      %v4600 = vadd.f32 0.0, %v4599
      %4601 = vmatmul.f32.gmra.mxu0 %v4278
      %v4602 = vpop.f32.mrf.mxu0
      %v4603 = vadd.f32 0.0, %v4602
      %4604 = vmatmul.f32.gmra.mxu0 %v4281
      %v4605 = vpop.f32.mrf.mxu0
      %v4606 = vadd.f32 0.0, %v4605
      %4607 = vmatmul.f32.gmra.mxu0 %v4284
      %v4608 = vpop.f32.mrf.mxu0
      %v4609 = vadd.f32 0.0, %v4608
      %4610 = vmatmul.f32.gmra.mxu0 %v4287
      %v4611 = vpop.f32.mrf.mxu0
      %v4612 = vadd.f32 0.0, %v4611
      %4613 = vmatmul.f32.gmra.mxu0 %v4290
      %v4614 = vpop.f32.mrf.mxu0
      %v4615 = vadd.f32 0.0, %v4614
      %4616 = vmatmul.f32.gmra.mxu0 %v4293
      %v4617 = vpop.f32.mrf.mxu0
      %v4618 = vadd.f32 0.0, %v4617
      %4619 = vdwg.mxu0
      %4620 = vmatpush.msra.mxu0 0.0
      %4621 = vmatpush.msra.mxu0 0.0
      %4622 = vmatpush.msra.mxu0 0.0
      %4623 = vmatpush.msra.mxu0 0.0
      %4624 = vmatpush.msra.mxu0 0.0
      %4625 = vmatpush.msra.mxu0 0.0
      %4626 = vmatpush.msra.mxu0 0.0
      %4627 = vmatpush.msra.mxu0 0.0
      %4628 = vmatpush.msra.mxu0 0.0
      %4629 = vmatpush.msra.mxu0 0.0
      %4630 = vmatpush.msra.mxu0 0.0
      %4631 = vmatpush.msra.mxu0 0.0
      %4632 = vmatpush.msra.mxu0 0.0
      %4633 = vmatpush.msra.mxu0 0.0
      %4634 = vmatpush.msra.mxu0 %v2722
      %4635 = vmatpush.msra.mxu0 %v2714
      %4636 = vmatmul.f32.gmra.mxu0 %v4248
      %v4637 = vpop.f32.mrf.mxu0
      %v4638 = vadd.f32 0.0, %v4637
      %4639 = vmatmul.f32.gmra.mxu0 %v4251
      %v4640 = vpop.f32.mrf.mxu0
      %v4641 = vadd.f32 0.0, %v4640
      %4642 = vmatmul.f32.gmra.mxu0 %v4254
      %v4643 = vpop.f32.mrf.mxu0
      %v4644 = vadd.f32 0.0, %v4643
      %4645 = vmatmul.f32.gmra.mxu0 %v4257
      %v4646 = vpop.f32.mrf.mxu0
      %v4647 = vadd.f32 0.0, %v4646
      %4648 = vmatmul.f32.gmra.mxu0 %v4260
      %v4649 = vpop.f32.mrf.mxu0
      %v4650 = vadd.f32 0.0, %v4649
      %4651 = vmatmul.f32.gmra.mxu0 %v4263
      %v4652 = vpop.f32.mrf.mxu0
      %v4653 = vadd.f32 0.0, %v4652
      %4654 = vmatmul.f32.gmra.mxu0 %v4266
      %v4655 = vpop.f32.mrf.mxu0
      %v4656 = vadd.f32 0.0, %v4655
      %4657 = vmatmul.f32.gmra.mxu0 %v4269
      %v4658 = vpop.f32.mrf.mxu0
      %v4659 = vadd.f32 0.0, %v4658
      %4660 = vmatmul.f32.gmra.mxu0 %v4272
      %v4661 = vpop.f32.mrf.mxu0
      %v4662 = vadd.f32 0.0, %v4661
      %4663 = vmatmul.f32.gmra.mxu0 %v4275
      %v4664 = vpop.f32.mrf.mxu0
      %v4665 = vadd.f32 0.0, %v4664
      %4666 = vmatmul.f32.gmra.mxu0 %v4278
      %v4667 = vpop.f32.mrf.mxu0
      %v4668 = vadd.f32 0.0, %v4667
      %4669 = vmatmul.f32.gmra.mxu0 %v4281
      %v4670 = vpop.f32.mrf.mxu0
      %v4671 = vadd.f32 0.0, %v4670
      %4672 = vmatmul.f32.gmra.mxu0 %v4284
      %v4673 = vpop.f32.mrf.mxu0
      %v4674 = vadd.f32 0.0, %v4673
      %4675 = vmatmul.f32.gmra.mxu0 %v4287
      %v4676 = vpop.f32.mrf.mxu0
      %v4677 = vadd.f32 0.0, %v4676
      %4678 = vmatmul.f32.gmra.mxu0 %v4290
      %v4679 = vpop.f32.mrf.mxu0
      %v4680 = vadd.f32 0.0, %v4679
      %4681 = vmatmul.f32.gmra.mxu0 %v4293
      %v4682 = vpop.f32.mrf.mxu0
      %v4683 = vadd.f32 0.0, %v4682
      %4684 = vdwg.mxu0
      %4685 = vmatpush.msra.mxu0 0.0
      %4686 = vmatpush.msra.mxu0 0.0
      %4687 = vmatpush.msra.mxu0 0.0
      %4688 = vmatpush.msra.mxu0 0.0
      %4689 = vmatpush.msra.mxu0 0.0
      %4690 = vmatpush.msra.mxu0 0.0
      %4691 = vmatpush.msra.mxu0 0.0
      %4692 = vmatpush.msra.mxu0 0.0
      %4693 = vmatpush.msra.mxu0 0.0
      %4694 = vmatpush.msra.mxu0 0.0
      %4695 = vmatpush.msra.mxu0 0.0
      %4696 = vmatpush.msra.mxu0 0.0
      %4697 = vmatpush.msra.mxu0 0.0
      %4698 = vmatpush.msra.mxu0 0.0
      %4699 = vmatpush.msra.mxu0 %v2723
      %4700 = vmatpush.msra.mxu0 %v2715
      %4701 = vmatmul.f32.gmra.mxu0 %v4248
      %v4702 = vpop.f32.mrf.mxu0
      %v4703 = vadd.f32 0.0, %v4702
      %4704 = vmatmul.f32.gmra.mxu0 %v4251
      %v4705 = vpop.f32.mrf.mxu0
      %v4706 = vadd.f32 0.0, %v4705
      %4707 = vmatmul.f32.gmra.mxu0 %v4254
      %v4708 = vpop.f32.mrf.mxu0
      %v4709 = vadd.f32 0.0, %v4708
      %4710 = vmatmul.f32.gmra.mxu0 %v4257
      %v4711 = vpop.f32.mrf.mxu0
      %v4712 = vadd.f32 0.0, %v4711
      %4713 = vmatmul.f32.gmra.mxu0 %v4260
      %v4714 = vpop.f32.mrf.mxu0
      %v4715 = vadd.f32 0.0, %v4714
      %4716 = vmatmul.f32.gmra.mxu0 %v4263
      %v4717 = vpop.f32.mrf.mxu0
      %v4718 = vadd.f32 0.0, %v4717
      %4719 = vmatmul.f32.gmra.mxu0 %v4266
      %v4720 = vpop.f32.mrf.mxu0
      %v4721 = vadd.f32 0.0, %v4720
      %4722 = vmatmul.f32.gmra.mxu0 %v4269
      %v4723 = vpop.f32.mrf.mxu0
      %v4724 = vadd.f32 0.0, %v4723
      %4725 = vmatmul.f32.gmra.mxu0 %v4272
      %v4726 = vpop.f32.mrf.mxu0
      %v4727 = vadd.f32 0.0, %v4726
      %4728 = vmatmul.f32.gmra.mxu0 %v4275
      %v4729 = vpop.f32.mrf.mxu0
      %v4730 = vadd.f32 0.0, %v4729
      %4731 = vmatmul.f32.gmra.mxu0 %v4278
      %v4732 = vpop.f32.mrf.mxu0
      %v4733 = vadd.f32 0.0, %v4732
      %4734 = vmatmul.f32.gmra.mxu0 %v4281
      %v4735 = vpop.f32.mrf.mxu0
      %v4736 = vadd.f32 0.0, %v4735
      %4737 = vmatmul.f32.gmra.mxu0 %v4284
      %v4738 = vpop.f32.mrf.mxu0
      %v4739 = vadd.f32 0.0, %v4738
      %4740 = vmatmul.f32.gmra.mxu0 %v4287
      %v4741 = vpop.f32.mrf.mxu0
      %v4742 = vadd.f32 0.0, %v4741
      %4743 = vmatmul.f32.gmra.mxu0 %v4290
      %v4744 = vpop.f32.mrf.mxu0
      %v4745 = vadd.f32 0.0, %v4744
      %4746 = vmatmul.f32.gmra.mxu0 %v4293
      %v4747 = vpop.f32.mrf.mxu0
      %v4748 = vadd.f32 0.0, %v4747
      %4749 = vdwg.mxu0
      %4750 = vmatpush.msra.mxu0 0.0
      %4751 = vmatpush.msra.mxu0 0.0
      %4752 = vmatpush.msra.mxu0 0.0
      %4753 = vmatpush.msra.mxu0 0.0
      %4754 = vmatpush.msra.mxu0 0.0
      %4755 = vmatpush.msra.mxu0 0.0
      %4756 = vmatpush.msra.mxu0 0.0
      %4757 = vmatpush.msra.mxu0 0.0
      %4758 = vmatpush.msra.mxu0 0.0
      %4759 = vmatpush.msra.mxu0 0.0
      %4760 = vmatpush.msra.mxu0 0.0
      %4761 = vmatpush.msra.mxu0 0.0
      %4762 = vmatpush.msra.mxu0 0.0
      %4763 = vmatpush.msra.mxu0 0.0
      %4764 = vmatpush.msra.mxu0 %v2724
      %4765 = vmatpush.msra.mxu0 %v2716
      %4766 = vmatmul.f32.gmra.mxu0 %v4248
      %v4767 = vpop.f32.mrf.mxu0
      %v4768 = vadd.f32 0.0, %v4767
      %4769 = vmatmul.f32.gmra.mxu0 %v4251
      %v4770 = vpop.f32.mrf.mxu0
      %v4771 = vadd.f32 0.0, %v4770
      %4772 = vmatmul.f32.gmra.mxu0 %v4254
      %v4773 = vpop.f32.mrf.mxu0
      %v4774 = vadd.f32 0.0, %v4773
      %4775 = vmatmul.f32.gmra.mxu0 %v4257
      %v4776 = vpop.f32.mrf.mxu0
      %v4777 = vadd.f32 0.0, %v4776
      %4778 = vmatmul.f32.gmra.mxu0 %v4260
      %v4779 = vpop.f32.mrf.mxu0
      %v4780 = vadd.f32 0.0, %v4779
      %4781 = vmatmul.f32.gmra.mxu0 %v4263
      %v4782 = vpop.f32.mrf.mxu0
      %v4783 = vadd.f32 0.0, %v4782
      %4784 = vmatmul.f32.gmra.mxu0 %v4266
      %v4785 = vpop.f32.mrf.mxu0
      %v4786 = vadd.f32 0.0, %v4785
      %4787 = vmatmul.f32.gmra.mxu0 %v4269
      %v4788 = vpop.f32.mrf.mxu0
      %v4789 = vadd.f32 0.0, %v4788
      %4790 = vmatmul.f32.gmra.mxu0 %v4272
      %v4791 = vpop.f32.mrf.mxu0
      %v4792 = vadd.f32 0.0, %v4791
      %4793 = vmatmul.f32.gmra.mxu0 %v4275
      %v4794 = vpop.f32.mrf.mxu0
      %v4795 = vadd.f32 0.0, %v4794
      %4796 = vmatmul.f32.gmra.mxu0 %v4278
      %v4797 = vpop.f32.mrf.mxu0
      %v4798 = vadd.f32 0.0, %v4797
      %4799 = vmatmul.f32.gmra.mxu0 %v4281
      %v4800 = vpop.f32.mrf.mxu0
      %v4801 = vadd.f32 0.0, %v4800
      %4802 = vmatmul.f32.gmra.mxu0 %v4284
      %v4803 = vpop.f32.mrf.mxu0
      %v4804 = vadd.f32 0.0, %v4803
      %4805 = vmatmul.f32.gmra.mxu0 %v4287
      %v4806 = vpop.f32.mrf.mxu0
      %v4807 = vadd.f32 0.0, %v4806
      %4808 = vmatmul.f32.gmra.mxu0 %v4290
      %v4809 = vpop.f32.mrf.mxu0
      %v4810 = vadd.f32 0.0, %v4809
      %4811 = vmatmul.f32.gmra.mxu0 %v4293
      %v4812 = vpop.f32.mrf.mxu0
      %v4813 = vadd.f32 0.0, %v4812
      %4814 = vdwg.mxu0
      %4815 = vst [vmem:[#allocation6] sm:$0xff] %v4313
      %4816 = vst [vmem:[#allocation6 + $0x8] sm:$0xff] %v4378
      %4817 = vst [vmem:[#allocation6 + $0x10] sm:$0xff] %v4443
      %4818 = vst [vmem:[#allocation6 + $0x18] sm:$0xff] %v4508
      %4819 = vst [vmem:[#allocation6 + $0x20] sm:$0xff] %v4573
      %4820 = vst [vmem:[#allocation6 + $0x28] sm:$0xff] %v4638
      %4821 = vst [vmem:[#allocation6 + $0x30] sm:$0xff] %v4703
      %4822 = vst [vmem:[#allocation6 + $0x38] sm:$0xff] %v4768
      %4823 = vst [vmem:[#allocation6 + $0x40] sm:$0xff] %v4316
      %4824 = vst [vmem:[#allocation6 + $0x48] sm:$0xff] %v4381
      %4825 = vst [vmem:[#allocation6 + $0x50] sm:$0xff] %v4446
      %4826 = vst [vmem:[#allocation6 + $0x58] sm:$0xff] %v4511
      %4827 = vst [vmem:[#allocation6 + $0x60] sm:$0xff] %v4576
      %4828 = vst [vmem:[#allocation6 + $0x68] sm:$0xff] %v4641
      %4829 = vst [vmem:[#allocation6 + $0x70] sm:$0xff] %v4706
      %4830 = vst [vmem:[#allocation6 + $0x78] sm:$0xff] %v4771
      %4831 = vst [vmem:[#allocation6 + $0x80] sm:$0xff] %v4319
      %4832 = vst [vmem:[#allocation6 + $0x88] sm:$0xff] %v4384
      %4833 = vst [vmem:[#allocation6 + $0x90] sm:$0xff] %v4449
      %4834 = vst [vmem:[#allocation6 + $0x98] sm:$0xff] %v4514
      %4835 = vst [vmem:[#allocation6 + $0xa0] sm:$0xff] %v4579
      %4836 = vst [vmem:[#allocation6 + $0xa8] sm:$0xff] %v4644
      %4837 = vst [vmem:[#allocation6 + $0xb0] sm:$0xff] %v4709
      %4838 = vst [vmem:[#allocation6 + $0xb8] sm:$0xff] %v4774
      %4839 = vst [vmem:[#allocation6 + $0xc0] sm:$0xff] %v4322
      %4840 = vst [vmem:[#allocation6 + $0xc8] sm:$0xff] %v4387
      %4841 = vst [vmem:[#allocation6 + $0xd0] sm:$0xff] %v4452
      %4842 = vst [vmem:[#allocation6 + $0xd8] sm:$0xff] %v4517
      %4843 = vst [vmem:[#allocation6 + $0xe0] sm:$0xff] %v4582
      %4844 = vst [vmem:[#allocation6 + $0xe8] sm:$0xff] %v4647
      %4845 = vst [vmem:[#allocation6 + $0xf0] sm:$0xff] %v4712
      %4846 = vst [vmem:[#allocation6 + $0xf8] sm:$0xff] %v4777
      %4847 = vst [vmem:[#allocation6 + $0x100] sm:$0xff] %v4325
      %4848 = vst [vmem:[#allocation6 + $0x108] sm:$0xff] %v4390
      %4849 = vst [vmem:[#allocation6 + $0x110] sm:$0xff] %v4455
      %4850 = vst [vmem:[#allocation6 + $0x118] sm:$0xff] %v4520
      %4851 = vst [vmem:[#allocation6 + $0x120] sm:$0xff] %v4585
      %4852 = vst [vmem:[#allocation6 + $0x128] sm:$0xff] %v4650
      %4853 = vst [vmem:[#allocation6 + $0x130] sm:$0xff] %v4715
      %4854 = vst [vmem:[#allocation6 + $0x138] sm:$0xff] %v4780
      %4855 = vst [vmem:[#allocation6 + $0x140] sm:$0xff] %v4328
      %4856 = vst [vmem:[#allocation6 + $0x148] sm:$0xff] %v4393
      %4857 = vst [vmem:[#allocation6 + $0x150] sm:$0xff] %v4458
      %4858 = vst [vmem:[#allocation6 + $0x158] sm:$0xff] %v4523
      %4859 = vst [vmem:[#allocation6 + $0x160] sm:$0xff] %v4588
      %4860 = vst [vmem:[#allocation6 + $0x168] sm:$0xff] %v4653
      %4861 = vst [vmem:[#allocation6 + $0x170] sm:$0xff] %v4718
      %4862 = vst [vmem:[#allocation6 + $0x178] sm:$0xff] %v4783
      %4863 = vst [vmem:[#allocation6 + $0x180] sm:$0xff] %v4331
      %4864 = vst [vmem:[#allocation6 + $0x188] sm:$0xff] %v4396
      %4865 = vst [vmem:[#allocation6 + $0x190] sm:$0xff] %v4461
      %4866 = vst [vmem:[#allocation6 + $0x198] sm:$0xff] %v4526
      %4867 = vst [vmem:[#allocation6 + $0x1a0] sm:$0xff] %v4591
      %4868 = vst [vmem:[#allocation6 + $0x1a8] sm:$0xff] %v4656
      %4869 = vst [vmem:[#allocation6 + $0x1b0] sm:$0xff] %v4721
      %4870 = vst [vmem:[#allocation6 + $0x1b8] sm:$0xff] %v4786
      %4871 = vst [vmem:[#allocation6 + $0x1c0] sm:$0xff] %v4334
      %4872 = vst [vmem:[#allocation6 + $0x1c8] sm:$0xff] %v4399
      %4873 = vst [vmem:[#allocation6 + $0x1d0] sm:$0xff] %v4464
      %4874 = vst [vmem:[#allocation6 + $0x1d8] sm:$0xff] %v4529
      %4875 = vst [vmem:[#allocation6 + $0x1e0] sm:$0xff] %v4594
      %4876 = vst [vmem:[#allocation6 + $0x1e8] sm:$0xff] %v4659
      %4877 = vst [vmem:[#allocation6 + $0x1f0] sm:$0xff] %v4724
      %4878 = vst [vmem:[#allocation6 + $0x1f8] sm:$0xff] %v4789
      %4879 = vst [vmem:[#allocation6 + $0x200] sm:$0xff] %v4337
      %4880 = vst [vmem:[#allocation6 + $0x208] sm:$0xff] %v4402
      %4881 = vst [vmem:[#allocation6 + $0x210] sm:$0xff] %v4467
      %4882 = vst [vmem:[#allocation6 + $0x218] sm:$0xff] %v4532
      %4883 = vst [vmem:[#allocation6 + $0x220] sm:$0xff] %v4597
      %4884 = vst [vmem:[#allocation6 + $0x228] sm:$0xff] %v4662
      %4885 = vst [vmem:[#allocation6 + $0x230] sm:$0xff] %v4727
      %4886 = vst [vmem:[#allocation6 + $0x238] sm:$0xff] %v4792
      %4887 = vst [vmem:[#allocation6 + $0x240] sm:$0xff] %v4340
      %4888 = vst [vmem:[#allocation6 + $0x248] sm:$0xff] %v4405
      %4889 = vst [vmem:[#allocation6 + $0x250] sm:$0xff] %v4470
      %4890 = vst [vmem:[#allocation6 + $0x258] sm:$0xff] %v4535
      %4891 = vst [vmem:[#allocation6 + $0x260] sm:$0xff] %v4600
      %4892 = vst [vmem:[#allocation6 + $0x268] sm:$0xff] %v4665
      %4893 = vst [vmem:[#allocation6 + $0x270] sm:$0xff] %v4730
      %4894 = vst [vmem:[#allocation6 + $0x278] sm:$0xff] %v4795
      %4895 = vst [vmem:[#allocation6 + $0x280] sm:$0xff] %v4343
      %4896 = vst [vmem:[#allocation6 + $0x288] sm:$0xff] %v4408
      %4897 = vst [vmem:[#allocation6 + $0x290] sm:$0xff] %v4473
      %4898 = vst [vmem:[#allocation6 + $0x298] sm:$0xff] %v4538
      %4899 = vst [vmem:[#allocation6 + $0x2a0] sm:$0xff] %v4603
      %4900 = vst [vmem:[#allocation6 + $0x2a8] sm:$0xff] %v4668
      %4901 = vst [vmem:[#allocation6 + $0x2b0] sm:$0xff] %v4733
      %4902 = vst [vmem:[#allocation6 + $0x2b8] sm:$0xff] %v4798
      %4903 = vst [vmem:[#allocation6 + $0x2c0] sm:$0xff] %v4346
      %4904 = vst [vmem:[#allocation6 + $0x2c8] sm:$0xff] %v4411
      %4905 = vst [vmem:[#allocation6 + $0x2d0] sm:$0xff] %v4476
      %4906 = vst [vmem:[#allocation6 + $0x2d8] sm:$0xff] %v4541
      %4907 = vst [vmem:[#allocation6 + $0x2e0] sm:$0xff] %v4606
      %4908 = vst [vmem:[#allocation6 + $0x2e8] sm:$0xff] %v4671
      %4909 = vst [vmem:[#allocation6 + $0x2f0] sm:$0xff] %v4736
      %4910 = vst [vmem:[#allocation6 + $0x2f8] sm:$0xff] %v4801
      %4911 = vst [vmem:[#allocation6 + $0x300] sm:$0xff] %v4349
      %4912 = vst [vmem:[#allocation6 + $0x308] sm:$0xff] %v4414
      %4913 = vst [vmem:[#allocation6 + $0x310] sm:$0xff] %v4479
      %4914 = vst [vmem:[#allocation6 + $0x318] sm:$0xff] %v4544
      %4915 = vst [vmem:[#allocation6 + $0x320] sm:$0xff] %v4609
      %4916 = vst [vmem:[#allocation6 + $0x328] sm:$0xff] %v4674
      %4917 = vst [vmem:[#allocation6 + $0x330] sm:$0xff] %v4739
      %4918 = vst [vmem:[#allocation6 + $0x338] sm:$0xff] %v4804
      %4919 = vst [vmem:[#allocation6 + $0x340] sm:$0xff] %v4352
      %4920 = vst [vmem:[#allocation6 + $0x348] sm:$0xff] %v4417
      %4921 = vst [vmem:[#allocation6 + $0x350] sm:$0xff] %v4482
      %4922 = vst [vmem:[#allocation6 + $0x358] sm:$0xff] %v4547
      %4923 = vst [vmem:[#allocation6 + $0x360] sm:$0xff] %v4612
      %4924 = vst [vmem:[#allocation6 + $0x368] sm:$0xff] %v4677
      %4925 = vst [vmem:[#allocation6 + $0x370] sm:$0xff] %v4742
      %4926 = vst [vmem:[#allocation6 + $0x378] sm:$0xff] %v4807
      %4927 = vst [vmem:[#allocation6 + $0x380] sm:$0xff] %v4355
      %4928 = vst [vmem:[#allocation6 + $0x388] sm:$0xff] %v4420
      %4929 = vst [vmem:[#allocation6 + $0x390] sm:$0xff] %v4485
      %4930 = vst [vmem:[#allocation6 + $0x398] sm:$0xff] %v4550
      %4931 = vst [vmem:[#allocation6 + $0x3a0] sm:$0xff] %v4615
      %4932 = vst [vmem:[#allocation6 + $0x3a8] sm:$0xff] %v4680
      %4933 = vst [vmem:[#allocation6 + $0x3b0] sm:$0xff] %v4745
      %4934 = vst [vmem:[#allocation6 + $0x3b8] sm:$0xff] %v4810
      %4935 = vst [vmem:[#allocation6 + $0x3c0] sm:$0xff] %v4358
      %4936 = vst [vmem:[#allocation6 + $0x3c8] sm:$0xff] %v4423
      %4937 = vst [vmem:[#allocation6 + $0x3d0] sm:$0xff] %v4488
      %4938 = vst [vmem:[#allocation6 + $0x3d8] sm:$0xff] %v4553
      %4939 = vst [vmem:[#allocation6 + $0x3e0] sm:$0xff] %v4618
      %4940 = vst [vmem:[#allocation6 + $0x3e8] sm:$0xff] %v4683
      %4941 = vst [vmem:[#allocation6 + $0x3f0] sm:$0xff] %v4748
      %4942 = vst [vmem:[#allocation6 + $0x3f8] sm:$0xff] %v4813
      %v4943 = vld [vmem:[%s15] sm:$0xf]
      %v4944 = vld [vmem:[%s15 + $0x4] sm:$0xf]
      %v4945 = vld [vmem:[%s15 + $0x8] sm:$0xf]
      %v4946 = vld [vmem:[%s15 + $0xc] sm:$0xf]
      %v4947 = vld [vmem:[%s15 + $0x10] sm:$0xf]
      %v4948 = vld [vmem:[%s15 + $0x14] sm:$0xf]
      %v4949 = vld [vmem:[%s15 + $0x18] sm:$0xf]
      %v4950 = vld [vmem:[%s15 + $0x1c] sm:$0xf]
      %v4951 = vld [vmem:[%s15 + $0x20] sm:$0xf]
      %v4952 = vld [vmem:[%s15 + $0x24] sm:$0xf]
      %v4953 = vld [vmem:[%s15 + $0x28] sm:$0xf]
      %v4954 = vld [vmem:[%s15 + $0x2c] sm:$0xf]
      %v4955 = vld [vmem:[%s15 + $0x30] sm:$0xf]
      %v4956 = vld [vmem:[%s15 + $0x34] sm:$0xf]
      %v4957 = vld [vmem:[%s15 + $0x38] sm:$0xf]
      %v4958 = vld [vmem:[%s15 + $0x3c] sm:$0xf]
      %v4959 = vld [vmem:[%s15 + $0x40] sm:$0xf]
      %v4960 = vld [vmem:[%s15 + $0x44] sm:$0xf]
      %v4961 = vld [vmem:[%s15 + $0x48] sm:$0xf]
      %v4962 = vld [vmem:[%s15 + $0x4c] sm:$0xf]
      %v4963 = vld [vmem:[%s15 + $0x50] sm:$0xf]
      %v4964 = vld [vmem:[%s15 + $0x54] sm:$0xf]
      %v4965 = vld [vmem:[%s15 + $0x58] sm:$0xf]
      %v4966 = vld [vmem:[%s15 + $0x5c] sm:$0xf]
      %v4967 = vld [vmem:[%s15 + $0x60] sm:$0xf]
      %v4968 = vld [vmem:[%s15 + $0x64] sm:$0xf]
      %v4969 = vld [vmem:[%s15 + $0x68] sm:$0xf]
      %v4970 = vld [vmem:[%s15 + $0x6c] sm:$0xf]
      %v4971 = vld [vmem:[%s15 + $0x70] sm:$0xf]
      %v4972 = vld [vmem:[%s15 + $0x74] sm:$0xf]
      %v4973 = vld [vmem:[%s15 + $0x78] sm:$0xf]
      %v4974 = vld [vmem:[%s15 + $0x7c] sm:$0xf]
      %v4975 = vld [vmem:[%s15 + $0x80] sm:$0xf]
      %v4976 = vld [vmem:[%s15 + $0x84] sm:$0xf]
      %v4977 = vld [vmem:[%s15 + $0x88] sm:$0xf]
      %v4978 = vld [vmem:[%s15 + $0x8c] sm:$0xf]
      %v4979 = vld [vmem:[%s15 + $0x90] sm:$0xf]
      %v4980 = vld [vmem:[%s15 + $0x94] sm:$0xf]
      %v4981 = vld [vmem:[%s15 + $0x98] sm:$0xf]
      %v4982 = vld [vmem:[%s15 + $0x9c] sm:$0xf]
      %v4983 = vld [vmem:[%s15 + $0xa0] sm:$0xf]
      %v4984 = vld [vmem:[%s15 + $0xa4] sm:$0xf]
      %v4985 = vld [vmem:[%s15 + $0xa8] sm:$0xf]
      %v4986 = vld [vmem:[%s15 + $0xac] sm:$0xf]
      %v4987 = vld [vmem:[%s15 + $0xb0] sm:$0xf]
      %v4988 = vld [vmem:[%s15 + $0xb4] sm:$0xf]
      %v4989 = vld [vmem:[%s15 + $0xb8] sm:$0xf]
      %v4990 = vld [vmem:[%s15 + $0xbc] sm:$0xf]
      %v4991 = vld [vmem:[%s15 + $0xc0] sm:$0xf]
      %v4992 = vld [vmem:[%s15 + $0xc4] sm:$0xf]
      %v4993 = vld [vmem:[%s15 + $0xc8] sm:$0xf]
      %v4994 = vld [vmem:[%s15 + $0xcc] sm:$0xf]
      %v4995 = vld [vmem:[%s15 + $0xd0] sm:$0xf]
      %v4996 = vld [vmem:[%s15 + $0xd4] sm:$0xf]
      %v4997 = vld [vmem:[%s15 + $0xd8] sm:$0xf]
      %v4998 = vld [vmem:[%s15 + $0xdc] sm:$0xf]
      %v4999 = vld [vmem:[%s15 + $0xe0] sm:$0xf]
      %v5000 = vld [vmem:[%s15 + $0xe4] sm:$0xf]
      %v5001 = vld [vmem:[%s15 + $0xe8] sm:$0xf]
      %v5002 = vld [vmem:[%s15 + $0xec] sm:$0xf]
      %v5003 = vld [vmem:[%s15 + $0xf0] sm:$0xf]
      %v5004 = vld [vmem:[%s15 + $0xf4] sm:$0xf]
      %v5005 = vld [vmem:[%s15 + $0xf8] sm:$0xf]
      %v5006 = vld [vmem:[%s15 + $0xfc] sm:$0xf]
      %v5007 = vunpack.c.l.bf16 %v4943
      %v5008 = vunpack.c.l.bf16 %v4944
      %v5009 = vunpack.c.l.bf16 %v4945
      %v5010 = vunpack.c.l.bf16 %v4946
      %v5011 = vunpack.c.l.bf16 %v4947
      %v5012 = vunpack.c.l.bf16 %v4948
      %v5013 = vunpack.c.l.bf16 %v4949
      %v5014 = vunpack.c.l.bf16 %v4950
      %v5015 = vunpack.c.l.bf16 %v4951
      %v5016 = vunpack.c.l.bf16 %v4952
      %v5017 = vunpack.c.l.bf16 %v4953
      %v5018 = vunpack.c.l.bf16 %v4954
      %v5019 = vunpack.c.l.bf16 %v4955
      %v5020 = vunpack.c.l.bf16 %v4956
      %v5021 = vunpack.c.l.bf16 %v4957
      %v5022 = vunpack.c.l.bf16 %v4958
      %v5023 = vunpack.c.l.bf16 %v4959
      %v5024 = vunpack.c.l.bf16 %v4960
      %v5025 = vunpack.c.l.bf16 %v4961
      %v5026 = vunpack.c.l.bf16 %v4962
      %v5027 = vunpack.c.l.bf16 %v4963
      %v5028 = vunpack.c.l.bf16 %v4964
      %v5029 = vunpack.c.l.bf16 %v4965
      %v5030 = vunpack.c.l.bf16 %v4966
      %v5031 = vunpack.c.l.bf16 %v4967
      %v5032 = vunpack.c.l.bf16 %v4968
      %v5033 = vunpack.c.l.bf16 %v4969
      %v5034 = vunpack.c.l.bf16 %v4970
      %v5035 = vunpack.c.l.bf16 %v4971
      %v5036 = vunpack.c.l.bf16 %v4972
      %v5037 = vunpack.c.l.bf16 %v4973
      %v5038 = vunpack.c.l.bf16 %v4974
      %v5039 = vunpack.c.l.bf16 %v4975
      %v5040 = vunpack.c.l.bf16 %v4976
      %v5041 = vunpack.c.l.bf16 %v4977
      %v5042 = vunpack.c.l.bf16 %v4978
      %v5043 = vunpack.c.l.bf16 %v4979
      %v5044 = vunpack.c.l.bf16 %v4980
      %v5045 = vunpack.c.l.bf16 %v4981
      %v5046 = vunpack.c.l.bf16 %v4982
      %v5047 = vunpack.c.l.bf16 %v4983
      %v5048 = vunpack.c.l.bf16 %v4984
      %v5049 = vunpack.c.l.bf16 %v4985
      %v5050 = vunpack.c.l.bf16 %v4986
      %v5051 = vunpack.c.l.bf16 %v4987
      %v5052 = vunpack.c.l.bf16 %v4988
      %v5053 = vunpack.c.l.bf16 %v4989
      %v5054 = vunpack.c.l.bf16 %v4990
      %v5055 = vunpack.c.l.bf16 %v4991
      %v5056 = vunpack.c.l.bf16 %v4992
      %v5057 = vunpack.c.l.bf16 %v4993
      %v5058 = vunpack.c.l.bf16 %v4994
      %v5059 = vunpack.c.l.bf16 %v4995
      %v5060 = vunpack.c.l.bf16 %v4996
      %v5061 = vunpack.c.l.bf16 %v4997
      %v5062 = vunpack.c.l.bf16 %v4998
      %v5063 = vunpack.c.l.bf16 %v4999
      %v5064 = vunpack.c.l.bf16 %v5000
      %v5065 = vunpack.c.l.bf16 %v5001
      %v5066 = vunpack.c.l.bf16 %v5002
      %v5067 = vunpack.c.l.bf16 %v5003
      %v5068 = vunpack.c.l.bf16 %v5004
      %v5069 = vunpack.c.l.bf16 %v5005
      %v5070 = vunpack.c.l.bf16 %v5006
      %v5071 = vld [vmem:[#allocation4] sm:$0xff]
      %v5072 = vld [vmem:[#allocation4 + $0x8] sm:$0xff]
      %v5073 = vld [vmem:[#allocation4 + $0x10] sm:$0xff]
      %v5074 = vld [vmem:[#allocation4 + $0x18] sm:$0xff]
      %v5075 = vld [vmem:[#allocation4 + $0x40] sm:$0xff]
      %v5076 = vld [vmem:[#allocation4 + $0x48] sm:$0xff]
      %v5077 = vld [vmem:[#allocation4 + $0x50] sm:$0xff]
      %v5078 = vld [vmem:[#allocation4 + $0x58] sm:$0xff]
      %v5079 = vmul.f32 %v5071, 0.0
      %v5080 = vmul.f32 %v5072, 0.0
      %v5081 = vmul.f32 %v5073, 0.0
      %v5082 = vmul.f32 %v5074, 0.0
      %v5083 = vmul.f32 %v5075, 0.0
      %v5084 = vmul.f32 %v5076, 0.0
      %v5085 = vmul.f32 %v5077, 0.0
      %v5086 = vmul.f32 %v5078, 0.0
      %v5087 = vld [vmem:[#allocation5] sm:$0xff]
      %v5088 = vld [vmem:[#allocation5 + $0x8] sm:$0xff]
      %v5089 = vld [vmem:[#allocation5 + $0x10] sm:$0xff]
      %v5090 = vld [vmem:[#allocation5 + $0x18] sm:$0xff]
      %v5091 = vld [vmem:[#allocation5 + $0x40] sm:$0xff]
      %v5092 = vld [vmem:[#allocation5 + $0x48] sm:$0xff]
      %v5093 = vld [vmem:[#allocation5 + $0x50] sm:$0xff]
      %v5094 = vld [vmem:[#allocation5 + $0x58] sm:$0xff]
      %v5095 = vadd.f32 %v5079, %v5087
      %v5096 = vadd.f32 %v5080, %v5088
      %v5097 = vadd.f32 %v5081, %v5089
      %v5098 = vadd.f32 %v5082, %v5090
      %v5099 = vadd.f32 %v5083, %v5091
      %v5100 = vadd.f32 %v5084, %v5092
      %v5101 = vadd.f32 %v5085, %v5093
      %v5102 = vadd.f32 %v5086, %v5094
      %v5103 = vld [vmem:[#allocation4 + $0x3a0] sm:$0xff]
      %v5104 = vld [vmem:[#allocation4 + $0x3a8] sm:$0xff]
      %v5105 = vld [vmem:[#allocation4 + $0x3b0] sm:$0xff]
      %v5106 = vld [vmem:[#allocation4 + $0x3b8] sm:$0xff]
      %v5107 = vld [vmem:[#allocation4 + $0x3e0] sm:$0xff]
      %v5108 = vld [vmem:[#allocation4 + $0x3e8] sm:$0xff]
      %v5109 = vld [vmem:[#allocation4 + $0x3f0] sm:$0xff]
      %v5110 = vld [vmem:[#allocation4 + $0x3f8] sm:$0xff]
      %v5111 = vmul.f32 %v5103, 0.0
      %v5112 = vmul.f32 %v5104, 0.0
      %v5113 = vmul.f32 %v5105, 0.0
      %v5114 = vmul.f32 %v5106, 0.0
      %v5115 = vmul.f32 %v5107, 0.0
      %v5116 = vmul.f32 %v5108, 0.0
      %v5117 = vmul.f32 %v5109, 0.0
      %v5118 = vmul.f32 %v5110, 0.0
      %v5119 = vld [vmem:[#allocation5 + $0x3a0] sm:$0xff]
      %v5120 = vld [vmem:[#allocation5 + $0x3a8] sm:$0xff]
      %v5121 = vld [vmem:[#allocation5 + $0x3b0] sm:$0xff]
      %v5122 = vld [vmem:[#allocation5 + $0x3b8] sm:$0xff]
      %v5123 = vld [vmem:[#allocation5 + $0x3e0] sm:$0xff]
      %v5124 = vld [vmem:[#allocation5 + $0x3e8] sm:$0xff]
      %v5125 = vld [vmem:[#allocation5 + $0x3f0] sm:$0xff]
      %v5126 = vld [vmem:[#allocation5 + $0x3f8] sm:$0xff]
      %v5127 = vadd.f32 %v5111, %v5119
      %v5128 = vadd.f32 %v5112, %v5120
      %v5129 = vadd.f32 %v5113, %v5121
      %v5130 = vadd.f32 %v5114, %v5122
      %v5131 = vadd.f32 %v5115, %v5123
      %v5132 = vadd.f32 %v5116, %v5124
      %v5133 = vadd.f32 %v5117, %v5125
      %v5134 = vadd.f32 %v5118, %v5126
      %v5135 = vld [vmem:[#allocation6] sm:$0xff]
      %v5136 = vld [vmem:[#allocation6 + $0x8] sm:$0xff]
      %v5137 = vld [vmem:[#allocation6 + $0x10] sm:$0xff]
      %v5138 = vld [vmem:[#allocation6 + $0x18] sm:$0xff]
      %v5139 = vld [vmem:[#allocation6 + $0x40] sm:$0xff]
      %v5140 = vld [vmem:[#allocation6 + $0x48] sm:$0xff]
      %v5141 = vld [vmem:[#allocation6 + $0x50] sm:$0xff]
      %v5142 = vld [vmem:[#allocation6 + $0x58] sm:$0xff]
      %v5143 = vmul.f32 %v5095, %v5135
      %v5144 = vmul.f32 %v5096, %v5136
      %v5145 = vmul.f32 %v5097, %v5137
      %v5146 = vmul.f32 %v5098, %v5138
      %v5147 = vmul.f32 %v5099, %v5139
      %v5148 = vmul.f32 %v5100, %v5140
      %v5149 = vmul.f32 %v5101, %v5141
      %v5150 = vmul.f32 %v5102, %v5142
      %5151 = vmatpush.msra.mxu0 %v5022
      %5152 = vmatpush.msra.mxu0 %v5021
      %5153 = vmatpush.msra.mxu0 %v5020
      %5154 = vmatpush.msra.mxu0 %v5019
      %5155 = vmatpush.msra.mxu0 %v5018
      %5156 = vmatpush.msra.mxu0 %v5017
      %5157 = vmatpush.msra.mxu0 %v5016
      %5158 = vmatpush.msra.mxu0 %v5015
      %5159 = vmatpush.msra.mxu0 %v5014
      %5160 = vmatpush.msra.mxu0 %v5013
      %5161 = vmatpush.msra.mxu0 %v5012
      %5162 = vmatpush.msra.mxu0 %v5011
      %5163 = vmatpush.msra.mxu0 %v5010
      %5164 = vmatpush.msra.mxu0 %v5009
      %5165 = vmatpush.msra.mxu0 %v5008
      %5166 = vmatpush.msra.mxu0 %v5007
      %5167 = vmatmul.f32.gmra.mxu0 %v5143
      %v5168 = vpop.f32.mrf.mxu0
      %v5169 = vadd.f32 0.0, %v5168
      %5170 = vmatmul.f32.gmra.mxu0 %v5147
      %v5171 = vpop.f32.mrf.mxu0
      %v5172 = vadd.f32 0.0, %v5171
      %5173 = vdwg.mxu0
      %5174 = vmatpush.msra.mxu0 %v5038
      %5175 = vmatpush.msra.mxu0 %v5037
      %5176 = vmatpush.msra.mxu0 %v5036
      %5177 = vmatpush.msra.mxu0 %v5035
      %5178 = vmatpush.msra.mxu0 %v5034
      %5179 = vmatpush.msra.mxu0 %v5033
      %5180 = vmatpush.msra.mxu0 %v5032
      %5181 = vmatpush.msra.mxu0 %v5031
      %5182 = vmatpush.msra.mxu0 %v5030
      %5183 = vmatpush.msra.mxu0 %v5029
      %5184 = vmatpush.msra.mxu0 %v5028
      %5185 = vmatpush.msra.mxu0 %v5027
      %5186 = vmatpush.msra.mxu0 %v5026
      %5187 = vmatpush.msra.mxu0 %v5025
      %5188 = vmatpush.msra.mxu0 %v5024
      %5189 = vmatpush.msra.mxu0 %v5023
      %5190 = vmatmul.f32.gmra.mxu0 %v5144
      %v5191 = vpop.f32.mrf.mxu0
      %v5192 = vadd.f32 %v5169, %v5191
      %5193 = vmatmul.f32.gmra.mxu0 %v5148
      %v5194 = vpop.f32.mrf.mxu0
      %v5195 = vadd.f32 %v5172, %v5194
      %5196 = vdwg.mxu0
      %5197 = vmatpush.msra.mxu0 %v5054
      %5198 = vmatpush.msra.mxu0 %v5053
      %5199 = vmatpush.msra.mxu0 %v5052
      %5200 = vmatpush.msra.mxu0 %v5051
      %5201 = vmatpush.msra.mxu0 %v5050
      %5202 = vmatpush.msra.mxu0 %v5049
      %5203 = vmatpush.msra.mxu0 %v5048
      %5204 = vmatpush.msra.mxu0 %v5047
      %5205 = vmatpush.msra.mxu0 %v5046
      %5206 = vmatpush.msra.mxu0 %v5045
      %5207 = vmatpush.msra.mxu0 %v5044
      %5208 = vmatpush.msra.mxu0 %v5043
      %5209 = vmatpush.msra.mxu0 %v5042
      %5210 = vmatpush.msra.mxu0 %v5041
      %5211 = vmatpush.msra.mxu0 %v5040
      %5212 = vmatpush.msra.mxu0 %v5039
      %5213 = vmatmul.f32.gmra.mxu0 %v5145
      %v5214 = vpop.f32.mrf.mxu0
      %v5215 = vadd.f32 %v5192, %v5214
      %5216 = vmatmul.f32.gmra.mxu0 %v5149
      %v5217 = vpop.f32.mrf.mxu0
      %v5218 = vadd.f32 %v5195, %v5217
      %5219 = vdwg.mxu0
      %5220 = vmatpush.msra.mxu0 %v5070
      %5221 = vmatpush.msra.mxu0 %v5069
      %5222 = vmatpush.msra.mxu0 %v5068
      %5223 = vmatpush.msra.mxu0 %v5067
      %5224 = vmatpush.msra.mxu0 %v5066
      %5225 = vmatpush.msra.mxu0 %v5065
      %5226 = vmatpush.msra.mxu0 %v5064
      %5227 = vmatpush.msra.mxu0 %v5063
      %5228 = vmatpush.msra.mxu0 %v5062
      %5229 = vmatpush.msra.mxu0 %v5061
      %5230 = vmatpush.msra.mxu0 %v5060
      %5231 = vmatpush.msra.mxu0 %v5059
      %5232 = vmatpush.msra.mxu0 %v5058
      %5233 = vmatpush.msra.mxu0 %v5057
      %5234 = vmatpush.msra.mxu0 %v5056
      %5235 = vmatpush.msra.mxu0 %v5055
      %5236 = vmatmul.f32.gmra.mxu0 %v5146
      %v5237 = vpop.f32.mrf.mxu0
      %v5238 = vadd.f32 %v5215, %v5237
      %5239 = vmatmul.f32.gmra.mxu0 %v5150
      %v5240 = vpop.f32.mrf.mxu0
      %v5241 = vadd.f32 %v5218, %v5240
      %5242 = vdwg.mxu0
      %vm5243 = vcmask 523264
      %5244 = vst.msk [vmem:[#allocation7] sm:$0xff] %vm5243, %v5238
      %5245 = vst.msk [vmem:[#allocation7 + $0x8] sm:$0xff] %vm5243, %v5241
      %v5246 = vld [vmem:[#allocation6 + $0x3a0] sm:$0xff]
      %v5247 = vld [vmem:[#allocation6 + $0x3a8] sm:$0xff]
      %v5248 = vld [vmem:[#allocation6 + $0x3b0] sm:$0xff]
      %v5249 = vld [vmem:[#allocation6 + $0x3b8] sm:$0xff]
      %v5250 = vld [vmem:[#allocation6 + $0x3e0] sm:$0xff]
      %v5251 = vld [vmem:[#allocation6 + $0x3e8] sm:$0xff]
      %v5252 = vld [vmem:[#allocation6 + $0x3f0] sm:$0xff]
      %v5253 = vld [vmem:[#allocation6 + $0x3f8] sm:$0xff]
      %v5254 = vmul.f32 %v5127, %v5246
      %v5255 = vmul.f32 %v5128, %v5247
      %v5256 = vmul.f32 %v5129, %v5248
      %v5257 = vmul.f32 %v5130, %v5249
      %v5258 = vmul.f32 %v5131, %v5250
      %v5259 = vmul.f32 %v5132, %v5251
      %v5260 = vmul.f32 %v5133, %v5252
      %v5261 = vmul.f32 %v5134, %v5253
      %5262 = vmatpush.msra.mxu0 %v5022
      %5263 = vmatpush.msra.mxu0 %v5021
      %5264 = vmatpush.msra.mxu0 %v5020
      %5265 = vmatpush.msra.mxu0 %v5019
      %5266 = vmatpush.msra.mxu0 %v5018
      %5267 = vmatpush.msra.mxu0 %v5017
      %5268 = vmatpush.msra.mxu0 %v5016
      %5269 = vmatpush.msra.mxu0 %v5015
      %5270 = vmatpush.msra.mxu0 %v5014
      %5271 = vmatpush.msra.mxu0 %v5013
      %5272 = vmatpush.msra.mxu0 %v5012
      %5273 = vmatpush.msra.mxu0 %v5011
      %5274 = vmatpush.msra.mxu0 %v5010
      %5275 = vmatpush.msra.mxu0 %v5009
      %5276 = vmatpush.msra.mxu0 %v5008
      %5277 = vmatpush.msra.mxu0 %v5007
      %5278 = vmatmul.f32.gmra.mxu0 %v5254
      %v5279 = vpop.f32.mrf.mxu0
      %v5280 = vadd.f32 0.0, %v5279
      %5281 = vmatmul.f32.gmra.mxu0 %v5258
      %v5282 = vpop.f32.mrf.mxu0
      %v5283 = vadd.f32 0.0, %v5282
      %5284 = vdwg.mxu0
      %5285 = vmatpush.msra.mxu0 %v5038
      %5286 = vmatpush.msra.mxu0 %v5037
      %5287 = vmatpush.msra.mxu0 %v5036
      %5288 = vmatpush.msra.mxu0 %v5035
      %5289 = vmatpush.msra.mxu0 %v5034
      %5290 = vmatpush.msra.mxu0 %v5033
      %5291 = vmatpush.msra.mxu0 %v5032
      %5292 = vmatpush.msra.mxu0 %v5031
      %5293 = vmatpush.msra.mxu0 %v5030
      %5294 = vmatpush.msra.mxu0 %v5029
      %5295 = vmatpush.msra.mxu0 %v5028
      %5296 = vmatpush.msra.mxu0 %v5027
      %5297 = vmatpush.msra.mxu0 %v5026
      %5298 = vmatpush.msra.mxu0 %v5025
      %5299 = vmatpush.msra.mxu0 %v5024
      %5300 = vmatpush.msra.mxu0 %v5023
      %5301 = vmatmul.f32.gmra.mxu0 %v5255
      %v5302 = vpop.f32.mrf.mxu0
      %v5303 = vadd.f32 %v5280, %v5302
      %5304 = vmatmul.f32.gmra.mxu0 %v5259
      %v5305 = vpop.f32.mrf.mxu0
      %v5306 = vadd.f32 %v5283, %v5305
      %5307 = vdwg.mxu0
      %5308 = vmatpush.msra.mxu0 %v5054
      %5309 = vmatpush.msra.mxu0 %v5053
      %5310 = vmatpush.msra.mxu0 %v5052
      %5311 = vmatpush.msra.mxu0 %v5051
      %5312 = vmatpush.msra.mxu0 %v5050
      %5313 = vmatpush.msra.mxu0 %v5049
      %5314 = vmatpush.msra.mxu0 %v5048
      %5315 = vmatpush.msra.mxu0 %v5047
      %5316 = vmatpush.msra.mxu0 %v5046
      %5317 = vmatpush.msra.mxu0 %v5045
      %5318 = vmatpush.msra.mxu0 %v5044
      %5319 = vmatpush.msra.mxu0 %v5043
      %5320 = vmatpush.msra.mxu0 %v5042
      %5321 = vmatpush.msra.mxu0 %v5041
      %5322 = vmatpush.msra.mxu0 %v5040
      %5323 = vmatpush.msra.mxu0 %v5039
      %5324 = vmatmul.f32.gmra.mxu0 %v5256
      %v5325 = vpop.f32.mrf.mxu0
      %v5326 = vadd.f32 %v5303, %v5325
      %5327 = vmatmul.f32.gmra.mxu0 %v5260
      %v5328 = vpop.f32.mrf.mxu0
      %v5329 = vadd.f32 %v5306, %v5328
      %5330 = vdwg.mxu0
      %5331 = vmatpush.msra.mxu0 %v5070
      %5332 = vmatpush.msra.mxu0 %v5069
      %5333 = vmatpush.msra.mxu0 %v5068
      %5334 = vmatpush.msra.mxu0 %v5067
      %5335 = vmatpush.msra.mxu0 %v5066
      %5336 = vmatpush.msra.mxu0 %v5065
      %5337 = vmatpush.msra.mxu0 %v5064
      %5338 = vmatpush.msra.mxu0 %v5063
      %5339 = vmatpush.msra.mxu0 %v5062
      %5340 = vmatpush.msra.mxu0 %v5061
      %5341 = vmatpush.msra.mxu0 %v5060
      %5342 = vmatpush.msra.mxu0 %v5059
      %5343 = vmatpush.msra.mxu0 %v5058
      %5344 = vmatpush.msra.mxu0 %v5057
      %5345 = vmatpush.msra.mxu0 %v5056
      %5346 = vmatpush.msra.mxu0 %v5055
      %5347 = vmatmul.f32.gmra.mxu0 %v5257
      %v5348 = vpop.f32.mrf.mxu0
      %v5349 = vadd.f32 %v5326, %v5348
      %5350 = vmatmul.f32.gmra.mxu0 %v5261
      %v5351 = vpop.f32.mrf.mxu0
      %v5352 = vadd.f32 %v5329, %v5351
      %5353 = vdwg.mxu0
      %5354 = vst.msk [vmem:[#allocation8 + $0x70] sm:$0xff] %vm5243, %v5349
      %5355 = vst.msk [vmem:[#allocation8 + $0x78] sm:$0xff] %vm5243, %v5352
      %v5356 = vld [vmem:[#allocation4 + $0x80] sm:$0xff]
      %v5357 = vld [vmem:[#allocation4 + $0x88] sm:$0xff]
      %v5358 = vld [vmem:[#allocation4 + $0x90] sm:$0xff]
      %v5359 = vld [vmem:[#allocation4 + $0x98] sm:$0xff]
      %v5360 = vld [vmem:[#allocation4 + $0xc0] sm:$0xff]
      %v5361 = vld [vmem:[#allocation4 + $0xc8] sm:$0xff]
      %v5362 = vld [vmem:[#allocation4 + $0xd0] sm:$0xff]
      %v5363 = vld [vmem:[#allocation4 + $0xd8] sm:$0xff]
      %v5364 = vmul.f32 %v5356, %v5095
      %v5365 = vmul.f32 %v5357, %v5096
      %v5366 = vmul.f32 %v5358, %v5097
      %v5367 = vmul.f32 %v5359, %v5098
      %v5368 = vmul.f32 %v5360, %v5099
      %v5369 = vmul.f32 %v5361, %v5100
      %v5370 = vmul.f32 %v5362, %v5101
      %v5371 = vmul.f32 %v5363, %v5102
      %v5372 = vld [vmem:[#allocation5 + $0x80] sm:$0xff]
      %v5373 = vld [vmem:[#allocation5 + $0x88] sm:$0xff]
      %v5374 = vld [vmem:[#allocation5 + $0x90] sm:$0xff]
      %v5375 = vld [vmem:[#allocation5 + $0x98] sm:$0xff]
      %v5376 = vld [vmem:[#allocation5 + $0xc0] sm:$0xff]
      %v5377 = vld [vmem:[#allocation5 + $0xc8] sm:$0xff]
      %v5378 = vld [vmem:[#allocation5 + $0xd0] sm:$0xff]
      %v5379 = vld [vmem:[#allocation5 + $0xd8] sm:$0xff]
      %v5380 = vadd.f32 %v5364, %v5372
      %v5381 = vadd.f32 %v5365, %v5373
      %v5382 = vadd.f32 %v5366, %v5374
      %v5383 = vadd.f32 %v5367, %v5375
      %v5384 = vadd.f32 %v5368, %v5376
      %v5385 = vadd.f32 %v5369, %v5377
      %v5386 = vadd.f32 %v5370, %v5378
      %v5387 = vadd.f32 %v5371, %v5379
      %v5388 = vld [vmem:[#allocation4 + $0x320] sm:$0xff]
      %v5389 = vld [vmem:[#allocation4 + $0x328] sm:$0xff]
      %v5390 = vld [vmem:[#allocation4 + $0x330] sm:$0xff]
      %v5391 = vld [vmem:[#allocation4 + $0x338] sm:$0xff]
      %v5392 = vld [vmem:[#allocation4 + $0x360] sm:$0xff]
      %v5393 = vld [vmem:[#allocation4 + $0x368] sm:$0xff]
      %v5394 = vld [vmem:[#allocation4 + $0x370] sm:$0xff]
      %v5395 = vld [vmem:[#allocation4 + $0x378] sm:$0xff]
      %v5396 = vmul.f32 %v5388, %v5127
      %v5397 = vmul.f32 %v5389, %v5128
      %v5398 = vmul.f32 %v5390, %v5129
      %v5399 = vmul.f32 %v5391, %v5130
      %v5400 = vmul.f32 %v5392, %v5131
      %v5401 = vmul.f32 %v5393, %v5132
      %v5402 = vmul.f32 %v5394, %v5133
      %v5403 = vmul.f32 %v5395, %v5134
      %v5404 = vld [vmem:[#allocation5 + $0x320] sm:$0xff]
      %v5405 = vld [vmem:[#allocation5 + $0x328] sm:$0xff]
      %v5406 = vld [vmem:[#allocation5 + $0x330] sm:$0xff]
      %v5407 = vld [vmem:[#allocation5 + $0x338] sm:$0xff]
      %v5408 = vld [vmem:[#allocation5 + $0x360] sm:$0xff]
      %v5409 = vld [vmem:[#allocation5 + $0x368] sm:$0xff]
      %v5410 = vld [vmem:[#allocation5 + $0x370] sm:$0xff]
      %v5411 = vld [vmem:[#allocation5 + $0x378] sm:$0xff]
      %v5412 = vadd.f32 %v5396, %v5404
      %v5413 = vadd.f32 %v5397, %v5405
      %v5414 = vadd.f32 %v5398, %v5406
      %v5415 = vadd.f32 %v5399, %v5407
      %v5416 = vadd.f32 %v5400, %v5408
      %v5417 = vadd.f32 %v5401, %v5409
      %v5418 = vadd.f32 %v5402, %v5410
      %v5419 = vadd.f32 %v5403, %v5411
      %v5420 = vld [vmem:[#allocation6 + $0x80] sm:$0xff]
      %v5421 = vld [vmem:[#allocation6 + $0x88] sm:$0xff]
      %v5422 = vld [vmem:[#allocation6 + $0x90] sm:$0xff]
      %v5423 = vld [vmem:[#allocation6 + $0x98] sm:$0xff]
      %v5424 = vld [vmem:[#allocation6 + $0xc0] sm:$0xff]
      %v5425 = vld [vmem:[#allocation6 + $0xc8] sm:$0xff]
      %v5426 = vld [vmem:[#allocation6 + $0xd0] sm:$0xff]
      %v5427 = vld [vmem:[#allocation6 + $0xd8] sm:$0xff]
      %v5428 = vmul.f32 %v5380, %v5420
      %v5429 = vmul.f32 %v5381, %v5421
      %v5430 = vmul.f32 %v5382, %v5422
      %v5431 = vmul.f32 %v5383, %v5423
      %v5432 = vmul.f32 %v5384, %v5424
      %v5433 = vmul.f32 %v5385, %v5425
      %v5434 = vmul.f32 %v5386, %v5426
      %v5435 = vmul.f32 %v5387, %v5427
      %5436 = vmatpush.msra.mxu0 %v5022
      %5437 = vmatpush.msra.mxu0 %v5021
      %5438 = vmatpush.msra.mxu0 %v5020
      %5439 = vmatpush.msra.mxu0 %v5019
      %5440 = vmatpush.msra.mxu0 %v5018
      %5441 = vmatpush.msra.mxu0 %v5017
      %5442 = vmatpush.msra.mxu0 %v5016
      %5443 = vmatpush.msra.mxu0 %v5015
      %5444 = vmatpush.msra.mxu0 %v5014
      %5445 = vmatpush.msra.mxu0 %v5013
      %5446 = vmatpush.msra.mxu0 %v5012
      %5447 = vmatpush.msra.mxu0 %v5011
      %5448 = vmatpush.msra.mxu0 %v5010
      %5449 = vmatpush.msra.mxu0 %v5009
      %5450 = vmatpush.msra.mxu0 %v5008
      %5451 = vmatpush.msra.mxu0 %v5007
      %5452 = vmatmul.f32.gmra.mxu0 %v5428
      %v5453 = vpop.f32.mrf.mxu0
      %v5454 = vadd.f32 0.0, %v5453
      %5455 = vmatmul.f32.gmra.mxu0 %v5432
      %v5456 = vpop.f32.mrf.mxu0
      %v5457 = vadd.f32 0.0, %v5456
      %5458 = vdwg.mxu0
      %5459 = vmatpush.msra.mxu0 %v5038
      %5460 = vmatpush.msra.mxu0 %v5037
      %5461 = vmatpush.msra.mxu0 %v5036
      %5462 = vmatpush.msra.mxu0 %v5035
      %5463 = vmatpush.msra.mxu0 %v5034
      %5464 = vmatpush.msra.mxu0 %v5033
      %5465 = vmatpush.msra.mxu0 %v5032
      %5466 = vmatpush.msra.mxu0 %v5031
      %5467 = vmatpush.msra.mxu0 %v5030
      %5468 = vmatpush.msra.mxu0 %v5029
      %5469 = vmatpush.msra.mxu0 %v5028
      %5470 = vmatpush.msra.mxu0 %v5027
      %5471 = vmatpush.msra.mxu0 %v5026
      %5472 = vmatpush.msra.mxu0 %v5025
      %5473 = vmatpush.msra.mxu0 %v5024
      %5474 = vmatpush.msra.mxu0 %v5023
      %5475 = vmatmul.f32.gmra.mxu0 %v5429
      %v5476 = vpop.f32.mrf.mxu0
      %v5477 = vadd.f32 %v5454, %v5476
      %5478 = vmatmul.f32.gmra.mxu0 %v5433
      %v5479 = vpop.f32.mrf.mxu0
      %v5480 = vadd.f32 %v5457, %v5479
      %5481 = vdwg.mxu0
      %5482 = vmatpush.msra.mxu0 %v5054
      %5483 = vmatpush.msra.mxu0 %v5053
      %5484 = vmatpush.msra.mxu0 %v5052
      %5485 = vmatpush.msra.mxu0 %v5051
      %5486 = vmatpush.msra.mxu0 %v5050
      %5487 = vmatpush.msra.mxu0 %v5049
      %5488 = vmatpush.msra.mxu0 %v5048
      %5489 = vmatpush.msra.mxu0 %v5047
      %5490 = vmatpush.msra.mxu0 %v5046
      %5491 = vmatpush.msra.mxu0 %v5045
      %5492 = vmatpush.msra.mxu0 %v5044
      %5493 = vmatpush.msra.mxu0 %v5043
      %5494 = vmatpush.msra.mxu0 %v5042
      %5495 = vmatpush.msra.mxu0 %v5041
      %5496 = vmatpush.msra.mxu0 %v5040
      %5497 = vmatpush.msra.mxu0 %v5039
      %5498 = vmatmul.f32.gmra.mxu0 %v5430
      %v5499 = vpop.f32.mrf.mxu0
      %v5500 = vadd.f32 %v5477, %v5499
      %5501 = vmatmul.f32.gmra.mxu0 %v5434
      %v5502 = vpop.f32.mrf.mxu0
      %v5503 = vadd.f32 %v5480, %v5502
      %5504 = vdwg.mxu0
      %5505 = vmatpush.msra.mxu0 %v5070
      %5506 = vmatpush.msra.mxu0 %v5069
      %5507 = vmatpush.msra.mxu0 %v5068
      %5508 = vmatpush.msra.mxu0 %v5067
      %5509 = vmatpush.msra.mxu0 %v5066
      %5510 = vmatpush.msra.mxu0 %v5065
      %5511 = vmatpush.msra.mxu0 %v5064
      %5512 = vmatpush.msra.mxu0 %v5063
      %5513 = vmatpush.msra.mxu0 %v5062
      %5514 = vmatpush.msra.mxu0 %v5061
      %5515 = vmatpush.msra.mxu0 %v5060
      %5516 = vmatpush.msra.mxu0 %v5059
      %5517 = vmatpush.msra.mxu0 %v5058
      %5518 = vmatpush.msra.mxu0 %v5057
      %5519 = vmatpush.msra.mxu0 %v5056
      %5520 = vmatpush.msra.mxu0 %v5055
      %5521 = vmatmul.f32.gmra.mxu0 %v5431
      %v5522 = vpop.f32.mrf.mxu0
      %v5523 = vadd.f32 %v5500, %v5522
      %5524 = vmatmul.f32.gmra.mxu0 %v5435
      %v5525 = vpop.f32.mrf.mxu0
      %v5526 = vadd.f32 %v5503, %v5525
      %5527 = vdwg.mxu0
      %5528 = vst.msk [vmem:[#allocation7 + $0x10] sm:$0xff] %vm5243, %v5523
      %5529 = vst.msk [vmem:[#allocation7 + $0x18] sm:$0xff] %vm5243, %v5526
      %v5530 = vld [vmem:[#allocation6 + $0x320] sm:$0xff]
      %v5531 = vld [vmem:[#allocation6 + $0x328] sm:$0xff]
      %v5532 = vld [vmem:[#allocation6 + $0x330] sm:$0xff]
      %v5533 = vld [vmem:[#allocation6 + $0x338] sm:$0xff]
      %v5534 = vld [vmem:[#allocation6 + $0x360] sm:$0xff]
      %v5535 = vld [vmem:[#allocation6 + $0x368] sm:$0xff]
      %v5536 = vld [vmem:[#allocation6 + $0x370] sm:$0xff]
      %v5537 = vld [vmem:[#allocation6 + $0x378] sm:$0xff]
      %v5538 = vmul.f32 %v5412, %v5530
      %v5539 = vmul.f32 %v5413, %v5531
      %v5540 = vmul.f32 %v5414, %v5532
      %v5541 = vmul.f32 %v5415, %v5533
      %v5542 = vmul.f32 %v5416, %v5534
      %v5543 = vmul.f32 %v5417, %v5535
      %v5544 = vmul.f32 %v5418, %v5536
      %v5545 = vmul.f32 %v5419, %v5537
      %5546 = vmatpush.msra.mxu0 %v5022
      %5547 = vmatpush.msra.mxu0 %v5021
      %5548 = vmatpush.msra.mxu0 %v5020
      %5549 = vmatpush.msra.mxu0 %v5019
      %5550 = vmatpush.msra.mxu0 %v5018
      %5551 = vmatpush.msra.mxu0 %v5017
      %5552 = vmatpush.msra.mxu0 %v5016
      %5553 = vmatpush.msra.mxu0 %v5015
      %5554 = vmatpush.msra.mxu0 %v5014
      %5555 = vmatpush.msra.mxu0 %v5013
      %5556 = vmatpush.msra.mxu0 %v5012
      %5557 = vmatpush.msra.mxu0 %v5011
      %5558 = vmatpush.msra.mxu0 %v5010
      %5559 = vmatpush.msra.mxu0 %v5009
      %5560 = vmatpush.msra.mxu0 %v5008
      %5561 = vmatpush.msra.mxu0 %v5007
      %5562 = vmatmul.f32.gmra.mxu0 %v5538
      %v5563 = vpop.f32.mrf.mxu0
      %v5564 = vadd.f32 0.0, %v5563
      %5565 = vmatmul.f32.gmra.mxu0 %v5542
      %v5566 = vpop.f32.mrf.mxu0
      %v5567 = vadd.f32 0.0, %v5566
      %5568 = vdwg.mxu0
      %5569 = vmatpush.msra.mxu0 %v5038
      %5570 = vmatpush.msra.mxu0 %v5037
      %5571 = vmatpush.msra.mxu0 %v5036
      %5572 = vmatpush.msra.mxu0 %v5035
      %5573 = vmatpush.msra.mxu0 %v5034
      %5574 = vmatpush.msra.mxu0 %v5033
      %5575 = vmatpush.msra.mxu0 %v5032
      %5576 = vmatpush.msra.mxu0 %v5031
      %5577 = vmatpush.msra.mxu0 %v5030
      %5578 = vmatpush.msra.mxu0 %v5029
      %5579 = vmatpush.msra.mxu0 %v5028
      %5580 = vmatpush.msra.mxu0 %v5027
      %5581 = vmatpush.msra.mxu0 %v5026
      %5582 = vmatpush.msra.mxu0 %v5025
      %5583 = vmatpush.msra.mxu0 %v5024
      %5584 = vmatpush.msra.mxu0 %v5023
      %5585 = vmatmul.f32.gmra.mxu0 %v5539
      %v5586 = vpop.f32.mrf.mxu0
      %v5587 = vadd.f32 %v5564, %v5586
      %5588 = vmatmul.f32.gmra.mxu0 %v5543
      %v5589 = vpop.f32.mrf.mxu0
      %v5590 = vadd.f32 %v5567, %v5589
      %5591 = vdwg.mxu0
      %5592 = vmatpush.msra.mxu0 %v5054
      %5593 = vmatpush.msra.mxu0 %v5053
      %5594 = vmatpush.msra.mxu0 %v5052
      %5595 = vmatpush.msra.mxu0 %v5051
      %5596 = vmatpush.msra.mxu0 %v5050
      %5597 = vmatpush.msra.mxu0 %v5049
      %5598 = vmatpush.msra.mxu0 %v5048
      %5599 = vmatpush.msra.mxu0 %v5047
      %5600 = vmatpush.msra.mxu0 %v5046
      %5601 = vmatpush.msra.mxu0 %v5045
      %5602 = vmatpush.msra.mxu0 %v5044
      %5603 = vmatpush.msra.mxu0 %v5043
      %5604 = vmatpush.msra.mxu0 %v5042
      %5605 = vmatpush.msra.mxu0 %v5041
      %5606 = vmatpush.msra.mxu0 %v5040
      %5607 = vmatpush.msra.mxu0 %v5039
      %5608 = vmatmul.f32.gmra.mxu0 %v5540
      %v5609 = vpop.f32.mrf.mxu0
      %v5610 = vadd.f32 %v5587, %v5609
      %5611 = vmatmul.f32.gmra.mxu0 %v5544
      %v5612 = vpop.f32.mrf.mxu0
      %v5613 = vadd.f32 %v5590, %v5612
      %5614 = vdwg.mxu0
      %5615 = vmatpush.msra.mxu0 %v5070
      %5616 = vmatpush.msra.mxu0 %v5069
      %5617 = vmatpush.msra.mxu0 %v5068
      %5618 = vmatpush.msra.mxu0 %v5067
      %5619 = vmatpush.msra.mxu0 %v5066
      %5620 = vmatpush.msra.mxu0 %v5065
      %5621 = vmatpush.msra.mxu0 %v5064
      %5622 = vmatpush.msra.mxu0 %v5063
      %5623 = vmatpush.msra.mxu0 %v5062
      %5624 = vmatpush.msra.mxu0 %v5061
      %5625 = vmatpush.msra.mxu0 %v5060
      %5626 = vmatpush.msra.mxu0 %v5059
      %5627 = vmatpush.msra.mxu0 %v5058
      %5628 = vmatpush.msra.mxu0 %v5057
      %5629 = vmatpush.msra.mxu0 %v5056
      %5630 = vmatpush.msra.mxu0 %v5055
      %5631 = vmatmul.f32.gmra.mxu0 %v5541
      %v5632 = vpop.f32.mrf.mxu0
      %v5633 = vadd.f32 %v5610, %v5632
      %5634 = vmatmul.f32.gmra.mxu0 %v5545
      %v5635 = vpop.f32.mrf.mxu0
      %v5636 = vadd.f32 %v5613, %v5635
      %5637 = vdwg.mxu0
      %5638 = vst.msk [vmem:[#allocation8 + $0x60] sm:$0xff] %vm5243, %v5633
      %5639 = vst.msk [vmem:[#allocation8 + $0x68] sm:$0xff] %vm5243, %v5636
      %v5640 = vld [vmem:[#allocation4 + $0x100] sm:$0xff]
      %v5641 = vld [vmem:[#allocation4 + $0x108] sm:$0xff]
      %v5642 = vld [vmem:[#allocation4 + $0x110] sm:$0xff]
      %v5643 = vld [vmem:[#allocation4 + $0x118] sm:$0xff]
      %v5644 = vld [vmem:[#allocation4 + $0x140] sm:$0xff]
      %v5645 = vld [vmem:[#allocation4 + $0x148] sm:$0xff]
      %v5646 = vld [vmem:[#allocation4 + $0x150] sm:$0xff]
      %v5647 = vld [vmem:[#allocation4 + $0x158] sm:$0xff]
      %v5648 = vmul.f32 %v5640, %v5380
      %v5649 = vmul.f32 %v5641, %v5381
      %v5650 = vmul.f32 %v5642, %v5382
      %v5651 = vmul.f32 %v5643, %v5383
      %v5652 = vmul.f32 %v5644, %v5384
      %v5653 = vmul.f32 %v5645, %v5385
      %v5654 = vmul.f32 %v5646, %v5386
      %v5655 = vmul.f32 %v5647, %v5387
      %v5656 = vld [vmem:[#allocation5 + $0x100] sm:$0xff]
      %v5657 = vld [vmem:[#allocation5 + $0x108] sm:$0xff]
      %v5658 = vld [vmem:[#allocation5 + $0x110] sm:$0xff]
      %v5659 = vld [vmem:[#allocation5 + $0x118] sm:$0xff]
      %v5660 = vld [vmem:[#allocation5 + $0x140] sm:$0xff]
      %v5661 = vld [vmem:[#allocation5 + $0x148] sm:$0xff]
      %v5662 = vld [vmem:[#allocation5 + $0x150] sm:$0xff]
      %v5663 = vld [vmem:[#allocation5 + $0x158] sm:$0xff]
      %v5664 = vadd.f32 %v5648, %v5656
      %v5665 = vadd.f32 %v5649, %v5657
      %v5666 = vadd.f32 %v5650, %v5658
      %v5667 = vadd.f32 %v5651, %v5659
      %v5668 = vadd.f32 %v5652, %v5660
      %v5669 = vadd.f32 %v5653, %v5661
      %v5670 = vadd.f32 %v5654, %v5662
      %v5671 = vadd.f32 %v5655, %v5663
      %v5672 = vld [vmem:[#allocation4 + $0x2a0] sm:$0xff]
      %v5673 = vld [vmem:[#allocation4 + $0x2a8] sm:$0xff]
      %v5674 = vld [vmem:[#allocation4 + $0x2b0] sm:$0xff]
      %v5675 = vld [vmem:[#allocation4 + $0x2b8] sm:$0xff]
      %v5676 = vld [vmem:[#allocation4 + $0x2e0] sm:$0xff]
      %v5677 = vld [vmem:[#allocation4 + $0x2e8] sm:$0xff]
      %v5678 = vld [vmem:[#allocation4 + $0x2f0] sm:$0xff]
      %v5679 = vld [vmem:[#allocation4 + $0x2f8] sm:$0xff]
      %v5680 = vmul.f32 %v5672, %v5412
      %v5681 = vmul.f32 %v5673, %v5413
      %v5682 = vmul.f32 %v5674, %v5414
      %v5683 = vmul.f32 %v5675, %v5415
      %v5684 = vmul.f32 %v5676, %v5416
      %v5685 = vmul.f32 %v5677, %v5417
      %v5686 = vmul.f32 %v5678, %v5418
      %v5687 = vmul.f32 %v5679, %v5419
      %v5688 = vld [vmem:[#allocation5 + $0x2a0] sm:$0xff]
      %v5689 = vld [vmem:[#allocation5 + $0x2a8] sm:$0xff]
      %v5690 = vld [vmem:[#allocation5 + $0x2b0] sm:$0xff]
      %v5691 = vld [vmem:[#allocation5 + $0x2b8] sm:$0xff]
      %v5692 = vld [vmem:[#allocation5 + $0x2e0] sm:$0xff]
      %v5693 = vld [vmem:[#allocation5 + $0x2e8] sm:$0xff]
      %v5694 = vld [vmem:[#allocation5 + $0x2f0] sm:$0xff]
      %v5695 = vld [vmem:[#allocation5 + $0x2f8] sm:$0xff]
      %v5696 = vadd.f32 %v5680, %v5688
      %v5697 = vadd.f32 %v5681, %v5689
      %v5698 = vadd.f32 %v5682, %v5690
      %v5699 = vadd.f32 %v5683, %v5691
      %v5700 = vadd.f32 %v5684, %v5692
      %v5701 = vadd.f32 %v5685, %v5693
      %v5702 = vadd.f32 %v5686, %v5694
      %v5703 = vadd.f32 %v5687, %v5695
      %v5704 = vld [vmem:[#allocation6 + $0x100] sm:$0xff]
      %v5705 = vld [vmem:[#allocation6 + $0x108] sm:$0xff]
      %v5706 = vld [vmem:[#allocation6 + $0x110] sm:$0xff]
      %v5707 = vld [vmem:[#allocation6 + $0x118] sm:$0xff]
      %v5708 = vld [vmem:[#allocation6 + $0x140] sm:$0xff]
      %v5709 = vld [vmem:[#allocation6 + $0x148] sm:$0xff]
      %v5710 = vld [vmem:[#allocation6 + $0x150] sm:$0xff]
      %v5711 = vld [vmem:[#allocation6 + $0x158] sm:$0xff]
      %v5712 = vmul.f32 %v5664, %v5704
      %v5713 = vmul.f32 %v5665, %v5705
      %v5714 = vmul.f32 %v5666, %v5706
      %v5715 = vmul.f32 %v5667, %v5707
      %v5716 = vmul.f32 %v5668, %v5708
      %v5717 = vmul.f32 %v5669, %v5709
      %v5718 = vmul.f32 %v5670, %v5710
      %v5719 = vmul.f32 %v5671, %v5711
      %5720 = vmatpush.msra.mxu0 %v5022
      %5721 = vmatpush.msra.mxu0 %v5021
      %5722 = vmatpush.msra.mxu0 %v5020
      %5723 = vmatpush.msra.mxu0 %v5019
      %5724 = vmatpush.msra.mxu0 %v5018
      %5725 = vmatpush.msra.mxu0 %v5017
      %5726 = vmatpush.msra.mxu0 %v5016
      %5727 = vmatpush.msra.mxu0 %v5015
      %5728 = vmatpush.msra.mxu0 %v5014
      %5729 = vmatpush.msra.mxu0 %v5013
      %5730 = vmatpush.msra.mxu0 %v5012
      %5731 = vmatpush.msra.mxu0 %v5011
      %5732 = vmatpush.msra.mxu0 %v5010
      %5733 = vmatpush.msra.mxu0 %v5009
      %5734 = vmatpush.msra.mxu0 %v5008
      %5735 = vmatpush.msra.mxu0 %v5007
      %5736 = vmatmul.f32.gmra.mxu0 %v5712
      %v5737 = vpop.f32.mrf.mxu0
      %v5738 = vadd.f32 0.0, %v5737
      %5739 = vmatmul.f32.gmra.mxu0 %v5716
      %v5740 = vpop.f32.mrf.mxu0
      %v5741 = vadd.f32 0.0, %v5740
      %5742 = vdwg.mxu0
      %5743 = vmatpush.msra.mxu0 %v5038
      %5744 = vmatpush.msra.mxu0 %v5037
      %5745 = vmatpush.msra.mxu0 %v5036
      %5746 = vmatpush.msra.mxu0 %v5035
      %5747 = vmatpush.msra.mxu0 %v5034
      %5748 = vmatpush.msra.mxu0 %v5033
      %5749 = vmatpush.msra.mxu0 %v5032
      %5750 = vmatpush.msra.mxu0 %v5031
      %5751 = vmatpush.msra.mxu0 %v5030
      %5752 = vmatpush.msra.mxu0 %v5029
      %5753 = vmatpush.msra.mxu0 %v5028
      %5754 = vmatpush.msra.mxu0 %v5027
      %5755 = vmatpush.msra.mxu0 %v5026
      %5756 = vmatpush.msra.mxu0 %v5025
      %5757 = vmatpush.msra.mxu0 %v5024
      %5758 = vmatpush.msra.mxu0 %v5023
      %5759 = vmatmul.f32.gmra.mxu0 %v5713
      %v5760 = vpop.f32.mrf.mxu0
      %v5761 = vadd.f32 %v5738, %v5760
      %5762 = vmatmul.f32.gmra.mxu0 %v5717
      %v5763 = vpop.f32.mrf.mxu0
      %v5764 = vadd.f32 %v5741, %v5763
      %5765 = vdwg.mxu0
      %5766 = vmatpush.msra.mxu0 %v5054
      %5767 = vmatpush.msra.mxu0 %v5053
      %5768 = vmatpush.msra.mxu0 %v5052
      %5769 = vmatpush.msra.mxu0 %v5051
      %5770 = vmatpush.msra.mxu0 %v5050
      %5771 = vmatpush.msra.mxu0 %v5049
      %5772 = vmatpush.msra.mxu0 %v5048
      %5773 = vmatpush.msra.mxu0 %v5047
      %5774 = vmatpush.msra.mxu0 %v5046
      %5775 = vmatpush.msra.mxu0 %v5045
      %5776 = vmatpush.msra.mxu0 %v5044
      %5777 = vmatpush.msra.mxu0 %v5043
      %5778 = vmatpush.msra.mxu0 %v5042
      %5779 = vmatpush.msra.mxu0 %v5041
      %5780 = vmatpush.msra.mxu0 %v5040
      %5781 = vmatpush.msra.mxu0 %v5039
      %5782 = vmatmul.f32.gmra.mxu0 %v5714
      %v5783 = vpop.f32.mrf.mxu0
      %v5784 = vadd.f32 %v5761, %v5783
      %5785 = vmatmul.f32.gmra.mxu0 %v5718
      %v5786 = vpop.f32.mrf.mxu0
      %v5787 = vadd.f32 %v5764, %v5786
      %5788 = vdwg.mxu0
      %5789 = vmatpush.msra.mxu0 %v5070
      %5790 = vmatpush.msra.mxu0 %v5069
      %5791 = vmatpush.msra.mxu0 %v5068
      %5792 = vmatpush.msra.mxu0 %v5067
      %5793 = vmatpush.msra.mxu0 %v5066
      %5794 = vmatpush.msra.mxu0 %v5065
      %5795 = vmatpush.msra.mxu0 %v5064
      %5796 = vmatpush.msra.mxu0 %v5063
      %5797 = vmatpush.msra.mxu0 %v5062
      %5798 = vmatpush.msra.mxu0 %v5061
      %5799 = vmatpush.msra.mxu0 %v5060
      %5800 = vmatpush.msra.mxu0 %v5059
      %5801 = vmatpush.msra.mxu0 %v5058
      %5802 = vmatpush.msra.mxu0 %v5057
      %5803 = vmatpush.msra.mxu0 %v5056
      %5804 = vmatpush.msra.mxu0 %v5055
      %5805 = vmatmul.f32.gmra.mxu0 %v5715
      %v5806 = vpop.f32.mrf.mxu0
      %v5807 = vadd.f32 %v5784, %v5806
      %5808 = vmatmul.f32.gmra.mxu0 %v5719
      %v5809 = vpop.f32.mrf.mxu0
      %v5810 = vadd.f32 %v5787, %v5809
      %5811 = vdwg.mxu0
      %5812 = vst.msk [vmem:[#allocation7 + $0x20] sm:$0xff] %vm5243, %v5807
      %5813 = vst.msk [vmem:[#allocation7 + $0x28] sm:$0xff] %vm5243, %v5810
      %v5814 = vld [vmem:[#allocation6 + $0x2a0] sm:$0xff]
      %v5815 = vld [vmem:[#allocation6 + $0x2a8] sm:$0xff]
      %v5816 = vld [vmem:[#allocation6 + $0x2b0] sm:$0xff]
      %v5817 = vld [vmem:[#allocation6 + $0x2b8] sm:$0xff]
      %v5818 = vld [vmem:[#allocation6 + $0x2e0] sm:$0xff]
      %v5819 = vld [vmem:[#allocation6 + $0x2e8] sm:$0xff]
      %v5820 = vld [vmem:[#allocation6 + $0x2f0] sm:$0xff]
      %v5821 = vld [vmem:[#allocation6 + $0x2f8] sm:$0xff]
      %v5822 = vmul.f32 %v5696, %v5814
      %v5823 = vmul.f32 %v5697, %v5815
      %v5824 = vmul.f32 %v5698, %v5816
      %v5825 = vmul.f32 %v5699, %v5817
      %v5826 = vmul.f32 %v5700, %v5818
      %v5827 = vmul.f32 %v5701, %v5819
      %v5828 = vmul.f32 %v5702, %v5820
      %v5829 = vmul.f32 %v5703, %v5821
      %5830 = vmatpush.msra.mxu0 %v5022
      %5831 = vmatpush.msra.mxu0 %v5021
      %5832 = vmatpush.msra.mxu0 %v5020
      %5833 = vmatpush.msra.mxu0 %v5019
      %5834 = vmatpush.msra.mxu0 %v5018
      %5835 = vmatpush.msra.mxu0 %v5017
      %5836 = vmatpush.msra.mxu0 %v5016
      %5837 = vmatpush.msra.mxu0 %v5015
      %5838 = vmatpush.msra.mxu0 %v5014
      %5839 = vmatpush.msra.mxu0 %v5013
      %5840 = vmatpush.msra.mxu0 %v5012
      %5841 = vmatpush.msra.mxu0 %v5011
      %5842 = vmatpush.msra.mxu0 %v5010
      %5843 = vmatpush.msra.mxu0 %v5009
      %5844 = vmatpush.msra.mxu0 %v5008
      %5845 = vmatpush.msra.mxu0 %v5007
      %5846 = vmatmul.f32.gmra.mxu0 %v5822
      %v5847 = vpop.f32.mrf.mxu0
      %v5848 = vadd.f32 0.0, %v5847
      %5849 = vmatmul.f32.gmra.mxu0 %v5826
      %v5850 = vpop.f32.mrf.mxu0
      %v5851 = vadd.f32 0.0, %v5850
      %5852 = vdwg.mxu0
      %5853 = vmatpush.msra.mxu0 %v5038
      %5854 = vmatpush.msra.mxu0 %v5037
      %5855 = vmatpush.msra.mxu0 %v5036
      %5856 = vmatpush.msra.mxu0 %v5035
      %5857 = vmatpush.msra.mxu0 %v5034
      %5858 = vmatpush.msra.mxu0 %v5033
      %5859 = vmatpush.msra.mxu0 %v5032
      %5860 = vmatpush.msra.mxu0 %v5031
      %5861 = vmatpush.msra.mxu0 %v5030
      %5862 = vmatpush.msra.mxu0 %v5029
      %5863 = vmatpush.msra.mxu0 %v5028
      %5864 = vmatpush.msra.mxu0 %v5027
      %5865 = vmatpush.msra.mxu0 %v5026
      %5866 = vmatpush.msra.mxu0 %v5025
      %5867 = vmatpush.msra.mxu0 %v5024
      %5868 = vmatpush.msra.mxu0 %v5023
      %5869 = vmatmul.f32.gmra.mxu0 %v5823
      %v5870 = vpop.f32.mrf.mxu0
      %v5871 = vadd.f32 %v5848, %v5870
      %5872 = vmatmul.f32.gmra.mxu0 %v5827
      %v5873 = vpop.f32.mrf.mxu0
      %v5874 = vadd.f32 %v5851, %v5873
      %5875 = vdwg.mxu0
      %5876 = vmatpush.msra.mxu0 %v5054
      %5877 = vmatpush.msra.mxu0 %v5053
      %5878 = vmatpush.msra.mxu0 %v5052
      %5879 = vmatpush.msra.mxu0 %v5051
      %5880 = vmatpush.msra.mxu0 %v5050
      %5881 = vmatpush.msra.mxu0 %v5049
      %5882 = vmatpush.msra.mxu0 %v5048
      %5883 = vmatpush.msra.mxu0 %v5047
      %5884 = vmatpush.msra.mxu0 %v5046
      %5885 = vmatpush.msra.mxu0 %v5045
      %5886 = vmatpush.msra.mxu0 %v5044
      %5887 = vmatpush.msra.mxu0 %v5043
      %5888 = vmatpush.msra.mxu0 %v5042
      %5889 = vmatpush.msra.mxu0 %v5041
      %5890 = vmatpush.msra.mxu0 %v5040
      %5891 = vmatpush.msra.mxu0 %v5039
      %5892 = vmatmul.f32.gmra.mxu0 %v5824
      %v5893 = vpop.f32.mrf.mxu0
      %v5894 = vadd.f32 %v5871, %v5893
      %5895 = vmatmul.f32.gmra.mxu0 %v5828
      %v5896 = vpop.f32.mrf.mxu0
      %v5897 = vadd.f32 %v5874, %v5896
      %5898 = vdwg.mxu0
      %5899 = vmatpush.msra.mxu0 %v5070
      %5900 = vmatpush.msra.mxu0 %v5069
      %5901 = vmatpush.msra.mxu0 %v5068
      %5902 = vmatpush.msra.mxu0 %v5067
      %5903 = vmatpush.msra.mxu0 %v5066
      %5904 = vmatpush.msra.mxu0 %v5065
      %5905 = vmatpush.msra.mxu0 %v5064
      %5906 = vmatpush.msra.mxu0 %v5063
      %5907 = vmatpush.msra.mxu0 %v5062
      %5908 = vmatpush.msra.mxu0 %v5061
      %5909 = vmatpush.msra.mxu0 %v5060
      %5910 = vmatpush.msra.mxu0 %v5059
      %5911 = vmatpush.msra.mxu0 %v5058
      %5912 = vmatpush.msra.mxu0 %v5057
      %5913 = vmatpush.msra.mxu0 %v5056
      %5914 = vmatpush.msra.mxu0 %v5055
      %5915 = vmatmul.f32.gmra.mxu0 %v5825
      %v5916 = vpop.f32.mrf.mxu0
      %v5917 = vadd.f32 %v5894, %v5916
      %5918 = vmatmul.f32.gmra.mxu0 %v5829
      %v5919 = vpop.f32.mrf.mxu0
      %v5920 = vadd.f32 %v5897, %v5919
      %5921 = vdwg.mxu0
      %5922 = vst.msk [vmem:[#allocation8 + $0x50] sm:$0xff] %vm5243, %v5917
      %5923 = vst.msk [vmem:[#allocation8 + $0x58] sm:$0xff] %vm5243, %v5920
      %v5924 = vld [vmem:[#allocation4 + $0x180] sm:$0xff]
      %v5925 = vld [vmem:[#allocation4 + $0x188] sm:$0xff]
      %v5926 = vld [vmem:[#allocation4 + $0x190] sm:$0xff]
      %v5927 = vld [vmem:[#allocation4 + $0x198] sm:$0xff]
      %v5928 = vld [vmem:[#allocation4 + $0x1c0] sm:$0xff]
      %v5929 = vld [vmem:[#allocation4 + $0x1c8] sm:$0xff]
      %v5930 = vld [vmem:[#allocation4 + $0x1d0] sm:$0xff]
      %v5931 = vld [vmem:[#allocation4 + $0x1d8] sm:$0xff]
      %v5932 = vmul.f32 %v5924, %v5664
      %v5933 = vmul.f32 %v5925, %v5665
      %v5934 = vmul.f32 %v5926, %v5666
      %v5935 = vmul.f32 %v5927, %v5667
      %v5936 = vmul.f32 %v5928, %v5668
      %v5937 = vmul.f32 %v5929, %v5669
      %v5938 = vmul.f32 %v5930, %v5670
      %v5939 = vmul.f32 %v5931, %v5671
      %v5940 = vld [vmem:[#allocation5 + $0x180] sm:$0xff]
      %v5941 = vld [vmem:[#allocation5 + $0x188] sm:$0xff]
      %v5942 = vld [vmem:[#allocation5 + $0x190] sm:$0xff]
      %v5943 = vld [vmem:[#allocation5 + $0x198] sm:$0xff]
      %v5944 = vld [vmem:[#allocation5 + $0x1c0] sm:$0xff]
      %v5945 = vld [vmem:[#allocation5 + $0x1c8] sm:$0xff]
      %v5946 = vld [vmem:[#allocation5 + $0x1d0] sm:$0xff]
      %v5947 = vld [vmem:[#allocation5 + $0x1d8] sm:$0xff]
      %v5948 = vadd.f32 %v5932, %v5940
      %v5949 = vadd.f32 %v5933, %v5941
      %v5950 = vadd.f32 %v5934, %v5942
      %v5951 = vadd.f32 %v5935, %v5943
      %v5952 = vadd.f32 %v5936, %v5944
      %v5953 = vadd.f32 %v5937, %v5945
      %v5954 = vadd.f32 %v5938, %v5946
      %v5955 = vadd.f32 %v5939, %v5947
      %v5956 = vld [vmem:[#allocation4 + $0x220] sm:$0xff]
      %v5957 = vld [vmem:[#allocation4 + $0x228] sm:$0xff]
      %v5958 = vld [vmem:[#allocation4 + $0x230] sm:$0xff]
      %v5959 = vld [vmem:[#allocation4 + $0x238] sm:$0xff]
      %v5960 = vld [vmem:[#allocation4 + $0x260] sm:$0xff]
      %v5961 = vld [vmem:[#allocation4 + $0x268] sm:$0xff]
      %v5962 = vld [vmem:[#allocation4 + $0x270] sm:$0xff]
      %v5963 = vld [vmem:[#allocation4 + $0x278] sm:$0xff]
      %v5964 = vmul.f32 %v5956, %v5696
      %v5965 = vmul.f32 %v5957, %v5697
      %v5966 = vmul.f32 %v5958, %v5698
      %v5967 = vmul.f32 %v5959, %v5699
      %v5968 = vmul.f32 %v5960, %v5700
      %v5969 = vmul.f32 %v5961, %v5701
      %v5970 = vmul.f32 %v5962, %v5702
      %v5971 = vmul.f32 %v5963, %v5703
      %v5972 = vld [vmem:[#allocation5 + $0x220] sm:$0xff]
      %v5973 = vld [vmem:[#allocation5 + $0x228] sm:$0xff]
      %v5974 = vld [vmem:[#allocation5 + $0x230] sm:$0xff]
      %v5975 = vld [vmem:[#allocation5 + $0x238] sm:$0xff]
      %v5976 = vld [vmem:[#allocation5 + $0x260] sm:$0xff]
      %v5977 = vld [vmem:[#allocation5 + $0x268] sm:$0xff]
      %v5978 = vld [vmem:[#allocation5 + $0x270] sm:$0xff]
      %v5979 = vld [vmem:[#allocation5 + $0x278] sm:$0xff]
      %v5980 = vadd.f32 %v5964, %v5972
      %v5981 = vadd.f32 %v5965, %v5973
      %v5982 = vadd.f32 %v5966, %v5974
      %v5983 = vadd.f32 %v5967, %v5975
      %v5984 = vadd.f32 %v5968, %v5976
      %v5985 = vadd.f32 %v5969, %v5977
      %v5986 = vadd.f32 %v5970, %v5978
      %v5987 = vadd.f32 %v5971, %v5979
      %v5988 = vld [vmem:[#allocation6 + $0x180] sm:$0xff]
      %v5989 = vld [vmem:[#allocation6 + $0x188] sm:$0xff]
      %v5990 = vld [vmem:[#allocation6 + $0x190] sm:$0xff]
      %v5991 = vld [vmem:[#allocation6 + $0x198] sm:$0xff]
      %v5992 = vld [vmem:[#allocation6 + $0x1c0] sm:$0xff]
      %v5993 = vld [vmem:[#allocation6 + $0x1c8] sm:$0xff]
      %v5994 = vld [vmem:[#allocation6 + $0x1d0] sm:$0xff]
      %v5995 = vld [vmem:[#allocation6 + $0x1d8] sm:$0xff]
      %v5996 = vmul.f32 %v5948, %v5988
      %v5997 = vmul.f32 %v5949, %v5989
      %v5998 = vmul.f32 %v5950, %v5990
      %v5999 = vmul.f32 %v5951, %v5991
      %v6000 = vmul.f32 %v5952, %v5992
      %v6001 = vmul.f32 %v5953, %v5993
      %v6002 = vmul.f32 %v5954, %v5994
      %v6003 = vmul.f32 %v5955, %v5995
      %6004 = vmatpush.msra.mxu0 %v5022
      %6005 = vmatpush.msra.mxu0 %v5021
      %6006 = vmatpush.msra.mxu0 %v5020
      %6007 = vmatpush.msra.mxu0 %v5019
      %6008 = vmatpush.msra.mxu0 %v5018
      %6009 = vmatpush.msra.mxu0 %v5017
      %6010 = vmatpush.msra.mxu0 %v5016
      %6011 = vmatpush.msra.mxu0 %v5015
      %6012 = vmatpush.msra.mxu0 %v5014
      %6013 = vmatpush.msra.mxu0 %v5013
      %6014 = vmatpush.msra.mxu0 %v5012
      %6015 = vmatpush.msra.mxu0 %v5011
      %6016 = vmatpush.msra.mxu0 %v5010
      %6017 = vmatpush.msra.mxu0 %v5009
      %6018 = vmatpush.msra.mxu0 %v5008
      %6019 = vmatpush.msra.mxu0 %v5007
      %6020 = vmatmul.f32.gmra.mxu0 %v5996
      %v6021 = vpop.f32.mrf.mxu0
      %v6022 = vadd.f32 0.0, %v6021
      %6023 = vmatmul.f32.gmra.mxu0 %v6000
      %v6024 = vpop.f32.mrf.mxu0
      %v6025 = vadd.f32 0.0, %v6024
      %6026 = vdwg.mxu0
      %6027 = vmatpush.msra.mxu0 %v5038
      %6028 = vmatpush.msra.mxu0 %v5037
      %6029 = vmatpush.msra.mxu0 %v5036
      %6030 = vmatpush.msra.mxu0 %v5035
      %6031 = vmatpush.msra.mxu0 %v5034
      %6032 = vmatpush.msra.mxu0 %v5033
      %6033 = vmatpush.msra.mxu0 %v5032
      %6034 = vmatpush.msra.mxu0 %v5031
      %6035 = vmatpush.msra.mxu0 %v5030
      %6036 = vmatpush.msra.mxu0 %v5029
      %6037 = vmatpush.msra.mxu0 %v5028
      %6038 = vmatpush.msra.mxu0 %v5027
      %6039 = vmatpush.msra.mxu0 %v5026
      %6040 = vmatpush.msra.mxu0 %v5025
      %6041 = vmatpush.msra.mxu0 %v5024
      %6042 = vmatpush.msra.mxu0 %v5023
      %6043 = vmatmul.f32.gmra.mxu0 %v5997
      %v6044 = vpop.f32.mrf.mxu0
      %v6045 = vadd.f32 %v6022, %v6044
      %6046 = vmatmul.f32.gmra.mxu0 %v6001
      %v6047 = vpop.f32.mrf.mxu0
      %v6048 = vadd.f32 %v6025, %v6047
      %6049 = vdwg.mxu0
      %6050 = vmatpush.msra.mxu0 %v5054
      %6051 = vmatpush.msra.mxu0 %v5053
      %6052 = vmatpush.msra.mxu0 %v5052
      %6053 = vmatpush.msra.mxu0 %v5051
      %6054 = vmatpush.msra.mxu0 %v5050
      %6055 = vmatpush.msra.mxu0 %v5049
      %6056 = vmatpush.msra.mxu0 %v5048
      %6057 = vmatpush.msra.mxu0 %v5047
      %6058 = vmatpush.msra.mxu0 %v5046
      %6059 = vmatpush.msra.mxu0 %v5045
      %6060 = vmatpush.msra.mxu0 %v5044
      %6061 = vmatpush.msra.mxu0 %v5043
      %6062 = vmatpush.msra.mxu0 %v5042
      %6063 = vmatpush.msra.mxu0 %v5041
      %6064 = vmatpush.msra.mxu0 %v5040
      %6065 = vmatpush.msra.mxu0 %v5039
      %6066 = vmatmul.f32.gmra.mxu0 %v5998
      %v6067 = vpop.f32.mrf.mxu0
      %v6068 = vadd.f32 %v6045, %v6067
      %6069 = vmatmul.f32.gmra.mxu0 %v6002
      %v6070 = vpop.f32.mrf.mxu0
      %v6071 = vadd.f32 %v6048, %v6070
      %6072 = vdwg.mxu0
      %6073 = vmatpush.msra.mxu0 %v5070
      %6074 = vmatpush.msra.mxu0 %v5069
      %6075 = vmatpush.msra.mxu0 %v5068
      %6076 = vmatpush.msra.mxu0 %v5067
      %6077 = vmatpush.msra.mxu0 %v5066
      %6078 = vmatpush.msra.mxu0 %v5065
      %6079 = vmatpush.msra.mxu0 %v5064
      %6080 = vmatpush.msra.mxu0 %v5063
      %6081 = vmatpush.msra.mxu0 %v5062
      %6082 = vmatpush.msra.mxu0 %v5061
      %6083 = vmatpush.msra.mxu0 %v5060
      %6084 = vmatpush.msra.mxu0 %v5059
      %6085 = vmatpush.msra.mxu0 %v5058
      %6086 = vmatpush.msra.mxu0 %v5057
      %6087 = vmatpush.msra.mxu0 %v5056
      %6088 = vmatpush.msra.mxu0 %v5055
      %6089 = vmatmul.f32.gmra.mxu0 %v5999
      %v6090 = vpop.f32.mrf.mxu0
      %v6091 = vadd.f32 %v6068, %v6090
      %6092 = vmatmul.f32.gmra.mxu0 %v6003
      %v6093 = vpop.f32.mrf.mxu0
      %v6094 = vadd.f32 %v6071, %v6093
      %6095 = vdwg.mxu0
      %6096 = vst.msk [vmem:[#allocation7 + $0x30] sm:$0xff] %vm5243, %v6091
      %6097 = vst.msk [vmem:[#allocation7 + $0x38] sm:$0xff] %vm5243, %v6094
      %v6098 = vld [vmem:[#allocation6 + $0x220] sm:$0xff]
      %v6099 = vld [vmem:[#allocation6 + $0x228] sm:$0xff]
      %v6100 = vld [vmem:[#allocation6 + $0x230] sm:$0xff]
      %v6101 = vld [vmem:[#allocation6 + $0x238] sm:$0xff]
      %v6102 = vld [vmem:[#allocation6 + $0x260] sm:$0xff]
      %v6103 = vld [vmem:[#allocation6 + $0x268] sm:$0xff]
      %v6104 = vld [vmem:[#allocation6 + $0x270] sm:$0xff]
      %v6105 = vld [vmem:[#allocation6 + $0x278] sm:$0xff]
      %v6106 = vmul.f32 %v5980, %v6098
      %v6107 = vmul.f32 %v5981, %v6099
      %v6108 = vmul.f32 %v5982, %v6100
      %v6109 = vmul.f32 %v5983, %v6101
      %v6110 = vmul.f32 %v5984, %v6102
      %v6111 = vmul.f32 %v5985, %v6103
      %v6112 = vmul.f32 %v5986, %v6104
      %v6113 = vmul.f32 %v5987, %v6105
      %6114 = vmatpush.msra.mxu0 %v5022
      %6115 = vmatpush.msra.mxu0 %v5021
      %6116 = vmatpush.msra.mxu0 %v5020
      %6117 = vmatpush.msra.mxu0 %v5019
      %6118 = vmatpush.msra.mxu0 %v5018
      %6119 = vmatpush.msra.mxu0 %v5017
      %6120 = vmatpush.msra.mxu0 %v5016
      %6121 = vmatpush.msra.mxu0 %v5015
      %6122 = vmatpush.msra.mxu0 %v5014
      %6123 = vmatpush.msra.mxu0 %v5013
      %6124 = vmatpush.msra.mxu0 %v5012
      %6125 = vmatpush.msra.mxu0 %v5011
      %6126 = vmatpush.msra.mxu0 %v5010
      %6127 = vmatpush.msra.mxu0 %v5009
      %6128 = vmatpush.msra.mxu0 %v5008
      %6129 = vmatpush.msra.mxu0 %v5007
      %6130 = vmatmul.f32.gmra.mxu0 %v6106
      %v6131 = vpop.f32.mrf.mxu0
      %v6132 = vadd.f32 0.0, %v6131
      %6133 = vmatmul.f32.gmra.mxu0 %v6110
      %v6134 = vpop.f32.mrf.mxu0
      %v6135 = vadd.f32 0.0, %v6134
      %6136 = vdwg.mxu0
      %6137 = vmatpush.msra.mxu0 %v5038
      %6138 = vmatpush.msra.mxu0 %v5037
      %6139 = vmatpush.msra.mxu0 %v5036
      %6140 = vmatpush.msra.mxu0 %v5035
      %6141 = vmatpush.msra.mxu0 %v5034
      %6142 = vmatpush.msra.mxu0 %v5033
      %6143 = vmatpush.msra.mxu0 %v5032
      %6144 = vmatpush.msra.mxu0 %v5031
      %6145 = vmatpush.msra.mxu0 %v5030
      %6146 = vmatpush.msra.mxu0 %v5029
      %6147 = vmatpush.msra.mxu0 %v5028
      %6148 = vmatpush.msra.mxu0 %v5027
      %6149 = vmatpush.msra.mxu0 %v5026
      %6150 = vmatpush.msra.mxu0 %v5025
      %6151 = vmatpush.msra.mxu0 %v5024
      %6152 = vmatpush.msra.mxu0 %v5023
      %6153 = vmatmul.f32.gmra.mxu0 %v6107
      %v6154 = vpop.f32.mrf.mxu0
      %v6155 = vadd.f32 %v6132, %v6154
      %6156 = vmatmul.f32.gmra.mxu0 %v6111
      %v6157 = vpop.f32.mrf.mxu0
      %v6158 = vadd.f32 %v6135, %v6157
      %6159 = vdwg.mxu0
      %6160 = vmatpush.msra.mxu0 %v5054
      %6161 = vmatpush.msra.mxu0 %v5053
      %6162 = vmatpush.msra.mxu0 %v5052
      %6163 = vmatpush.msra.mxu0 %v5051
      %6164 = vmatpush.msra.mxu0 %v5050
      %6165 = vmatpush.msra.mxu0 %v5049
      %6166 = vmatpush.msra.mxu0 %v5048
      %6167 = vmatpush.msra.mxu0 %v5047
      %6168 = vmatpush.msra.mxu0 %v5046
      %6169 = vmatpush.msra.mxu0 %v5045
      %6170 = vmatpush.msra.mxu0 %v5044
      %6171 = vmatpush.msra.mxu0 %v5043
      %6172 = vmatpush.msra.mxu0 %v5042
      %6173 = vmatpush.msra.mxu0 %v5041
      %6174 = vmatpush.msra.mxu0 %v5040
      %6175 = vmatpush.msra.mxu0 %v5039
      %6176 = vmatmul.f32.gmra.mxu0 %v6108
      %v6177 = vpop.f32.mrf.mxu0
      %v6178 = vadd.f32 %v6155, %v6177
      %6179 = vmatmul.f32.gmra.mxu0 %v6112
      %v6180 = vpop.f32.mrf.mxu0
      %v6181 = vadd.f32 %v6158, %v6180
      %6182 = vdwg.mxu0
      %6183 = vmatpush.msra.mxu0 %v5070
      %6184 = vmatpush.msra.mxu0 %v5069
      %6185 = vmatpush.msra.mxu0 %v5068
      %6186 = vmatpush.msra.mxu0 %v5067
      %6187 = vmatpush.msra.mxu0 %v5066
      %6188 = vmatpush.msra.mxu0 %v5065
      %6189 = vmatpush.msra.mxu0 %v5064
      %6190 = vmatpush.msra.mxu0 %v5063
      %6191 = vmatpush.msra.mxu0 %v5062
      %6192 = vmatpush.msra.mxu0 %v5061
      %6193 = vmatpush.msra.mxu0 %v5060
      %6194 = vmatpush.msra.mxu0 %v5059
      %6195 = vmatpush.msra.mxu0 %v5058
      %6196 = vmatpush.msra.mxu0 %v5057
      %6197 = vmatpush.msra.mxu0 %v5056
      %6198 = vmatpush.msra.mxu0 %v5055
      %6199 = vmatmul.f32.gmra.mxu0 %v6109
      %v6200 = vpop.f32.mrf.mxu0
      %v6201 = vadd.f32 %v6178, %v6200
      %6202 = vmatmul.f32.gmra.mxu0 %v6113
      %v6203 = vpop.f32.mrf.mxu0
      %v6204 = vadd.f32 %v6181, %v6203
      %6205 = vdwg.mxu0
      %6206 = vst.msk [vmem:[#allocation8 + $0x40] sm:$0xff] %vm5243, %v6201
      %6207 = vst.msk [vmem:[#allocation8 + $0x48] sm:$0xff] %vm5243, %v6204
      %v6208 = vld [vmem:[#allocation4 + $0x200] sm:$0xff]
      %v6209 = vld [vmem:[#allocation4 + $0x208] sm:$0xff]
      %v6210 = vld [vmem:[#allocation4 + $0x210] sm:$0xff]
      %v6211 = vld [vmem:[#allocation4 + $0x218] sm:$0xff]
      %v6212 = vld [vmem:[#allocation4 + $0x240] sm:$0xff]
      %v6213 = vld [vmem:[#allocation4 + $0x248] sm:$0xff]
      %v6214 = vld [vmem:[#allocation4 + $0x250] sm:$0xff]
      %v6215 = vld [vmem:[#allocation4 + $0x258] sm:$0xff]
      %v6216 = vmul.f32 %v6208, %v5948
      %v6217 = vmul.f32 %v6209, %v5949
      %v6218 = vmul.f32 %v6210, %v5950
      %v6219 = vmul.f32 %v6211, %v5951
      %v6220 = vmul.f32 %v6212, %v5952
      %v6221 = vmul.f32 %v6213, %v5953
      %v6222 = vmul.f32 %v6214, %v5954
      %v6223 = vmul.f32 %v6215, %v5955
      %v6224 = vld [vmem:[#allocation5 + $0x200] sm:$0xff]
      %v6225 = vld [vmem:[#allocation5 + $0x208] sm:$0xff]
      %v6226 = vld [vmem:[#allocation5 + $0x210] sm:$0xff]
      %v6227 = vld [vmem:[#allocation5 + $0x218] sm:$0xff]
      %v6228 = vld [vmem:[#allocation5 + $0x240] sm:$0xff]
      %v6229 = vld [vmem:[#allocation5 + $0x248] sm:$0xff]
      %v6230 = vld [vmem:[#allocation5 + $0x250] sm:$0xff]
      %v6231 = vld [vmem:[#allocation5 + $0x258] sm:$0xff]
      %v6232 = vadd.f32 %v6216, %v6224
      %v6233 = vadd.f32 %v6217, %v6225
      %v6234 = vadd.f32 %v6218, %v6226
      %v6235 = vadd.f32 %v6219, %v6227
      %v6236 = vadd.f32 %v6220, %v6228
      %v6237 = vadd.f32 %v6221, %v6229
      %v6238 = vadd.f32 %v6222, %v6230
      %v6239 = vadd.f32 %v6223, %v6231
      %v6240 = vld [vmem:[#allocation4 + $0x1a0] sm:$0xff]
      %v6241 = vld [vmem:[#allocation4 + $0x1a8] sm:$0xff]
      %v6242 = vld [vmem:[#allocation4 + $0x1b0] sm:$0xff]
      %v6243 = vld [vmem:[#allocation4 + $0x1b8] sm:$0xff]
      %v6244 = vld [vmem:[#allocation4 + $0x1e0] sm:$0xff]
      %v6245 = vld [vmem:[#allocation4 + $0x1e8] sm:$0xff]
      %v6246 = vld [vmem:[#allocation4 + $0x1f0] sm:$0xff]
      %v6247 = vld [vmem:[#allocation4 + $0x1f8] sm:$0xff]
      %v6248 = vmul.f32 %v6240, %v5980
      %v6249 = vmul.f32 %v6241, %v5981
      %v6250 = vmul.f32 %v6242, %v5982
      %v6251 = vmul.f32 %v6243, %v5983
      %v6252 = vmul.f32 %v6244, %v5984
      %v6253 = vmul.f32 %v6245, %v5985
      %v6254 = vmul.f32 %v6246, %v5986
      %v6255 = vmul.f32 %v6247, %v5987
      %v6256 = vld [vmem:[#allocation5 + $0x1a0] sm:$0xff]
      %v6257 = vld [vmem:[#allocation5 + $0x1a8] sm:$0xff]
      %v6258 = vld [vmem:[#allocation5 + $0x1b0] sm:$0xff]
      %v6259 = vld [vmem:[#allocation5 + $0x1b8] sm:$0xff]
      %v6260 = vld [vmem:[#allocation5 + $0x1e0] sm:$0xff]
      %v6261 = vld [vmem:[#allocation5 + $0x1e8] sm:$0xff]
      %v6262 = vld [vmem:[#allocation5 + $0x1f0] sm:$0xff]
      %v6263 = vld [vmem:[#allocation5 + $0x1f8] sm:$0xff]
      %v6264 = vadd.f32 %v6248, %v6256
      %v6265 = vadd.f32 %v6249, %v6257
      %v6266 = vadd.f32 %v6250, %v6258
      %v6267 = vadd.f32 %v6251, %v6259
      %v6268 = vadd.f32 %v6252, %v6260
      %v6269 = vadd.f32 %v6253, %v6261
      %v6270 = vadd.f32 %v6254, %v6262
      %v6271 = vadd.f32 %v6255, %v6263
      %v6272 = vld [vmem:[#allocation6 + $0x200] sm:$0xff]
      %v6273 = vld [vmem:[#allocation6 + $0x208] sm:$0xff]
      %v6274 = vld [vmem:[#allocation6 + $0x210] sm:$0xff]
      %v6275 = vld [vmem:[#allocation6 + $0x218] sm:$0xff]
      %v6276 = vld [vmem:[#allocation6 + $0x240] sm:$0xff]
      %v6277 = vld [vmem:[#allocation6 + $0x248] sm:$0xff]
      %v6278 = vld [vmem:[#allocation6 + $0x250] sm:$0xff]
      %v6279 = vld [vmem:[#allocation6 + $0x258] sm:$0xff]
      %v6280 = vmul.f32 %v6232, %v6272
      %v6281 = vmul.f32 %v6233, %v6273
      %v6282 = vmul.f32 %v6234, %v6274
      %v6283 = vmul.f32 %v6235, %v6275
      %v6284 = vmul.f32 %v6236, %v6276
      %v6285 = vmul.f32 %v6237, %v6277
      %v6286 = vmul.f32 %v6238, %v6278
      %v6287 = vmul.f32 %v6239, %v6279
      %6288 = vmatpush.msra.mxu0 %v5022
      %6289 = vmatpush.msra.mxu0 %v5021
      %6290 = vmatpush.msra.mxu0 %v5020
      %6291 = vmatpush.msra.mxu0 %v5019
      %6292 = vmatpush.msra.mxu0 %v5018
      %6293 = vmatpush.msra.mxu0 %v5017
      %6294 = vmatpush.msra.mxu0 %v5016
      %6295 = vmatpush.msra.mxu0 %v5015
      %6296 = vmatpush.msra.mxu0 %v5014
      %6297 = vmatpush.msra.mxu0 %v5013
      %6298 = vmatpush.msra.mxu0 %v5012
      %6299 = vmatpush.msra.mxu0 %v5011
      %6300 = vmatpush.msra.mxu0 %v5010
      %6301 = vmatpush.msra.mxu0 %v5009
      %6302 = vmatpush.msra.mxu0 %v5008
      %6303 = vmatpush.msra.mxu0 %v5007
      %6304 = vmatmul.f32.gmra.mxu0 %v6280
      %v6305 = vpop.f32.mrf.mxu0
      %v6306 = vadd.f32 0.0, %v6305
      %6307 = vmatmul.f32.gmra.mxu0 %v6284
      %v6308 = vpop.f32.mrf.mxu0
      %v6309 = vadd.f32 0.0, %v6308
      %6310 = vdwg.mxu0
      %6311 = vmatpush.msra.mxu0 %v5038
      %6312 = vmatpush.msra.mxu0 %v5037
      %6313 = vmatpush.msra.mxu0 %v5036
      %6314 = vmatpush.msra.mxu0 %v5035
      %6315 = vmatpush.msra.mxu0 %v5034
      %6316 = vmatpush.msra.mxu0 %v5033
      %6317 = vmatpush.msra.mxu0 %v5032
      %6318 = vmatpush.msra.mxu0 %v5031
      %6319 = vmatpush.msra.mxu0 %v5030
      %6320 = vmatpush.msra.mxu0 %v5029
      %6321 = vmatpush.msra.mxu0 %v5028
      %6322 = vmatpush.msra.mxu0 %v5027
      %6323 = vmatpush.msra.mxu0 %v5026
      %6324 = vmatpush.msra.mxu0 %v5025
      %6325 = vmatpush.msra.mxu0 %v5024
      %6326 = vmatpush.msra.mxu0 %v5023
      %6327 = vmatmul.f32.gmra.mxu0 %v6281
      %v6328 = vpop.f32.mrf.mxu0
      %v6329 = vadd.f32 %v6306, %v6328
      %6330 = vmatmul.f32.gmra.mxu0 %v6285
      %v6331 = vpop.f32.mrf.mxu0
      %v6332 = vadd.f32 %v6309, %v6331
      %6333 = vdwg.mxu0
      %6334 = vmatpush.msra.mxu0 %v5054
      %6335 = vmatpush.msra.mxu0 %v5053
      %6336 = vmatpush.msra.mxu0 %v5052
      %6337 = vmatpush.msra.mxu0 %v5051
      %6338 = vmatpush.msra.mxu0 %v5050
      %6339 = vmatpush.msra.mxu0 %v5049
      %6340 = vmatpush.msra.mxu0 %v5048
      %6341 = vmatpush.msra.mxu0 %v5047
      %6342 = vmatpush.msra.mxu0 %v5046
      %6343 = vmatpush.msra.mxu0 %v5045
      %6344 = vmatpush.msra.mxu0 %v5044
      %6345 = vmatpush.msra.mxu0 %v5043
      %6346 = vmatpush.msra.mxu0 %v5042
      %6347 = vmatpush.msra.mxu0 %v5041
      %6348 = vmatpush.msra.mxu0 %v5040
      %6349 = vmatpush.msra.mxu0 %v5039
      %6350 = vmatmul.f32.gmra.mxu0 %v6282
      %v6351 = vpop.f32.mrf.mxu0
      %v6352 = vadd.f32 %v6329, %v6351
      %6353 = vmatmul.f32.gmra.mxu0 %v6286
      %v6354 = vpop.f32.mrf.mxu0
      %v6355 = vadd.f32 %v6332, %v6354
      %6356 = vdwg.mxu0
      %6357 = vmatpush.msra.mxu0 %v5070
      %6358 = vmatpush.msra.mxu0 %v5069
      %6359 = vmatpush.msra.mxu0 %v5068
      %6360 = vmatpush.msra.mxu0 %v5067
      %6361 = vmatpush.msra.mxu0 %v5066
      %6362 = vmatpush.msra.mxu0 %v5065
      %6363 = vmatpush.msra.mxu0 %v5064
      %6364 = vmatpush.msra.mxu0 %v5063
      %6365 = vmatpush.msra.mxu0 %v5062
      %6366 = vmatpush.msra.mxu0 %v5061
      %6367 = vmatpush.msra.mxu0 %v5060
      %6368 = vmatpush.msra.mxu0 %v5059
      %6369 = vmatpush.msra.mxu0 %v5058
      %6370 = vmatpush.msra.mxu0 %v5057
      %6371 = vmatpush.msra.mxu0 %v5056
      %6372 = vmatpush.msra.mxu0 %v5055
      %6373 = vmatmul.f32.gmra.mxu0 %v6283
      %v6374 = vpop.f32.mrf.mxu0
      %v6375 = vadd.f32 %v6352, %v6374
      %6376 = vmatmul.f32.gmra.mxu0 %v6287
      %v6377 = vpop.f32.mrf.mxu0
      %v6378 = vadd.f32 %v6355, %v6377
      %6379 = vdwg.mxu0
      %6380 = vst.msk [vmem:[#allocation7 + $0x40] sm:$0xff] %vm5243, %v6375
      %6381 = vst.msk [vmem:[#allocation7 + $0x48] sm:$0xff] %vm5243, %v6378
      %v6382 = vld [vmem:[#allocation6 + $0x1a0] sm:$0xff]
      %v6383 = vld [vmem:[#allocation6 + $0x1a8] sm:$0xff]
      %v6384 = vld [vmem:[#allocation6 + $0x1b0] sm:$0xff]
      %v6385 = vld [vmem:[#allocation6 + $0x1b8] sm:$0xff]
      %v6386 = vld [vmem:[#allocation6 + $0x1e0] sm:$0xff]
      %v6387 = vld [vmem:[#allocation6 + $0x1e8] sm:$0xff]
      %v6388 = vld [vmem:[#allocation6 + $0x1f0] sm:$0xff]
      %v6389 = vld [vmem:[#allocation6 + $0x1f8] sm:$0xff]
      %v6390 = vmul.f32 %v6264, %v6382
      %v6391 = vmul.f32 %v6265, %v6383
      %v6392 = vmul.f32 %v6266, %v6384
      %v6393 = vmul.f32 %v6267, %v6385
      %v6394 = vmul.f32 %v6268, %v6386
      %v6395 = vmul.f32 %v6269, %v6387
      %v6396 = vmul.f32 %v6270, %v6388
      %v6397 = vmul.f32 %v6271, %v6389
      %6398 = vmatpush.msra.mxu0 %v5022
      %6399 = vmatpush.msra.mxu0 %v5021
      %6400 = vmatpush.msra.mxu0 %v5020
      %6401 = vmatpush.msra.mxu0 %v5019
      %6402 = vmatpush.msra.mxu0 %v5018
      %6403 = vmatpush.msra.mxu0 %v5017
      %6404 = vmatpush.msra.mxu0 %v5016
      %6405 = vmatpush.msra.mxu0 %v5015
      %6406 = vmatpush.msra.mxu0 %v5014
      %6407 = vmatpush.msra.mxu0 %v5013
      %6408 = vmatpush.msra.mxu0 %v5012
      %6409 = vmatpush.msra.mxu0 %v5011
      %6410 = vmatpush.msra.mxu0 %v5010
      %6411 = vmatpush.msra.mxu0 %v5009
      %6412 = vmatpush.msra.mxu0 %v5008
      %6413 = vmatpush.msra.mxu0 %v5007
      %6414 = vmatmul.f32.gmra.mxu0 %v6390
      %v6415 = vpop.f32.mrf.mxu0
      %v6416 = vadd.f32 0.0, %v6415
      %6417 = vmatmul.f32.gmra.mxu0 %v6394
      %v6418 = vpop.f32.mrf.mxu0
      %v6419 = vadd.f32 0.0, %v6418
      %6420 = vdwg.mxu0
      %6421 = vmatpush.msra.mxu0 %v5038
      %6422 = vmatpush.msra.mxu0 %v5037
      %6423 = vmatpush.msra.mxu0 %v5036
      %6424 = vmatpush.msra.mxu0 %v5035
      %6425 = vmatpush.msra.mxu0 %v5034
      %6426 = vmatpush.msra.mxu0 %v5033
      %6427 = vmatpush.msra.mxu0 %v5032
      %6428 = vmatpush.msra.mxu0 %v5031
      %6429 = vmatpush.msra.mxu0 %v5030
      %6430 = vmatpush.msra.mxu0 %v5029
      %6431 = vmatpush.msra.mxu0 %v5028
      %6432 = vmatpush.msra.mxu0 %v5027
      %6433 = vmatpush.msra.mxu0 %v5026
      %6434 = vmatpush.msra.mxu0 %v5025
      %6435 = vmatpush.msra.mxu0 %v5024
      %6436 = vmatpush.msra.mxu0 %v5023
      %6437 = vmatmul.f32.gmra.mxu0 %v6391
      %v6438 = vpop.f32.mrf.mxu0
      %v6439 = vadd.f32 %v6416, %v6438
      %6440 = vmatmul.f32.gmra.mxu0 %v6395
      %v6441 = vpop.f32.mrf.mxu0
      %v6442 = vadd.f32 %v6419, %v6441
      %6443 = vdwg.mxu0
      %6444 = vmatpush.msra.mxu0 %v5054
      %6445 = vmatpush.msra.mxu0 %v5053
      %6446 = vmatpush.msra.mxu0 %v5052
      %6447 = vmatpush.msra.mxu0 %v5051
      %6448 = vmatpush.msra.mxu0 %v5050
      %6449 = vmatpush.msra.mxu0 %v5049
      %6450 = vmatpush.msra.mxu0 %v5048
      %6451 = vmatpush.msra.mxu0 %v5047
      %6452 = vmatpush.msra.mxu0 %v5046
      %6453 = vmatpush.msra.mxu0 %v5045
      %6454 = vmatpush.msra.mxu0 %v5044
      %6455 = vmatpush.msra.mxu0 %v5043
      %6456 = vmatpush.msra.mxu0 %v5042
      %6457 = vmatpush.msra.mxu0 %v5041
      %6458 = vmatpush.msra.mxu0 %v5040
      %6459 = vmatpush.msra.mxu0 %v5039
      %6460 = vmatmul.f32.gmra.mxu0 %v6392
      %v6461 = vpop.f32.mrf.mxu0
      %v6462 = vadd.f32 %v6439, %v6461
      %6463 = vmatmul.f32.gmra.mxu0 %v6396
      %v6464 = vpop.f32.mrf.mxu0
      %v6465 = vadd.f32 %v6442, %v6464
      %6466 = vdwg.mxu0
      %6467 = vmatpush.msra.mxu0 %v5070
      %6468 = vmatpush.msra.mxu0 %v5069
      %6469 = vmatpush.msra.mxu0 %v5068
      %6470 = vmatpush.msra.mxu0 %v5067
      %6471 = vmatpush.msra.mxu0 %v5066
      %6472 = vmatpush.msra.mxu0 %v5065
      %6473 = vmatpush.msra.mxu0 %v5064
      %6474 = vmatpush.msra.mxu0 %v5063
      %6475 = vmatpush.msra.mxu0 %v5062
      %6476 = vmatpush.msra.mxu0 %v5061
      %6477 = vmatpush.msra.mxu0 %v5060
      %6478 = vmatpush.msra.mxu0 %v5059
      %6479 = vmatpush.msra.mxu0 %v5058
      %6480 = vmatpush.msra.mxu0 %v5057
      %6481 = vmatpush.msra.mxu0 %v5056
      %6482 = vmatpush.msra.mxu0 %v5055
      %6483 = vmatmul.f32.gmra.mxu0 %v6393
      %v6484 = vpop.f32.mrf.mxu0
      %v6485 = vadd.f32 %v6462, %v6484
      %6486 = vmatmul.f32.gmra.mxu0 %v6397
      %v6487 = vpop.f32.mrf.mxu0
      %v6488 = vadd.f32 %v6465, %v6487
      %6489 = vdwg.mxu0
      %6490 = vst.msk [vmem:[#allocation8 + $0x30] sm:$0xff] %vm5243, %v6485
      %6491 = vst.msk [vmem:[#allocation8 + $0x38] sm:$0xff] %vm5243, %v6488
      %v6492 = vld [vmem:[#allocation4 + $0x280] sm:$0xff]
      %v6493 = vld [vmem:[#allocation4 + $0x288] sm:$0xff]
      %v6494 = vld [vmem:[#allocation4 + $0x290] sm:$0xff]
      %v6495 = vld [vmem:[#allocation4 + $0x298] sm:$0xff]
      %v6496 = vld [vmem:[#allocation4 + $0x2c0] sm:$0xff]
      %v6497 = vld [vmem:[#allocation4 + $0x2c8] sm:$0xff]
      %v6498 = vld [vmem:[#allocation4 + $0x2d0] sm:$0xff]
      %v6499 = vld [vmem:[#allocation4 + $0x2d8] sm:$0xff]
      %v6500 = vmul.f32 %v6492, %v6232
      %v6501 = vmul.f32 %v6493, %v6233
      %v6502 = vmul.f32 %v6494, %v6234
      %v6503 = vmul.f32 %v6495, %v6235
      %v6504 = vmul.f32 %v6496, %v6236
      %v6505 = vmul.f32 %v6497, %v6237
      %v6506 = vmul.f32 %v6498, %v6238
      %v6507 = vmul.f32 %v6499, %v6239
      %v6508 = vld [vmem:[#allocation5 + $0x280] sm:$0xff]
      %v6509 = vld [vmem:[#allocation5 + $0x288] sm:$0xff]
      %v6510 = vld [vmem:[#allocation5 + $0x290] sm:$0xff]
      %v6511 = vld [vmem:[#allocation5 + $0x298] sm:$0xff]
      %v6512 = vld [vmem:[#allocation5 + $0x2c0] sm:$0xff]
      %v6513 = vld [vmem:[#allocation5 + $0x2c8] sm:$0xff]
      %v6514 = vld [vmem:[#allocation5 + $0x2d0] sm:$0xff]
      %v6515 = vld [vmem:[#allocation5 + $0x2d8] sm:$0xff]
      %v6516 = vadd.f32 %v6500, %v6508
      %v6517 = vadd.f32 %v6501, %v6509
      %v6518 = vadd.f32 %v6502, %v6510
      %v6519 = vadd.f32 %v6503, %v6511
      %v6520 = vadd.f32 %v6504, %v6512
      %v6521 = vadd.f32 %v6505, %v6513
      %v6522 = vadd.f32 %v6506, %v6514
      %v6523 = vadd.f32 %v6507, %v6515
      %v6524 = vld [vmem:[#allocation4 + $0x120] sm:$0xff]
      %v6525 = vld [vmem:[#allocation4 + $0x128] sm:$0xff]
      %v6526 = vld [vmem:[#allocation4 + $0x130] sm:$0xff]
      %v6527 = vld [vmem:[#allocation4 + $0x138] sm:$0xff]
      %v6528 = vld [vmem:[#allocation4 + $0x160] sm:$0xff]
      %v6529 = vld [vmem:[#allocation4 + $0x168] sm:$0xff]
      %v6530 = vld [vmem:[#allocation4 + $0x170] sm:$0xff]
      %v6531 = vld [vmem:[#allocation4 + $0x178] sm:$0xff]
      %v6532 = vmul.f32 %v6524, %v6264
      %v6533 = vmul.f32 %v6525, %v6265
      %v6534 = vmul.f32 %v6526, %v6266
      %v6535 = vmul.f32 %v6527, %v6267
      %v6536 = vmul.f32 %v6528, %v6268
      %v6537 = vmul.f32 %v6529, %v6269
      %v6538 = vmul.f32 %v6530, %v6270
      %v6539 = vmul.f32 %v6531, %v6271
      %v6540 = vld [vmem:[#allocation5 + $0x120] sm:$0xff]
      %v6541 = vld [vmem:[#allocation5 + $0x128] sm:$0xff]
      %v6542 = vld [vmem:[#allocation5 + $0x130] sm:$0xff]
      %v6543 = vld [vmem:[#allocation5 + $0x138] sm:$0xff]
      %v6544 = vld [vmem:[#allocation5 + $0x160] sm:$0xff]
      %v6545 = vld [vmem:[#allocation5 + $0x168] sm:$0xff]
      %v6546 = vld [vmem:[#allocation5 + $0x170] sm:$0xff]
      %v6547 = vld [vmem:[#allocation5 + $0x178] sm:$0xff]
      %v6548 = vadd.f32 %v6532, %v6540
      %v6549 = vadd.f32 %v6533, %v6541
      %v6550 = vadd.f32 %v6534, %v6542
      %v6551 = vadd.f32 %v6535, %v6543
      %v6552 = vadd.f32 %v6536, %v6544
      %v6553 = vadd.f32 %v6537, %v6545
      %v6554 = vadd.f32 %v6538, %v6546
      %v6555 = vadd.f32 %v6539, %v6547
      %v6556 = vld [vmem:[#allocation6 + $0x280] sm:$0xff]
      %v6557 = vld [vmem:[#allocation6 + $0x288] sm:$0xff]
      %v6558 = vld [vmem:[#allocation6 + $0x290] sm:$0xff]
      %v6559 = vld [vmem:[#allocation6 + $0x298] sm:$0xff]
      %v6560 = vld [vmem:[#allocation6 + $0x2c0] sm:$0xff]
      %v6561 = vld [vmem:[#allocation6 + $0x2c8] sm:$0xff]
      %v6562 = vld [vmem:[#allocation6 + $0x2d0] sm:$0xff]
      %v6563 = vld [vmem:[#allocation6 + $0x2d8] sm:$0xff]
      %v6564 = vmul.f32 %v6516, %v6556
      %v6565 = vmul.f32 %v6517, %v6557
      %v6566 = vmul.f32 %v6518, %v6558
      %v6567 = vmul.f32 %v6519, %v6559
      %v6568 = vmul.f32 %v6520, %v6560
      %v6569 = vmul.f32 %v6521, %v6561
      %v6570 = vmul.f32 %v6522, %v6562
      %v6571 = vmul.f32 %v6523, %v6563
      %6572 = vmatpush.msra.mxu0 %v5022
      %6573 = vmatpush.msra.mxu0 %v5021
      %6574 = vmatpush.msra.mxu0 %v5020
      %6575 = vmatpush.msra.mxu0 %v5019
      %6576 = vmatpush.msra.mxu0 %v5018
      %6577 = vmatpush.msra.mxu0 %v5017
      %6578 = vmatpush.msra.mxu0 %v5016
      %6579 = vmatpush.msra.mxu0 %v5015
      %6580 = vmatpush.msra.mxu0 %v5014
      %6581 = vmatpush.msra.mxu0 %v5013
      %6582 = vmatpush.msra.mxu0 %v5012
      %6583 = vmatpush.msra.mxu0 %v5011
      %6584 = vmatpush.msra.mxu0 %v5010
      %6585 = vmatpush.msra.mxu0 %v5009
      %6586 = vmatpush.msra.mxu0 %v5008
      %6587 = vmatpush.msra.mxu0 %v5007
      %6588 = vmatmul.f32.gmra.mxu0 %v6564
      %v6589 = vpop.f32.mrf.mxu0
      %v6590 = vadd.f32 0.0, %v6589
      %6591 = vmatmul.f32.gmra.mxu0 %v6568
      %v6592 = vpop.f32.mrf.mxu0
      %v6593 = vadd.f32 0.0, %v6592
      %6594 = vdwg.mxu0
      %6595 = vmatpush.msra.mxu0 %v5038
      %6596 = vmatpush.msra.mxu0 %v5037
      %6597 = vmatpush.msra.mxu0 %v5036
      %6598 = vmatpush.msra.mxu0 %v5035
      %6599 = vmatpush.msra.mxu0 %v5034
      %6600 = vmatpush.msra.mxu0 %v5033
      %6601 = vmatpush.msra.mxu0 %v5032
      %6602 = vmatpush.msra.mxu0 %v5031
      %6603 = vmatpush.msra.mxu0 %v5030
      %6604 = vmatpush.msra.mxu0 %v5029
      %6605 = vmatpush.msra.mxu0 %v5028
      %6606 = vmatpush.msra.mxu0 %v5027
      %6607 = vmatpush.msra.mxu0 %v5026
      %6608 = vmatpush.msra.mxu0 %v5025
      %6609 = vmatpush.msra.mxu0 %v5024
      %6610 = vmatpush.msra.mxu0 %v5023
      %6611 = vmatmul.f32.gmra.mxu0 %v6565
      %v6612 = vpop.f32.mrf.mxu0
      %v6613 = vadd.f32 %v6590, %v6612
      %6614 = vmatmul.f32.gmra.mxu0 %v6569
      %v6615 = vpop.f32.mrf.mxu0
      %v6616 = vadd.f32 %v6593, %v6615
      %6617 = vdwg.mxu0
      %6618 = vmatpush.msra.mxu0 %v5054
      %6619 = vmatpush.msra.mxu0 %v5053
      %6620 = vmatpush.msra.mxu0 %v5052
      %6621 = vmatpush.msra.mxu0 %v5051
      %6622 = vmatpush.msra.mxu0 %v5050
      %6623 = vmatpush.msra.mxu0 %v5049
      %6624 = vmatpush.msra.mxu0 %v5048
      %6625 = vmatpush.msra.mxu0 %v5047
      %6626 = vmatpush.msra.mxu0 %v5046
      %6627 = vmatpush.msra.mxu0 %v5045
      %6628 = vmatpush.msra.mxu0 %v5044
      %6629 = vmatpush.msra.mxu0 %v5043
      %6630 = vmatpush.msra.mxu0 %v5042
      %6631 = vmatpush.msra.mxu0 %v5041
      %6632 = vmatpush.msra.mxu0 %v5040
      %6633 = vmatpush.msra.mxu0 %v5039
      %6634 = vmatmul.f32.gmra.mxu0 %v6566
      %v6635 = vpop.f32.mrf.mxu0
      %v6636 = vadd.f32 %v6613, %v6635
      %6637 = vmatmul.f32.gmra.mxu0 %v6570
      %v6638 = vpop.f32.mrf.mxu0
      %v6639 = vadd.f32 %v6616, %v6638
      %6640 = vdwg.mxu0
      %6641 = vmatpush.msra.mxu0 %v5070
      %6642 = vmatpush.msra.mxu0 %v5069
      %6643 = vmatpush.msra.mxu0 %v5068
      %6644 = vmatpush.msra.mxu0 %v5067
      %6645 = vmatpush.msra.mxu0 %v5066
      %6646 = vmatpush.msra.mxu0 %v5065
      %6647 = vmatpush.msra.mxu0 %v5064
      %6648 = vmatpush.msra.mxu0 %v5063
      %6649 = vmatpush.msra.mxu0 %v5062
      %6650 = vmatpush.msra.mxu0 %v5061
      %6651 = vmatpush.msra.mxu0 %v5060
      %6652 = vmatpush.msra.mxu0 %v5059
      %6653 = vmatpush.msra.mxu0 %v5058
      %6654 = vmatpush.msra.mxu0 %v5057
      %6655 = vmatpush.msra.mxu0 %v5056
      %6656 = vmatpush.msra.mxu0 %v5055
      %6657 = vmatmul.f32.gmra.mxu0 %v6567
      %v6658 = vpop.f32.mrf.mxu0
      %v6659 = vadd.f32 %v6636, %v6658
      %6660 = vmatmul.f32.gmra.mxu0 %v6571
      %v6661 = vpop.f32.mrf.mxu0
      %v6662 = vadd.f32 %v6639, %v6661
      %6663 = vdwg.mxu0
      %6664 = vst.msk [vmem:[#allocation7 + $0x50] sm:$0xff] %vm5243, %v6659
      %6665 = vst.msk [vmem:[#allocation7 + $0x58] sm:$0xff] %vm5243, %v6662
      %v6666 = vld [vmem:[#allocation6 + $0x120] sm:$0xff]
      %v6667 = vld [vmem:[#allocation6 + $0x128] sm:$0xff]
      %v6668 = vld [vmem:[#allocation6 + $0x130] sm:$0xff]
      %v6669 = vld [vmem:[#allocation6 + $0x138] sm:$0xff]
      %v6670 = vld [vmem:[#allocation6 + $0x160] sm:$0xff]
      %v6671 = vld [vmem:[#allocation6 + $0x168] sm:$0xff]
      %v6672 = vld [vmem:[#allocation6 + $0x170] sm:$0xff]
      %v6673 = vld [vmem:[#allocation6 + $0x178] sm:$0xff]
      %v6674 = vmul.f32 %v6548, %v6666
      %v6675 = vmul.f32 %v6549, %v6667
      %v6676 = vmul.f32 %v6550, %v6668
      %v6677 = vmul.f32 %v6551, %v6669
      %v6678 = vmul.f32 %v6552, %v6670
      %v6679 = vmul.f32 %v6553, %v6671
      %v6680 = vmul.f32 %v6554, %v6672
      %v6681 = vmul.f32 %v6555, %v6673
      %6682 = vmatpush.msra.mxu0 %v5022
      %6683 = vmatpush.msra.mxu0 %v5021
      %6684 = vmatpush.msra.mxu0 %v5020
      %6685 = vmatpush.msra.mxu0 %v5019
      %6686 = vmatpush.msra.mxu0 %v5018
      %6687 = vmatpush.msra.mxu0 %v5017
      %6688 = vmatpush.msra.mxu0 %v5016
      %6689 = vmatpush.msra.mxu0 %v5015
      %6690 = vmatpush.msra.mxu0 %v5014
      %6691 = vmatpush.msra.mxu0 %v5013
      %6692 = vmatpush.msra.mxu0 %v5012
      %6693 = vmatpush.msra.mxu0 %v5011
      %6694 = vmatpush.msra.mxu0 %v5010
      %6695 = vmatpush.msra.mxu0 %v5009
      %6696 = vmatpush.msra.mxu0 %v5008
      %6697 = vmatpush.msra.mxu0 %v5007
      %6698 = vmatmul.f32.gmra.mxu0 %v6674
      %v6699 = vpop.f32.mrf.mxu0
      %v6700 = vadd.f32 0.0, %v6699
      %6701 = vmatmul.f32.gmra.mxu0 %v6678
      %v6702 = vpop.f32.mrf.mxu0
      %v6703 = vadd.f32 0.0, %v6702
      %6704 = vdwg.mxu0
      %6705 = vmatpush.msra.mxu0 %v5038
      %6706 = vmatpush.msra.mxu0 %v5037
      %6707 = vmatpush.msra.mxu0 %v5036
      %6708 = vmatpush.msra.mxu0 %v5035
      %6709 = vmatpush.msra.mxu0 %v5034
      %6710 = vmatpush.msra.mxu0 %v5033
      %6711 = vmatpush.msra.mxu0 %v5032
      %6712 = vmatpush.msra.mxu0 %v5031
      %6713 = vmatpush.msra.mxu0 %v5030
      %6714 = vmatpush.msra.mxu0 %v5029
      %6715 = vmatpush.msra.mxu0 %v5028
      %6716 = vmatpush.msra.mxu0 %v5027
      %6717 = vmatpush.msra.mxu0 %v5026
      %6718 = vmatpush.msra.mxu0 %v5025
      %6719 = vmatpush.msra.mxu0 %v5024
      %6720 = vmatpush.msra.mxu0 %v5023
      %6721 = vmatmul.f32.gmra.mxu0 %v6675
      %v6722 = vpop.f32.mrf.mxu0
      %v6723 = vadd.f32 %v6700, %v6722
      %6724 = vmatmul.f32.gmra.mxu0 %v6679
      %v6725 = vpop.f32.mrf.mxu0
      %v6726 = vadd.f32 %v6703, %v6725
      %6727 = vdwg.mxu0
      %6728 = vmatpush.msra.mxu0 %v5054
      %6729 = vmatpush.msra.mxu0 %v5053
      %6730 = vmatpush.msra.mxu0 %v5052
      %6731 = vmatpush.msra.mxu0 %v5051
      %6732 = vmatpush.msra.mxu0 %v5050
      %6733 = vmatpush.msra.mxu0 %v5049
      %6734 = vmatpush.msra.mxu0 %v5048
      %6735 = vmatpush.msra.mxu0 %v5047
      %6736 = vmatpush.msra.mxu0 %v5046
      %6737 = vmatpush.msra.mxu0 %v5045
      %6738 = vmatpush.msra.mxu0 %v5044
      %6739 = vmatpush.msra.mxu0 %v5043
      %6740 = vmatpush.msra.mxu0 %v5042
      %6741 = vmatpush.msra.mxu0 %v5041
      %6742 = vmatpush.msra.mxu0 %v5040
      %6743 = vmatpush.msra.mxu0 %v5039
      %6744 = vmatmul.f32.gmra.mxu0 %v6676
      %v6745 = vpop.f32.mrf.mxu0
      %v6746 = vadd.f32 %v6723, %v6745
      %6747 = vmatmul.f32.gmra.mxu0 %v6680
      %v6748 = vpop.f32.mrf.mxu0
      %v6749 = vadd.f32 %v6726, %v6748
      %6750 = vdwg.mxu0
      %6751 = vmatpush.msra.mxu0 %v5070
      %6752 = vmatpush.msra.mxu0 %v5069
      %6753 = vmatpush.msra.mxu0 %v5068
      %6754 = vmatpush.msra.mxu0 %v5067
      %6755 = vmatpush.msra.mxu0 %v5066
      %6756 = vmatpush.msra.mxu0 %v5065
      %6757 = vmatpush.msra.mxu0 %v5064
      %6758 = vmatpush.msra.mxu0 %v5063
      %6759 = vmatpush.msra.mxu0 %v5062
      %6760 = vmatpush.msra.mxu0 %v5061
      %6761 = vmatpush.msra.mxu0 %v5060
      %6762 = vmatpush.msra.mxu0 %v5059
      %6763 = vmatpush.msra.mxu0 %v5058
      %6764 = vmatpush.msra.mxu0 %v5057
      %6765 = vmatpush.msra.mxu0 %v5056
      %6766 = vmatpush.msra.mxu0 %v5055
      %6767 = vmatmul.f32.gmra.mxu0 %v6677
      %v6768 = vpop.f32.mrf.mxu0
      %v6769 = vadd.f32 %v6746, %v6768
      %6770 = vmatmul.f32.gmra.mxu0 %v6681
      %v6771 = vpop.f32.mrf.mxu0
      %v6772 = vadd.f32 %v6749, %v6771
      %6773 = vdwg.mxu0
      %6774 = vst.msk [vmem:[#allocation8 + $0x20] sm:$0xff] %vm5243, %v6769
      %6775 = vst.msk [vmem:[#allocation8 + $0x28] sm:$0xff] %vm5243, %v6772
      %v6776 = vld [vmem:[#allocation4 + $0x300] sm:$0xff]
      %v6777 = vld [vmem:[#allocation4 + $0x308] sm:$0xff]
      %v6778 = vld [vmem:[#allocation4 + $0x310] sm:$0xff]
      %v6779 = vld [vmem:[#allocation4 + $0x318] sm:$0xff]
      %v6780 = vld [vmem:[#allocation4 + $0x340] sm:$0xff]
      %v6781 = vld [vmem:[#allocation4 + $0x348] sm:$0xff]
      %v6782 = vld [vmem:[#allocation4 + $0x350] sm:$0xff]
      %v6783 = vld [vmem:[#allocation4 + $0x358] sm:$0xff]
      %v6784 = vmul.f32 %v6776, %v6516
      %v6785 = vmul.f32 %v6777, %v6517
      %v6786 = vmul.f32 %v6778, %v6518
      %v6787 = vmul.f32 %v6779, %v6519
      %v6788 = vmul.f32 %v6780, %v6520
      %v6789 = vmul.f32 %v6781, %v6521
      %v6790 = vmul.f32 %v6782, %v6522
      %v6791 = vmul.f32 %v6783, %v6523
      %v6792 = vld [vmem:[#allocation5 + $0x300] sm:$0xff]
      %v6793 = vld [vmem:[#allocation5 + $0x308] sm:$0xff]
      %v6794 = vld [vmem:[#allocation5 + $0x310] sm:$0xff]
      %v6795 = vld [vmem:[#allocation5 + $0x318] sm:$0xff]
      %v6796 = vld [vmem:[#allocation5 + $0x340] sm:$0xff]
      %v6797 = vld [vmem:[#allocation5 + $0x348] sm:$0xff]
      %v6798 = vld [vmem:[#allocation5 + $0x350] sm:$0xff]
      %v6799 = vld [vmem:[#allocation5 + $0x358] sm:$0xff]
      %v6800 = vadd.f32 %v6784, %v6792
      %v6801 = vadd.f32 %v6785, %v6793
      %v6802 = vadd.f32 %v6786, %v6794
      %v6803 = vadd.f32 %v6787, %v6795
      %v6804 = vadd.f32 %v6788, %v6796
      %v6805 = vadd.f32 %v6789, %v6797
      %v6806 = vadd.f32 %v6790, %v6798
      %v6807 = vadd.f32 %v6791, %v6799
      %v6808 = vld [vmem:[#allocation4 + $0xa0] sm:$0xff]
      %v6809 = vld [vmem:[#allocation4 + $0xa8] sm:$0xff]
      %v6810 = vld [vmem:[#allocation4 + $0xb0] sm:$0xff]
      %v6811 = vld [vmem:[#allocation4 + $0xb8] sm:$0xff]
      %v6812 = vld [vmem:[#allocation4 + $0xe0] sm:$0xff]
      %v6813 = vld [vmem:[#allocation4 + $0xe8] sm:$0xff]
      %v6814 = vld [vmem:[#allocation4 + $0xf0] sm:$0xff]
      %v6815 = vld [vmem:[#allocation4 + $0xf8] sm:$0xff]
      %v6816 = vmul.f32 %v6808, %v6548
      %v6817 = vmul.f32 %v6809, %v6549
      %v6818 = vmul.f32 %v6810, %v6550
      %v6819 = vmul.f32 %v6811, %v6551
      %v6820 = vmul.f32 %v6812, %v6552
      %v6821 = vmul.f32 %v6813, %v6553
      %v6822 = vmul.f32 %v6814, %v6554
      %v6823 = vmul.f32 %v6815, %v6555
      %v6824 = vld [vmem:[#allocation5 + $0xa0] sm:$0xff]
      %v6825 = vld [vmem:[#allocation5 + $0xa8] sm:$0xff]
      %v6826 = vld [vmem:[#allocation5 + $0xb0] sm:$0xff]
      %v6827 = vld [vmem:[#allocation5 + $0xb8] sm:$0xff]
      %v6828 = vld [vmem:[#allocation5 + $0xe0] sm:$0xff]
      %v6829 = vld [vmem:[#allocation5 + $0xe8] sm:$0xff]
      %v6830 = vld [vmem:[#allocation5 + $0xf0] sm:$0xff]
      %v6831 = vld [vmem:[#allocation5 + $0xf8] sm:$0xff]
      %v6832 = vadd.f32 %v6816, %v6824
      %v6833 = vadd.f32 %v6817, %v6825
      %v6834 = vadd.f32 %v6818, %v6826
      %v6835 = vadd.f32 %v6819, %v6827
      %v6836 = vadd.f32 %v6820, %v6828
      %v6837 = vadd.f32 %v6821, %v6829
      %v6838 = vadd.f32 %v6822, %v6830
      %v6839 = vadd.f32 %v6823, %v6831
      %v6840 = vld [vmem:[#allocation6 + $0x300] sm:$0xff]
      %v6841 = vld [vmem:[#allocation6 + $0x308] sm:$0xff]
      %v6842 = vld [vmem:[#allocation6 + $0x310] sm:$0xff]
      %v6843 = vld [vmem:[#allocation6 + $0x318] sm:$0xff]
      %v6844 = vld [vmem:[#allocation6 + $0x340] sm:$0xff]
      %v6845 = vld [vmem:[#allocation6 + $0x348] sm:$0xff]
      %v6846 = vld [vmem:[#allocation6 + $0x350] sm:$0xff]
      %v6847 = vld [vmem:[#allocation6 + $0x358] sm:$0xff]
      %v6848 = vmul.f32 %v6800, %v6840
      %v6849 = vmul.f32 %v6801, %v6841
      %v6850 = vmul.f32 %v6802, %v6842
      %v6851 = vmul.f32 %v6803, %v6843
      %v6852 = vmul.f32 %v6804, %v6844
      %v6853 = vmul.f32 %v6805, %v6845
      %v6854 = vmul.f32 %v6806, %v6846
      %v6855 = vmul.f32 %v6807, %v6847
      %6856 = vmatpush.msra.mxu0 %v5022
      %6857 = vmatpush.msra.mxu0 %v5021
      %6858 = vmatpush.msra.mxu0 %v5020
      %6859 = vmatpush.msra.mxu0 %v5019
      %6860 = vmatpush.msra.mxu0 %v5018
      %6861 = vmatpush.msra.mxu0 %v5017
      %6862 = vmatpush.msra.mxu0 %v5016
      %6863 = vmatpush.msra.mxu0 %v5015
      %6864 = vmatpush.msra.mxu0 %v5014
      %6865 = vmatpush.msra.mxu0 %v5013
      %6866 = vmatpush.msra.mxu0 %v5012
      %6867 = vmatpush.msra.mxu0 %v5011
      %6868 = vmatpush.msra.mxu0 %v5010
      %6869 = vmatpush.msra.mxu0 %v5009
      %6870 = vmatpush.msra.mxu0 %v5008
      %6871 = vmatpush.msra.mxu0 %v5007
      %6872 = vmatmul.f32.gmra.mxu0 %v6848
      %v6873 = vpop.f32.mrf.mxu0
      %v6874 = vadd.f32 0.0, %v6873
      %6875 = vmatmul.f32.gmra.mxu0 %v6852
      %v6876 = vpop.f32.mrf.mxu0
      %v6877 = vadd.f32 0.0, %v6876
      %6878 = vdwg.mxu0
      %6879 = vmatpush.msra.mxu0 %v5038
      %6880 = vmatpush.msra.mxu0 %v5037
      %6881 = vmatpush.msra.mxu0 %v5036
      %6882 = vmatpush.msra.mxu0 %v5035
      %6883 = vmatpush.msra.mxu0 %v5034
      %6884 = vmatpush.msra.mxu0 %v5033
      %6885 = vmatpush.msra.mxu0 %v5032
      %6886 = vmatpush.msra.mxu0 %v5031
      %6887 = vmatpush.msra.mxu0 %v5030
      %6888 = vmatpush.msra.mxu0 %v5029
      %6889 = vmatpush.msra.mxu0 %v5028
      %6890 = vmatpush.msra.mxu0 %v5027
      %6891 = vmatpush.msra.mxu0 %v5026
      %6892 = vmatpush.msra.mxu0 %v5025
      %6893 = vmatpush.msra.mxu0 %v5024
      %6894 = vmatpush.msra.mxu0 %v5023
      %6895 = vmatmul.f32.gmra.mxu0 %v6849
      %v6896 = vpop.f32.mrf.mxu0
      %v6897 = vadd.f32 %v6874, %v6896
      %6898 = vmatmul.f32.gmra.mxu0 %v6853
      %v6899 = vpop.f32.mrf.mxu0
      %v6900 = vadd.f32 %v6877, %v6899
      %6901 = vdwg.mxu0
      %6902 = vmatpush.msra.mxu0 %v5054
      %6903 = vmatpush.msra.mxu0 %v5053
      %6904 = vmatpush.msra.mxu0 %v5052
      %6905 = vmatpush.msra.mxu0 %v5051
      %6906 = vmatpush.msra.mxu0 %v5050
      %6907 = vmatpush.msra.mxu0 %v5049
      %6908 = vmatpush.msra.mxu0 %v5048
      %6909 = vmatpush.msra.mxu0 %v5047
      %6910 = vmatpush.msra.mxu0 %v5046
      %6911 = vmatpush.msra.mxu0 %v5045
      %6912 = vmatpush.msra.mxu0 %v5044
      %6913 = vmatpush.msra.mxu0 %v5043
      %6914 = vmatpush.msra.mxu0 %v5042
      %6915 = vmatpush.msra.mxu0 %v5041
      %6916 = vmatpush.msra.mxu0 %v5040
      %6917 = vmatpush.msra.mxu0 %v5039
      %6918 = vmatmul.f32.gmra.mxu0 %v6850
      %v6919 = vpop.f32.mrf.mxu0
      %v6920 = vadd.f32 %v6897, %v6919
      %6921 = vmatmul.f32.gmra.mxu0 %v6854
      %v6922 = vpop.f32.mrf.mxu0
      %v6923 = vadd.f32 %v6900, %v6922
      %6924 = vdwg.mxu0
      %6925 = vmatpush.msra.mxu0 %v5070
      %6926 = vmatpush.msra.mxu0 %v5069
      %6927 = vmatpush.msra.mxu0 %v5068
      %6928 = vmatpush.msra.mxu0 %v5067
      %6929 = vmatpush.msra.mxu0 %v5066
      %6930 = vmatpush.msra.mxu0 %v5065
      %6931 = vmatpush.msra.mxu0 %v5064
      %6932 = vmatpush.msra.mxu0 %v5063
      %6933 = vmatpush.msra.mxu0 %v5062
      %6934 = vmatpush.msra.mxu0 %v5061
      %6935 = vmatpush.msra.mxu0 %v5060
      %6936 = vmatpush.msra.mxu0 %v5059
      %6937 = vmatpush.msra.mxu0 %v5058
      %6938 = vmatpush.msra.mxu0 %v5057
      %6939 = vmatpush.msra.mxu0 %v5056
      %6940 = vmatpush.msra.mxu0 %v5055
      %6941 = vmatmul.f32.gmra.mxu0 %v6851
      %v6942 = vpop.f32.mrf.mxu0
      %v6943 = vadd.f32 %v6920, %v6942
      %6944 = vmatmul.f32.gmra.mxu0 %v6855
      %v6945 = vpop.f32.mrf.mxu0
      %v6946 = vadd.f32 %v6923, %v6945
      %6947 = vdwg.mxu0
      %6948 = vst.msk [vmem:[#allocation7 + $0x60] sm:$0xff] %vm5243, %v6943
      %6949 = vst.msk [vmem:[#allocation7 + $0x68] sm:$0xff] %vm5243, %v6946
      %v6950 = vld [vmem:[#allocation6 + $0xa0] sm:$0xff]
      %v6951 = vld [vmem:[#allocation6 + $0xa8] sm:$0xff]
      %v6952 = vld [vmem:[#allocation6 + $0xb0] sm:$0xff]
      %v6953 = vld [vmem:[#allocation6 + $0xb8] sm:$0xff]
      %v6954 = vld [vmem:[#allocation6 + $0xe0] sm:$0xff]
      %v6955 = vld [vmem:[#allocation6 + $0xe8] sm:$0xff]
      %v6956 = vld [vmem:[#allocation6 + $0xf0] sm:$0xff]
      %v6957 = vld [vmem:[#allocation6 + $0xf8] sm:$0xff]
      %v6958 = vmul.f32 %v6832, %v6950
      %v6959 = vmul.f32 %v6833, %v6951
      %v6960 = vmul.f32 %v6834, %v6952
      %v6961 = vmul.f32 %v6835, %v6953
      %v6962 = vmul.f32 %v6836, %v6954
      %v6963 = vmul.f32 %v6837, %v6955
      %v6964 = vmul.f32 %v6838, %v6956
      %v6965 = vmul.f32 %v6839, %v6957
      %6966 = vmatpush.msra.mxu0 %v5022
      %6967 = vmatpush.msra.mxu0 %v5021
      %6968 = vmatpush.msra.mxu0 %v5020
      %6969 = vmatpush.msra.mxu0 %v5019
      %6970 = vmatpush.msra.mxu0 %v5018
      %6971 = vmatpush.msra.mxu0 %v5017
      %6972 = vmatpush.msra.mxu0 %v5016
      %6973 = vmatpush.msra.mxu0 %v5015
      %6974 = vmatpush.msra.mxu0 %v5014
      %6975 = vmatpush.msra.mxu0 %v5013
      %6976 = vmatpush.msra.mxu0 %v5012
      %6977 = vmatpush.msra.mxu0 %v5011
      %6978 = vmatpush.msra.mxu0 %v5010
      %6979 = vmatpush.msra.mxu0 %v5009
      %6980 = vmatpush.msra.mxu0 %v5008
      %6981 = vmatpush.msra.mxu0 %v5007
      %6982 = vmatmul.f32.gmra.mxu0 %v6958
      %v6983 = vpop.f32.mrf.mxu0
      %v6984 = vadd.f32 0.0, %v6983
      %6985 = vmatmul.f32.gmra.mxu0 %v6962
      %v6986 = vpop.f32.mrf.mxu0
      %v6987 = vadd.f32 0.0, %v6986
      %6988 = vdwg.mxu0
      %6989 = vmatpush.msra.mxu0 %v5038
      %6990 = vmatpush.msra.mxu0 %v5037
      %6991 = vmatpush.msra.mxu0 %v5036
      %6992 = vmatpush.msra.mxu0 %v5035
      %6993 = vmatpush.msra.mxu0 %v5034
      %6994 = vmatpush.msra.mxu0 %v5033
      %6995 = vmatpush.msra.mxu0 %v5032
      %6996 = vmatpush.msra.mxu0 %v5031
      %6997 = vmatpush.msra.mxu0 %v5030
      %6998 = vmatpush.msra.mxu0 %v5029
      %6999 = vmatpush.msra.mxu0 %v5028
      %7000 = vmatpush.msra.mxu0 %v5027
      %7001 = vmatpush.msra.mxu0 %v5026
      %7002 = vmatpush.msra.mxu0 %v5025
      %7003 = vmatpush.msra.mxu0 %v5024
      %7004 = vmatpush.msra.mxu0 %v5023
      %7005 = vmatmul.f32.gmra.mxu0 %v6959
      %v7006 = vpop.f32.mrf.mxu0
      %v7007 = vadd.f32 %v6984, %v7006
      %7008 = vmatmul.f32.gmra.mxu0 %v6963
      %v7009 = vpop.f32.mrf.mxu0
      %v7010 = vadd.f32 %v6987, %v7009
      %7011 = vdwg.mxu0
      %7012 = vmatpush.msra.mxu0 %v5054
      %7013 = vmatpush.msra.mxu0 %v5053
      %7014 = vmatpush.msra.mxu0 %v5052
      %7015 = vmatpush.msra.mxu0 %v5051
      %7016 = vmatpush.msra.mxu0 %v5050
      %7017 = vmatpush.msra.mxu0 %v5049
      %7018 = vmatpush.msra.mxu0 %v5048
      %7019 = vmatpush.msra.mxu0 %v5047
      %7020 = vmatpush.msra.mxu0 %v5046
      %7021 = vmatpush.msra.mxu0 %v5045
      %7022 = vmatpush.msra.mxu0 %v5044
      %7023 = vmatpush.msra.mxu0 %v5043
      %7024 = vmatpush.msra.mxu0 %v5042
      %7025 = vmatpush.msra.mxu0 %v5041
      %7026 = vmatpush.msra.mxu0 %v5040
      %7027 = vmatpush.msra.mxu0 %v5039
      %7028 = vmatmul.f32.gmra.mxu0 %v6960
      %v7029 = vpop.f32.mrf.mxu0
      %v7030 = vadd.f32 %v7007, %v7029
      %7031 = vmatmul.f32.gmra.mxu0 %v6964
      %v7032 = vpop.f32.mrf.mxu0
      %v7033 = vadd.f32 %v7010, %v7032
      %7034 = vdwg.mxu0
      %7035 = vmatpush.msra.mxu0 %v5070
      %7036 = vmatpush.msra.mxu0 %v5069
      %7037 = vmatpush.msra.mxu0 %v5068
      %7038 = vmatpush.msra.mxu0 %v5067
      %7039 = vmatpush.msra.mxu0 %v5066
      %7040 = vmatpush.msra.mxu0 %v5065
      %7041 = vmatpush.msra.mxu0 %v5064
      %7042 = vmatpush.msra.mxu0 %v5063
      %7043 = vmatpush.msra.mxu0 %v5062
      %7044 = vmatpush.msra.mxu0 %v5061
      %7045 = vmatpush.msra.mxu0 %v5060
      %7046 = vmatpush.msra.mxu0 %v5059
      %7047 = vmatpush.msra.mxu0 %v5058
      %7048 = vmatpush.msra.mxu0 %v5057
      %7049 = vmatpush.msra.mxu0 %v5056
      %7050 = vmatpush.msra.mxu0 %v5055
      %7051 = vmatmul.f32.gmra.mxu0 %v6961
      %v7052 = vpop.f32.mrf.mxu0
      %v7053 = vadd.f32 %v7030, %v7052
      %7054 = vmatmul.f32.gmra.mxu0 %v6965
      %v7055 = vpop.f32.mrf.mxu0
      %v7056 = vadd.f32 %v7033, %v7055
      %7057 = vdwg.mxu0
      %7058 = vst.msk [vmem:[#allocation8 + $0x10] sm:$0xff] %vm5243, %v7053
      %7059 = vst.msk [vmem:[#allocation8 + $0x18] sm:$0xff] %vm5243, %v7056
      %v7060 = vld [vmem:[#allocation4 + $0x380] sm:$0xff]
      %v7061 = vld [vmem:[#allocation4 + $0x388] sm:$0xff]
      %v7062 = vld [vmem:[#allocation4 + $0x390] sm:$0xff]
      %v7063 = vld [vmem:[#allocation4 + $0x398] sm:$0xff]
      %v7064 = vld [vmem:[#allocation4 + $0x3c0] sm:$0xff]
      %v7065 = vld [vmem:[#allocation4 + $0x3c8] sm:$0xff]
      %v7066 = vld [vmem:[#allocation4 + $0x3d0] sm:$0xff]
      %v7067 = vld [vmem:[#allocation4 + $0x3d8] sm:$0xff]
      %v7068 = vmul.f32 %v7060, %v6800
      %v7069 = vmul.f32 %v7061, %v6801
      %v7070 = vmul.f32 %v7062, %v6802
      %v7071 = vmul.f32 %v7063, %v6803
      %v7072 = vmul.f32 %v7064, %v6804
      %v7073 = vmul.f32 %v7065, %v6805
      %v7074 = vmul.f32 %v7066, %v6806
      %v7075 = vmul.f32 %v7067, %v6807
      %v7076 = vld [vmem:[#allocation5 + $0x380] sm:$0xff]
      %v7077 = vld [vmem:[#allocation5 + $0x388] sm:$0xff]
      %v7078 = vld [vmem:[#allocation5 + $0x390] sm:$0xff]
      %v7079 = vld [vmem:[#allocation5 + $0x398] sm:$0xff]
      %v7080 = vld [vmem:[#allocation5 + $0x3c0] sm:$0xff]
      %v7081 = vld [vmem:[#allocation5 + $0x3c8] sm:$0xff]
      %v7082 = vld [vmem:[#allocation5 + $0x3d0] sm:$0xff]
      %v7083 = vld [vmem:[#allocation5 + $0x3d8] sm:$0xff]
      %v7084 = vadd.f32 %v7068, %v7076
      %v7085 = vadd.f32 %v7069, %v7077
      %v7086 = vadd.f32 %v7070, %v7078
      %v7087 = vadd.f32 %v7071, %v7079
      %v7088 = vadd.f32 %v7072, %v7080
      %v7089 = vadd.f32 %v7073, %v7081
      %v7090 = vadd.f32 %v7074, %v7082
      %v7091 = vadd.f32 %v7075, %v7083
      %v7092 = vld [vmem:[#allocation4 + $0x20] sm:$0xff]
      %v7093 = vld [vmem:[#allocation4 + $0x28] sm:$0xff]
      %v7094 = vld [vmem:[#allocation4 + $0x30] sm:$0xff]
      %v7095 = vld [vmem:[#allocation4 + $0x38] sm:$0xff]
      %v7096 = vld [vmem:[#allocation4 + $0x60] sm:$0xff]
      %v7097 = vld [vmem:[#allocation4 + $0x68] sm:$0xff]
      %v7098 = vld [vmem:[#allocation4 + $0x70] sm:$0xff]
      %v7099 = vld [vmem:[#allocation4 + $0x78] sm:$0xff]
      %v7100 = vmul.f32 %v7092, %v6832
      %v7101 = vmul.f32 %v7093, %v6833
      %v7102 = vmul.f32 %v7094, %v6834
      %v7103 = vmul.f32 %v7095, %v6835
      %v7104 = vmul.f32 %v7096, %v6836
      %v7105 = vmul.f32 %v7097, %v6837
      %v7106 = vmul.f32 %v7098, %v6838
      %v7107 = vmul.f32 %v7099, %v6839
      %v7108 = vld [vmem:[#allocation5 + $0x20] sm:$0xff]
      %v7109 = vld [vmem:[#allocation5 + $0x28] sm:$0xff]
      %v7110 = vld [vmem:[#allocation5 + $0x30] sm:$0xff]
      %v7111 = vld [vmem:[#allocation5 + $0x38] sm:$0xff]
      %v7112 = vld [vmem:[#allocation5 + $0x60] sm:$0xff]
      %v7113 = vld [vmem:[#allocation5 + $0x68] sm:$0xff]
      %v7114 = vld [vmem:[#allocation5 + $0x70] sm:$0xff]
      %v7115 = vld [vmem:[#allocation5 + $0x78] sm:$0xff]
      %v7116 = vadd.f32 %v7100, %v7108
      %v7117 = vadd.f32 %v7101, %v7109
      %v7118 = vadd.f32 %v7102, %v7110
      %v7119 = vadd.f32 %v7103, %v7111
      %v7120 = vadd.f32 %v7104, %v7112
      %v7121 = vadd.f32 %v7105, %v7113
      %v7122 = vadd.f32 %v7106, %v7114
      %v7123 = vadd.f32 %v7107, %v7115
      %v7124 = vld [vmem:[#allocation6 + $0x380] sm:$0xff]
      %v7125 = vld [vmem:[#allocation6 + $0x388] sm:$0xff]
      %v7126 = vld [vmem:[#allocation6 + $0x390] sm:$0xff]
      %v7127 = vld [vmem:[#allocation6 + $0x398] sm:$0xff]
      %v7128 = vld [vmem:[#allocation6 + $0x3c0] sm:$0xff]
      %v7129 = vld [vmem:[#allocation6 + $0x3c8] sm:$0xff]
      %v7130 = vld [vmem:[#allocation6 + $0x3d0] sm:$0xff]
      %v7131 = vld [vmem:[#allocation6 + $0x3d8] sm:$0xff]
      %v7132 = vmul.f32 %v7084, %v7124
      %v7133 = vmul.f32 %v7085, %v7125
      %v7134 = vmul.f32 %v7086, %v7126
      %v7135 = vmul.f32 %v7087, %v7127
      %v7136 = vmul.f32 %v7088, %v7128
      %v7137 = vmul.f32 %v7089, %v7129
      %v7138 = vmul.f32 %v7090, %v7130
      %v7139 = vmul.f32 %v7091, %v7131
      %7140 = vmatpush.msra.mxu0 %v5022
      %7141 = vmatpush.msra.mxu0 %v5021
      %7142 = vmatpush.msra.mxu0 %v5020
      %7143 = vmatpush.msra.mxu0 %v5019
      %7144 = vmatpush.msra.mxu0 %v5018
      %7145 = vmatpush.msra.mxu0 %v5017
      %7146 = vmatpush.msra.mxu0 %v5016
      %7147 = vmatpush.msra.mxu0 %v5015
      %7148 = vmatpush.msra.mxu0 %v5014
      %7149 = vmatpush.msra.mxu0 %v5013
      %7150 = vmatpush.msra.mxu0 %v5012
      %7151 = vmatpush.msra.mxu0 %v5011
      %7152 = vmatpush.msra.mxu0 %v5010
      %7153 = vmatpush.msra.mxu0 %v5009
      %7154 = vmatpush.msra.mxu0 %v5008
      %7155 = vmatpush.msra.mxu0 %v5007
      %7156 = vmatmul.f32.gmra.mxu0 %v7132
      %v7157 = vpop.f32.mrf.mxu0
      %v7158 = vadd.f32 0.0, %v7157
      %7159 = vmatmul.f32.gmra.mxu0 %v7136
      %v7160 = vpop.f32.mrf.mxu0
      %v7161 = vadd.f32 0.0, %v7160
      %7162 = vdwg.mxu0
      %7163 = vmatpush.msra.mxu0 %v5038
      %7164 = vmatpush.msra.mxu0 %v5037
      %7165 = vmatpush.msra.mxu0 %v5036
      %7166 = vmatpush.msra.mxu0 %v5035
      %7167 = vmatpush.msra.mxu0 %v5034
      %7168 = vmatpush.msra.mxu0 %v5033
      %7169 = vmatpush.msra.mxu0 %v5032
      %7170 = vmatpush.msra.mxu0 %v5031
      %7171 = vmatpush.msra.mxu0 %v5030
      %7172 = vmatpush.msra.mxu0 %v5029
      %7173 = vmatpush.msra.mxu0 %v5028
      %7174 = vmatpush.msra.mxu0 %v5027
      %7175 = vmatpush.msra.mxu0 %v5026
      %7176 = vmatpush.msra.mxu0 %v5025
      %7177 = vmatpush.msra.mxu0 %v5024
      %7178 = vmatpush.msra.mxu0 %v5023
      %7179 = vmatmul.f32.gmra.mxu0 %v7133
      %v7180 = vpop.f32.mrf.mxu0
      %v7181 = vadd.f32 %v7158, %v7180
      %7182 = vmatmul.f32.gmra.mxu0 %v7137
      %v7183 = vpop.f32.mrf.mxu0
      %v7184 = vadd.f32 %v7161, %v7183
      %7185 = vdwg.mxu0
      %7186 = vmatpush.msra.mxu0 %v5054
      %7187 = vmatpush.msra.mxu0 %v5053
      %7188 = vmatpush.msra.mxu0 %v5052
      %7189 = vmatpush.msra.mxu0 %v5051
      %7190 = vmatpush.msra.mxu0 %v5050
      %7191 = vmatpush.msra.mxu0 %v5049
      %7192 = vmatpush.msra.mxu0 %v5048
      %7193 = vmatpush.msra.mxu0 %v5047
      %7194 = vmatpush.msra.mxu0 %v5046
      %7195 = vmatpush.msra.mxu0 %v5045
      %7196 = vmatpush.msra.mxu0 %v5044
      %7197 = vmatpush.msra.mxu0 %v5043
      %7198 = vmatpush.msra.mxu0 %v5042
      %7199 = vmatpush.msra.mxu0 %v5041
      %7200 = vmatpush.msra.mxu0 %v5040
      %7201 = vmatpush.msra.mxu0 %v5039
      %7202 = vmatmul.f32.gmra.mxu0 %v7134
      %v7203 = vpop.f32.mrf.mxu0
      %v7204 = vadd.f32 %v7181, %v7203
      %7205 = vmatmul.f32.gmra.mxu0 %v7138
      %v7206 = vpop.f32.mrf.mxu0
      %v7207 = vadd.f32 %v7184, %v7206
      %7208 = vdwg.mxu0
      %7209 = vmatpush.msra.mxu0 %v5070
      %7210 = vmatpush.msra.mxu0 %v5069
      %7211 = vmatpush.msra.mxu0 %v5068
      %7212 = vmatpush.msra.mxu0 %v5067
      %7213 = vmatpush.msra.mxu0 %v5066
      %7214 = vmatpush.msra.mxu0 %v5065
      %7215 = vmatpush.msra.mxu0 %v5064
      %7216 = vmatpush.msra.mxu0 %v5063
      %7217 = vmatpush.msra.mxu0 %v5062
      %7218 = vmatpush.msra.mxu0 %v5061
      %7219 = vmatpush.msra.mxu0 %v5060
      %7220 = vmatpush.msra.mxu0 %v5059
      %7221 = vmatpush.msra.mxu0 %v5058
      %7222 = vmatpush.msra.mxu0 %v5057
      %7223 = vmatpush.msra.mxu0 %v5056
      %7224 = vmatpush.msra.mxu0 %v5055
      %7225 = vmatmul.f32.gmra.mxu0 %v7135
      %v7226 = vpop.f32.mrf.mxu0
      %v7227 = vadd.f32 %v7204, %v7226
      %7228 = vmatmul.f32.gmra.mxu0 %v7139
      %v7229 = vpop.f32.mrf.mxu0
      %v7230 = vadd.f32 %v7207, %v7229
      %7231 = vdwg.mxu0
      %7232 = vst.msk [vmem:[#allocation7 + $0x70] sm:$0xff] %vm5243, %v7227
      %7233 = vst.msk [vmem:[#allocation7 + $0x78] sm:$0xff] %vm5243, %v7230
      %v7234 = vld [vmem:[#allocation6 + $0x20] sm:$0xff]
      %v7235 = vld [vmem:[#allocation6 + $0x28] sm:$0xff]
      %v7236 = vld [vmem:[#allocation6 + $0x30] sm:$0xff]
      %v7237 = vld [vmem:[#allocation6 + $0x38] sm:$0xff]
      %v7238 = vld [vmem:[#allocation6 + $0x60] sm:$0xff]
      %v7239 = vld [vmem:[#allocation6 + $0x68] sm:$0xff]
      %v7240 = vld [vmem:[#allocation6 + $0x70] sm:$0xff]
      %v7241 = vld [vmem:[#allocation6 + $0x78] sm:$0xff]
      %v7242 = vmul.f32 %v7116, %v7234
      %v7243 = vmul.f32 %v7117, %v7235
      %v7244 = vmul.f32 %v7118, %v7236
      %v7245 = vmul.f32 %v7119, %v7237
      %v7246 = vmul.f32 %v7120, %v7238
      %v7247 = vmul.f32 %v7121, %v7239
      %v7248 = vmul.f32 %v7122, %v7240
      %v7249 = vmul.f32 %v7123, %v7241
      %7250 = vmatpush.msra.mxu0 %v5022
      %7251 = vmatpush.msra.mxu0 %v5021
      %7252 = vmatpush.msra.mxu0 %v5020
      %7253 = vmatpush.msra.mxu0 %v5019
      %7254 = vmatpush.msra.mxu0 %v5018
      %7255 = vmatpush.msra.mxu0 %v5017
      %7256 = vmatpush.msra.mxu0 %v5016
      %7257 = vmatpush.msra.mxu0 %v5015
      %7258 = vmatpush.msra.mxu0 %v5014
      %7259 = vmatpush.msra.mxu0 %v5013
      %7260 = vmatpush.msra.mxu0 %v5012
      %7261 = vmatpush.msra.mxu0 %v5011
      %7262 = vmatpush.msra.mxu0 %v5010
      %7263 = vmatpush.msra.mxu0 %v5009
      %7264 = vmatpush.msra.mxu0 %v5008
      %7265 = vmatpush.msra.mxu0 %v5007
      %7266 = vmatmul.f32.gmra.mxu0 %v7242
      %v7267 = vpop.f32.mrf.mxu0
      %v7268 = vadd.f32 0.0, %v7267
      %7269 = vmatmul.f32.gmra.mxu0 %v7246
      %v7270 = vpop.f32.mrf.mxu0
      %v7271 = vadd.f32 0.0, %v7270
      %7272 = vdwg.mxu0
      %7273 = vmatpush.msra.mxu0 %v5038
      %7274 = vmatpush.msra.mxu0 %v5037
      %7275 = vmatpush.msra.mxu0 %v5036
      %7276 = vmatpush.msra.mxu0 %v5035
      %7277 = vmatpush.msra.mxu0 %v5034
      %7278 = vmatpush.msra.mxu0 %v5033
      %7279 = vmatpush.msra.mxu0 %v5032
      %7280 = vmatpush.msra.mxu0 %v5031
      %7281 = vmatpush.msra.mxu0 %v5030
      %7282 = vmatpush.msra.mxu0 %v5029
      %7283 = vmatpush.msra.mxu0 %v5028
      %7284 = vmatpush.msra.mxu0 %v5027
      %7285 = vmatpush.msra.mxu0 %v5026
      %7286 = vmatpush.msra.mxu0 %v5025
      %7287 = vmatpush.msra.mxu0 %v5024
      %7288 = vmatpush.msra.mxu0 %v5023
      %7289 = vmatmul.f32.gmra.mxu0 %v7243
      %v7290 = vpop.f32.mrf.mxu0
      %v7291 = vadd.f32 %v7268, %v7290
      %7292 = vmatmul.f32.gmra.mxu0 %v7247
      %v7293 = vpop.f32.mrf.mxu0
      %v7294 = vadd.f32 %v7271, %v7293
      %7295 = vdwg.mxu0
      %7296 = vmatpush.msra.mxu0 %v5054
      %7297 = vmatpush.msra.mxu0 %v5053
      %7298 = vmatpush.msra.mxu0 %v5052
      %7299 = vmatpush.msra.mxu0 %v5051
      %7300 = vmatpush.msra.mxu0 %v5050
      %7301 = vmatpush.msra.mxu0 %v5049
      %7302 = vmatpush.msra.mxu0 %v5048
      %7303 = vmatpush.msra.mxu0 %v5047
      %7304 = vmatpush.msra.mxu0 %v5046
      %7305 = vmatpush.msra.mxu0 %v5045
      %7306 = vmatpush.msra.mxu0 %v5044
      %7307 = vmatpush.msra.mxu0 %v5043
      %7308 = vmatpush.msra.mxu0 %v5042
      %7309 = vmatpush.msra.mxu0 %v5041
      %7310 = vmatpush.msra.mxu0 %v5040
      %7311 = vmatpush.msra.mxu0 %v5039
      %7312 = vmatmul.f32.gmra.mxu0 %v7244
      %v7313 = vpop.f32.mrf.mxu0
      %v7314 = vadd.f32 %v7291, %v7313
      %7315 = vmatmul.f32.gmra.mxu0 %v7248
      %v7316 = vpop.f32.mrf.mxu0
      %v7317 = vadd.f32 %v7294, %v7316
      %7318 = vdwg.mxu0
      %7319 = vmatpush.msra.mxu0 %v5070
      %7320 = vmatpush.msra.mxu0 %v5069
      %7321 = vmatpush.msra.mxu0 %v5068
      %7322 = vmatpush.msra.mxu0 %v5067
      %7323 = vmatpush.msra.mxu0 %v5066
      %7324 = vmatpush.msra.mxu0 %v5065
      %7325 = vmatpush.msra.mxu0 %v5064
      %7326 = vmatpush.msra.mxu0 %v5063
      %7327 = vmatpush.msra.mxu0 %v5062
      %7328 = vmatpush.msra.mxu0 %v5061
      %7329 = vmatpush.msra.mxu0 %v5060
      %7330 = vmatpush.msra.mxu0 %v5059
      %7331 = vmatpush.msra.mxu0 %v5058
      %7332 = vmatpush.msra.mxu0 %v5057
      %7333 = vmatpush.msra.mxu0 %v5056
      %7334 = vmatpush.msra.mxu0 %v5055
      %7335 = vmatmul.f32.gmra.mxu0 %v7245
      %v7336 = vpop.f32.mrf.mxu0
      %v7337 = vadd.f32 %v7314, %v7336
      %7338 = vmatmul.f32.gmra.mxu0 %v7249
      %v7339 = vpop.f32.mrf.mxu0
      %v7340 = vadd.f32 %v7317, %v7339
      %7341 = vdwg.mxu0
      %7342 = vst.msk [vmem:[#allocation8] sm:$0xff] %vm5243, %v7337
      %7343 = vst.msk [vmem:[#allocation8 + $0x8] sm:$0xff] %vm5243, %v7340
      %v7344 = vld [vmem:[#allocation3] sm:$0xff]
      %v7345 = vld [vmem:[#allocation3 + $0x8] sm:$0xff]
      %v7346 = vld [vmem:[#allocation3 + $0x10] sm:$0xff]
      %v7347 = vld [vmem:[#allocation3 + $0x18] sm:$0xff]
      %v7348 = vld [vmem:[#allocation3 + $0x20] sm:$0xff]
      %v7349 = vld [vmem:[#allocation3 + $0x28] sm:$0xff]
      %v7350 = vld [vmem:[#allocation3 + $0x30] sm:$0xff]
      %v7351 = vld [vmem:[#allocation3 + $0x38] sm:$0xff]
      %v7352 = vld [vmem:[#allocation3 + $0x40] sm:$0xff]
      %v7353 = vld [vmem:[#allocation3 + $0x48] sm:$0xff]
      %v7354 = vld [vmem:[#allocation3 + $0x50] sm:$0xff]
      %v7355 = vld [vmem:[#allocation3 + $0x58] sm:$0xff]
      %v7356 = vld [vmem:[#allocation3 + $0x60] sm:$0xff]
      %v7357 = vld [vmem:[#allocation3 + $0x68] sm:$0xff]
      %v7358 = vld [vmem:[#allocation3 + $0x70] sm:$0xff]
      %v7359 = vld [vmem:[#allocation3 + $0x78] sm:$0xff]
      %v7360 = vld [vmem:[%s676] sm:$0xff]
      %v7361 = vld [vmem:[%s676 + $0x8] sm:$0xff]
      %v7362 = vld [vmem:[%s676 + $0x10] sm:$0xff]
      %v7363 = vld [vmem:[%s676 + $0x18] sm:$0xff]
      %v7364 = vld [vmem:[%s676 + $0x20] sm:$0xff]
      %v7365 = vld [vmem:[%s676 + $0x28] sm:$0xff]
      %v7366 = vld [vmem:[%s676 + $0x30] sm:$0xff]
      %v7367 = vld [vmem:[%s676 + $0x38] sm:$0xff]
      %v7368 = vld [vmem:[%s676 + $0x40] sm:$0xff]
      %v7369 = vld [vmem:[%s676 + $0x48] sm:$0xff]
      %v7370 = vld [vmem:[%s676 + $0x50] sm:$0xff]
      %v7371 = vld [vmem:[%s676 + $0x58] sm:$0xff]
      %v7372 = vld [vmem:[%s676 + $0x60] sm:$0xff]
      %v7373 = vld [vmem:[%s676 + $0x68] sm:$0xff]
      %v7374 = vld [vmem:[%s676 + $0x70] sm:$0xff]
      %v7375 = vld [vmem:[%s676 + $0x78] sm:$0xff]
      %v7376 = vld [vmem:[%s686] sm:$0xff]
      %v7377 = vld [vmem:[%s686 + $0x8] sm:$0xff]
      %v7379 = vsel %vm750, %v7360, 0
      %v7382 = vsel %vm750, %v7361, 0
      %v7385 = vsel %vm750, %v7362, 0
      %v7388 = vsel %vm750, %v7363, 0
      %v7391 = vsel %vm750, %v7364, 0
      %v7394 = vsel %vm750, %v7365, 0
      %v7397 = vsel %vm750, %v7366, 0
      %v7400 = vsel %vm750, %v7367, 0
      %v7403 = vsel %vm750, %v7368, 0
      %v7406 = vsel %vm750, %v7369, 0
      %v7409 = vsel %vm750, %v7370, 0
      %v7412 = vsel %vm750, %v7371, 0
      %v7415 = vsel %vm750, %v7372, 0
      %v7418 = vsel %vm750, %v7373, 0
      %v7421 = vsel %vm750, %v7374, 0
      %v7424 = vsel %vm750, %v7375, 0
      %7426 = vmatpush.msra.mxu0 0.0
      %7427 = vmatpush.msra.mxu0 0.0
      %7428 = vmatpush.msra.mxu0 0.0
      %7429 = vmatpush.msra.mxu0 0.0
      %7430 = vmatpush.msra.mxu0 0.0
      %7431 = vmatpush.msra.mxu0 0.0
      %7432 = vmatpush.msra.mxu0 0.0
      %7433 = vmatpush.msra.mxu0 0.0
      %7434 = vmatpush.msra.mxu0 0.0
      %7435 = vmatpush.msra.mxu0 0.0
      %7436 = vmatpush.msra.mxu0 0.0
      %7437 = vmatpush.msra.mxu0 0.0
      %7438 = vmatpush.msra.mxu0 0.0
      %7439 = vmatpush.msra.mxu0 0.0
      %7440 = vmatpush.msra.mxu0 %v7377
      %7441 = vmatpush.msra.mxu0 %v7376
      %7442 = vmatmul.f32.gmra.mxu0 %v7379
      %v7443 = vpop.f32.mrf.mxu0
      %v7444 = vadd.f32 0.0, %v7443
      %7445 = vmatmul.f32.gmra.mxu0 %v7382
      %v7446 = vpop.f32.mrf.mxu0
      %v7447 = vadd.f32 0.0, %v7446
      %7448 = vmatmul.f32.gmra.mxu0 %v7385
      %v7449 = vpop.f32.mrf.mxu0
      %v7450 = vadd.f32 0.0, %v7449
      %7451 = vmatmul.f32.gmra.mxu0 %v7388
      %v7452 = vpop.f32.mrf.mxu0
      %v7453 = vadd.f32 0.0, %v7452
      %7454 = vmatmul.f32.gmra.mxu0 %v7391
      %v7455 = vpop.f32.mrf.mxu0
      %v7456 = vadd.f32 0.0, %v7455
      %7457 = vmatmul.f32.gmra.mxu0 %v7394
      %v7458 = vpop.f32.mrf.mxu0
      %v7459 = vadd.f32 0.0, %v7458
      %7460 = vmatmul.f32.gmra.mxu0 %v7397
      %v7461 = vpop.f32.mrf.mxu0
      %v7462 = vadd.f32 0.0, %v7461
      %7463 = vmatmul.f32.gmra.mxu0 %v7400
      %v7464 = vpop.f32.mrf.mxu0
      %v7465 = vadd.f32 0.0, %v7464
      %7466 = vmatmul.f32.gmra.mxu0 %v7403
      %v7467 = vpop.f32.mrf.mxu0
      %v7468 = vadd.f32 0.0, %v7467
      %7469 = vmatmul.f32.gmra.mxu0 %v7406
      %v7470 = vpop.f32.mrf.mxu0
      %v7471 = vadd.f32 0.0, %v7470
      %7472 = vmatmul.f32.gmra.mxu0 %v7409
      %v7473 = vpop.f32.mrf.mxu0
      %v7474 = vadd.f32 0.0, %v7473
      %7475 = vmatmul.f32.gmra.mxu0 %v7412
      %v7476 = vpop.f32.mrf.mxu0
      %v7477 = vadd.f32 0.0, %v7476
      %7478 = vmatmul.f32.gmra.mxu0 %v7415
      %v7479 = vpop.f32.mrf.mxu0
      %v7480 = vadd.f32 0.0, %v7479
      %7481 = vmatmul.f32.gmra.mxu0 %v7418
      %v7482 = vpop.f32.mrf.mxu0
      %v7483 = vadd.f32 0.0, %v7482
      %7484 = vmatmul.f32.gmra.mxu0 %v7421
      %v7485 = vpop.f32.mrf.mxu0
      %v7486 = vadd.f32 0.0, %v7485
      %7487 = vmatmul.f32.gmra.mxu0 %v7424
      %v7488 = vpop.f32.mrf.mxu0
      %v7489 = vadd.f32 0.0, %v7488
      %7490 = vdwg.mxu0
      %v7491 = vsub.f32 0.0, %v7444
      %v7492 = vsub.f32 0.0, %v7447
      %v7493 = vsub.f32 0.0, %v7450
      %v7494 = vsub.f32 0.0, %v7453
      %v7495 = vsub.f32 0.0, %v7456
      %v7496 = vsub.f32 0.0, %v7459
      %v7497 = vsub.f32 0.0, %v7462
      %v7498 = vsub.f32 0.0, %v7465
      %v7499 = vsub.f32 0.0, %v7468
      %v7500 = vsub.f32 0.0, %v7471
      %v7501 = vsub.f32 0.0, %v7474
      %v7502 = vsub.f32 0.0, %v7477
      %v7503 = vsub.f32 0.0, %v7480
      %v7504 = vsub.f32 0.0, %v7483
      %v7505 = vsub.f32 0.0, %v7486
      %v7506 = vsub.f32 0.0, %v7489
      %v7507 = vmul.f32 %v7491, 1.442695
      %v7508 = vpow.pop %v7507
      %v7509 = vmul.f32 %v7492, 1.442695
      %v7510 = vpow.pop %v7509
      %v7511 = vmul.f32 %v7493, 1.442695
      %v7512 = vpow.pop %v7511
      %v7513 = vmul.f32 %v7494, 1.442695
      %v7514 = vpow.pop %v7513
      %v7515 = vmul.f32 %v7495, 1.442695
      %v7516 = vpow.pop %v7515
      %v7517 = vmul.f32 %v7496, 1.442695
      %v7518 = vpow.pop %v7517
      %v7519 = vmul.f32 %v7497, 1.442695
      %v7520 = vpow.pop %v7519
      %v7521 = vmul.f32 %v7498, 1.442695
      %v7522 = vpow.pop %v7521
      %v7523 = vmul.f32 %v7499, 1.442695
      %v7524 = vpow.pop %v7523
      %v7525 = vmul.f32 %v7500, 1.442695
      %v7526 = vpow.pop %v7525
      %v7527 = vmul.f32 %v7501, 1.442695
      %v7528 = vpow.pop %v7527
      %v7529 = vmul.f32 %v7502, 1.442695
      %v7530 = vpow.pop %v7529
      %v7531 = vmul.f32 %v7503, 1.442695
      %v7532 = vpow.pop %v7531
      %v7533 = vmul.f32 %v7504, 1.442695
      %v7534 = vpow.pop %v7533
      %v7535 = vmul.f32 %v7505, 1.442695
      %v7536 = vpow.pop %v7535
      %v7537 = vmul.f32 %v7506, 1.442695
      %v7538 = vpow.pop %v7537
      %v7539 = vadd.f32 %v7508, 1.0
      %v7540 = vadd.f32 %v7510, 1.0
      %v7541 = vadd.f32 %v7512, 1.0
      %v7542 = vadd.f32 %v7514, 1.0
      %v7543 = vadd.f32 %v7516, 1.0
      %v7544 = vadd.f32 %v7518, 1.0
      %v7545 = vadd.f32 %v7520, 1.0
      %v7546 = vadd.f32 %v7522, 1.0
      %v7547 = vadd.f32 %v7524, 1.0
      %v7548 = vadd.f32 %v7526, 1.0
      %v7549 = vadd.f32 %v7528, 1.0
      %v7550 = vadd.f32 %v7530, 1.0
      %v7551 = vadd.f32 %v7532, 1.0
      %v7552 = vadd.f32 %v7534, 1.0
      %v7553 = vadd.f32 %v7536, 1.0
      %v7554 = vadd.f32 %v7538, 1.0
      %v7555 = vrcp.pop %v7539
      %v7556 = vrcp.pop %v7540
      %v7557 = vrcp.pop %v7541
      %v7558 = vrcp.pop %v7542
      %v7559 = vrcp.pop %v7543
      %v7560 = vrcp.pop %v7544
      %v7561 = vrcp.pop %v7545
      %v7562 = vrcp.pop %v7546
      %v7563 = vrcp.pop %v7547
      %v7564 = vrcp.pop %v7548
      %v7565 = vrcp.pop %v7549
      %v7566 = vrcp.pop %v7550
      %v7567 = vrcp.pop %v7551
      %v7568 = vrcp.pop %v7552
      %v7569 = vrcp.pop %v7553
      %v7570 = vrcp.pop %v7554
      %v7571 = vmul.f32 %v7444, %v7555
      %v7572 = vmul.f32 %v7447, %v7556
      %v7573 = vmul.f32 %v7450, %v7557
      %v7574 = vmul.f32 %v7453, %v7558
      %v7575 = vmul.f32 %v7456, %v7559
      %v7576 = vmul.f32 %v7459, %v7560
      %v7577 = vmul.f32 %v7462, %v7561
      %v7578 = vmul.f32 %v7465, %v7562
      %v7579 = vmul.f32 %v7468, %v7563
      %v7580 = vmul.f32 %v7471, %v7564
      %v7581 = vmul.f32 %v7474, %v7565
      %v7582 = vmul.f32 %v7477, %v7566
      %v7583 = vmul.f32 %v7480, %v7567
      %v7584 = vmul.f32 %v7483, %v7568
      %v7585 = vmul.f32 %v7486, %v7569
      %v7586 = vmul.f32 %v7489, %v7570
      %v7587 = vld [vmem:[%s718] sm:$0x1]
      %v7589 = vperm.slane %v7587, 0
      %v7591 = vmul.f32 %v7344, %v7589
      %v7592 = vmul.f32 %v7345, %v7589
      %v7593 = vmul.f32 %v7346, %v7589
      %v7594 = vmul.f32 %v7347, %v7589
      %v7595 = vmul.f32 %v7348, %v7589
      %v7596 = vmul.f32 %v7349, %v7589
      %v7597 = vmul.f32 %v7350, %v7589
      %v7598 = vmul.f32 %v7351, %v7589
      %v7599 = vmul.f32 %v7352, %v7589
      %v7600 = vmul.f32 %v7353, %v7589
      %v7601 = vmul.f32 %v7354, %v7589
      %v7602 = vmul.f32 %v7355, %v7589
      %v7603 = vmul.f32 %v7356, %v7589
      %v7604 = vmul.f32 %v7357, %v7589
      %v7605 = vmul.f32 %v7358, %v7589
      %v7606 = vmul.f32 %v7359, %v7589
      %v7607 = vld [vmem:[%s723] sm:$0xff]
      %v7608 = vld [vmem:[%s723 + $0x8] sm:$0xff]
      %v7609 = vld [vmem:[%s723 + $0x10] sm:$0xff]
      %v7610 = vld [vmem:[%s723 + $0x18] sm:$0xff]
      %v7611 = vld [vmem:[%s723 + $0x20] sm:$0xff]
      %v7612 = vld [vmem:[%s723 + $0x28] sm:$0xff]
      %v7613 = vld [vmem:[%s723 + $0x30] sm:$0xff]
      %v7614 = vld [vmem:[%s723 + $0x38] sm:$0xff]
      %v7615 = vld [vmem:[%s723 + $0x40] sm:$0xff]
      %v7616 = vld [vmem:[%s723 + $0x48] sm:$0xff]
      %v7617 = vld [vmem:[%s723 + $0x50] sm:$0xff]
      %v7618 = vld [vmem:[%s723 + $0x58] sm:$0xff]
      %v7619 = vld [vmem:[%s723 + $0x60] sm:$0xff]
      %v7620 = vld [vmem:[%s723 + $0x68] sm:$0xff]
      %v7621 = vld [vmem:[%s723 + $0x70] sm:$0xff]
      %v7622 = vld [vmem:[%s723 + $0x78] sm:$0xff]
      %v7623 = vld [vmem:[#allocation7] sm:$0xff]
      %v7624 = vld [vmem:[#allocation7 + $0x8] sm:$0xff]
      %v7625 = vld [vmem:[#allocation7 + $0x10] sm:$0xff]
      %v7626 = vld [vmem:[#allocation7 + $0x18] sm:$0xff]
      %v7627 = vld [vmem:[#allocation7 + $0x20] sm:$0xff]
      %v7628 = vld [vmem:[#allocation7 + $0x28] sm:$0xff]
      %v7629 = vld [vmem:[#allocation7 + $0x30] sm:$0xff]
      %v7630 = vld [vmem:[#allocation7 + $0x38] sm:$0xff]
      %v7631 = vld [vmem:[#allocation7 + $0x40] sm:$0xff]
      %v7632 = vld [vmem:[#allocation7 + $0x48] sm:$0xff]
      %v7633 = vld [vmem:[#allocation7 + $0x50] sm:$0xff]
      %v7634 = vld [vmem:[#allocation7 + $0x58] sm:$0xff]
      %v7635 = vld [vmem:[#allocation7 + $0x60] sm:$0xff]
      %v7636 = vld [vmem:[#allocation7 + $0x68] sm:$0xff]
      %v7637 = vld [vmem:[#allocation7 + $0x70] sm:$0xff]
      %v7638 = vld [vmem:[#allocation7 + $0x78] sm:$0xff]
      %v7639 = vadd.f32 %v7623, %v7591
      %v7640 = vadd.f32 %v7624, %v7592
      %v7641 = vadd.f32 %v7625, %v7593
      %v7642 = vadd.f32 %v7626, %v7594
      %v7643 = vadd.f32 %v7627, %v7595
      %v7644 = vadd.f32 %v7628, %v7596
      %v7645 = vadd.f32 %v7629, %v7597
      %v7646 = vadd.f32 %v7630, %v7598
      %v7647 = vadd.f32 %v7631, %v7599
      %v7648 = vadd.f32 %v7632, %v7600
      %v7649 = vadd.f32 %v7633, %v7601
      %v7650 = vadd.f32 %v7634, %v7602
      %v7651 = vadd.f32 %v7635, %v7603
      %v7652 = vadd.f32 %v7636, %v7604
      %v7653 = vadd.f32 %v7637, %v7605
      %v7654 = vadd.f32 %v7638, %v7606
      %v7655 = vmul.f32 %v7639, %v7571
      %v7656 = vmul.f32 %v7640, %v7572
      %v7657 = vmul.f32 %v7641, %v7573
      %v7658 = vmul.f32 %v7642, %v7574
      %v7659 = vmul.f32 %v7643, %v7575
      %v7660 = vmul.f32 %v7644, %v7576
      %v7661 = vmul.f32 %v7645, %v7577
      %v7662 = vmul.f32 %v7646, %v7578
      %v7663 = vmul.f32 %v7647, %v7579
      %v7664 = vmul.f32 %v7648, %v7580
      %v7665 = vmul.f32 %v7649, %v7581
      %v7666 = vmul.f32 %v7650, %v7582
      %v7667 = vmul.f32 %v7651, %v7583
      %v7668 = vmul.f32 %v7652, %v7584
      %v7669 = vmul.f32 %v7653, %v7585
      %v7670 = vmul.f32 %v7654, %v7586
      %v7671 = vld [vmem:[#allocation8] sm:$0xff]
      %v7672 = vld [vmem:[#allocation8 + $0x8] sm:$0xff]
      %v7673 = vld [vmem:[#allocation8 + $0x10] sm:$0xff]
      %v7674 = vld [vmem:[#allocation8 + $0x18] sm:$0xff]
      %v7675 = vld [vmem:[#allocation8 + $0x20] sm:$0xff]
      %v7676 = vld [vmem:[#allocation8 + $0x28] sm:$0xff]
      %v7677 = vld [vmem:[#allocation8 + $0x30] sm:$0xff]
      %v7678 = vld [vmem:[#allocation8 + $0x38] sm:$0xff]
      %v7679 = vld [vmem:[#allocation8 + $0x40] sm:$0xff]
      %v7680 = vld [vmem:[#allocation8 + $0x48] sm:$0xff]
      %v7681 = vld [vmem:[#allocation8 + $0x50] sm:$0xff]
      %v7682 = vld [vmem:[#allocation8 + $0x58] sm:$0xff]
      %v7683 = vld [vmem:[#allocation8 + $0x60] sm:$0xff]
      %v7684 = vld [vmem:[#allocation8 + $0x68] sm:$0xff]
      %v7685 = vld [vmem:[#allocation8 + $0x70] sm:$0xff]
      %v7686 = vld [vmem:[#allocation8 + $0x78] sm:$0xff]
      %7703 = vrot.lane.b32.xlu0 %v7591, 64
      %v7704 = vpop.permute.xlu0 %7703
      %7705 = vrot.lane.b32.xlu0 %v7592, 64
      %v7706 = vpop.permute.xlu0 %7705
      %7707 = vrot.lane.b32.xlu0 %v7593, 64
      %v7708 = vpop.permute.xlu0 %7707
      %7709 = vrot.lane.b32.xlu0 %v7594, 64
      %v7710 = vpop.permute.xlu0 %7709
      %7711 = vrot.lane.b32.xlu0 %v7595, 64
      %v7712 = vpop.permute.xlu0 %7711
      %7713 = vrot.lane.b32.xlu0 %v7596, 64
      %v7714 = vpop.permute.xlu0 %7713
      %7715 = vrot.lane.b32.xlu0 %v7597, 64
      %v7716 = vpop.permute.xlu0 %7715
      %7717 = vrot.lane.b32.xlu0 %v7598, 64
      %v7718 = vpop.permute.xlu0 %7717
      %7719 = vrot.lane.b32.xlu0 %v7599, 64
      %v7720 = vpop.permute.xlu0 %7719
      %7721 = vrot.lane.b32.xlu0 %v7600, 64
      %v7722 = vpop.permute.xlu0 %7721
      %7723 = vrot.lane.b32.xlu0 %v7601, 64
      %v7724 = vpop.permute.xlu0 %7723
      %7725 = vrot.lane.b32.xlu0 %v7602, 64
      %v7726 = vpop.permute.xlu0 %7725
      %7727 = vrot.lane.b32.xlu0 %v7603, 64
      %v7728 = vpop.permute.xlu0 %7727
      %7729 = vrot.lane.b32.xlu0 %v7604, 64
      %v7730 = vpop.permute.xlu0 %7729
      %7731 = vrot.lane.b32.xlu0 %v7605, 64
      %v7732 = vpop.permute.xlu0 %7731
      %7733 = vrot.lane.b32.xlu0 %v7606, 64
      %v7734 = vpop.permute.xlu0 %7733
      %v7751 = vadd.f32 %v7671, %v7704
      %v7752 = vadd.f32 %v7672, %v7706
      %v7753 = vadd.f32 %v7673, %v7708
      %v7754 = vadd.f32 %v7674, %v7710
      %v7755 = vadd.f32 %v7675, %v7712
      %v7756 = vadd.f32 %v7676, %v7714
      %v7757 = vadd.f32 %v7677, %v7716
      %v7758 = vadd.f32 %v7678, %v7718
      %v7759 = vadd.f32 %v7679, %v7720
      %v7760 = vadd.f32 %v7680, %v7722
      %v7761 = vadd.f32 %v7681, %v7724
      %v7762 = vadd.f32 %v7682, %v7726
      %v7763 = vadd.f32 %v7683, %v7728
      %v7764 = vadd.f32 %v7684, %v7730
      %v7765 = vadd.f32 %v7685, %v7732
      %v7766 = vadd.f32 %v7686, %v7734
      %7783 = vrot.lane.b32.xlu0 %v7571, 64
      %v7784 = vpop.permute.xlu0 %7783
      %7785 = vrot.lane.b32.xlu0 %v7572, 64
      %v7786 = vpop.permute.xlu0 %7785
      %7787 = vrot.lane.b32.xlu0 %v7573, 64
      %v7788 = vpop.permute.xlu0 %7787
      %7789 = vrot.lane.b32.xlu0 %v7574, 64
      %v7790 = vpop.permute.xlu0 %7789
      %7791 = vrot.lane.b32.xlu0 %v7575, 64
      %v7792 = vpop.permute.xlu0 %7791
      %7793 = vrot.lane.b32.xlu0 %v7576, 64
      %v7794 = vpop.permute.xlu0 %7793
      %7795 = vrot.lane.b32.xlu0 %v7577, 64
      %v7796 = vpop.permute.xlu0 %7795
      %7797 = vrot.lane.b32.xlu0 %v7578, 64
      %v7798 = vpop.permute.xlu0 %7797
      %7799 = vrot.lane.b32.xlu0 %v7579, 64
      %v7800 = vpop.permute.xlu0 %7799
      %7801 = vrot.lane.b32.xlu0 %v7580, 64
      %v7802 = vpop.permute.xlu0 %7801
      %7803 = vrot.lane.b32.xlu0 %v7581, 64
      %v7804 = vpop.permute.xlu0 %7803
      %7805 = vrot.lane.b32.xlu0 %v7582, 64
      %v7806 = vpop.permute.xlu0 %7805
      %7807 = vrot.lane.b32.xlu0 %v7583, 64
      %v7808 = vpop.permute.xlu0 %7807
      %7809 = vrot.lane.b32.xlu0 %v7584, 64
      %v7810 = vpop.permute.xlu0 %7809
      %7811 = vrot.lane.b32.xlu0 %v7585, 64
      %v7812 = vpop.permute.xlu0 %7811
      %7813 = vrot.lane.b32.xlu0 %v7586, 64
      %v7814 = vpop.permute.xlu0 %7813
      %v7831 = vmul.f32 %v7751, %v7784
      %v7832 = vmul.f32 %v7752, %v7786
      %v7833 = vmul.f32 %v7753, %v7788
      %v7834 = vmul.f32 %v7754, %v7790
      %v7835 = vmul.f32 %v7755, %v7792
      %v7836 = vmul.f32 %v7756, %v7794
      %v7837 = vmul.f32 %v7757, %v7796
      %v7838 = vmul.f32 %v7758, %v7798
      %v7839 = vmul.f32 %v7759, %v7800
      %v7840 = vmul.f32 %v7760, %v7802
      %v7841 = vmul.f32 %v7761, %v7804
      %v7842 = vmul.f32 %v7762, %v7806
      %v7843 = vmul.f32 %v7763, %v7808
      %v7844 = vmul.f32 %v7764, %v7810
      %v7845 = vmul.f32 %v7765, %v7812
      %v7846 = vmul.f32 %v7766, %v7814
      %v7848 = vsel %vm5243, %v7831, 0
      %v7851 = vsel %vm5243, %v7832, 0
      %v7854 = vsel %vm5243, %v7833, 0
      %v7857 = vsel %vm5243, %v7834, 0
      %v7860 = vsel %vm5243, %v7835, 0
      %v7863 = vsel %vm5243, %v7836, 0
      %v7866 = vsel %vm5243, %v7837, 0
      %v7869 = vsel %vm5243, %v7838, 0
      %v7872 = vsel %vm5243, %v7839, 0
      %v7875 = vsel %vm5243, %v7840, 0
      %v7878 = vsel %vm5243, %v7841, 0
      %v7881 = vsel %vm5243, %v7842, 0
      %v7884 = vsel %vm5243, %v7843, 0
      %v7887 = vsel %vm5243, %v7844, 0
      %v7890 = vsel %vm5243, %v7845, 0
      %v7893 = vsel %vm5243, %v7846, 0
      %7895 = vmatpush.msra.mxu0 0.0
      %7896 = vmatpush.msra.mxu0 0.0
      %7897 = vmatpush.msra.mxu0 0.0
      %7898 = vmatpush.msra.mxu0 0.0
      %7899 = vmatpush.msra.mxu0 0.0
      %7900 = vmatpush.msra.mxu0 0.0
      %7901 = vmatpush.msra.mxu0 0.0
      %7902 = vmatpush.msra.mxu0 0.0
      %7903 = vmatpush.msra.mxu0 %v7622
      %7904 = vmatpush.msra.mxu0 %v7621
      %7905 = vmatpush.msra.mxu0 %v7620
      %7906 = vmatpush.msra.mxu0 %v7619
      %7907 = vmatpush.msra.mxu0 %v7618
      %7908 = vmatpush.msra.mxu0 %v7617
      %7909 = vmatpush.msra.mxu0 %v7616
      %7910 = vmatpush.msra.mxu0 %v7615
      %7911 = vmatmul.f32.gmra.mxu0 %v7848
      %v7912 = vpop.f32.mrf.mxu0
      %v7913 = vadd.f32 0.0, %v7912
      %7914 = vmatmul.f32.gmra.mxu0 %v7851
      %v7915 = vpop.f32.mrf.mxu0
      %v7916 = vadd.f32 0.0, %v7915
      %7917 = vmatmul.f32.gmra.mxu0 %v7854
      %v7918 = vpop.f32.mrf.mxu0
      %v7919 = vadd.f32 0.0, %v7918
      %7920 = vmatmul.f32.gmra.mxu0 %v7857
      %v7921 = vpop.f32.mrf.mxu0
      %v7922 = vadd.f32 0.0, %v7921
      %7923 = vmatmul.f32.gmra.mxu0 %v7860
      %v7924 = vpop.f32.mrf.mxu0
      %v7925 = vadd.f32 0.0, %v7924
      %7926 = vmatmul.f32.gmra.mxu0 %v7863
      %v7927 = vpop.f32.mrf.mxu0
      %v7928 = vadd.f32 0.0, %v7927
      %7929 = vmatmul.f32.gmra.mxu0 %v7866
      %v7930 = vpop.f32.mrf.mxu0
      %v7931 = vadd.f32 0.0, %v7930
      %7932 = vmatmul.f32.gmra.mxu0 %v7869
      %v7933 = vpop.f32.mrf.mxu0
      %v7934 = vadd.f32 0.0, %v7933
      %7935 = vmatmul.f32.gmra.mxu0 %v7872
      %v7936 = vpop.f32.mrf.mxu0
      %v7937 = vadd.f32 0.0, %v7936
      %7938 = vmatmul.f32.gmra.mxu0 %v7875
      %v7939 = vpop.f32.mrf.mxu0
      %v7940 = vadd.f32 0.0, %v7939
      %7941 = vmatmul.f32.gmra.mxu0 %v7878
      %v7942 = vpop.f32.mrf.mxu0
      %v7943 = vadd.f32 0.0, %v7942
      %7944 = vmatmul.f32.gmra.mxu0 %v7881
      %v7945 = vpop.f32.mrf.mxu0
      %v7946 = vadd.f32 0.0, %v7945
      %7947 = vmatmul.f32.gmra.mxu0 %v7884
      %v7948 = vpop.f32.mrf.mxu0
      %v7949 = vadd.f32 0.0, %v7948
      %7950 = vmatmul.f32.gmra.mxu0 %v7887
      %v7951 = vpop.f32.mrf.mxu0
      %v7952 = vadd.f32 0.0, %v7951
      %7953 = vmatmul.f32.gmra.mxu0 %v7890
      %v7954 = vpop.f32.mrf.mxu0
      %v7955 = vadd.f32 0.0, %v7954
      %7956 = vmatmul.f32.gmra.mxu0 %v7893
      %v7957 = vpop.f32.mrf.mxu0
      %v7958 = vadd.f32 0.0, %v7957
      %7959 = vdwg.mxu0
      %v7961 = vsel %vm5243, %v7655, 0
      %v7964 = vsel %vm5243, %v7656, 0
      %v7967 = vsel %vm5243, %v7657, 0
      %v7970 = vsel %vm5243, %v7658, 0
      %v7973 = vsel %vm5243, %v7659, 0
      %v7976 = vsel %vm5243, %v7660, 0
      %v7979 = vsel %vm5243, %v7661, 0
      %v7982 = vsel %vm5243, %v7662, 0
      %v7985 = vsel %vm5243, %v7663, 0
      %v7988 = vsel %vm5243, %v7664, 0
      %v7991 = vsel %vm5243, %v7665, 0
      %v7994 = vsel %vm5243, %v7666, 0
      %v7997 = vsel %vm5243, %v7667, 0
      %v8000 = vsel %vm5243, %v7668, 0
      %v8003 = vsel %vm5243, %v7669, 0
      %v8006 = vsel %vm5243, %v7670, 0
      %8008 = vmatpush.msra.mxu0 0.0
      %8009 = vmatpush.msra.mxu0 0.0
      %8010 = vmatpush.msra.mxu0 0.0
      %8011 = vmatpush.msra.mxu0 0.0
      %8012 = vmatpush.msra.mxu0 0.0
      %8013 = vmatpush.msra.mxu0 0.0
      %8014 = vmatpush.msra.mxu0 0.0
      %8015 = vmatpush.msra.mxu0 0.0
      %8016 = vmatpush.msra.mxu0 %v7614
      %8017 = vmatpush.msra.mxu0 %v7613
      %8018 = vmatpush.msra.mxu0 %v7612
      %8019 = vmatpush.msra.mxu0 %v7611
      %8020 = vmatpush.msra.mxu0 %v7610
      %8021 = vmatpush.msra.mxu0 %v7609
      %8022 = vmatpush.msra.mxu0 %v7608
      %8023 = vmatpush.msra.mxu0 %v7607
      %8024 = vmatmul.f32.gmra.mxu0 %v7961
      %v8025 = vpop.f32.mrf.mxu0
      %v8026 = vadd.f32 %v7913, %v8025
      %8027 = vmatmul.f32.gmra.mxu0 %v7964
      %v8028 = vpop.f32.mrf.mxu0
      %v8029 = vadd.f32 %v7916, %v8028
      %8030 = vmatmul.f32.gmra.mxu0 %v7967
      %v8031 = vpop.f32.mrf.mxu0
      %v8032 = vadd.f32 %v7919, %v8031
      %8033 = vmatmul.f32.gmra.mxu0 %v7970
      %v8034 = vpop.f32.mrf.mxu0
      %v8035 = vadd.f32 %v7922, %v8034
      %8036 = vmatmul.f32.gmra.mxu0 %v7973
      %v8037 = vpop.f32.mrf.mxu0
      %v8038 = vadd.f32 %v7925, %v8037
      %8039 = vmatmul.f32.gmra.mxu0 %v7976
      %v8040 = vpop.f32.mrf.mxu0
      %v8041 = vadd.f32 %v7928, %v8040
      %8042 = vmatmul.f32.gmra.mxu0 %v7979
      %v8043 = vpop.f32.mrf.mxu0
      %v8044 = vadd.f32 %v7931, %v8043
      %8045 = vmatmul.f32.gmra.mxu0 %v7982
      %v8046 = vpop.f32.mrf.mxu0
      %v8047 = vadd.f32 %v7934, %v8046
      %8048 = vmatmul.f32.gmra.mxu0 %v7985
      %v8049 = vpop.f32.mrf.mxu0
      %v8050 = vadd.f32 %v7937, %v8049
      %8051 = vmatmul.f32.gmra.mxu0 %v7988
      %v8052 = vpop.f32.mrf.mxu0
      %v8053 = vadd.f32 %v7940, %v8052
      %8054 = vmatmul.f32.gmra.mxu0 %v7991
      %v8055 = vpop.f32.mrf.mxu0
      %v8056 = vadd.f32 %v7943, %v8055
      %8057 = vmatmul.f32.gmra.mxu0 %v7994
      %v8058 = vpop.f32.mrf.mxu0
      %v8059 = vadd.f32 %v7946, %v8058
      %8060 = vmatmul.f32.gmra.mxu0 %v7997
      %v8061 = vpop.f32.mrf.mxu0
      %v8062 = vadd.f32 %v7949, %v8061
      %8063 = vmatmul.f32.gmra.mxu0 %v8000
      %v8064 = vpop.f32.mrf.mxu0
      %v8065 = vadd.f32 %v7952, %v8064
      %8066 = vmatmul.f32.gmra.mxu0 %v8003
      %v8067 = vpop.f32.mrf.mxu0
      %v8068 = vadd.f32 %v7955, %v8067
      %8069 = vmatmul.f32.gmra.mxu0 %v8006
      %v8070 = vpop.f32.mrf.mxu0
      %v8071 = vadd.f32 %v7958, %v8070
      %8072 = vdwg.mxu0
      %v8073 = vld [vmem:[%s726] sm:$0x1]
      %v8075 = vperm.slane %v8073, 0
      %v8077 = vadd.f32 %v8026, %v8075
      %v8078 = vadd.f32 %v8029, %v8075
      %v8079 = vadd.f32 %v8032, %v8075
      %v8080 = vadd.f32 %v8035, %v8075
      %v8081 = vadd.f32 %v8038, %v8075
      %v8082 = vadd.f32 %v8041, %v8075
      %v8083 = vadd.f32 %v8044, %v8075
      %v8084 = vadd.f32 %v8047, %v8075
      %v8085 = vadd.f32 %v8050, %v8075
      %v8086 = vadd.f32 %v8053, %v8075
      %v8087 = vadd.f32 %v8056, %v8075
      %v8088 = vadd.f32 %v8059, %v8075
      %v8089 = vadd.f32 %v8062, %v8075
      %v8090 = vadd.f32 %v8065, %v8075
      %v8091 = vadd.f32 %v8068, %v8075
      %v8092 = vadd.f32 %v8071, %v8075
      %8093 = vst.msk [vmem:[%s731] sm:$0xff] %vm750, %v8077
      %8094 = vst.msk [vmem:[%s731 + $0x8] sm:$0xff] %vm750, %v8078
      %8095 = vst.msk [vmem:[%s731 + $0x10] sm:$0xff] %vm750, %v8079
      %8096 = vst.msk [vmem:[%s731 + $0x18] sm:$0xff] %vm750, %v8080
      %8097 = vst.msk [vmem:[%s731 + $0x20] sm:$0xff] %vm750, %v8081
      %8098 = vst.msk [vmem:[%s731 + $0x28] sm:$0xff] %vm750, %v8082
      %8099 = vst.msk [vmem:[%s731 + $0x30] sm:$0xff] %vm750, %v8083
      %8100 = vst.msk [vmem:[%s731 + $0x38] sm:$0xff] %vm750, %v8084
      %8101 = vst.msk [vmem:[%s731 + $0x40] sm:$0xff] %vm750, %v8085
      %8102 = vst.msk [vmem:[%s731 + $0x48] sm:$0xff] %vm750, %v8086
      %8103 = vst.msk [vmem:[%s731 + $0x50] sm:$0xff] %vm750, %v8087
      %8104 = vst.msk [vmem:[%s731 + $0x58] sm:$0xff] %vm750, %v8088
      %8105 = vst.msk [vmem:[%s731 + $0x60] sm:$0xff] %vm750, %v8089
      %8106 = vst.msk [vmem:[%s731 + $0x68] sm:$0xff] %vm750, %v8090
      %8107 = vst.msk [vmem:[%s731 + $0x70] sm:$0xff] %vm750, %v8091
      %8108 = vst.msk [vmem:[%s731 + $0x78] sm:$0xff] %vm750, %v8092
      %p8109 = scmp.lt.s32.totalorder %s27, 1
      %s8110 = scalar_select %p8109, %s27, 1
      %s8111 = smul.addr %s8110, 16
      %s8112 = smul.addr %s8111, 8
      %s8113 = scalar_lea.vmem %s16, %s8112
      // Predicated region
      $region85: #{mamba2d_forward.1} parent=83 // pred_check
        %p8114 = pneg %p446
      $region86: #{mamba2d_forward.1} parent=83 // pred_check_branch
        %8116 = sbr.rel (%p8114) target = $region88
      $region87: #{mamba2d_forward.1} parent=83 // pred_region
        _
      $region88: #{mamba2d_forward.1} parent=83 // pred_fallthru
        _
    $region84: #{mamba2d_forward.1} parent=5 // pred_fallthru
      _
    %p8117 = scmp.le.s32.totalorder 2, %s22
    // Predicated region
    $region89: #{mamba2d_forward.1} parent=5 // pred_check
      %p8118 = pneg %p8117
    $region90: #{mamba2d_forward.1} parent=5 // pred_check_branch
      %8120 = sbr.rel (%p8118) target = $region92
    $region91: #{mamba2d_forward.1} parent=5 // pred_region
      %s8121 = ssub.s32 %s22, 2
      // Predicated region
      $region93: #{mamba2d_forward.1} parent=91 // pred_check
        %p8122 = pneg %p452
      $region94: #{mamba2d_forward.1} parent=91 // pred_check_branch
        %8124 = sbr.rel (%p8122) target = $region96
      $region95: #{mamba2d_forward.1} parent=91 // pred_region
        %p8125 = scmp.lt.s32.totalorder %s28, 1
        %s8126 = scalar_select %p8125, %s28, 1
        %s8127 = smul.addr %s8126, 16
        %s8128 = smul.addr %s8127, 8
        %s8129 = scalar_lea.vmem %s16, %s8128
      $region96: #{mamba2d_forward.1} parent=91 // pred_fallthru
        _
    $region92: #{mamba2d_forward.1} parent=5 // pred_fallthru
      _
  $region6: #{mamba2d_forward.1} parent=0 // loop_footer
    %s26 = sadd.s32 1, %s22
  $region7: #{mamba2d_forward.1} parent=0 // loop_footer_branch
    %21 = sbr.rel target = $region3
  $region8: #{mamba2d_forward.1} parent=0 // loop_exit
    _

</llo_original>
